<compile_context>
chip_gen: v6e
topology: v6e:2x2x1
jax: 0.10.0
libtpu: 0.0.40
codegen_flags: <defaults>
</compile_context>

<pallas_src>
import functools

import jax
import jax.numpy as jnp
from jax import lax
from jax.experimental import pallas as pl
from jax.experimental.pallas import tpu as pltpu

# -----------------------------------------------------------------------------
# Model hyperparameters (small, consistent with the module defaults scaled down)
# -----------------------------------------------------------------------------
BATCH = 2
SEQ = 64            # number of tokens
DIM = 32            # model dim
HEADS = 4
DIM_HEAD = 8
INNER = HEADS * DIM_HEAD
DEPTH = 2
NUM_LANDMARKS = 16  # clip(quo+1, 16, 64) -> 16 for small sequences
PINV_ITERS = 6
RES_CONV_KERNEL = 33
FF_MULT = 4
LN_EPS = 1e-5


# -----------------------------------------------------------------------------
# In-kernel helpers
# -----------------------------------------------------------------------------
def _bf16(x):
    return x.astype(jnp.bfloat16)


def _mm(a, b):
    """(M, K) @ (K, N): bf16 operands (MXU-native), f32 accumulation."""
    return jnp.dot(_bf16(a), _bf16(b), preferred_element_type=jnp.float32)


def _mm_nt(a, b):
    """(M, K) x (N, K) -> (M, N), contracting last dims (no transpose op)."""
    return lax.dot_general(_bf16(a), _bf16(b), (((1,), (1,)), ((), ())),
                           preferred_element_type=jnp.float32)


def _softmax(s):
    m = jnp.max(s, axis=-1, keepdims=True)
    e = jnp.exp(s - m)
    # reciprocal goes to the (otherwise idle) EUP slot
    return e * pl.reciprocal(jnp.sum(e, axis=-1, keepdims=True), approx=True)


def _layernorm(x, g, b, eps):
    mu = jnp.mean(x, axis=-1, keepdims=True)
    var = jnp.mean((x - mu) ** 2, axis=-1, keepdims=True)
    return (x - mu) * lax.rsqrt(var + eps) * g + b


def _identity(n):
    r = lax.broadcasted_iota(jnp.int32, (n, n), 0)
    c = lax.broadcasted_iota(jnp.int32, (n, n), 1)
    return (r == c).astype(jnp.float32)


# -----------------------------------------------------------------------------
# Fused per-layer kernel: one grid step == one batch element, all in VMEM
# -----------------------------------------------------------------------------
def fused_layer_kernel(x_ref, ln1g_ref, ln1b_ref, wq_ref, wk_ref, wv_ref,
                       outw_ref, outb_ref, convw_ref, ln2g_ref, ln2b_ref,
                       ffw1_ref, ffb1_ref, ffw2_ref, ffb2_ref, o_ref, *,
                       heads, dim_head, n_landmarks, pinv_iters, conv_k, eps):
    f32 = jnp.float32
    x = x_ref[...]                               # (N, D) f32
    n_seq = x.shape[0]
    lm = n_landmarks
    inner = heads * dim_head

    # ---- PreNorm(LN1) + bias-free QKV projection -----------------------------
    xn = _bf16(_layernorm(x, ln1g_ref[...], ln1b_ref[...], eps))
    q_all = jnp.dot(xn, wq_ref[...], preferred_element_type=f32)   # (N, h*d)
    k_all = jnp.dot(xn, wk_ref[...], preferred_element_type=f32)
    v_all = jnp.dot(xn, wv_ref[...], preferred_element_type=f32)

    # ---- landmark mean pooling (equal windows) for all heads at once ---------
    # pool matrix built in-register from iota: no HBM input, one MXU pass each.
    win = n_seq // lm
    l_idx = lax.broadcasted_iota(jnp.int32, (lm, n_seq), 0)
    n_idx = lax.broadcasted_iota(jnp.int32, (lm, n_seq), 1)
    in_win = (n_idx >= l_idx * win) & (n_idx < (l_idx + 1) * win)
    pool = jnp.where(in_win, 1.0 / win, 0.0).astype(f32)            # (L, N)
    q_land = _mm(pool, q_all)                                       # (L, h*d)
    k_land = _mm(pool, k_all)

    # ---- per-head similarities / softmax (reference applies no 1/sqrt(d)) ----
    attn1_l, attn2_l, a3v_l = [], [], []
    for h in range(heads):
        lo, hi = h * dim_head, (h + 1) * dim_head
        q_h, k_h, v_h = q_all[:, lo:hi], k_all[:, lo:hi], v_all[:, lo:hi]
        ql_h, kl_h = q_land[:, lo:hi], k_land[:, lo:hi]
        attn1_l.append(_softmax(_mm_nt(q_h, kl_h)))                 # (N, L)
        attn2_l.append(_softmax(_mm_nt(ql_h, kl_h)))                # (L, L)
        attn3_h = _softmax(_mm_nt(ql_h, k_h))                       # (L, N)
        a3v_l.append(_mm(attn3_h, v_h))                             # (L, d)

    # ---- Moore-Penrose iterative pinv, all heads packed block-diagonally -----
    # Each of the pinv_iters*4 chained matmuls is one (h*L, h*L) MXU op instead
    # of `heads` tiny (L, L) ones.  Block structure is preserved exactly.
    zero_ll = jnp.zeros((lm, lm), f32)
    a_bd = jnp.concatenate(
        [jnp.concatenate([attn2_l[h] if g == h else zero_ll
                          for g in range(heads)], axis=1)
         for h in range(heads)], axis=0)                            # (hL, hL)

    abs_a = jnp.abs(a_bd)
    col = jnp.sum(abs_a, axis=-1, keepdims=True)
    row = jnp.sum(abs_a, axis=-2, keepdims=True)
    # NOTE: the torch reference takes this max globally over the batch; with the
    # batch on the grid it is taken per batch element, which only rescales the
    # Newton-Schulz initial guess (the converged pseudoinverse is unchanged).
    denom = jnp.max(col) * jnp.max(row)

    eye = _identity(heads * lm)
    # transpose expressed as an MXU contraction (I x A over last dims) to stay
    # on the well-supported dot_general path.
    a_t = lax.dot_general(eye, a_bd, (((1,), (1,)), ((), ())),
                          preferred_element_type=f32)
    z = a_t / denom
    for _ in range(pinv_iters):
        xz = _mm(a_bd, z)
        t = 7.0 * eye - xz
        t = 15.0 * eye - _mm(xz, t)
        t = 13.0 * eye - _mm(xz, t)
        z = 0.25 * _mm(z, t)

    # ---- attention output, assembled lane-dense as (N, heads*dim_head) -------
    outs = []
    for h in range(heads):
        lo, hi = h * lm, (h + 1) * lm
        z_h = z[lo:hi, lo:hi]                                       # (L, L)
        a1z = _mm(attn1_l[h], z_h)                                  # (N, L)
        outs.append(_mm(a1z, a3v_l[h]))                             # (N, d)
    attn_out = jnp.concatenate(outs, axis=1)                        # (N, h*d)

    # ---- residual depthwise conv along the sequence: K shifted adds on the
    #      lane-dense v slab (replaces the dense (N, N) banded matmul + DMA).
    pad = conv_k // 2
    zpad = jnp.zeros((pad, inner), f32)
    v_padded = jnp.concatenate([zpad, v_all, zpad], axis=0)         # (N+K-1, h*d)
    cw = convw_ref[...]                                             # (K, h*d)
    conv_out = jnp.zeros_like(v_all)
    for j in range(conv_k):                                         # static unroll
        conv_out = conv_out + v_padded[j:j + n_seq, :] * cw[j:j + 1, :]

    # ---- output projection + residual ----------------------------------------
    attn_proj = _mm(attn_out + conv_out, outw_ref[...]) + outb_ref[...]
    x = x + attn_proj

    # ---- PreNorm(LN2) + FeedForward (exact erf GELU) + residual ---------------
    xn2 = _layernorm(x, ln2g_ref[...], ln2b_ref[...], eps)
    hdn = _mm(xn2, ffw1_ref[...]) + ffb1_ref[...]
    hdn = 0.5 * hdn * (1.0 + lax.erf(hdn / jnp.sqrt(jnp.float32(2.0))))
    ff = _mm(hdn, ffw2_ref[...]) + ffb2_ref[...]
    o_ref[...] = x + ff


# -----------------------------------------------------------------------------
# pallas_call wrapper: one call per layer
# -----------------------------------------------------------------------------
def fused_layer(x2d, layer, *, batch, seq, dim, heads, dim_head, n_landmarks,
                pinv_iters, conv_k, ff_mult, eps):
    assert seq % n_landmarks == 0
    inner = heads * dim_head
    ffh = dim * ff_mult
    bf16, f32 = jnp.bfloat16, jnp.float32

    qkv_w = layer['qkv_w']                                      # (dim, 3*inner)
    w_q = qkv_w[:, :inner].astype(bf16)
    w_k = qkv_w[:, inner:2 * inner].astype(bf16)
    w_v = qkv_w[:, 2 * inner:].astype(bf16)
    out_w = layer['out_w'].astype(bf16)
    ff_w1 = layer['ff_w1'].astype(bf16)
    ff_w2 = layer['ff_w2'].astype(bf16)
    # expand per-head conv taps across each head's dim_head lanes: (K, h*d)
    conv_w = jnp.repeat(layer['conv_w'].T, dim_head, axis=1).astype(f32)

    def r2(v):
        return v.reshape(1, -1).astype(f32)

    def bcast_spec(shape):
        zeros = (0,) * len(shape)
        return pl.BlockSpec(shape, lambda b: zeros)

    kern = functools.partial(
        fused_layer_kernel, heads=heads, dim_head=dim_head,
        n_landmarks=n_landmarks, pinv_iters=pinv_iters, conv_k=conv_k, eps=eps)

    return pl.pallas_call(
        kern,
        out_shape=jax.ShapeDtypeStruct((batch * seq, dim), f32),
        grid=(batch,),
        in_specs=[
            pl.BlockSpec((seq, dim), lambda b: (b, 0)),   # x (one batch element)
            bcast_spec((1, dim)), bcast_spec((1, dim)),   # ln1 gamma, beta
            bcast_spec((dim, inner)),                     # W_q (bf16)
            bcast_spec((dim, inner)),                     # W_k (bf16)
            bcast_spec((dim, inner)),                     # W_v (bf16)
            bcast_spec((inner, dim)),                     # out proj W (bf16)
            bcast_spec((1, dim)),                         # out proj b
            bcast_spec((conv_k, inner)),                  # conv taps
            bcast_spec((1, dim)), bcast_spec((1, dim)),   # ln2 gamma, beta
            bcast_spec((dim, ffh)), bcast_spec((1, ffh)), # ff W1 (bf16), b1
            bcast_spec((ffh, dim)), bcast_spec((1, dim)), # ff W2 (bf16), b2
        ],
        out_specs=pl.BlockSpec((seq, dim), lambda b: (b, 0)),
        compiler_params=pltpu.CompilerParams(
            dimension_semantics=("parallel",),            # megacore on v7x
            vmem_limit_bytes=32 * 1024 * 1024),
    )(x2d, r2(layer['ln1_g']), r2(layer['ln1_b']),
      w_q, w_k, w_v, out_w, r2(layer['out_b']), conv_w,
      r2(layer['ln2_g']), r2(layer['ln2_b']),
      ff_w1, r2(layer['ff_b1']), ff_w2, r2(layer['ff_b2']))


# -----------------------------------------------------------------------------
# Parameter construction (deterministic, synthetic)
# -----------------------------------------------------------------------------
def init_params(key, depth=DEPTH, dim=DIM, heads=HEADS, dim_head=DIM_HEAD,
                ff_mult=FF_MULT, res_kernel=RES_CONV_KERNEL):
    inner = heads * dim_head
    layers = []
    for _ in range(depth):
        key, *ks = jax.random.split(key, 8)
        layers.append({
            'ln1_g': jnp.ones((dim,), jnp.float32),
            'ln1_b': jnp.zeros((dim,), jnp.float32),
            'qkv_w': 0.02 * jax.random.normal(ks[0], (dim, 3 * inner), jnp.float32),
            'out_w': 0.02 * jax.random.normal(ks[1], (inner, dim), jnp.float32),
            'out_b': jnp.zeros((dim,), jnp.float32),
            'conv_w': 0.02 * jax.random.normal(ks[2], (heads, res_kernel), jnp.float32),
            'ln2_g': jnp.ones((dim,), jnp.float32),
            'ln2_b': jnp.zeros((dim,), jnp.float32),
            'ff_w1': 0.02 * jax.random.normal(ks[3], (dim, dim * ff_mult), jnp.float32),
            'ff_b1': jnp.zeros((dim * ff_mult,), jnp.float32),
            'ff_w2': 0.02 * jax.random.normal(ks[4], (dim * ff_mult, dim), jnp.float32),
            'ff_b2': jnp.zeros((dim,), jnp.float32),
        })
    return {'layers': layers}


# -----------------------------------------------------------------------------
# Forward pass: DEPTH fused pallas_calls total
# -----------------------------------------------------------------------------
def nystromformer2d_forward(params, x):
    b, n, d = x.shape
    x2d = x.reshape(b * n, d)
    for layer in params['layers']:
        x2d = fused_layer(x2d, layer, batch=b, seq=n, dim=d, heads=HEADS,
                          dim_head=DIM_HEAD, n_landmarks=NUM_LANDMARKS,
                          pinv_iters=PINV_ITERS, conv_k=RES_CONV_KERNEL,
                          ff_mult=FF_MULT, eps=LN_EPS)
    return x2d.reshape(b, n, d)


# -----------------------------------------------------------------------------
# Main
# -----------------------------------------------------------------------------
if __name__ == "__main__":
    key = jax.random.PRNGKey(0)
    k_param, k_x = jax.random.split(key)
    params = init_params(k_param)
    x = jax.random.normal(k_x, (BATCH, SEQ, DIM), jnp.float32)

    fwd = jax.jit(nystromformer2d_forward)
    y = fwd(params, x)
    jax.block_until_ready(y)
    assert y.shape == (BATCH, SEQ, DIM)
    print("KERNEL_OK")
</pallas_src>

<mosaic_0001>
module attributes {stable_mosaic.version = 11 : i64} {
  func.func @fused_layer_kernel(%arg0: i32, %arg1: memref<64x32xf32, #tpu.memory_space<vmem>>, %arg2: memref<1x32xf32, #tpu.memory_space<vmem>>, %arg3: memref<1x32xf32, #tpu.memory_space<vmem>>, %arg4: memref<32x32xbf16, #tpu.memory_space<vmem>>, %arg5: memref<32x32xbf16, #tpu.memory_space<vmem>>, %arg6: memref<32x32xbf16, #tpu.memory_space<vmem>>, %arg7: memref<32x32xbf16, #tpu.memory_space<vmem>>, %arg8: memref<1x32xf32, #tpu.memory_space<vmem>>, %arg9: memref<33x32xf32, #tpu.memory_space<vmem>>, %arg10: memref<1x32xf32, #tpu.memory_space<vmem>>, %arg11: memref<1x32xf32, #tpu.memory_space<vmem>>, %arg12: memref<32x128xbf16, #tpu.memory_space<vmem>>, %arg13: memref<1x128xf32, #tpu.memory_space<vmem>>, %arg14: memref<128x32xbf16, #tpu.memory_space<vmem>>, %arg15: memref<1x32xf32, #tpu.memory_space<vmem>>, %arg16: memref<64x32xf32, #tpu.memory_space<vmem>>) attributes {dimension_semantics = [#tpu.dimension_semantics<parallel>], iteration_bounds = array<i64: 2>, scalar_prefetch = 0 : i64, scratch_operands = 0 : i64, tpu.core_type = #tpu.core_type<tc>, window_params = [{transform_indices = @transform_0, window_bounds = array<i64: 64, 32>}, {pipeline_mode = #tpu.pipeline_mode<synchronous>, transform_indices = @transform_1, window_bounds = array<i64: 1, 32>}, {pipeline_mode = #tpu.pipeline_mode<synchronous>, transform_indices = @transform_2, window_bounds = array<i64: 1, 32>}, {pipeline_mode = #tpu.pipeline_mode<synchronous>, transform_indices = @transform_3, window_bounds = array<i64: 32, 32>}, {pipeline_mode = #tpu.pipeline_mode<synchronous>, transform_indices = @transform_4, window_bounds = array<i64: 32, 32>}, {pipeline_mode = #tpu.pipeline_mode<synchronous>, transform_indices = @transform_5, window_bounds = array<i64: 32, 32>}, {pipeline_mode = #tpu.pipeline_mode<synchronous>, transform_indices = @transform_6, window_bounds = array<i64: 32, 32>}, {pipeline_mode = #tpu.pipeline_mode<synchronous>, transform_indices = @transform_7, window_bounds = array<i64: 1, 32>}, {pipeline_mode = #tpu.pipeline_mode<synchronous>, transform_indices = @transform_8, window_bounds = array<i64: 33, 32>}, {pipeline_mode = #tpu.pipeline_mode<synchronous>, transform_indices = @transform_9, window_bounds = array<i64: 1, 32>}, {pipeline_mode = #tpu.pipeline_mode<synchronous>, transform_indices = @transform_10, window_bounds = array<i64: 1, 32>}, {pipeline_mode = #tpu.pipeline_mode<synchronous>, transform_indices = @transform_11, window_bounds = array<i64: 32, 128>}, {pipeline_mode = #tpu.pipeline_mode<synchronous>, transform_indices = @transform_12, window_bounds = array<i64: 1, 128>}, {pipeline_mode = #tpu.pipeline_mode<synchronous>, transform_indices = @transform_13, window_bounds = array<i64: 128, 32>}, {pipeline_mode = #tpu.pipeline_mode<synchronous>, transform_indices = @transform_14, window_bounds = array<i64: 1, 32>}, {transform_indices = @transform_15, window_bounds = array<i64: 64, 32>}]} {
    %c0 = arith.constant 0 : index
    %c0_0 = arith.constant 0 : index
    %0 = vector.load %arg1[%c0, %c0_0] : memref<64x32xf32, #tpu.memory_space<vmem>>, vector<64x32xf32>
    %c0_1 = arith.constant 0 : index
    %c0_2 = arith.constant 0 : index
    %1 = vector.load %arg2[%c0_1, %c0_2] : memref<1x32xf32, #tpu.memory_space<vmem>>, vector<1x32xf32>
    %c0_3 = arith.constant 0 : index
    %c0_4 = arith.constant 0 : index
    %2 = vector.load %arg3[%c0_3, %c0_4] : memref<1x32xf32, #tpu.memory_space<vmem>>, vector<1x32xf32>
    %cst = arith.constant dense<0.000000e+00> : vector<64xf32>
    %3 = vector.multi_reduction <add>, %0, %cst [1] : vector<64x32xf32> to vector<64xf32>
    %4 = vector.shape_cast %3 : vector<64xf32> to vector<64x1xf32>
    %cst_5 = arith.constant 3.200000e+01 : f32
    %5 = vector.broadcast %cst_5 : f32 to vector<64x1xf32>
    %6 = arith.divf %4, %5 : vector<64x1xf32>
    %7 = vector.broadcast %6 : vector<64x1xf32> to vector<64x32xf32>
    %8 = arith.subf %0, %7 : vector<64x32xf32>
    %9 = arith.mulf %8, %8 : vector<64x32xf32>
    %cst_6 = arith.constant dense<0.000000e+00> : vector<64xf32>
    %10 = vector.multi_reduction <add>, %9, %cst_6 [1] : vector<64x32xf32> to vector<64xf32>
    %11 = vector.shape_cast %10 : vector<64xf32> to vector<64x1xf32>
    %cst_7 = arith.constant 3.200000e+01 : f32
    %12 = vector.broadcast %cst_7 : f32 to vector<64x1xf32>
    %13 = arith.divf %11, %12 : vector<64x1xf32>
    %14 = vector.broadcast %6 : vector<64x1xf32> to vector<64x32xf32>
    %15 = arith.subf %0, %14 : vector<64x32xf32>
    %cst_8 = arith.constant 9.99999974E-6 : f32
    %16 = vector.broadcast %cst_8 : f32 to vector<64x1xf32>
    %17 = arith.addf %13, %16 : vector<64x1xf32>
    %18 = math.rsqrt %17 : vector<64x1xf32>
    %19 = vector.broadcast %18 : vector<64x1xf32> to vector<64x32xf32>
    %20 = arith.mulf %15, %19 : vector<64x32xf32>
    %21 = vector.broadcast %1 : vector<1x32xf32> to vector<64x32xf32>
    %22 = arith.mulf %20, %21 : vector<64x32xf32>
    %23 = vector.broadcast %2 : vector<1x32xf32> to vector<64x32xf32>
    %24 = arith.addf %22, %23 : vector<64x32xf32>
    %25 = arith.truncf %24 : vector<64x32xf32> to vector<64x32xbf16>
    %c0_9 = arith.constant 0 : index
    %c0_10 = arith.constant 0 : index
    %26 = vector.load %arg4[%c0_9, %c0_10] : memref<32x32xbf16, #tpu.memory_space<vmem>>, vector<32x32xbf16>
    %cst_11 = arith.constant dense<0.000000e+00> : vector<64x32xf32>
    %27 = tpu.matmul %25, %26, %cst_11 {dimension_numbers = #tpu.dot_dimension_numbers<[1], [0], [0], [1], [0, 0, 1, 1], [], []>} : vector<64x32xbf16>, vector<32x32xbf16>, vector<64x32xf32> -> vector<64x32xf32>
    %c0_12 = arith.constant 0 : index
    %c0_13 = arith.constant 0 : index
    %28 = vector.load %arg5[%c0_12, %c0_13] : memref<32x32xbf16, #tpu.memory_space<vmem>>, vector<32x32xbf16>
    %cst_14 = arith.constant dense<0.000000e+00> : vector<64x32xf32>
    %29 = tpu.matmul %25, %28, %cst_14 {dimension_numbers = #tpu.dot_dimension_numbers<[1], [0], [0], [1], [0, 0, 1, 1], [], []>} : vector<64x32xbf16>, vector<32x32xbf16>, vector<64x32xf32> -> vector<64x32xf32>
    %c0_15 = arith.constant 0 : index
    %c0_16 = arith.constant 0 : index
    %30 = vector.load %arg6[%c0_15, %c0_16] : memref<32x32xbf16, #tpu.memory_space<vmem>>, vector<32x32xbf16>
    %cst_17 = arith.constant dense<0.000000e+00> : vector<64x32xf32>
    %31 = tpu.matmul %25, %30, %cst_17 {dimension_numbers = #tpu.dot_dimension_numbers<[1], [0], [0], [1], [0, 0, 1, 1], [], []>} : vector<64x32xbf16>, vector<32x32xbf16>, vector<64x32xf32> -> vector<64x32xf32>
    %32 = tpu.iota {dimensions = array<i32: 0>} : vector<16x64xi32>
    %33 = tpu.iota {dimensions = array<i32: 1>} : vector<16x64xi32>
    %c4_i32 = arith.constant 4 : i32
    %34 = vector.broadcast %c4_i32 : i32 to vector<16x64xi32>
    %35 = arith.muli %32, %34 : vector<16x64xi32>
    %36 = arith.cmpi sge, %33, %35 : vector<16x64xi32>
    %c1_i32 = arith.constant 1 : i32
    %37 = vector.broadcast %c1_i32 : i32 to vector<16x64xi32>
    %38 = arith.addi %32, %37 : vector<16x64xi32>
    %c4_i32_18 = arith.constant 4 : i32
    %39 = vector.broadcast %c4_i32_18 : i32 to vector<16x64xi32>
    %40 = arith.muli %38, %39 : vector<16x64xi32>
    %41 = arith.cmpi slt, %33, %40 : vector<16x64xi32>
    %42 = arith.andi %36, %41 : vector<16x64xi1>
    %cst_19 = arith.constant 2.500000e-01 : f32
    %cst_20 = arith.constant 0.000000e+00 : f32
    %43 = vector.broadcast %cst_19 : f32 to vector<16x64xf32>
    %44 = vector.broadcast %cst_20 : f32 to vector<16x64xf32>
    %45 = arith.select %42, %43, %44 : vector<16x64xi1>, vector<16x64xf32>
    %46 = arith.truncf %45 : vector<16x64xf32> to vector<16x64xbf16>
    %47 = arith.truncf %27 : vector<64x32xf32> to vector<64x32xbf16>
    %cst_21 = arith.constant dense<0.000000e+00> : vector<16x32xf32>
    %48 = tpu.matmul %46, %47, %cst_21 {dimension_numbers = #tpu.dot_dimension_numbers<[1], [0], [0], [1], [0, 0, 1, 1], [], []>} : vector<16x64xbf16>, vector<64x32xbf16>, vector<16x32xf32> -> vector<16x32xf32>
    %49 = arith.truncf %45 : vector<16x64xf32> to vector<16x64xbf16>
    %50 = arith.truncf %29 : vector<64x32xf32> to vector<64x32xbf16>
    %cst_22 = arith.constant dense<0.000000e+00> : vector<16x32xf32>
    %51 = tpu.matmul %49, %50, %cst_22 {dimension_numbers = #tpu.dot_dimension_numbers<[1], [0], [0], [1], [0, 0, 1, 1], [], []>} : vector<16x64xbf16>, vector<64x32xbf16>, vector<16x32xf32> -> vector<16x32xf32>
    %52 = vector.extract_strided_slice %27 {offsets = [0, 0], sizes = [64, 8], strides = [1, 1]} : vector<64x32xf32> to vector<64x8xf32>
    %53 = vector.extract_strided_slice %29 {offsets = [0, 0], sizes = [64, 8], strides = [1, 1]} : vector<64x32xf32> to vector<64x8xf32>
    %54 = vector.extract_strided_slice %31 {offsets = [0, 0], sizes = [64, 8], strides = [1, 1]} : vector<64x32xf32> to vector<64x8xf32>
    %55 = vector.extract_strided_slice %48 {offsets = [0, 0], sizes = [16, 8], strides = [1, 1]} : vector<16x32xf32> to vector<16x8xf32>
    %56 = vector.extract_strided_slice %51 {offsets = [0, 0], sizes = [16, 8], strides = [1, 1]} : vector<16x32xf32> to vector<16x8xf32>
    %57 = arith.truncf %52 : vector<64x8xf32> to vector<64x8xbf16>
    %58 = arith.truncf %56 : vector<16x8xf32> to vector<16x8xbf16>
    %cst_23 = arith.constant dense<0.000000e+00> : vector<64x16xf32>
    %59 = tpu.matmul %57, %58, %cst_23 {dimension_numbers = #tpu.dot_dimension_numbers<[1], [1], [0], [0], [0, 0, 1, 0], [], []>} : vector<64x8xbf16>, vector<16x8xbf16>, vector<64x16xf32> -> vector<64x16xf32>
    %cst_24 = arith.constant dense<0xFF800000> : vector<64xf32>
    %60 = vector.multi_reduction <maximumf>, %59, %cst_24 [1] : vector<64x16xf32> to vector<64xf32>
    %61 = vector.shape_cast %60 : vector<64xf32> to vector<64x1xf32>
    %62 = vector.broadcast %61 : vector<64x1xf32> to vector<64x16xf32>
    %63 = arith.subf %59, %62 : vector<64x16xf32>
    %64 = math.exp %63 : vector<64x16xf32>
    %cst_25 = arith.constant dense<0.000000e+00> : vector<64xf32>
    %65 = vector.multi_reduction <add>, %64, %cst_25 [1] : vector<64x16xf32> to vector<64xf32>
    %66 = vector.shape_cast %65 : vector<64xf32> to vector<64x1xf32>
    %67 = tpu.reciprocal %66 {approx = true} : vector<64x1xf32> -> vector<64x1xf32>
    %68 = vector.broadcast %67 : vector<64x1xf32> to vector<64x16xf32>
    %69 = arith.mulf %64, %68 : vector<64x16xf32>
    %70 = arith.truncf %55 : vector<16x8xf32> to vector<16x8xbf16>
    %71 = arith.truncf %56 : vector<16x8xf32> to vector<16x8xbf16>
    %cst_26 = arith.constant dense<0.000000e+00> : vector<16x16xf32>
    %72 = tpu.matmul %70, %71, %cst_26 {dimension_numbers = #tpu.dot_dimension_numbers<[1], [1], [0], [0], [0, 0, 1, 0], [], []>} : vector<16x8xbf16>, vector<16x8xbf16>, vector<16x16xf32> -> vector<16x16xf32>
    %cst_27 = arith.constant dense<0xFF800000> : vector<16xf32>
    %73 = vector.multi_reduction <maximumf>, %72, %cst_27 [1] : vector<16x16xf32> to vector<16xf32>
    %74 = vector.shape_cast %73 : vector<16xf32> to vector<16x1xf32>
    %75 = vector.broadcast %74 : vector<16x1xf32> to vector<16x16xf32>
    %76 = arith.subf %72, %75 : vector<16x16xf32>
    %77 = math.exp %76 : vector<16x16xf32>
    %cst_28 = arith.constant dense<0.000000e+00> : vector<16xf32>
    %78 = vector.multi_reduction <add>, %77, %cst_28 [1] : vector<16x16xf32> to vector<16xf32>
    %79 = vector.shape_cast %78 : vector<16xf32> to vector<16x1xf32>
    %80 = tpu.reciprocal %79 {approx = true} : vector<16x1xf32> -> vector<16x1xf32>
    %81 = vector.broadcast %80 : vector<16x1xf32> to vector<16x16xf32>
    %82 = arith.mulf %77, %81 : vector<16x16xf32>
    %83 = arith.truncf %55 : vector<16x8xf32> to vector<16x8xbf16>
    %84 = arith.truncf %53 : vector<64x8xf32> to vector<64x8xbf16>
    %cst_29 = arith.constant dense<0.000000e+00> : vector<16x64xf32>
    %85 = tpu.matmul %83, %84, %cst_29 {dimension_numbers = #tpu.dot_dimension_numbers<[1], [1], [0], [0], [0, 0, 1, 0], [], []>} : vector<16x8xbf16>, vector<64x8xbf16>, vector<16x64xf32> -> vector<16x64xf32>
    %cst_30 = arith.constant dense<0xFF800000> : vector<16xf32>
    %86 = vector.multi_reduction <maximumf>, %85, %cst_30 [1] : vector<16x64xf32> to vector<16xf32>
    %87 = vector.shape_cast %86 : vector<16xf32> to vector<16x1xf32>
    %88 = vector.broadcast %87 : vector<16x1xf32> to vector<16x64xf32>
    %89 = arith.subf %85, %88 : vector<16x64xf32>
    %90 = math.exp %89 : vector<16x64xf32>
    %cst_31 = arith.constant dense<0.000000e+00> : vector<16xf32>
    %91 = vector.multi_reduction <add>, %90, %cst_31 [1] : vector<16x64xf32> to vector<16xf32>
    %92 = vector.shape_cast %91 : vector<16xf32> to vector<16x1xf32>
    %93 = tpu.reciprocal %92 {approx = true} : vector<16x1xf32> -> vector<16x1xf32>
    %94 = vector.broadcast %93 : vector<16x1xf32> to vector<16x64xf32>
    %95 = arith.mulf %90, %94 : vector<16x64xf32>
    %96 = arith.truncf %95 : vector<16x64xf32> to vector<16x64xbf16>
    %97 = arith.truncf %54 : vector<64x8xf32> to vector<64x8xbf16>
    %cst_32 = arith.constant dense<0.000000e+00> : vector<16x8xf32>
    %98 = tpu.matmul %96, %97, %cst_32 {dimension_numbers = #tpu.dot_dimension_numbers<[1], [0], [0], [1], [0, 0, 1, 1], [], []>} : vector<16x64xbf16>, vector<64x8xbf16>, vector<16x8xf32> -> vector<16x8xf32>
    %99 = vector.extract_strided_slice %27 {offsets = [0, 8], sizes = [64, 8], strides = [1, 1]} : vector<64x32xf32> to vector<64x8xf32>
    %100 = vector.extract_strided_slice %29 {offsets = [0, 8], sizes = [64, 8], strides = [1, 1]} : vector<64x32xf32> to vector<64x8xf32>
    %101 = vector.extract_strided_slice %31 {offsets = [0, 8], sizes = [64, 8], strides = [1, 1]} : vector<64x32xf32> to vector<64x8xf32>
    %102 = vector.extract_strided_slice %48 {offsets = [0, 8], sizes = [16, 8], strides = [1, 1]} : vector<16x32xf32> to vector<16x8xf32>
    %103 = vector.extract_strided_slice %51 {offsets = [0, 8], sizes = [16, 8], strides = [1, 1]} : vector<16x32xf32> to vector<16x8xf32>
    %104 = arith.truncf %99 : vector<64x8xf32> to vector<64x8xbf16>
    %105 = arith.truncf %103 : vector<16x8xf32> to vector<16x8xbf16>
    %cst_33 = arith.constant dense<0.000000e+00> : vector<64x16xf32>
    %106 = tpu.matmul %104, %105, %cst_33 {dimension_numbers = #tpu.dot_dimension_numbers<[1], [1], [0], [0], [0, 0, 1, 0], [], []>} : vector<64x8xbf16>, vector<16x8xbf16>, vector<64x16xf32> -> vector<64x16xf32>
    %cst_34 = arith.constant dense<0xFF800000> : vector<64xf32>
    %107 = vector.multi_reduction <maximumf>, %106, %cst_34 [1] : vector<64x16xf32> to vector<64xf32>
    %108 = vector.shape_cast %107 : vector<64xf32> to vector<64x1xf32>
    %109 = vector.broadcast %108 : vector<64x1xf32> to vector<64x16xf32>
    %110 = arith.subf %106, %109 : vector<64x16xf32>
    %111 = math.exp %110 : vector<64x16xf32>
    %cst_35 = arith.constant dense<0.000000e+00> : vector<64xf32>
    %112 = vector.multi_reduction <add>, %111, %cst_35 [1] : vector<64x16xf32> to vector<64xf32>
    %113 = vector.shape_cast %112 : vector<64xf32> to vector<64x1xf32>
    %114 = tpu.reciprocal %113 {approx = true} : vector<64x1xf32> -> vector<64x1xf32>
    %115 = vector.broadcast %114 : vector<64x1xf32> to vector<64x16xf32>
    %116 = arith.mulf %111, %115 : vector<64x16xf32>
    %117 = arith.truncf %102 : vector<16x8xf32> to vector<16x8xbf16>
    %118 = arith.truncf %103 : vector<16x8xf32> to vector<16x8xbf16>
    %cst_36 = arith.constant dense<0.000000e+00> : vector<16x16xf32>
    %119 = tpu.matmul %117, %118, %cst_36 {dimension_numbers = #tpu.dot_dimension_numbers<[1], [1], [0], [0], [0, 0, 1, 0], [], []>} : vector<16x8xbf16>, vector<16x8xbf16>, vector<16x16xf32> -> vector<16x16xf32>
    %cst_37 = arith.constant dense<0xFF800000> : vector<16xf32>
    %120 = vector.multi_reduction <maximumf>, %119, %cst_37 [1] : vector<16x16xf32> to vector<16xf32>
    %121 = vector.shape_cast %120 : vector<16xf32> to vector<16x1xf32>
    %122 = vector.broadcast %121 : vector<16x1xf32> to vector<16x16xf32>
    %123 = arith.subf %119, %122 : vector<16x16xf32>
    %124 = math.exp %123 : vector<16x16xf32>
    %cst_38 = arith.constant dense<0.000000e+00> : vector<16xf32>
    %125 = vector.multi_reduction <add>, %124, %cst_38 [1] : vector<16x16xf32> to vector<16xf32>
    %126 = vector.shape_cast %125 : vector<16xf32> to vector<16x1xf32>
    %127 = tpu.reciprocal %126 {approx = true} : vector<16x1xf32> -> vector<16x1xf32>
    %128 = vector.broadcast %127 : vector<16x1xf32> to vector<16x16xf32>
    %129 = arith.mulf %124, %128 : vector<16x16xf32>
    %130 = arith.truncf %102 : vector<16x8xf32> to vector<16x8xbf16>
    %131 = arith.truncf %100 : vector<64x8xf32> to vector<64x8xbf16>
    %cst_39 = arith.constant dense<0.000000e+00> : vector<16x64xf32>
    %132 = tpu.matmul %130, %131, %cst_39 {dimension_numbers = #tpu.dot_dimension_numbers<[1], [1], [0], [0], [0, 0, 1, 0], [], []>} : vector<16x8xbf16>, vector<64x8xbf16>, vector<16x64xf32> -> vector<16x64xf32>
    %cst_40 = arith.constant dense<0xFF800000> : vector<16xf32>
    %133 = vector.multi_reduction <maximumf>, %132, %cst_40 [1] : vector<16x64xf32> to vector<16xf32>
    %134 = vector.shape_cast %133 : vector<16xf32> to vector<16x1xf32>
    %135 = vector.broadcast %134 : vector<16x1xf32> to vector<16x64xf32>
    %136 = arith.subf %132, %135 : vector<16x64xf32>
    %137 = math.exp %136 : vector<16x64xf32>
    %cst_41 = arith.constant dense<0.000000e+00> : vector<16xf32>
    %138 = vector.multi_reduction <add>, %137, %cst_41 [1] : vector<16x64xf32> to vector<16xf32>
    %139 = vector.shape_cast %138 : vector<16xf32> to vector<16x1xf32>
    %140 = tpu.reciprocal %139 {approx = true} : vector<16x1xf32> -> vector<16x1xf32>
    %141 = vector.broadcast %140 : vector<16x1xf32> to vector<16x64xf32>
    %142 = arith.mulf %137, %141 : vector<16x64xf32>
    %143 = arith.truncf %142 : vector<16x64xf32> to vector<16x64xbf16>
    %144 = arith.truncf %101 : vector<64x8xf32> to vector<64x8xbf16>
    %cst_42 = arith.constant dense<0.000000e+00> : vector<16x8xf32>
    %145 = tpu.matmul %143, %144, %cst_42 {dimension_numbers = #tpu.dot_dimension_numbers<[1], [0], [0], [1], [0, 0, 1, 1], [], []>} : vector<16x64xbf16>, vector<64x8xbf16>, vector<16x8xf32> -> vector<16x8xf32>
    %146 = vector.extract_strided_slice %27 {offsets = [0, 16], sizes = [64, 8], strides = [1, 1]} : vector<64x32xf32> to vector<64x8xf32>
    %147 = vector.extract_strided_slice %29 {offsets = [0, 16], sizes = [64, 8], strides = [1, 1]} : vector<64x32xf32> to vector<64x8xf32>
    %148 = vector.extract_strided_slice %31 {offsets = [0, 16], sizes = [64, 8], strides = [1, 1]} : vector<64x32xf32> to vector<64x8xf32>
    %149 = vector.extract_strided_slice %48 {offsets = [0, 16], sizes = [16, 8], strides = [1, 1]} : vector<16x32xf32> to vector<16x8xf32>
    %150 = vector.extract_strided_slice %51 {offsets = [0, 16], sizes = [16, 8], strides = [1, 1]} : vector<16x32xf32> to vector<16x8xf32>
    %151 = arith.truncf %146 : vector<64x8xf32> to vector<64x8xbf16>
    %152 = arith.truncf %150 : vector<16x8xf32> to vector<16x8xbf16>
    %cst_43 = arith.constant dense<0.000000e+00> : vector<64x16xf32>
    %153 = tpu.matmul %151, %152, %cst_43 {dimension_numbers = #tpu.dot_dimension_numbers<[1], [1], [0], [0], [0, 0, 1, 0], [], []>} : vector<64x8xbf16>, vector<16x8xbf16>, vector<64x16xf32> -> vector<64x16xf32>
    %cst_44 = arith.constant dense<0xFF800000> : vector<64xf32>
    %154 = vector.multi_reduction <maximumf>, %153, %cst_44 [1] : vector<64x16xf32> to vector<64xf32>
    %155 = vector.shape_cast %154 : vector<64xf32> to vector<64x1xf32>
    %156 = vector.broadcast %155 : vector<64x1xf32> to vector<64x16xf32>
    %157 = arith.subf %153, %156 : vector<64x16xf32>
    %158 = math.exp %157 : vector<64x16xf32>
    %cst_45 = arith.constant dense<0.000000e+00> : vector<64xf32>
    %159 = vector.multi_reduction <add>, %158, %cst_45 [1] : vector<64x16xf32> to vector<64xf32>
    %160 = vector.shape_cast %159 : vector<64xf32> to vector<64x1xf32>
    %161 = tpu.reciprocal %160 {approx = true} : vector<64x1xf32> -> vector<64x1xf32>
    %162 = vector.broadcast %161 : vector<64x1xf32> to vector<64x16xf32>
    %163 = arith.mulf %158, %162 : vector<64x16xf32>
    %164 = arith.truncf %149 : vector<16x8xf32> to vector<16x8xbf16>
    %165 = arith.truncf %150 : vector<16x8xf32> to vector<16x8xbf16>
    %cst_46 = arith.constant dense<0.000000e+00> : vector<16x16xf32>
    %166 = tpu.matmul %164, %165, %cst_46 {dimension_numbers = #tpu.dot_dimension_numbers<[1], [1], [0], [0], [0, 0, 1, 0], [], []>} : vector<16x8xbf16>, vector<16x8xbf16>, vector<16x16xf32> -> vector<16x16xf32>
    %cst_47 = arith.constant dense<0xFF800000> : vector<16xf32>
    %167 = vector.multi_reduction <maximumf>, %166, %cst_47 [1] : vector<16x16xf32> to vector<16xf32>
    %168 = vector.shape_cast %167 : vector<16xf32> to vector<16x1xf32>
    %169 = vector.broadcast %168 : vector<16x1xf32> to vector<16x16xf32>
    %170 = arith.subf %166, %169 : vector<16x16xf32>
    %171 = math.exp %170 : vector<16x16xf32>
    %cst_48 = arith.constant dense<0.000000e+00> : vector<16xf32>
    %172 = vector.multi_reduction <add>, %171, %cst_48 [1] : vector<16x16xf32> to vector<16xf32>
    %173 = vector.shape_cast %172 : vector<16xf32> to vector<16x1xf32>
    %174 = tpu.reciprocal %173 {approx = true} : vector<16x1xf32> -> vector<16x1xf32>
    %175 = vector.broadcast %174 : vector<16x1xf32> to vector<16x16xf32>
    %176 = arith.mulf %171, %175 : vector<16x16xf32>
    %177 = arith.truncf %149 : vector<16x8xf32> to vector<16x8xbf16>
    %178 = arith.truncf %147 : vector<64x8xf32> to vector<64x8xbf16>
    %cst_49 = arith.constant dense<0.000000e+00> : vector<16x64xf32>
    %179 = tpu.matmul %177, %178, %cst_49 {dimension_numbers = #tpu.dot_dimension_numbers<[1], [1], [0], [0], [0, 0, 1, 0], [], []>} : vector<16x8xbf16>, vector<64x8xbf16>, vector<16x64xf32> -> vector<16x64xf32>
    %cst_50 = arith.constant dense<0xFF800000> : vector<16xf32>
    %180 = vector.multi_reduction <maximumf>, %179, %cst_50 [1] : vector<16x64xf32> to vector<16xf32>
    %181 = vector.shape_cast %180 : vector<16xf32> to vector<16x1xf32>
    %182 = vector.broadcast %181 : vector<16x1xf32> to vector<16x64xf32>
    %183 = arith.subf %179, %182 : vector<16x64xf32>
    %184 = math.exp %183 : vector<16x64xf32>
    %cst_51 = arith.constant dense<0.000000e+00> : vector<16xf32>
    %185 = vector.multi_reduction <add>, %184, %cst_51 [1] : vector<16x64xf32> to vector<16xf32>
    %186 = vector.shape_cast %185 : vector<16xf32> to vector<16x1xf32>
    %187 = tpu.reciprocal %186 {approx = true} : vector<16x1xf32> -> vector<16x1xf32>
    %188 = vector.broadcast %187 : vector<16x1xf32> to vector<16x64xf32>
    %189 = arith.mulf %184, %188 : vector<16x64xf32>
    %190 = arith.truncf %189 : vector<16x64xf32> to vector<16x64xbf16>
    %191 = arith.truncf %148 : vector<64x8xf32> to vector<64x8xbf16>
    %cst_52 = arith.constant dense<0.000000e+00> : vector<16x8xf32>
    %192 = tpu.matmul %190, %191, %cst_52 {dimension_numbers = #tpu.dot_dimension_numbers<[1], [0], [0], [1], [0, 0, 1, 1], [], []>} : vector<16x64xbf16>, vector<64x8xbf16>, vector<16x8xf32> -> vector<16x8xf32>
    %193 = vector.extract_strided_slice %27 {offsets = [0, 24], sizes = [64, 8], strides = [1, 1]} : vector<64x32xf32> to vector<64x8xf32>
    %194 = vector.extract_strided_slice %29 {offsets = [0, 24], sizes = [64, 8], strides = [1, 1]} : vector<64x32xf32> to vector<64x8xf32>
    %195 = vector.extract_strided_slice %31 {offsets = [0, 24], sizes = [64, 8], strides = [1, 1]} : vector<64x32xf32> to vector<64x8xf32>
    %196 = vector.extract_strided_slice %48 {offsets = [0, 24], sizes = [16, 8], strides = [1, 1]} : vector<16x32xf32> to vector<16x8xf32>
    %197 = vector.extract_strided_slice %51 {offsets = [0, 24], sizes = [16, 8], strides = [1, 1]} : vector<16x32xf32> to vector<16x8xf32>
    %198 = arith.truncf %193 : vector<64x8xf32> to vector<64x8xbf16>
    %199 = arith.truncf %197 : vector<16x8xf32> to vector<16x8xbf16>
    %cst_53 = arith.constant dense<0.000000e+00> : vector<64x16xf32>
    %200 = tpu.matmul %198, %199, %cst_53 {dimension_numbers = #tpu.dot_dimension_numbers<[1], [1], [0], [0], [0, 0, 1, 0], [], []>} : vector<64x8xbf16>, vector<16x8xbf16>, vector<64x16xf32> -> vector<64x16xf32>
    %cst_54 = arith.constant dense<0xFF800000> : vector<64xf32>
    %201 = vector.multi_reduction <maximumf>, %200, %cst_54 [1] : vector<64x16xf32> to vector<64xf32>
    %202 = vector.shape_cast %201 : vector<64xf32> to vector<64x1xf32>
    %203 = vector.broadcast %202 : vector<64x1xf32> to vector<64x16xf32>
    %204 = arith.subf %200, %203 : vector<64x16xf32>
    %205 = math.exp %204 : vector<64x16xf32>
    %cst_55 = arith.constant dense<0.000000e+00> : vector<64xf32>
    %206 = vector.multi_reduction <add>, %205, %cst_55 [1] : vector<64x16xf32> to vector<64xf32>
    %207 = vector.shape_cast %206 : vector<64xf32> to vector<64x1xf32>
    %208 = tpu.reciprocal %207 {approx = true} : vector<64x1xf32> -> vector<64x1xf32>
    %209 = vector.broadcast %208 : vector<64x1xf32> to vector<64x16xf32>
    %210 = arith.mulf %205, %209 : vector<64x16xf32>
    %211 = arith.truncf %196 : vector<16x8xf32> to vector<16x8xbf16>
    %212 = arith.truncf %197 : vector<16x8xf32> to vector<16x8xbf16>
    %cst_56 = arith.constant dense<0.000000e+00> : vector<16x16xf32>
    %213 = tpu.matmul %211, %212, %cst_56 {dimension_numbers = #tpu.dot_dimension_numbers<[1], [1], [0], [0], [0, 0, 1, 0], [], []>} : vector<16x8xbf16>, vector<16x8xbf16>, vector<16x16xf32> -> vector<16x16xf32>
    %cst_57 = arith.constant dense<0xFF800000> : vector<16xf32>
    %214 = vector.multi_reduction <maximumf>, %213, %cst_57 [1] : vector<16x16xf32> to vector<16xf32>
    %215 = vector.shape_cast %214 : vector<16xf32> to vector<16x1xf32>
    %216 = vector.broadcast %215 : vector<16x1xf32> to vector<16x16xf32>
    %217 = arith.subf %213, %216 : vector<16x16xf32>
    %218 = math.exp %217 : vector<16x16xf32>
    %cst_58 = arith.constant dense<0.000000e+00> : vector<16xf32>
    %219 = vector.multi_reduction <add>, %218, %cst_58 [1] : vector<16x16xf32> to vector<16xf32>
    %220 = vector.shape_cast %219 : vector<16xf32> to vector<16x1xf32>
    %221 = tpu.reciprocal %220 {approx = true} : vector<16x1xf32> -> vector<16x1xf32>
    %222 = vector.broadcast %221 : vector<16x1xf32> to vector<16x16xf32>
    %223 = arith.mulf %218, %222 : vector<16x16xf32>
    %224 = arith.truncf %196 : vector<16x8xf32> to vector<16x8xbf16>
    %225 = arith.truncf %194 : vector<64x8xf32> to vector<64x8xbf16>
    %cst_59 = arith.constant dense<0.000000e+00> : vector<16x64xf32>
    %226 = tpu.matmul %224, %225, %cst_59 {dimension_numbers = #tpu.dot_dimension_numbers<[1], [1], [0], [0], [0, 0, 1, 0], [], []>} : vector<16x8xbf16>, vector<64x8xbf16>, vector<16x64xf32> -> vector<16x64xf32>
    %cst_60 = arith.constant dense<0xFF800000> : vector<16xf32>
    %227 = vector.multi_reduction <maximumf>, %226, %cst_60 [1] : vector<16x64xf32> to vector<16xf32>
    %228 = vector.shape_cast %227 : vector<16xf32> to vector<16x1xf32>
    %229 = vector.broadcast %228 : vector<16x1xf32> to vector<16x64xf32>
    %230 = arith.subf %226, %229 : vector<16x64xf32>
    %231 = math.exp %230 : vector<16x64xf32>
    %cst_61 = arith.constant dense<0.000000e+00> : vector<16xf32>
    %232 = vector.multi_reduction <add>, %231, %cst_61 [1] : vector<16x64xf32> to vector<16xf32>
    %233 = vector.shape_cast %232 : vector<16xf32> to vector<16x1xf32>
    %234 = tpu.reciprocal %233 {approx = true} : vector<16x1xf32> -> vector<16x1xf32>
    %235 = vector.broadcast %234 : vector<16x1xf32> to vector<16x64xf32>
    %236 = arith.mulf %231, %235 : vector<16x64xf32>
    %237 = arith.truncf %236 : vector<16x64xf32> to vector<16x64xbf16>
    %238 = arith.truncf %195 : vector<64x8xf32> to vector<64x8xbf16>
    %cst_62 = arith.constant dense<0.000000e+00> : vector<16x8xf32>
    %239 = tpu.matmul %237, %238, %cst_62 {dimension_numbers = #tpu.dot_dimension_numbers<[1], [0], [0], [1], [0, 0, 1, 1], [], []>} : vector<16x64xbf16>, vector<64x8xbf16>, vector<16x8xf32> -> vector<16x8xf32>
    %cst_63 = arith.constant 0.000000e+00 : f32
    %240 = vector.broadcast %cst_63 : f32 to vector<16x16xf32>
    %241 = tpu.concatenate %82, %240, %240, %240 in 1 : vector<16x16xf32>, vector<16x16xf32>, vector<16x16xf32>, vector<16x16xf32> -> vector<16x64xf32>
    %242 = tpu.concatenate %240, %129, %240, %240 in 1 : vector<16x16xf32>, vector<16x16xf32>, vector<16x16xf32>, vector<16x16xf32> -> vector<16x64xf32>
    %243 = tpu.concatenate %240, %240, %176, %240 in 1 : vector<16x16xf32>, vector<16x16xf32>, vector<16x16xf32>, vector<16x16xf32> -> vector<16x64xf32>
    %244 = tpu.concatenate %240, %240, %240, %223 in 1 : vector<16x16xf32>, vector<16x16xf32>, vector<16x16xf32>, vector<16x16xf32> -> vector<16x64xf32>
    %245 = tpu.concatenate %241, %242, %243, %244 in 0 : vector<16x64xf32>, vector<16x64xf32>, vector<16x64xf32>, vector<16x64xf32> -> vector<64x64xf32>
    %246 = math.absf %245 : vector<64x64xf32>
    %cst_64 = arith.constant dense<0.000000e+00> : vector<64xf32>
    %247 = vector.multi_reduction <add>, %246, %cst_64 [1] : vector<64x64xf32> to vector<64xf32>
    %248 = vector.shape_cast %247 : vector<64xf32> to vector<64x1xf32>
    %cst_65 = arith.constant dense<0.000000e+00> : vector<64xf32>
    %249 = vector.multi_reduction <add>, %246, %cst_65 [0] : vector<64x64xf32> to vector<64xf32>
    %250 = vector.shape_cast %249 : vector<64xf32> to vector<1x64xf32>
    %251 = vector.shape_cast %248 : vector<64x1xf32> to vector<1x64x1xf32>
    %cst_66 = arith.constant dense<0xFF800000> : vector<1xf32>
    %252 = vector.multi_reduction <maximumf>, %251, %cst_66 [1, 2] : vector<1x64x1xf32> to vector<1xf32>
    %253 = vector.shape_cast %252 : vector<1xf32> to vector<1x1x1xf32>
    %254 = vector.extract %253[0, 0, 0] : f32 from vector<1x1x1xf32>
    %255 = vector.shape_cast %250 : vector<1x64xf32> to vector<1x1x64xf32>
    %cst_67 = arith.constant dense<0xFF800000> : vector<1xf32>
    %256 = vector.multi_reduction <maximumf>, %255, %cst_67 [1, 2] : vector<1x1x64xf32> to vector<1xf32>
    %257 = vector.shape_cast %256 : vector<1xf32> to vector<1x1x1xf32>
    %258 = vector.extract %257[0, 0, 0] : f32 from vector<1x1x1xf32>
    %259 = arith.mulf %254, %258 : f32
    %260 = tpu.iota {dimensions = array<i32: 0>} : vector<64x64xi32>
    %261 = tpu.iota {dimensions = array<i32: 1>} : vector<64x64xi32>
    %262 = arith.cmpi eq, %260, %261 : vector<64x64xi32>
    %263 = arith.extui %262 : vector<64x64xi1> to vector<64x64xi32>
    %264 = arith.sitofp %263 : vector<64x64xi32> to vector<64x64xf32>
    %cst_68 = arith.constant dense<0.000000e+00> : vector<64x64xf32>
    %265 = tpu.matmul %264, %245, %cst_68 {dimension_numbers = #tpu.dot_dimension_numbers<[1], [1], [0], [0], [0, 0, 1, 0], [], []>} : vector<64x64xf32>, vector<64x64xf32>, vector<64x64xf32> -> vector<64x64xf32>
    %266 = vector.broadcast %259 : f32 to vector<64x64xf32>
    %267 = arith.divf %265, %266 : vector<64x64xf32>
    %268 = arith.truncf %245 : vector<64x64xf32> to vector<64x64xbf16>
    %269 = arith.truncf %267 : vector<64x64xf32> to vector<64x64xbf16>
    %cst_69 = arith.constant dense<0.000000e+00> : vector<64x64xf32>
    %270 = tpu.matmul %268, %269, %cst_69 {dimension_numbers = #tpu.dot_dimension_numbers<[1], [0], [0], [1], [0, 0, 1, 1], [], []>} : vector<64x64xbf16>, vector<64x64xbf16>, vector<64x64xf32> -> vector<64x64xf32>
    %cst_70 = arith.constant 7.000000e+00 : f32
    %271 = vector.broadcast %cst_70 : f32 to vector<64x64xf32>
    %272 = arith.mulf %271, %264 : vector<64x64xf32>
    %273 = arith.subf %272, %270 : vector<64x64xf32>
    %cst_71 = arith.constant 1.500000e+01 : f32
    %274 = vector.broadcast %cst_71 : f32 to vector<64x64xf32>
    %275 = arith.mulf %274, %264 : vector<64x64xf32>
    %276 = arith.truncf %270 : vector<64x64xf32> to vector<64x64xbf16>
    %277 = arith.truncf %273 : vector<64x64xf32> to vector<64x64xbf16>
    %cst_72 = arith.constant dense<0.000000e+00> : vector<64x64xf32>
    %278 = tpu.matmul %276, %277, %cst_72 {dimension_numbers = #tpu.dot_dimension_numbers<[1], [0], [0], [1], [0, 0, 1, 1], [], []>} : vector<64x64xbf16>, vector<64x64xbf16>, vector<64x64xf32> -> vector<64x64xf32>
    %279 = arith.subf %275, %278 : vector<64x64xf32>
    %cst_73 = arith.constant 1.300000e+01 : f32
    %280 = vector.broadcast %cst_73 : f32 to vector<64x64xf32>
    %281 = arith.mulf %280, %264 : vector<64x64xf32>
    %282 = arith.truncf %270 : vector<64x64xf32> to vector<64x64xbf16>
    %283 = arith.truncf %279 : vector<64x64xf32> to vector<64x64xbf16>
    %cst_74 = arith.constant dense<0.000000e+00> : vector<64x64xf32>
    %284 = tpu.matmul %282, %283, %cst_74 {dimension_numbers = #tpu.dot_dimension_numbers<[1], [0], [0], [1], [0, 0, 1, 1], [], []>} : vector<64x64xbf16>, vector<64x64xbf16>, vector<64x64xf32> -> vector<64x64xf32>
    %285 = arith.subf %281, %284 : vector<64x64xf32>
    %286 = arith.truncf %267 : vector<64x64xf32> to vector<64x64xbf16>
    %287 = arith.truncf %285 : vector<64x64xf32> to vector<64x64xbf16>
    %cst_75 = arith.constant dense<0.000000e+00> : vector<64x64xf32>
    %288 = tpu.matmul %286, %287, %cst_75 {dimension_numbers = #tpu.dot_dimension_numbers<[1], [0], [0], [1], [0, 0, 1, 1], [], []>} : vector<64x64xbf16>, vector<64x64xbf16>, vector<64x64xf32> -> vector<64x64xf32>
    %cst_76 = arith.constant 2.500000e-01 : f32
    %289 = vector.broadcast %cst_76 : f32 to vector<64x64xf32>
    %290 = arith.mulf %289, %288 : vector<64x64xf32>
    %291 = arith.truncf %245 : vector<64x64xf32> to vector<64x64xbf16>
    %292 = arith.truncf %290 : vector<64x64xf32> to vector<64x64xbf16>
    %cst_77 = arith.constant dense<0.000000e+00> : vector<64x64xf32>
    %293 = tpu.matmul %291, %292, %cst_77 {dimension_numbers = #tpu.dot_dimension_numbers<[1], [0], [0], [1], [0, 0, 1, 1], [], []>} : vector<64x64xbf16>, vector<64x64xbf16>, vector<64x64xf32> -> vector<64x64xf32>
    %cst_78 = arith.constant 7.000000e+00 : f32
    %294 = vector.broadcast %cst_78 : f32 to vector<64x64xf32>
    %295 = arith.mulf %294, %264 : vector<64x64xf32>
    %296 = arith.subf %295, %293 : vector<64x64xf32>
    %cst_79 = arith.constant 1.500000e+01 : f32
    %297 = vector.broadcast %cst_79 : f32 to vector<64x64xf32>
    %298 = arith.mulf %297, %264 : vector<64x64xf32>
    %299 = arith.truncf %293 : vector<64x64xf32> to vector<64x64xbf16>
    %300 = arith.truncf %296 : vector<64x64xf32> to vector<64x64xbf16>
    %cst_80 = arith.constant dense<0.000000e+00> : vector<64x64xf32>
    %301 = tpu.matmul %299, %300, %cst_80 {dimension_numbers = #tpu.dot_dimension_numbers<[1], [0], [0], [1], [0, 0, 1, 1], [], []>} : vector<64x64xbf16>, vector<64x64xbf16>, vector<64x64xf32> -> vector<64x64xf32>
    %302 = arith.subf %298, %301 : vector<64x64xf32>
    %cst_81 = arith.constant 1.300000e+01 : f32
    %303 = vector.broadcast %cst_81 : f32 to vector<64x64xf32>
    %304 = arith.mulf %303, %264 : vector<64x64xf32>
    %305 = arith.truncf %293 : vector<64x64xf32> to vector<64x64xbf16>
    %306 = arith.truncf %302 : vector<64x64xf32> to vector<64x64xbf16>
    %cst_82 = arith.constant dense<0.000000e+00> : vector<64x64xf32>
    %307 = tpu.matmul %305, %306, %cst_82 {dimension_numbers = #tpu.dot_dimension_numbers<[1], [0], [0], [1], [0, 0, 1, 1], [], []>} : vector<64x64xbf16>, vector<64x64xbf16>, vector<64x64xf32> -> vector<64x64xf32>
    %308 = arith.subf %304, %307 : vector<64x64xf32>
    %309 = arith.truncf %290 : vector<64x64xf32> to vector<64x64xbf16>
    %310 = arith.truncf %308 : vector<64x64xf32> to vector<64x64xbf16>
    %cst_83 = arith.constant dense<0.000000e+00> : vector<64x64xf32>
    %311 = tpu.matmul %309, %310, %cst_83 {dimension_numbers = #tpu.dot_dimension_numbers<[1], [0], [0], [1], [0, 0, 1, 1], [], []>} : vector<64x64xbf16>, vector<64x64xbf16>, vector<64x64xf32> -> vector<64x64xf32>
    %cst_84 = arith.constant 2.500000e-01 : f32
    %312 = vector.broadcast %cst_84 : f32 to vector<64x64xf32>
    %313 = arith.mulf %312, %311 : vector<64x64xf32>
    %314 = arith.truncf %245 : vector<64x64xf32> to vector<64x64xbf16>
    %315 = arith.truncf %313 : vector<64x64xf32> to vector<64x64xbf16>
    %cst_85 = arith.constant dense<0.000000e+00> : vector<64x64xf32>
    %316 = tpu.matmul %314, %315, %cst_85 {dimension_numbers = #tpu.dot_dimension_numbers<[1], [0], [0], [1], [0, 0, 1, 1], [], []>} : vector<64x64xbf16>, vector<64x64xbf16>, vector<64x64xf32> -> vector<64x64xf32>
    %cst_86 = arith.constant 7.000000e+00 : f32
    %317 = vector.broadcast %cst_86 : f32 to vector<64x64xf32>
    %318 = arith.mulf %317, %264 : vector<64x64xf32>
    %319 = arith.subf %318, %316 : vector<64x64xf32>
    %cst_87 = arith.constant 1.500000e+01 : f32
    %320 = vector.broadcast %cst_87 : f32 to vector<64x64xf32>
    %321 = arith.mulf %320, %264 : vector<64x64xf32>
    %322 = arith.truncf %316 : vector<64x64xf32> to vector<64x64xbf16>
    %323 = arith.truncf %319 : vector<64x64xf32> to vector<64x64xbf16>
    %cst_88 = arith.constant dense<0.000000e+00> : vector<64x64xf32>
    %324 = tpu.matmul %322, %323, %cst_88 {dimension_numbers = #tpu.dot_dimension_numbers<[1], [0], [0], [1], [0, 0, 1, 1], [], []>} : vector<64x64xbf16>, vector<64x64xbf16>, vector<64x64xf32> -> vector<64x64xf32>
    %325 = arith.subf %321, %324 : vector<64x64xf32>
    %cst_89 = arith.constant 1.300000e+01 : f32
    %326 = vector.broadcast %cst_89 : f32 to vector<64x64xf32>
    %327 = arith.mulf %326, %264 : vector<64x64xf32>
    %328 = arith.truncf %316 : vector<64x64xf32> to vector<64x64xbf16>
    %329 = arith.truncf %325 : vector<64x64xf32> to vector<64x64xbf16>
    %cst_90 = arith.constant dense<0.000000e+00> : vector<64x64xf32>
    %330 = tpu.matmul %328, %329, %cst_90 {dimension_numbers = #tpu.dot_dimension_numbers<[1], [0], [0], [1], [0, 0, 1, 1], [], []>} : vector<64x64xbf16>, vector<64x64xbf16>, vector<64x64xf32> -> vector<64x64xf32>
    %331 = arith.subf %327, %330 : vector<64x64xf32>
    %332 = arith.truncf %313 : vector<64x64xf32> to vector<64x64xbf16>
    %333 = arith.truncf %331 : vector<64x64xf32> to vector<64x64xbf16>
    %cst_91 = arith.constant dense<0.000000e+00> : vector<64x64xf32>
    %334 = tpu.matmul %332, %333, %cst_91 {dimension_numbers = #tpu.dot_dimension_numbers<[1], [0], [0], [1], [0, 0, 1, 1], [], []>} : vector<64x64xbf16>, vector<64x64xbf16>, vector<64x64xf32> -> vector<64x64xf32>
    %cst_92 = arith.constant 2.500000e-01 : f32
    %335 = vector.broadcast %cst_92 : f32 to vector<64x64xf32>
    %336 = arith.mulf %335, %334 : vector<64x64xf32>
    %337 = arith.truncf %245 : vector<64x64xf32> to vector<64x64xbf16>
    %338 = arith.truncf %336 : vector<64x64xf32> to vector<64x64xbf16>
    %cst_93 = arith.constant dense<0.000000e+00> : vector<64x64xf32>
    %339 = tpu.matmul %337, %338, %cst_93 {dimension_numbers = #tpu.dot_dimension_numbers<[1], [0], [0], [1], [0, 0, 1, 1], [], []>} : vector<64x64xbf16>, vector<64x64xbf16>, vector<64x64xf32> -> vector<64x64xf32>
    %cst_94 = arith.constant 7.000000e+00 : f32
    %340 = vector.broadcast %cst_94 : f32 to vector<64x64xf32>
    %341 = arith.mulf %340, %264 : vector<64x64xf32>
    %342 = arith.subf %341, %339 : vector<64x64xf32>
    %cst_95 = arith.constant 1.500000e+01 : f32
    %343 = vector.broadcast %cst_95 : f32 to vector<64x64xf32>
    %344 = arith.mulf %343, %264 : vector<64x64xf32>
    %345 = arith.truncf %339 : vector<64x64xf32> to vector<64x64xbf16>
    %346 = arith.truncf %342 : vector<64x64xf32> to vector<64x64xbf16>
    %cst_96 = arith.constant dense<0.000000e+00> : vector<64x64xf32>
    %347 = tpu.matmul %345, %346, %cst_96 {dimension_numbers = #tpu.dot_dimension_numbers<[1], [0], [0], [1], [0, 0, 1, 1], [], []>} : vector<64x64xbf16>, vector<64x64xbf16>, vector<64x64xf32> -> vector<64x64xf32>
    %348 = arith.subf %344, %347 : vector<64x64xf32>
    %cst_97 = arith.constant 1.300000e+01 : f32
    %349 = vector.broadcast %cst_97 : f32 to vector<64x64xf32>
    %350 = arith.mulf %349, %264 : vector<64x64xf32>
    %351 = arith.truncf %339 : vector<64x64xf32> to vector<64x64xbf16>
    %352 = arith.truncf %348 : vector<64x64xf32> to vector<64x64xbf16>
    %cst_98 = arith.constant dense<0.000000e+00> : vector<64x64xf32>
    %353 = tpu.matmul %351, %352, %cst_98 {dimension_numbers = #tpu.dot_dimension_numbers<[1], [0], [0], [1], [0, 0, 1, 1], [], []>} : vector<64x64xbf16>, vector<64x64xbf16>, vector<64x64xf32> -> vector<64x64xf32>
    %354 = arith.subf %350, %353 : vector<64x64xf32>
    %355 = arith.truncf %336 : vector<64x64xf32> to vector<64x64xbf16>
    %356 = arith.truncf %354 : vector<64x64xf32> to vector<64x64xbf16>
    %cst_99 = arith.constant dense<0.000000e+00> : vector<64x64xf32>
    %357 = tpu.matmul %355, %356, %cst_99 {dimension_numbers = #tpu.dot_dimension_numbers<[1], [0], [0], [1], [0, 0, 1, 1], [], []>} : vector<64x64xbf16>, vector<64x64xbf16>, vector<64x64xf32> -> vector<64x64xf32>
    %cst_100 = arith.constant 2.500000e-01 : f32
    %358 = vector.broadcast %cst_100 : f32 to vector<64x64xf32>
    %359 = arith.mulf %358, %357 : vector<64x64xf32>
    %360 = arith.truncf %245 : vector<64x64xf32> to vector<64x64xbf16>
    %361 = arith.truncf %359 : vector<64x64xf32> to vector<64x64xbf16>
    %cst_101 = arith.constant dense<0.000000e+00> : vector<64x64xf32>
    %362 = tpu.matmul %360, %361, %cst_101 {dimension_numbers = #tpu.dot_dimension_numbers<[1], [0], [0], [1], [0, 0, 1, 1], [], []>} : vector<64x64xbf16>, vector<64x64xbf16>, vector<64x64xf32> -> vector<64x64xf32>
    %cst_102 = arith.constant 7.000000e+00 : f32
    %363 = vector.broadcast %cst_102 : f32 to vector<64x64xf32>
    %364 = arith.mulf %363, %264 : vector<64x64xf32>
    %365 = arith.subf %364, %362 : vector<64x64xf32>
    %cst_103 = arith.constant 1.500000e+01 : f32
    %366 = vector.broadcast %cst_103 : f32 to vector<64x64xf32>
    %367 = arith.mulf %366, %264 : vector<64x64xf32>
    %368 = arith.truncf %362 : vector<64x64xf32> to vector<64x64xbf16>
    %369 = arith.truncf %365 : vector<64x64xf32> to vector<64x64xbf16>
    %cst_104 = arith.constant dense<0.000000e+00> : vector<64x64xf32>
    %370 = tpu.matmul %368, %369, %cst_104 {dimension_numbers = #tpu.dot_dimension_numbers<[1], [0], [0], [1], [0, 0, 1, 1], [], []>} : vector<64x64xbf16>, vector<64x64xbf16>, vector<64x64xf32> -> vector<64x64xf32>
    %371 = arith.subf %367, %370 : vector<64x64xf32>
    %cst_105 = arith.constant 1.300000e+01 : f32
    %372 = vector.broadcast %cst_105 : f32 to vector<64x64xf32>
    %373 = arith.mulf %372, %264 : vector<64x64xf32>
    %374 = arith.truncf %362 : vector<64x64xf32> to vector<64x64xbf16>
    %375 = arith.truncf %371 : vector<64x64xf32> to vector<64x64xbf16>
    %cst_106 = arith.constant dense<0.000000e+00> : vector<64x64xf32>
    %376 = tpu.matmul %374, %375, %cst_106 {dimension_numbers = #tpu.dot_dimension_numbers<[1], [0], [0], [1], [0, 0, 1, 1], [], []>} : vector<64x64xbf16>, vector<64x64xbf16>, vector<64x64xf32> -> vector<64x64xf32>
    %377 = arith.subf %373, %376 : vector<64x64xf32>
    %378 = arith.truncf %359 : vector<64x64xf32> to vector<64x64xbf16>
    %379 = arith.truncf %377 : vector<64x64xf32> to vector<64x64xbf16>
    %cst_107 = arith.constant dense<0.000000e+00> : vector<64x64xf32>
    %380 = tpu.matmul %378, %379, %cst_107 {dimension_numbers = #tpu.dot_dimension_numbers<[1], [0], [0], [1], [0, 0, 1, 1], [], []>} : vector<64x64xbf16>, vector<64x64xbf16>, vector<64x64xf32> -> vector<64x64xf32>
    %cst_108 = arith.constant 2.500000e-01 : f32
    %381 = vector.broadcast %cst_108 : f32 to vector<64x64xf32>
    %382 = arith.mulf %381, %380 : vector<64x64xf32>
    %383 = arith.truncf %245 : vector<64x64xf32> to vector<64x64xbf16>
    %384 = arith.truncf %382 : vector<64x64xf32> to vector<64x64xbf16>
    %cst_109 = arith.constant dense<0.000000e+00> : vector<64x64xf32>
    %385 = tpu.matmul %383, %384, %cst_109 {dimension_numbers = #tpu.dot_dimension_numbers<[1], [0], [0], [1], [0, 0, 1, 1], [], []>} : vector<64x64xbf16>, vector<64x64xbf16>, vector<64x64xf32> -> vector<64x64xf32>
    %cst_110 = arith.constant 7.000000e+00 : f32
    %386 = vector.broadcast %cst_110 : f32 to vector<64x64xf32>
    %387 = arith.mulf %386, %264 : vector<64x64xf32>
    %388 = arith.subf %387, %385 : vector<64x64xf32>
    %cst_111 = arith.constant 1.500000e+01 : f32
    %389 = vector.broadcast %cst_111 : f32 to vector<64x64xf32>
    %390 = arith.mulf %389, %264 : vector<64x64xf32>
    %391 = arith.truncf %385 : vector<64x64xf32> to vector<64x64xbf16>
    %392 = arith.truncf %388 : vector<64x64xf32> to vector<64x64xbf16>
    %cst_112 = arith.constant dense<0.000000e+00> : vector<64x64xf32>
    %393 = tpu.matmul %391, %392, %cst_112 {dimension_numbers = #tpu.dot_dimension_numbers<[1], [0], [0], [1], [0, 0, 1, 1], [], []>} : vector<64x64xbf16>, vector<64x64xbf16>, vector<64x64xf32> -> vector<64x64xf32>
    %394 = arith.subf %390, %393 : vector<64x64xf32>
    %cst_113 = arith.constant 1.300000e+01 : f32
    %395 = vector.broadcast %cst_113 : f32 to vector<64x64xf32>
    %396 = arith.mulf %395, %264 : vector<64x64xf32>
    %397 = arith.truncf %385 : vector<64x64xf32> to vector<64x64xbf16>
    %398 = arith.truncf %394 : vector<64x64xf32> to vector<64x64xbf16>
    %cst_114 = arith.constant dense<0.000000e+00> : vector<64x64xf32>
    %399 = tpu.matmul %397, %398, %cst_114 {dimension_numbers = #tpu.dot_dimension_numbers<[1], [0], [0], [1], [0, 0, 1, 1], [], []>} : vector<64x64xbf16>, vector<64x64xbf16>, vector<64x64xf32> -> vector<64x64xf32>
    %400 = arith.subf %396, %399 : vector<64x64xf32>
    %401 = arith.truncf %382 : vector<64x64xf32> to vector<64x64xbf16>
    %402 = arith.truncf %400 : vector<64x64xf32> to vector<64x64xbf16>
    %cst_115 = arith.constant dense<0.000000e+00> : vector<64x64xf32>
    %403 = tpu.matmul %401, %402, %cst_115 {dimension_numbers = #tpu.dot_dimension_numbers<[1], [0], [0], [1], [0, 0, 1, 1], [], []>} : vector<64x64xbf16>, vector<64x64xbf16>, vector<64x64xf32> -> vector<64x64xf32>
    %cst_116 = arith.constant 2.500000e-01 : f32
    %404 = vector.broadcast %cst_116 : f32 to vector<64x64xf32>
    %405 = arith.mulf %404, %403 : vector<64x64xf32>
    %406 = vector.extract_strided_slice %405 {offsets = [0, 0], sizes = [16, 16], strides = [1, 1]} : vector<64x64xf32> to vector<16x16xf32>
    %407 = arith.truncf %69 : vector<64x16xf32> to vector<64x16xbf16>
    %408 = arith.truncf %406 : vector<16x16xf32> to vector<16x16xbf16>
    %cst_117 = arith.constant dense<0.000000e+00> : vector<64x16xf32>
    %409 = tpu.matmul %407, %408, %cst_117 {dimension_numbers = #tpu.dot_dimension_numbers<[1], [0], [0], [1], [0, 0, 1, 1], [], []>} : vector<64x16xbf16>, vector<16x16xbf16>, vector<64x16xf32> -> vector<64x16xf32>
    %410 = arith.truncf %409 : vector<64x16xf32> to vector<64x16xbf16>
    %411 = arith.truncf %98 : vector<16x8xf32> to vector<16x8xbf16>
    %cst_118 = arith.constant dense<0.000000e+00> : vector<64x8xf32>
    %412 = tpu.matmul %410, %411, %cst_118 {dimension_numbers = #tpu.dot_dimension_numbers<[1], [0], [0], [1], [0, 0, 1, 1], [], []>} : vector<64x16xbf16>, vector<16x8xbf16>, vector<64x8xf32> -> vector<64x8xf32>
    %413 = vector.extract_strided_slice %405 {offsets = [16, 16], sizes = [16, 16], strides = [1, 1]} : vector<64x64xf32> to vector<16x16xf32>
    %414 = arith.truncf %116 : vector<64x16xf32> to vector<64x16xbf16>
    %415 = arith.truncf %413 : vector<16x16xf32> to vector<16x16xbf16>
    %cst_119 = arith.constant dense<0.000000e+00> : vector<64x16xf32>
    %416 = tpu.matmul %414, %415, %cst_119 {dimension_numbers = #tpu.dot_dimension_numbers<[1], [0], [0], [1], [0, 0, 1, 1], [], []>} : vector<64x16xbf16>, vector<16x16xbf16>, vector<64x16xf32> -> vector<64x16xf32>
    %417 = arith.truncf %416 : vector<64x16xf32> to vector<64x16xbf16>
    %418 = arith.truncf %145 : vector<16x8xf32> to vector<16x8xbf16>
    %cst_120 = arith.constant dense<0.000000e+00> : vector<64x8xf32>
    %419 = tpu.matmul %417, %418, %cst_120 {dimension_numbers = #tpu.dot_dimension_numbers<[1], [0], [0], [1], [0, 0, 1, 1], [], []>} : vector<64x16xbf16>, vector<16x8xbf16>, vector<64x8xf32> -> vector<64x8xf32>
    %420 = vector.extract_strided_slice %405 {offsets = [32, 32], sizes = [16, 16], strides = [1, 1]} : vector<64x64xf32> to vector<16x16xf32>
    %421 = arith.truncf %163 : vector<64x16xf32> to vector<64x16xbf16>
    %422 = arith.truncf %420 : vector<16x16xf32> to vector<16x16xbf16>
    %cst_121 = arith.constant dense<0.000000e+00> : vector<64x16xf32>
    %423 = tpu.matmul %421, %422, %cst_121 {dimension_numbers = #tpu.dot_dimension_numbers<[1], [0], [0], [1], [0, 0, 1, 1], [], []>} : vector<64x16xbf16>, vector<16x16xbf16>, vector<64x16xf32> -> vector<64x16xf32>
    %424 = arith.truncf %423 : vector<64x16xf32> to vector<64x16xbf16>
    %425 = arith.truncf %192 : vector<16x8xf32> to vector<16x8xbf16>
    %cst_122 = arith.constant dense<0.000000e+00> : vector<64x8xf32>
    %426 = tpu.matmul %424, %425, %cst_122 {dimension_numbers = #tpu.dot_dimension_numbers<[1], [0], [0], [1], [0, 0, 1, 1], [], []>} : vector<64x16xbf16>, vector<16x8xbf16>, vector<64x8xf32> -> vector<64x8xf32>
    %427 = vector.extract_strided_slice %405 {offsets = [48, 48], sizes = [16, 16], strides = [1, 1]} : vector<64x64xf32> to vector<16x16xf32>
    %428 = arith.truncf %210 : vector<64x16xf32> to vector<64x16xbf16>
    %429 = arith.truncf %427 : vector<16x16xf32> to vector<16x16xbf16>
    %cst_123 = arith.constant dense<0.000000e+00> : vector<64x16xf32>
    %430 = tpu.matmul %428, %429, %cst_123 {dimension_numbers = #tpu.dot_dimension_numbers<[1], [0], [0], [1], [0, 0, 1, 1], [], []>} : vector<64x16xbf16>, vector<16x16xbf16>, vector<64x16xf32> -> vector<64x16xf32>
    %431 = arith.truncf %430 : vector<64x16xf32> to vector<64x16xbf16>
    %432 = arith.truncf %239 : vector<16x8xf32> to vector<16x8xbf16>
    %cst_124 = arith.constant dense<0.000000e+00> : vector<64x8xf32>
    %433 = tpu.matmul %431, %432, %cst_124 {dimension_numbers = #tpu.dot_dimension_numbers<[1], [0], [0], [1], [0, 0, 1, 1], [], []>} : vector<64x16xbf16>, vector<16x8xbf16>, vector<64x8xf32> -> vector<64x8xf32>
    %434 = tpu.concatenate %412, %419, %426, %433 in 1 : vector<64x8xf32>, vector<64x8xf32>, vector<64x8xf32>, vector<64x8xf32> -> vector<64x32xf32>
    %cst_125 = arith.constant 0.000000e+00 : f32
    %435 = vector.broadcast %cst_125 : f32 to vector<16x32xf32>
    %436 = tpu.concatenate %435, %31, %435 in 0 : vector<16x32xf32>, vector<64x32xf32>, vector<16x32xf32> -> vector<96x32xf32>
    %c0_126 = arith.constant 0 : index
    %c0_127 = arith.constant 0 : index
    %437 = vector.load %arg9[%c0_126, %c0_127] : memref<33x32xf32, #tpu.memory_space<vmem>>, vector<33x32xf32>
    %cst_128 = arith.constant 0.000000e+00 : f32
    %438 = vector.broadcast %cst_128 : f32 to vector<64x32xf32>
    %439 = vector.extract_strided_slice %436 {offsets = [0, 0], sizes = [64, 32], strides = [1, 1]} : vector<96x32xf32> to vector<64x32xf32>
    %440 = vector.extract_strided_slice %437 {offsets = [0, 0], sizes = [1, 32], strides = [1, 1]} : vector<33x32xf32> to vector<1x32xf32>
    %441 = vector.broadcast %440 : vector<1x32xf32> to vector<64x32xf32>
    %442 = arith.mulf %439, %441 : vector<64x32xf32>
    %443 = arith.addf %438, %442 : vector<64x32xf32>
    %444 = vector.extract_strided_slice %436 {offsets = [1, 0], sizes = [64, 32], strides = [1, 1]} : vector<96x32xf32> to vector<64x32xf32>
    %445 = vector.extract_strided_slice %437 {offsets = [1, 0], sizes = [1, 32], strides = [1, 1]} : vector<33x32xf32> to vector<1x32xf32>
    %446 = vector.broadcast %445 : vector<1x32xf32> to vector<64x32xf32>
    %447 = arith.mulf %444, %446 : vector<64x32xf32>
    %448 = arith.addf %443, %447 : vector<64x32xf32>
    %449 = vector.extract_strided_slice %436 {offsets = [2, 0], sizes = [64, 32], strides = [1, 1]} : vector<96x32xf32> to vector<64x32xf32>
    %450 = vector.extract_strided_slice %437 {offsets = [2, 0], sizes = [1, 32], strides = [1, 1]} : vector<33x32xf32> to vector<1x32xf32>
    %451 = vector.broadcast %450 : vector<1x32xf32> to vector<64x32xf32>
    %452 = arith.mulf %449, %451 : vector<64x32xf32>
    %453 = arith.addf %448, %452 : vector<64x32xf32>
    %454 = vector.extract_strided_slice %436 {offsets = [3, 0], sizes = [64, 32], strides = [1, 1]} : vector<96x32xf32> to vector<64x32xf32>
    %455 = vector.extract_strided_slice %437 {offsets = [3, 0], sizes = [1, 32], strides = [1, 1]} : vector<33x32xf32> to vector<1x32xf32>
    %456 = vector.broadcast %455 : vector<1x32xf32> to vector<64x32xf32>
    %457 = arith.mulf %454, %456 : vector<64x32xf32>
    %458 = arith.addf %453, %457 : vector<64x32xf32>
    %459 = vector.extract_strided_slice %436 {offsets = [4, 0], sizes = [64, 32], strides = [1, 1]} : vector<96x32xf32> to vector<64x32xf32>
    %460 = vector.extract_strided_slice %437 {offsets = [4, 0], sizes = [1, 32], strides = [1, 1]} : vector<33x32xf32> to vector<1x32xf32>
    %461 = vector.broadcast %460 : vector<1x32xf32> to vector<64x32xf32>
    %462 = arith.mulf %459, %461 : vector<64x32xf32>
    %463 = arith.addf %458, %462 : vector<64x32xf32>
    %464 = vector.extract_strided_slice %436 {offsets = [5, 0], sizes = [64, 32], strides = [1, 1]} : vector<96x32xf32> to vector<64x32xf32>
    %465 = vector.extract_strided_slice %437 {offsets = [5, 0], sizes = [1, 32], strides = [1, 1]} : vector<33x32xf32> to vector<1x32xf32>
    %466 = vector.broadcast %465 : vector<1x32xf32> to vector<64x32xf32>
    %467 = arith.mulf %464, %466 : vector<64x32xf32>
    %468 = arith.addf %463, %467 : vector<64x32xf32>
    %469 = vector.extract_strided_slice %436 {offsets = [6, 0], sizes = [64, 32], strides = [1, 1]} : vector<96x32xf32> to vector<64x32xf32>
    %470 = vector.extract_strided_slice %437 {offsets = [6, 0], sizes = [1, 32], strides = [1, 1]} : vector<33x32xf32> to vector<1x32xf32>
    %471 = vector.broadcast %470 : vector<1x32xf32> to vector<64x32xf32>
    %472 = arith.mulf %469, %471 : vector<64x32xf32>
    %473 = arith.addf %468, %472 : vector<64x32xf32>
    %474 = vector.extract_strided_slice %436 {offsets = [7, 0], sizes = [64, 32], strides = [1, 1]} : vector<96x32xf32> to vector<64x32xf32>
    %475 = vector.extract_strided_slice %437 {offsets = [7, 0], sizes = [1, 32], strides = [1, 1]} : vector<33x32xf32> to vector<1x32xf32>
    %476 = vector.broadcast %475 : vector<1x32xf32> to vector<64x32xf32>
    %477 = arith.mulf %474, %476 : vector<64x32xf32>
    %478 = arith.addf %473, %477 : vector<64x32xf32>
    %479 = vector.extract_strided_slice %436 {offsets = [8, 0], sizes = [64, 32], strides = [1, 1]} : vector<96x32xf32> to vector<64x32xf32>
    %480 = vector.extract_strided_slice %437 {offsets = [8, 0], sizes = [1, 32], strides = [1, 1]} : vector<33x32xf32> to vector<1x32xf32>
    %481 = vector.broadcast %480 : vector<1x32xf32> to vector<64x32xf32>
    %482 = arith.mulf %479, %481 : vector<64x32xf32>
    %483 = arith.addf %478, %482 : vector<64x32xf32>
    %484 = vector.extract_strided_slice %436 {offsets = [9, 0], sizes = [64, 32], strides = [1, 1]} : vector<96x32xf32> to vector<64x32xf32>
    %485 = vector.extract_strided_slice %437 {offsets = [9, 0], sizes = [1, 32], strides = [1, 1]} : vector<33x32xf32> to vector<1x32xf32>
    %486 = vector.broadcast %485 : vector<1x32xf32> to vector<64x32xf32>
    %487 = arith.mulf %484, %486 : vector<64x32xf32>
    %488 = arith.addf %483, %487 : vector<64x32xf32>
    %489 = vector.extract_strided_slice %436 {offsets = [10, 0], sizes = [64, 32], strides = [1, 1]} : vector<96x32xf32> to vector<64x32xf32>
    %490 = vector.extract_strided_slice %437 {offsets = [10, 0], sizes = [1, 32], strides = [1, 1]} : vector<33x32xf32> to vector<1x32xf32>
    %491 = vector.broadcast %490 : vector<1x32xf32> to vector<64x32xf32>
    %492 = arith.mulf %489, %491 : vector<64x32xf32>
    %493 = arith.addf %488, %492 : vector<64x32xf32>
    %494 = vector.extract_strided_slice %436 {offsets = [11, 0], sizes = [64, 32], strides = [1, 1]} : vector<96x32xf32> to vector<64x32xf32>
    %495 = vector.extract_strided_slice %437 {offsets = [11, 0], sizes = [1, 32], strides = [1, 1]} : vector<33x32xf32> to vector<1x32xf32>
    %496 = vector.broadcast %495 : vector<1x32xf32> to vector<64x32xf32>
    %497 = arith.mulf %494, %496 : vector<64x32xf32>
    %498 = arith.addf %493, %497 : vector<64x32xf32>
    %499 = vector.extract_strided_slice %436 {offsets = [12, 0], sizes = [64, 32], strides = [1, 1]} : vector<96x32xf32> to vector<64x32xf32>
    %500 = vector.extract_strided_slice %437 {offsets = [12, 0], sizes = [1, 32], strides = [1, 1]} : vector<33x32xf32> to vector<1x32xf32>
    %501 = vector.broadcast %500 : vector<1x32xf32> to vector<64x32xf32>
    %502 = arith.mulf %499, %501 : vector<64x32xf32>
    %503 = arith.addf %498, %502 : vector<64x32xf32>
    %504 = vector.extract_strided_slice %436 {offsets = [13, 0], sizes = [64, 32], strides = [1, 1]} : vector<96x32xf32> to vector<64x32xf32>
    %505 = vector.extract_strided_slice %437 {offsets = [13, 0], sizes = [1, 32], strides = [1, 1]} : vector<33x32xf32> to vector<1x32xf32>
    %506 = vector.broadcast %505 : vector<1x32xf32> to vector<64x32xf32>
    %507 = arith.mulf %504, %506 : vector<64x32xf32>
    %508 = arith.addf %503, %507 : vector<64x32xf32>
    %509 = vector.extract_strided_slice %436 {offsets = [14, 0], sizes = [64, 32], strides = [1, 1]} : vector<96x32xf32> to vector<64x32xf32>
    %510 = vector.extract_strided_slice %437 {offsets = [14, 0], sizes = [1, 32], strides = [1, 1]} : vector<33x32xf32> to vector<1x32xf32>
    %511 = vector.broadcast %510 : vector<1x32xf32> to vector<64x32xf32>
    %512 = arith.mulf %509, %511 : vector<64x32xf32>
    %513 = arith.addf %508, %512 : vector<64x32xf32>
    %514 = vector.extract_strided_slice %436 {offsets = [15, 0], sizes = [64, 32], strides = [1, 1]} : vector<96x32xf32> to vector<64x32xf32>
    %515 = vector.extract_strided_slice %437 {offsets = [15, 0], sizes = [1, 32], strides = [1, 1]} : vector<33x32xf32> to vector<1x32xf32>
    %516 = vector.broadcast %515 : vector<1x32xf32> to vector<64x32xf32>
    %517 = arith.mulf %514, %516 : vector<64x32xf32>
    %518 = arith.addf %513, %517 : vector<64x32xf32>
    %519 = vector.extract_strided_slice %436 {offsets = [16, 0], sizes = [64, 32], strides = [1, 1]} : vector<96x32xf32> to vector<64x32xf32>
    %520 = vector.extract_strided_slice %437 {offsets = [16, 0], sizes = [1, 32], strides = [1, 1]} : vector<33x32xf32> to vector<1x32xf32>
    %521 = vector.broadcast %520 : vector<1x32xf32> to vector<64x32xf32>
    %522 = arith.mulf %519, %521 : vector<64x32xf32>
    %523 = arith.addf %518, %522 : vector<64x32xf32>
    %524 = vector.extract_strided_slice %436 {offsets = [17, 0], sizes = [64, 32], strides = [1, 1]} : vector<96x32xf32> to vector<64x32xf32>
    %525 = vector.extract_strided_slice %437 {offsets = [17, 0], sizes = [1, 32], strides = [1, 1]} : vector<33x32xf32> to vector<1x32xf32>
    %526 = vector.broadcast %525 : vector<1x32xf32> to vector<64x32xf32>
    %527 = arith.mulf %524, %526 : vector<64x32xf32>
    %528 = arith.addf %523, %527 : vector<64x32xf32>
    %529 = vector.extract_strided_slice %436 {offsets = [18, 0], sizes = [64, 32], strides = [1, 1]} : vector<96x32xf32> to vector<64x32xf32>
    %530 = vector.extract_strided_slice %437 {offsets = [18, 0], sizes = [1, 32], strides = [1, 1]} : vector<33x32xf32> to vector<1x32xf32>
    %531 = vector.broadcast %530 : vector<1x32xf32> to vector<64x32xf32>
    %532 = arith.mulf %529, %531 : vector<64x32xf32>
    %533 = arith.addf %528, %532 : vector<64x32xf32>
    %534 = vector.extract_strided_slice %436 {offsets = [19, 0], sizes = [64, 32], strides = [1, 1]} : vector<96x32xf32> to vector<64x32xf32>
    %535 = vector.extract_strided_slice %437 {offsets = [19, 0], sizes = [1, 32], strides = [1, 1]} : vector<33x32xf32> to vector<1x32xf32>
    %536 = vector.broadcast %535 : vector<1x32xf32> to vector<64x32xf32>
    %537 = arith.mulf %534, %536 : vector<64x32xf32>
    %538 = arith.addf %533, %537 : vector<64x32xf32>
    %539 = vector.extract_strided_slice %436 {offsets = [20, 0], sizes = [64, 32], strides = [1, 1]} : vector<96x32xf32> to vector<64x32xf32>
    %540 = vector.extract_strided_slice %437 {offsets = [20, 0], sizes = [1, 32], strides = [1, 1]} : vector<33x32xf32> to vector<1x32xf32>
    %541 = vector.broadcast %540 : vector<1x32xf32> to vector<64x32xf32>
    %542 = arith.mulf %539, %541 : vector<64x32xf32>
    %543 = arith.addf %538, %542 : vector<64x32xf32>
    %544 = vector.extract_strided_slice %436 {offsets = [21, 0], sizes = [64, 32], strides = [1, 1]} : vector<96x32xf32> to vector<64x32xf32>
    %545 = vector.extract_strided_slice %437 {offsets = [21, 0], sizes = [1, 32], strides = [1, 1]} : vector<33x32xf32> to vector<1x32xf32>
    %546 = vector.broadcast %545 : vector<1x32xf32> to vector<64x32xf32>
    %547 = arith.mulf %544, %546 : vector<64x32xf32>
    %548 = arith.addf %543, %547 : vector<64x32xf32>
    %549 = vector.extract_strided_slice %436 {offsets = [22, 0], sizes = [64, 32], strides = [1, 1]} : vector<96x32xf32> to vector<64x32xf32>
    %550 = vector.extract_strided_slice %437 {offsets = [22, 0], sizes = [1, 32], strides = [1, 1]} : vector<33x32xf32> to vector<1x32xf32>
    %551 = vector.broadcast %550 : vector<1x32xf32> to vector<64x32xf32>
    %552 = arith.mulf %549, %551 : vector<64x32xf32>
    %553 = arith.addf %548, %552 : vector<64x32xf32>
    %554 = vector.extract_strided_slice %436 {offsets = [23, 0], sizes = [64, 32], strides = [1, 1]} : vector<96x32xf32> to vector<64x32xf32>
    %555 = vector.extract_strided_slice %437 {offsets = [23, 0], sizes = [1, 32], strides = [1, 1]} : vector<33x32xf32> to vector<1x32xf32>
    %556 = vector.broadcast %555 : vector<1x32xf32> to vector<64x32xf32>
    %557 = arith.mulf %554, %556 : vector<64x32xf32>
    %558 = arith.addf %553, %557 : vector<64x32xf32>
    %559 = vector.extract_strided_slice %436 {offsets = [24, 0], sizes = [64, 32], strides = [1, 1]} : vector<96x32xf32> to vector<64x32xf32>
    %560 = vector.extract_strided_slice %437 {offsets = [24, 0], sizes = [1, 32], strides = [1, 1]} : vector<33x32xf32> to vector<1x32xf32>
    %561 = vector.broadcast %560 : vector<1x32xf32> to vector<64x32xf32>
    %562 = arith.mulf %559, %561 : vector<64x32xf32>
    %563 = arith.addf %558, %562 : vector<64x32xf32>
    %564 = vector.extract_strided_slice %436 {offsets = [25, 0], sizes = [64, 32], strides = [1, 1]} : vector<96x32xf32> to vector<64x32xf32>
    %565 = vector.extract_strided_slice %437 {offsets = [25, 0], sizes = [1, 32], strides = [1, 1]} : vector<33x32xf32> to vector<1x32xf32>
    %566 = vector.broadcast %565 : vector<1x32xf32> to vector<64x32xf32>
    %567 = arith.mulf %564, %566 : vector<64x32xf32>
    %568 = arith.addf %563, %567 : vector<64x32xf32>
    %569 = vector.extract_strided_slice %436 {offsets = [26, 0], sizes = [64, 32], strides = [1, 1]} : vector<96x32xf32> to vector<64x32xf32>
    %570 = vector.extract_strided_slice %437 {offsets = [26, 0], sizes = [1, 32], strides = [1, 1]} : vector<33x32xf32> to vector<1x32xf32>
    %571 = vector.broadcast %570 : vector<1x32xf32> to vector<64x32xf32>
    %572 = arith.mulf %569, %571 : vector<64x32xf32>
    %573 = arith.addf %568, %572 : vector<64x32xf32>
    %574 = vector.extract_strided_slice %436 {offsets = [27, 0], sizes = [64, 32], strides = [1, 1]} : vector<96x32xf32> to vector<64x32xf32>
    %575 = vector.extract_strided_slice %437 {offsets = [27, 0], sizes = [1, 32], strides = [1, 1]} : vector<33x32xf32> to vector<1x32xf32>
    %576 = vector.broadcast %575 : vector<1x32xf32> to vector<64x32xf32>
    %577 = arith.mulf %574, %576 : vector<64x32xf32>
    %578 = arith.addf %573, %577 : vector<64x32xf32>
    %579 = vector.extract_strided_slice %436 {offsets = [28, 0], sizes = [64, 32], strides = [1, 1]} : vector<96x32xf32> to vector<64x32xf32>
    %580 = vector.extract_strided_slice %437 {offsets = [28, 0], sizes = [1, 32], strides = [1, 1]} : vector<33x32xf32> to vector<1x32xf32>
    %581 = vector.broadcast %580 : vector<1x32xf32> to vector<64x32xf32>
    %582 = arith.mulf %579, %581 : vector<64x32xf32>
    %583 = arith.addf %578, %582 : vector<64x32xf32>
    %584 = vector.extract_strided_slice %436 {offsets = [29, 0], sizes = [64, 32], strides = [1, 1]} : vector<96x32xf32> to vector<64x32xf32>
    %585 = vector.extract_strided_slice %437 {offsets = [29, 0], sizes = [1, 32], strides = [1, 1]} : vector<33x32xf32> to vector<1x32xf32>
    %586 = vector.broadcast %585 : vector<1x32xf32> to vector<64x32xf32>
    %587 = arith.mulf %584, %586 : vector<64x32xf32>
    %588 = arith.addf %583, %587 : vector<64x32xf32>
    %589 = vector.extract_strided_slice %436 {offsets = [30, 0], sizes = [64, 32], strides = [1, 1]} : vector<96x32xf32> to vector<64x32xf32>
    %590 = vector.extract_strided_slice %437 {offsets = [30, 0], sizes = [1, 32], strides = [1, 1]} : vector<33x32xf32> to vector<1x32xf32>
    %591 = vector.broadcast %590 : vector<1x32xf32> to vector<64x32xf32>
    %592 = arith.mulf %589, %591 : vector<64x32xf32>
    %593 = arith.addf %588, %592 : vector<64x32xf32>
    %594 = vector.extract_strided_slice %436 {offsets = [31, 0], sizes = [64, 32], strides = [1, 1]} : vector<96x32xf32> to vector<64x32xf32>
    %595 = vector.extract_strided_slice %437 {offsets = [31, 0], sizes = [1, 32], strides = [1, 1]} : vector<33x32xf32> to vector<1x32xf32>
    %596 = vector.broadcast %595 : vector<1x32xf32> to vector<64x32xf32>
    %597 = arith.mulf %594, %596 : vector<64x32xf32>
    %598 = arith.addf %593, %597 : vector<64x32xf32>
    %599 = vector.extract_strided_slice %436 {offsets = [32, 0], sizes = [64, 32], strides = [1, 1]} : vector<96x32xf32> to vector<64x32xf32>
    %600 = vector.extract_strided_slice %437 {offsets = [32, 0], sizes = [1, 32], strides = [1, 1]} : vector<33x32xf32> to vector<1x32xf32>
    %601 = vector.broadcast %600 : vector<1x32xf32> to vector<64x32xf32>
    %602 = arith.mulf %599, %601 : vector<64x32xf32>
    %603 = arith.addf %598, %602 : vector<64x32xf32>
    %604 = arith.addf %434, %603 : vector<64x32xf32>
    %c0_129 = arith.constant 0 : index
    %c0_130 = arith.constant 0 : index
    %605 = vector.load %arg7[%c0_129, %c0_130] : memref<32x32xbf16, #tpu.memory_space<vmem>>, vector<32x32xbf16>
    %606 = arith.truncf %604 : vector<64x32xf32> to vector<64x32xbf16>
    %cst_131 = arith.constant dense<0.000000e+00> : vector<64x32xf32>
    %607 = tpu.matmul %606, %605, %cst_131 {dimension_numbers = #tpu.dot_dimension_numbers<[1], [0], [0], [1], [0, 0, 1, 1], [], []>} : vector<64x32xbf16>, vector<32x32xbf16>, vector<64x32xf32> -> vector<64x32xf32>
    %c0_132 = arith.constant 0 : index
    %c0_133 = arith.constant 0 : index
    %608 = vector.load %arg8[%c0_132, %c0_133] : memref<1x32xf32, #tpu.memory_space<vmem>>, vector<1x32xf32>
    %609 = vector.broadcast %608 : vector<1x32xf32> to vector<64x32xf32>
    %610 = arith.addf %607, %609 : vector<64x32xf32>
    %611 = arith.addf %0, %610 : vector<64x32xf32>
    %c0_134 = arith.constant 0 : index
    %c0_135 = arith.constant 0 : index
    %612 = vector.load %arg10[%c0_134, %c0_135] : memref<1x32xf32, #tpu.memory_space<vmem>>, vector<1x32xf32>
    %c0_136 = arith.constant 0 : index
    %c0_137 = arith.constant 0 : index
    %613 = vector.load %arg11[%c0_136, %c0_137] : memref<1x32xf32, #tpu.memory_space<vmem>>, vector<1x32xf32>
    %cst_138 = arith.constant dense<0.000000e+00> : vector<64xf32>
    %614 = vector.multi_reduction <add>, %611, %cst_138 [1] : vector<64x32xf32> to vector<64xf32>
    %615 = vector.shape_cast %614 : vector<64xf32> to vector<64x1xf32>
    %cst_139 = arith.constant 3.200000e+01 : f32
    %616 = vector.broadcast %cst_139 : f32 to vector<64x1xf32>
    %617 = arith.divf %615, %616 : vector<64x1xf32>
    %618 = vector.broadcast %617 : vector<64x1xf32> to vector<64x32xf32>
    %619 = arith.subf %611, %618 : vector<64x32xf32>
    %620 = arith.mulf %619, %619 : vector<64x32xf32>
    %cst_140 = arith.constant dense<0.000000e+00> : vector<64xf32>
    %621 = vector.multi_reduction <add>, %620, %cst_140 [1] : vector<64x32xf32> to vector<64xf32>
    %622 = vector.shape_cast %621 : vector<64xf32> to vector<64x1xf32>
    %cst_141 = arith.constant 3.200000e+01 : f32
    %623 = vector.broadcast %cst_141 : f32 to vector<64x1xf32>
    %624 = arith.divf %622, %623 : vector<64x1xf32>
    %625 = vector.broadcast %617 : vector<64x1xf32> to vector<64x32xf32>
    %626 = arith.subf %611, %625 : vector<64x32xf32>
    %cst_142 = arith.constant 9.99999974E-6 : f32
    %627 = vector.broadcast %cst_142 : f32 to vector<64x1xf32>
    %628 = arith.addf %624, %627 : vector<64x1xf32>
    %629 = math.rsqrt %628 : vector<64x1xf32>
    %630 = vector.broadcast %629 : vector<64x1xf32> to vector<64x32xf32>
    %631 = arith.mulf %626, %630 : vector<64x32xf32>
    %632 = vector.broadcast %612 : vector<1x32xf32> to vector<64x32xf32>
    %633 = arith.mulf %631, %632 : vector<64x32xf32>
    %634 = vector.broadcast %613 : vector<1x32xf32> to vector<64x32xf32>
    %635 = arith.addf %633, %634 : vector<64x32xf32>
    %c0_143 = arith.constant 0 : index
    %c0_144 = arith.constant 0 : index
    %636 = vector.load %arg12[%c0_143, %c0_144] : memref<32x128xbf16, #tpu.memory_space<vmem>>, vector<32x128xbf16>
    %637 = arith.truncf %635 : vector<64x32xf32> to vector<64x32xbf16>
    %cst_145 = arith.constant dense<0.000000e+00> : vector<64x128xf32>
    %638 = tpu.matmul %637, %636, %cst_145 {dimension_numbers = #tpu.dot_dimension_numbers<[1], [0], [0], [1], [0, 0, 1, 1], [], []>} : vector<64x32xbf16>, vector<32x128xbf16>, vector<64x128xf32> -> vector<64x128xf32>
    %c0_146 = arith.constant 0 : index
    %c0_147 = arith.constant 0 : index
    %639 = vector.load %arg13[%c0_146, %c0_147] : memref<1x128xf32, #tpu.memory_space<vmem>>, vector<1x128xf32>
    %640 = vector.broadcast %639 : vector<1x128xf32> to vector<64x128xf32>
    %641 = arith.addf %638, %640 : vector<64x128xf32>
    %cst_148 = arith.constant 5.000000e-01 : f32
    %642 = vector.broadcast %cst_148 : f32 to vector<64x128xf32>
    %643 = arith.mulf %642, %641 : vector<64x128xf32>
    %cst_149 = arith.constant 2.000000e+00 : f32
    %644 = math.sqrt %cst_149 : f32
    %645 = vector.broadcast %644 : f32 to vector<64x128xf32>
    %646 = arith.divf %641, %645 : vector<64x128xf32>
    %647 = math.erf %646 : vector<64x128xf32>
    %cst_150 = arith.constant 1.000000e+00 : f32
    %648 = vector.broadcast %cst_150 : f32 to vector<64x128xf32>
    %649 = arith.addf %648, %647 : vector<64x128xf32>
    %650 = arith.mulf %643, %649 : vector<64x128xf32>
    %c0_151 = arith.constant 0 : index
    %c0_152 = arith.constant 0 : index
    %651 = vector.load %arg14[%c0_151, %c0_152] : memref<128x32xbf16, #tpu.memory_space<vmem>>, vector<128x32xbf16>
    %652 = arith.truncf %650 : vector<64x128xf32> to vector<64x128xbf16>
    %cst_153 = arith.constant dense<0.000000e+00> : vector<64x32xf32>
    %653 = tpu.matmul %652, %651, %cst_153 {dimension_numbers = #tpu.dot_dimension_numbers<[1], [0], [0], [1], [0, 0, 1, 1], [], []>} : vector<64x128xbf16>, vector<128x32xbf16>, vector<64x32xf32> -> vector<64x32xf32>
    %c0_154 = arith.constant 0 : index
    %c0_155 = arith.constant 0 : index
    %654 = vector.load %arg15[%c0_154, %c0_155] : memref<1x32xf32, #tpu.memory_space<vmem>>, vector<1x32xf32>
    %655 = vector.broadcast %654 : vector<1x32xf32> to vector<64x32xf32>
    %656 = arith.addf %653, %655 : vector<64x32xf32>
    %657 = arith.addf %611, %656 : vector<64x32xf32>
    %c0_156 = arith.constant 0 : index
    %c0_157 = arith.constant 0 : index
    %658 = vector.load %arg16[%c0_156, %c0_157] : memref<64x32xf32, #tpu.memory_space<vmem>>, vector<64x32xf32>
    tpu.vector_store %arg16[%c0_156, %c0_157], %657 {strides = array<i32>} : memref<64x32xf32, #tpu.memory_space<vmem>>, vector<64x32xf32>,
    return
  }
  func.func @transform_0(%arg0: i32) -> (i32, i32) {
    %c0_i32 = arith.constant 0 : i32
    %c0_i32_0 = arith.constant 0 : i32
    return %arg0, %c0_i32 : i32, i32
  }
  func.func @transform_1(%arg0: i32) -> (i32, i32) {
    %c0_i32 = arith.constant 0 : i32
    %c0_i32_0 = arith.constant 0 : i32
    %c0_i32_1 = arith.constant 0 : i32
    return %c0_i32, %c0_i32_0 : i32, i32
  }
  func.func @transform_2(%arg0: i32) -> (i32, i32) {
    %c0_i32 = arith.constant 0 : i32
    %c0_i32_0 = arith.constant 0 : i32
    %c0_i32_1 = arith.constant 0 : i32
    return %c0_i32, %c0_i32_0 : i32, i32
  }
  func.func @transform_3(%arg0: i32) -> (i32, i32) {
    %c0_i32 = arith.constant 0 : i32
    %c0_i32_0 = arith.constant 0 : i32
    %c0_i32_1 = arith.constant 0 : i32
    return %c0_i32, %c0_i32_0 : i32, i32
  }
  func.func @transform_4(%arg0: i32) -> (i32, i32) {
    %c0_i32 = arith.constant 0 : i32
    %c0_i32_0 = arith.constant 0 : i32
    %c0_i32_1 = arith.constant 0 : i32
    return %c0_i32, %c0_i32_0 : i32, i32
  }
  func.func @transform_5(%arg0: i32) -> (i32, i32) {
    %c0_i32 = arith.constant 0 : i32
    %c0_i32_0 = arith.constant 0 : i32
    %c0_i32_1 = arith.constant 0 : i32
    return %c0_i32, %c0_i32_0 : i32, i32
  }
  func.func @transform_6(%arg0: i32) -> (i32, i32) {
    %c0_i32 = arith.constant 0 : i32
    %c0_i32_0 = arith.constant 0 : i32
    %c0_i32_1 = arith.constant 0 : i32
    return %c0_i32, %c0_i32_0 : i32, i32
  }
  func.func @transform_7(%arg0: i32) -> (i32, i32) {
    %c0_i32 = arith.constant 0 : i32
    %c0_i32_0 = arith.constant 0 : i32
    %c0_i32_1 = arith.constant 0 : i32
    return %c0_i32, %c0_i32_0 : i32, i32
  }
  func.func @transform_8(%arg0: i32) -> (i32, i32) {
    %c0_i32 = arith.constant 0 : i32
    %c0_i32_0 = arith.constant 0 : i32
    %c0_i32_1 = arith.constant 0 : i32
    return %c0_i32, %c0_i32_0 : i32, i32
  }
  func.func @transform_9(%arg0: i32) -> (i32, i32) {
    %c0_i32 = arith.constant 0 : i32
    %c0_i32_0 = arith.constant 0 : i32
    %c0_i32_1 = arith.constant 0 : i32
    return %c0_i32, %c0_i32_0 : i32, i32
  }
  func.func @transform_10(%arg0: i32) -> (i32, i32) {
    %c0_i32 = arith.constant 0 : i32
    %c0_i32_0 = arith.constant 0 : i32
    %c0_i32_1 = arith.constant 0 : i32
    return %c0_i32, %c0_i32_0 : i32, i32
  }
  func.func @transform_11(%arg0: i32) -> (i32, i32) {
    %c0_i32 = arith.constant 0 : i32
    %c0_i32_0 = arith.constant 0 : i32
    %c0_i32_1 = arith.constant 0 : i32
    return %c0_i32, %c0_i32_0 : i32, i32
  }
  func.func @transform_12(%arg0: i32) -> (i32, i32) {
    %c0_i32 = arith.constant 0 : i32
    %c0_i32_0 = arith.constant 0 : i32
    %c0_i32_1 = arith.constant 0 : i32
    return %c0_i32, %c0_i32_0 : i32, i32
  }
  func.func @transform_13(%arg0: i32) -> (i32, i32) {
    %c0_i32 = arith.constant 0 : i32
    %c0_i32_0 = arith.constant 0 : i32
    %c0_i32_1 = arith.constant 0 : i32
    return %c0_i32, %c0_i32_0 : i32, i32
  }
  func.func @transform_14(%arg0: i32) -> (i32, i32) {
    %c0_i32 = arith.constant 0 : i32
    %c0_i32_0 = arith.constant 0 : i32
    %c0_i32_1 = arith.constant 0 : i32
    return %c0_i32, %c0_i32_0 : i32, i32
  }
  func.func @transform_15(%arg0: i32) -> (i32, i32) {
    %c0_i32 = arith.constant 0 : i32
    %c0_i32_0 = arith.constant 0 : i32
    return %arg0, %c0_i32 : i32, i32
  }
}

</mosaic_0001>

<llo_original>
// kernel: nystromformer2d_forward.2
$region0: #{nystromformer2d_forward.2}
  #allocation0 [shape = 'u32[]', space=smem, size = 0x4, offset = 0x4, fixed_abs, tag = 'smem constant byte address 0x4 - core index']
  #allocation1 [shape = 'u32[144,128]{1,0:T(1,128)}', space=vmem, size = 0x12000, scoped, tag = 'internal scratch']
  %s0 = inlined_call_operand.vmem [shape: f32[128,32], index: 0, kind: input, shape index: {}]
  %s1 = inlined_call_operand.vmem [shape: f32[1,32], index: 1, kind: input, shape index: {}]
  %s2 = inlined_call_operand.vmem [shape: f32[1,32], index: 2, kind: input, shape index: {}]
  %s3 = inlined_call_operand.vmem [shape: bf16[32,32], index: 3, kind: input, shape index: {}]
  %s4 = inlined_call_operand.vmem [shape: bf16[32,32], index: 4, kind: input, shape index: {}]
  %s5 = inlined_call_operand.vmem [shape: bf16[32,32], index: 5, kind: input, shape index: {}]
  %s6 = inlined_call_operand.vmem [shape: bf16[32,32], index: 6, kind: input, shape index: {}]
  %s7 = inlined_call_operand.vmem [shape: f32[1,32], index: 7, kind: input, shape index: {}]
  %s8 = inlined_call_operand.vmem [shape: f32[33,32], index: 8, kind: input, shape index: {}]
  %s9 = inlined_call_operand.vmem [shape: f32[1,32], index: 9, kind: input, shape index: {}]
  %s10 = inlined_call_operand.vmem [shape: f32[1,32], index: 10, kind: input, shape index: {}]
  %s11 = inlined_call_operand.vmem [shape: bf16[32,128], index: 11, kind: input, shape index: {}]
  %s12 = inlined_call_operand.vmem [shape: f32[1,128], index: 12, kind: input, shape index: {}]
  %s13 = inlined_call_operand.vmem [shape: bf16[128,32], index: 13, kind: input, shape index: {}]
  %s14 = inlined_call_operand.vmem [shape: f32[1,32], index: 14, kind: input, shape index: {}]
  %s15 = inlined_call_operand.vmem [shape: f32[128,32], index: 15, kind: output, shape index: {}]
  %s16 = sld [smem:[#allocation0]]
  $region93: #{nystromformer2d_forward.2} parent=0
    _
  %s18 = ssub.s32 1, %s16
  %s19 = scalar_select 0, %s18, %s16
  loop: start=0, step=1, limit=4
  $region2: #{nystromformer2d_forward.2} parent=0 // loop_pre_header
    _
  $region3: #{nystromformer2d_forward.2} parent=0 // loop_header
    %s21 = sphi 0, %s25
    %p22 = scmp.ge.s32.totalorder %s21, 4
    %s31 = sphi 0, %s33
    %s34 = sphi 0, %s31
    %s35 = sphi 0, %s34
    %s51 = sphi 0, %s35
    %s55 = sphi 0, %s55
    %s57 = sphi 0, %s55
    %s58 = sphi 0, %s57
    %s72 = sphi 0, %s58
    %s76 = sphi 0, %s76
    %s78 = sphi 0, %s76
    %s79 = sphi 0, %s78
    %s93 = sphi 0, %s79
    %s97 = sphi 0, %s97
    %s99 = sphi 0, %s97
    %s100 = sphi 0, %s99
    %s114 = sphi 0, %s100
    %s118 = sphi 0, %s118
    %s120 = sphi 0, %s118
    %s121 = sphi 0, %s120
    %s135 = sphi 0, %s121
    %s139 = sphi 0, %s139
    %s141 = sphi 0, %s139
    %s142 = sphi 0, %s141
    %s156 = sphi 0, %s142
    %s160 = sphi 0, %s160
    %s162 = sphi 0, %s160
    %s163 = sphi 0, %s162
    %s177 = sphi 0, %s163
    %s181 = sphi 0, %s181
    %s183 = sphi 0, %s181
    %s184 = sphi 0, %s183
    %s198 = sphi 0, %s184
    %s202 = sphi 0, %s202
    %s204 = sphi 0, %s202
    %s205 = sphi 0, %s204
    %s219 = sphi 0, %s205
    %s223 = sphi 0, %s223
    %s225 = sphi 0, %s223
    %s226 = sphi 0, %s225
    %s240 = sphi 0, %s226
    %s244 = sphi 0, %s244
    %s246 = sphi 0, %s244
    %s247 = sphi 0, %s246
    %s261 = sphi 0, %s247
    %s265 = sphi 0, %s265
    %s267 = sphi 0, %s265
    %s268 = sphi 0, %s267
    %s282 = sphi 0, %s268
    %s286 = sphi 0, %s286
    %s288 = sphi 0, %s286
    %s289 = sphi 0, %s288
    %s303 = sphi 0, %s289
    %s307 = sphi 0, %s307
    %s309 = sphi 0, %s307
    %s310 = sphi 0, %s309
    %s324 = sphi 0, %s310
    %s328 = sphi 0, %s328
    %s330 = sphi 0, %s328
    %s331 = sphi 0, %s330
    %s345 = sphi 0, %s331
    %s351 = sphi 0, %s353
    %s354 = sphi 0, %s351
    %s355 = sphi 0, %s354
    %s371 = sphi 0, %s355
  $region4: #{nystromformer2d_forward.2} parent=0 // loop_header_branch
    %24 = sbr.rel (%p22) target = $region8
  $region5: #{nystromformer2d_forward.2} parent=0 // loop_body
    %s26 = ssub.s32 %s21, 1
    %s27 = ssub.s32 %s21, 2
    %s28 = sadd.s32 %s21, 1
    %s29 = ssub.s32 %s21, %s28
    %p30 = scmp.eq.s32.totalorder %s29, 0
    %s32 = sadd.s32 %s31, 1
    %s33 = scalar_select %p30, %s31, %s32
    %p36 = pneg %p30
    %p37 = scmp.eq.s32.totalorder %s21, 1
    %p38 = por %p36, %p37
    %p39 = scmp.ne.s32.totalorder %s31, %s34
    %p40 = scmp.eq.s32.totalorder %s21, 0
    %p41 = por %p39, %p40
    %p42 = scmp.ne.s32.totalorder %s31, %s34
    %p43 = scmp.eq.s32.totalorder %s26, 1
    %p44 = por %p42, %p43
    %p45 = scmp.ne.s32.totalorder %s34, %s35
    %p46 = scmp.eq.s32.totalorder %s26, 0
    %p47 = por %p45, %p46
    %p48 = scmp.ne.s32.totalorder %s34, %s35
    %p49 = scmp.eq.s32.totalorder %s27, 1
    %p50 = por %p48, %p49
    %p52 = scmp.ne.s32.totalorder %s35, %s51
    %p53 = scmp.eq.s32.totalorder %s27, 0
    %p54 = por %p52, %p53
    %s56 = sadd.s32 %s55, 1
    %p59 = scmp.eq.s32.totalorder %s21, 1
    %p60 = scmp.ne.s32.totalorder %s55, %s57
    %p61 = scmp.eq.s32.totalorder %s21, 0
    %p62 = por %p60, %p61
    %p63 = scmp.ne.s32.totalorder %s55, %s57
    %p64 = scmp.eq.s32.totalorder %s26, 1
    %p65 = por %p63, %p64
    %p66 = scmp.ne.s32.totalorder %s57, %s58
    %p67 = scmp.eq.s32.totalorder %s26, 0
    %p68 = por %p66, %p67
    %p69 = scmp.ne.s32.totalorder %s57, %s58
    %p70 = scmp.eq.s32.totalorder %s27, 1
    %p71 = por %p69, %p70
    %p73 = scmp.ne.s32.totalorder %s58, %s72
    %p74 = scmp.eq.s32.totalorder %s27, 0
    %p75 = por %p73, %p74
    %s77 = sadd.s32 %s76, 1
    %p80 = scmp.eq.s32.totalorder %s21, 1
    %p81 = scmp.ne.s32.totalorder %s76, %s78
    %p82 = scmp.eq.s32.totalorder %s21, 0
    %p83 = por %p81, %p82
    %p84 = scmp.ne.s32.totalorder %s76, %s78
    %p85 = scmp.eq.s32.totalorder %s26, 1
    %p86 = por %p84, %p85
    %p87 = scmp.ne.s32.totalorder %s78, %s79
    %p88 = scmp.eq.s32.totalorder %s26, 0
    %p89 = por %p87, %p88
    %p90 = scmp.ne.s32.totalorder %s78, %s79
    %p91 = scmp.eq.s32.totalorder %s27, 1
    %p92 = por %p90, %p91
    %p94 = scmp.ne.s32.totalorder %s79, %s93
    %p95 = scmp.eq.s32.totalorder %s27, 0
    %p96 = por %p94, %p95
    %s98 = sadd.s32 %s97, 1
    %p101 = scmp.eq.s32.totalorder %s21, 1
    %p102 = scmp.ne.s32.totalorder %s97, %s99
    %p103 = scmp.eq.s32.totalorder %s21, 0
    %p104 = por %p102, %p103
    %p105 = scmp.ne.s32.totalorder %s97, %s99
    %p106 = scmp.eq.s32.totalorder %s26, 1
    %p107 = por %p105, %p106
    %p108 = scmp.ne.s32.totalorder %s99, %s100
    %p109 = scmp.eq.s32.totalorder %s26, 0
    %p110 = por %p108, %p109
    %p111 = scmp.ne.s32.totalorder %s99, %s100
    %p112 = scmp.eq.s32.totalorder %s27, 1
    %p113 = por %p111, %p112
    %p115 = scmp.ne.s32.totalorder %s100, %s114
    %p116 = scmp.eq.s32.totalorder %s27, 0
    %p117 = por %p115, %p116
    %s119 = sadd.s32 %s118, 1
    %p122 = scmp.eq.s32.totalorder %s21, 1
    %p123 = scmp.ne.s32.totalorder %s118, %s120
    %p124 = scmp.eq.s32.totalorder %s21, 0
    %p125 = por %p123, %p124
    %p126 = scmp.ne.s32.totalorder %s118, %s120
    %p127 = scmp.eq.s32.totalorder %s26, 1
    %p128 = por %p126, %p127
    %p129 = scmp.ne.s32.totalorder %s120, %s121
    %p130 = scmp.eq.s32.totalorder %s26, 0
    %p131 = por %p129, %p130
    %p132 = scmp.ne.s32.totalorder %s120, %s121
    %p133 = scmp.eq.s32.totalorder %s27, 1
    %p134 = por %p132, %p133
    %p136 = scmp.ne.s32.totalorder %s121, %s135
    %p137 = scmp.eq.s32.totalorder %s27, 0
    %p138 = por %p136, %p137
    %s140 = sadd.s32 %s139, 1
    %p143 = scmp.eq.s32.totalorder %s21, 1
    %p144 = scmp.ne.s32.totalorder %s139, %s141
    %p145 = scmp.eq.s32.totalorder %s21, 0
    %p146 = por %p144, %p145
    %p147 = scmp.ne.s32.totalorder %s139, %s141
    %p148 = scmp.eq.s32.totalorder %s26, 1
    %p149 = por %p147, %p148
    %p150 = scmp.ne.s32.totalorder %s141, %s142
    %p151 = scmp.eq.s32.totalorder %s26, 0
    %p152 = por %p150, %p151
    %p153 = scmp.ne.s32.totalorder %s141, %s142
    %p154 = scmp.eq.s32.totalorder %s27, 1
    %p155 = por %p153, %p154
    %p157 = scmp.ne.s32.totalorder %s142, %s156
    %p158 = scmp.eq.s32.totalorder %s27, 0
    %p159 = por %p157, %p158
    %s161 = sadd.s32 %s160, 1
    %p164 = scmp.eq.s32.totalorder %s21, 1
    %p165 = scmp.ne.s32.totalorder %s160, %s162
    %p166 = scmp.eq.s32.totalorder %s21, 0
    %p167 = por %p165, %p166
    %p168 = scmp.ne.s32.totalorder %s160, %s162
    %p169 = scmp.eq.s32.totalorder %s26, 1
    %p170 = por %p168, %p169
    %p171 = scmp.ne.s32.totalorder %s162, %s163
    %p172 = scmp.eq.s32.totalorder %s26, 0
    %p173 = por %p171, %p172
    %p174 = scmp.ne.s32.totalorder %s162, %s163
    %p175 = scmp.eq.s32.totalorder %s27, 1
    %p176 = por %p174, %p175
    %p178 = scmp.ne.s32.totalorder %s163, %s177
    %p179 = scmp.eq.s32.totalorder %s27, 0
    %p180 = por %p178, %p179
    %s182 = sadd.s32 %s181, 1
    %p185 = scmp.eq.s32.totalorder %s21, 1
    %p186 = scmp.ne.s32.totalorder %s181, %s183
    %p187 = scmp.eq.s32.totalorder %s21, 0
    %p188 = por %p186, %p187
    %p189 = scmp.ne.s32.totalorder %s181, %s183
    %p190 = scmp.eq.s32.totalorder %s26, 1
    %p191 = por %p189, %p190
    %p192 = scmp.ne.s32.totalorder %s183, %s184
    %p193 = scmp.eq.s32.totalorder %s26, 0
    %p194 = por %p192, %p193
    %p195 = scmp.ne.s32.totalorder %s183, %s184
    %p196 = scmp.eq.s32.totalorder %s27, 1
    %p197 = por %p195, %p196
    %p199 = scmp.ne.s32.totalorder %s184, %s198
    %p200 = scmp.eq.s32.totalorder %s27, 0
    %p201 = por %p199, %p200
    %s203 = sadd.s32 %s202, 1
    %p206 = scmp.eq.s32.totalorder %s21, 1
    %p207 = scmp.ne.s32.totalorder %s202, %s204
    %p208 = scmp.eq.s32.totalorder %s21, 0
    %p209 = por %p207, %p208
    %p210 = scmp.ne.s32.totalorder %s202, %s204
    %p211 = scmp.eq.s32.totalorder %s26, 1
    %p212 = por %p210, %p211
    %p213 = scmp.ne.s32.totalorder %s204, %s205
    %p214 = scmp.eq.s32.totalorder %s26, 0
    %p215 = por %p213, %p214
    %p216 = scmp.ne.s32.totalorder %s204, %s205
    %p217 = scmp.eq.s32.totalorder %s27, 1
    %p218 = por %p216, %p217
    %p220 = scmp.ne.s32.totalorder %s205, %s219
    %p221 = scmp.eq.s32.totalorder %s27, 0
    %p222 = por %p220, %p221
    %s224 = sadd.s32 %s223, 1
    %p227 = scmp.eq.s32.totalorder %s21, 1
    %p228 = scmp.ne.s32.totalorder %s223, %s225
    %p229 = scmp.eq.s32.totalorder %s21, 0
    %p230 = por %p228, %p229
    %p231 = scmp.ne.s32.totalorder %s223, %s225
    %p232 = scmp.eq.s32.totalorder %s26, 1
    %p233 = por %p231, %p232
    %p234 = scmp.ne.s32.totalorder %s225, %s226
    %p235 = scmp.eq.s32.totalorder %s26, 0
    %p236 = por %p234, %p235
    %p237 = scmp.ne.s32.totalorder %s225, %s226
    %p238 = scmp.eq.s32.totalorder %s27, 1
    %p239 = por %p237, %p238
    %p241 = scmp.ne.s32.totalorder %s226, %s240
    %p242 = scmp.eq.s32.totalorder %s27, 0
    %p243 = por %p241, %p242
    %s245 = sadd.s32 %s244, 1
    %p248 = scmp.eq.s32.totalorder %s21, 1
    %p249 = scmp.ne.s32.totalorder %s244, %s246
    %p250 = scmp.eq.s32.totalorder %s21, 0
    %p251 = por %p249, %p250
    %p252 = scmp.ne.s32.totalorder %s244, %s246
    %p253 = scmp.eq.s32.totalorder %s26, 1
    %p254 = por %p252, %p253
    %p255 = scmp.ne.s32.totalorder %s246, %s247
    %p256 = scmp.eq.s32.totalorder %s26, 0
    %p257 = por %p255, %p256
    %p258 = scmp.ne.s32.totalorder %s246, %s247
    %p259 = scmp.eq.s32.totalorder %s27, 1
    %p260 = por %p258, %p259
    %p262 = scmp.ne.s32.totalorder %s247, %s261
    %p263 = scmp.eq.s32.totalorder %s27, 0
    %p264 = por %p262, %p263
    %s266 = sadd.s32 %s265, 1
    %p269 = scmp.eq.s32.totalorder %s21, 1
    %p270 = scmp.ne.s32.totalorder %s265, %s267
    %p271 = scmp.eq.s32.totalorder %s21, 0
    %p272 = por %p270, %p271
    %p273 = scmp.ne.s32.totalorder %s265, %s267
    %p274 = scmp.eq.s32.totalorder %s26, 1
    %p275 = por %p273, %p274
    %p276 = scmp.ne.s32.totalorder %s267, %s268
    %p277 = scmp.eq.s32.totalorder %s26, 0
    %p278 = por %p276, %p277
    %p279 = scmp.ne.s32.totalorder %s267, %s268
    %p280 = scmp.eq.s32.totalorder %s27, 1
    %p281 = por %p279, %p280
    %p283 = scmp.ne.s32.totalorder %s268, %s282
    %p284 = scmp.eq.s32.totalorder %s27, 0
    %p285 = por %p283, %p284
    %s287 = sadd.s32 %s286, 1
    %p290 = scmp.eq.s32.totalorder %s21, 1
    %p291 = scmp.ne.s32.totalorder %s286, %s288
    %p292 = scmp.eq.s32.totalorder %s21, 0
    %p293 = por %p291, %p292
    %p294 = scmp.ne.s32.totalorder %s286, %s288
    %p295 = scmp.eq.s32.totalorder %s26, 1
    %p296 = por %p294, %p295
    %p297 = scmp.ne.s32.totalorder %s288, %s289
    %p298 = scmp.eq.s32.totalorder %s26, 0
    %p299 = por %p297, %p298
    %p300 = scmp.ne.s32.totalorder %s288, %s289
    %p301 = scmp.eq.s32.totalorder %s27, 1
    %p302 = por %p300, %p301
    %p304 = scmp.ne.s32.totalorder %s289, %s303
    %p305 = scmp.eq.s32.totalorder %s27, 0
    %p306 = por %p304, %p305
    %s308 = sadd.s32 %s307, 1
    %p311 = scmp.eq.s32.totalorder %s21, 1
    %p312 = scmp.ne.s32.totalorder %s307, %s309
    %p313 = scmp.eq.s32.totalorder %s21, 0
    %p314 = por %p312, %p313
    %p315 = scmp.ne.s32.totalorder %s307, %s309
    %p316 = scmp.eq.s32.totalorder %s26, 1
    %p317 = por %p315, %p316
    %p318 = scmp.ne.s32.totalorder %s309, %s310
    %p319 = scmp.eq.s32.totalorder %s26, 0
    %p320 = por %p318, %p319
    %p321 = scmp.ne.s32.totalorder %s309, %s310
    %p322 = scmp.eq.s32.totalorder %s27, 1
    %p323 = por %p321, %p322
    %p325 = scmp.ne.s32.totalorder %s310, %s324
    %p326 = scmp.eq.s32.totalorder %s27, 0
    %p327 = por %p325, %p326
    %s329 = sadd.s32 %s328, 1
    %p332 = scmp.eq.s32.totalorder %s21, 1
    %p333 = scmp.ne.s32.totalorder %s328, %s330
    %p334 = scmp.eq.s32.totalorder %s21, 0
    %p335 = por %p333, %p334
    %p336 = scmp.ne.s32.totalorder %s328, %s330
    %p337 = scmp.eq.s32.totalorder %s26, 1
    %p338 = por %p336, %p337
    %p339 = scmp.ne.s32.totalorder %s330, %s331
    %p340 = scmp.eq.s32.totalorder %s26, 0
    %p341 = por %p339, %p340
    %p342 = scmp.ne.s32.totalorder %s330, %s331
    %p343 = scmp.eq.s32.totalorder %s27, 1
    %p344 = por %p342, %p343
    %p346 = scmp.ne.s32.totalorder %s331, %s345
    %p347 = scmp.eq.s32.totalorder %s27, 0
    %p348 = por %p346, %p347
    %s349 = ssub.s32 %s21, %s28
    %p350 = scmp.eq.s32.totalorder %s349, 0
    %s352 = sadd.s32 %s351, 1
    %s353 = scalar_select %p350, %s351, %s352
    %p356 = pneg %p350
    %p357 = scmp.eq.s32.totalorder %s21, 1
    %p358 = por %p356, %p357
    %p359 = scmp.ne.s32.totalorder %s351, %s354
    %p360 = scmp.eq.s32.totalorder %s21, 0
    %p361 = por %p359, %p360
    %p362 = scmp.ne.s32.totalorder %s351, %s354
    %p363 = scmp.eq.s32.totalorder %s26, 1
    %p364 = por %p362, %p363
    %p365 = scmp.ne.s32.totalorder %s354, %s355
    %p366 = scmp.eq.s32.totalorder %s26, 0
    %p367 = por %p365, %p366
    %p368 = scmp.ne.s32.totalorder %s354, %s355
    %p369 = scmp.eq.s32.totalorder %s27, 1
    %p370 = por %p368, %p369
    %p372 = scmp.ne.s32.totalorder %s355, %s371
    %p373 = scmp.eq.s32.totalorder %s27, 0
    %p374 = por %p372, %p373
    %p375 = scmp.le.s32.totalorder 1, %s21
    %p376 = scmp.lt.s32.totalorder %s21, 3
    %p377 = pnand %p375, %p376
    %p378 = pneg %p377
    // Predicated region
    $region9: #{nystromformer2d_forward.2} parent=5 // pred_check
      _
    $region10: #{nystromformer2d_forward.2} parent=5 // pred_check_branch
      %380 = sbr.rel (%p377) target = $region12
    $region11: #{nystromformer2d_forward.2} parent=5 // pred_region
      %s381 = ssub.s32 %s21, 1
      // Predicated region
      $region13: #{nystromformer2d_forward.2} parent=11 // pred_check
        %p382 = pneg %p68
      $region14: #{nystromformer2d_forward.2} parent=11 // pred_check_branch
        %384 = sbr.rel (%p382) target = $region16
      $region15: #{nystromformer2d_forward.2} parent=11 // pred_region
        _
      $region16: #{nystromformer2d_forward.2} parent=11 // pred_fallthru
        _
      // Predicated region
      $region17: #{nystromformer2d_forward.2} parent=11 // pred_check
        %p385 = pneg %p89
      $region18: #{nystromformer2d_forward.2} parent=11 // pred_check_branch
        %387 = sbr.rel (%p385) target = $region20
      $region19: #{nystromformer2d_forward.2} parent=11 // pred_region
        _
      $region20: #{nystromformer2d_forward.2} parent=11 // pred_fallthru
        _
      // Predicated region
      $region21: #{nystromformer2d_forward.2} parent=11 // pred_check
        %p388 = pneg %p110
      $region22: #{nystromformer2d_forward.2} parent=11 // pred_check_branch
        %390 = sbr.rel (%p388) target = $region24
      $region23: #{nystromformer2d_forward.2} parent=11 // pred_region
        _
      $region24: #{nystromformer2d_forward.2} parent=11 // pred_fallthru
        _
      // Predicated region
      $region25: #{nystromformer2d_forward.2} parent=11 // pred_check
        %p391 = pneg %p131
      $region26: #{nystromformer2d_forward.2} parent=11 // pred_check_branch
        %393 = sbr.rel (%p391) target = $region28
      $region27: #{nystromformer2d_forward.2} parent=11 // pred_region
        _
      $region28: #{nystromformer2d_forward.2} parent=11 // pred_fallthru
        _
      // Predicated region
      $region29: #{nystromformer2d_forward.2} parent=11 // pred_check
        %p394 = pneg %p152
      $region30: #{nystromformer2d_forward.2} parent=11 // pred_check_branch
        %396 = sbr.rel (%p394) target = $region32
      $region31: #{nystromformer2d_forward.2} parent=11 // pred_region
        _
      $region32: #{nystromformer2d_forward.2} parent=11 // pred_fallthru
        _
      // Predicated region
      $region33: #{nystromformer2d_forward.2} parent=11 // pred_check
        %p397 = pneg %p173
      $region34: #{nystromformer2d_forward.2} parent=11 // pred_check_branch
        %399 = sbr.rel (%p397) target = $region36
      $region35: #{nystromformer2d_forward.2} parent=11 // pred_region
        _
      $region36: #{nystromformer2d_forward.2} parent=11 // pred_fallthru
        _
      // Predicated region
      $region37: #{nystromformer2d_forward.2} parent=11 // pred_check
        %p400 = pneg %p194
      $region38: #{nystromformer2d_forward.2} parent=11 // pred_check_branch
        %402 = sbr.rel (%p400) target = $region40
      $region39: #{nystromformer2d_forward.2} parent=11 // pred_region
        _
      $region40: #{nystromformer2d_forward.2} parent=11 // pred_fallthru
        _
      // Predicated region
      $region41: #{nystromformer2d_forward.2} parent=11 // pred_check
        %p403 = pneg %p215
      $region42: #{nystromformer2d_forward.2} parent=11 // pred_check_branch
        %405 = sbr.rel (%p403) target = $region44
      $region43: #{nystromformer2d_forward.2} parent=11 // pred_region
        _
      $region44: #{nystromformer2d_forward.2} parent=11 // pred_fallthru
        _
      // Predicated region
      $region45: #{nystromformer2d_forward.2} parent=11 // pred_check
        %p406 = pneg %p236
      $region46: #{nystromformer2d_forward.2} parent=11 // pred_check_branch
        %408 = sbr.rel (%p406) target = $region48
      $region47: #{nystromformer2d_forward.2} parent=11 // pred_region
        _
      $region48: #{nystromformer2d_forward.2} parent=11 // pred_fallthru
        _
      // Predicated region
      $region49: #{nystromformer2d_forward.2} parent=11 // pred_check
        %p409 = pneg %p257
      $region50: #{nystromformer2d_forward.2} parent=11 // pred_check_branch
        %411 = sbr.rel (%p409) target = $region52
      $region51: #{nystromformer2d_forward.2} parent=11 // pred_region
        _
      $region52: #{nystromformer2d_forward.2} parent=11 // pred_fallthru
        _
      // Predicated region
      $region53: #{nystromformer2d_forward.2} parent=11 // pred_check
        %p412 = pneg %p278
      $region54: #{nystromformer2d_forward.2} parent=11 // pred_check_branch
        %414 = sbr.rel (%p412) target = $region56
      $region55: #{nystromformer2d_forward.2} parent=11 // pred_region
        _
      $region56: #{nystromformer2d_forward.2} parent=11 // pred_fallthru
        _
      // Predicated region
      $region57: #{nystromformer2d_forward.2} parent=11 // pred_check
        %p415 = pneg %p299
      $region58: #{nystromformer2d_forward.2} parent=11 // pred_check_branch
        %417 = sbr.rel (%p415) target = $region60
      $region59: #{nystromformer2d_forward.2} parent=11 // pred_region
        _
      $region60: #{nystromformer2d_forward.2} parent=11 // pred_fallthru
        _
      // Predicated region
      $region61: #{nystromformer2d_forward.2} parent=11 // pred_check
        %p418 = pneg %p320
      $region62: #{nystromformer2d_forward.2} parent=11 // pred_check_branch
        %420 = sbr.rel (%p418) target = $region64
      $region63: #{nystromformer2d_forward.2} parent=11 // pred_region
        _
      $region64: #{nystromformer2d_forward.2} parent=11 // pred_fallthru
        _
      // Predicated region
      $region65: #{nystromformer2d_forward.2} parent=11 // pred_check
        %p421 = pneg %p341
      $region66: #{nystromformer2d_forward.2} parent=11 // pred_check_branch
        %423 = sbr.rel (%p421) target = $region68
      $region67: #{nystromformer2d_forward.2} parent=11 // pred_region
        _
      $region68: #{nystromformer2d_forward.2} parent=11 // pred_fallthru
        _
    $region12: #{nystromformer2d_forward.2} parent=5 // pred_fallthru
      _
    %p424 = scmp.lt.s32.totalorder %s21, 2
    // Predicated region
    $region69: #{nystromformer2d_forward.2} parent=5 // pred_check
      %p425 = pneg %p424
    $region70: #{nystromformer2d_forward.2} parent=5 // pred_check_branch
      %427 = sbr.rel (%p425) target = $region72
    $region71: #{nystromformer2d_forward.2} parent=5 // pred_region
      // Predicated region
      $region73: #{nystromformer2d_forward.2} parent=71 // pred_check
        %p428 = pneg %p41
      $region74: #{nystromformer2d_forward.2} parent=71 // pred_check_branch
        %430 = sbr.rel (%p428) target = $region76
      $region75: #{nystromformer2d_forward.2} parent=71 // pred_region
        %s431 = smul.u32 8, %s21
        %p432 = scmp.lt.s32.totalorder %s431, 15
        %s433 = scalar_select %p432, %s431, 15
        %s434 = smul.addr %s433, 8
        %s435 = scalar_lea.vmem %s0, %s434
        %s436 = smul.u32 8, %s21
      $region76: #{nystromformer2d_forward.2} parent=71 // pred_fallthru
        _
    $region72: #{nystromformer2d_forward.2} parent=5 // pred_fallthru
      _
    %p437 = scmp.le.s32.totalorder 1, %s21
    %p438 = scmp.lt.s32.totalorder %s21, 3
    %p439 = pnand %p437, %p438
    %p440 = pneg %p439
    // Predicated region
    $region77: #{nystromformer2d_forward.2} parent=5 // pred_check
      _
    $region78: #{nystromformer2d_forward.2} parent=5 // pred_check_branch
      %442 = sbr.rel (%p439) target = $region80
    $region79: #{nystromformer2d_forward.2} parent=5 // pred_region
      %s443 = ssub.s32 %s21, 1
      %s444 = smul.u32 8, %s26
      %p445 = scmp.lt.s32.totalorder %s444, 15
      %s446 = scalar_select %p445, %s444, 15
      %s447 = smul.addr %s446, 8
      %s448 = scalar_lea.vmem %s0, %s447
      %p449 = pneg %p47
      %p450 = pneg %p44
      %p451 = pneg %p68
      %p452 = pneg %p65
      %p453 = pneg %p89
      %p454 = pneg %p86
      %p455 = pneg %p110
      %p456 = pneg %p107
      %p457 = pneg %p131
      %p458 = pneg %p128
      %p459 = pneg %p152
      %p460 = pneg %p149
      %p461 = pneg %p173
      %p462 = pneg %p170
      %p463 = pneg %p194
      %p464 = pneg %p191
      %p465 = pneg %p215
      %p466 = pneg %p212
      %p467 = pneg %p236
      %p468 = pneg %p233
      %p469 = pneg %p257
      %p470 = pneg %p254
      %p471 = pneg %p278
      %p472 = pneg %p275
      %p473 = pneg %p299
      %p474 = pneg %p296
      %p475 = pneg %p320
      %p476 = pneg %p317
      %p477 = pneg %p341
      %p478 = pneg %p338
      %p479 = pneg %p367
      %p480 = pneg %p364
      %s481 = smul.u32 8, %s26
      %p482 = scmp.lt.s32.totalorder %s481, 15
      %s483 = scalar_select %p482, %s481, 15
      %s484 = smul.addr %s483, 8
      %s485 = scalar_lea.vmem %s15, %s484
      %s486 = smul.u32 8, %s26
      %p487 = scmp.lt.s32.totalorder %s486, 15
      %s488 = scalar_select %p487, %s486, 15
      %s489 = smul.addr %s488, 8
      %s490 = scalar_lea.vmem %s0, %s489
      %s491 = smul.u32 8, %s26
      %s492 = smul.u32 8, %s26
      %p493 = scmp.lt.s32.totalorder %s492, 15
      %s494 = scalar_select %p493, %s492, 15
      %s495 = smul.addr %s494, 8
      %s496 = scalar_lea.vmem %s15, %s495
      %s497 = smul.u32 8, %s26
      %v499 = vld [vmem:[%s490] sm:$0xff]
      %v500 = vld [vmem:[%s490 + $0x8] sm:$0xff]
      %v501 = vld [vmem:[%s490 + $0x10] sm:$0xff]
      %v502 = vld [vmem:[%s490 + $0x18] sm:$0xff]
      %v503 = vld [vmem:[%s490 + $0x20] sm:$0xff]
      %v504 = vld [vmem:[%s490 + $0x28] sm:$0xff]
      %v505 = vld [vmem:[%s490 + $0x30] sm:$0xff]
      %v506 = vld [vmem:[%s490 + $0x38] sm:$0xff]
      %v507 = vld [vmem:[%s1] sm:$0x1]
      %v508 = vld [vmem:[%s2] sm:$0x1]
      %vm509 = vcmask 261120
      %v510 = vsel %vm509, %v499, 0.0
      %511 = vadd.xlane.f32.xlu0 %v510
      %v512 = vpop.xlane.xlu0 %511
      %v513 = vsel %vm509, %v500, 0.0
      %514 = vadd.xlane.f32.xlu0 %v513
      %v515 = vpop.xlane.xlu0 %514
      %v516 = vsel %vm509, %v501, 0.0
      %517 = vadd.xlane.f32.xlu0 %v516
      %v518 = vpop.xlane.xlu0 %517
      %v519 = vsel %vm509, %v502, 0.0
      %520 = vadd.xlane.f32.xlu0 %v519
      %v521 = vpop.xlane.xlu0 %520
      %v522 = vsel %vm509, %v503, 0.0
      %523 = vadd.xlane.f32.xlu0 %v522
      %v524 = vpop.xlane.xlu0 %523
      %v525 = vsel %vm509, %v504, 0.0
      %526 = vadd.xlane.f32.xlu0 %v525
      %v527 = vpop.xlane.xlu0 %526
      %v528 = vsel %vm509, %v505, 0.0
      %529 = vadd.xlane.f32.xlu0 %v528
      %v530 = vpop.xlane.xlu0 %529
      %v531 = vsel %vm509, %v506, 0.0
      %532 = vadd.xlane.f32.xlu0 %v531
      %v533 = vpop.xlane.xlu0 %532
      %v534 = vrcp.pop 32.0
      %v535 = vmul.f32 %v512, %v534
      %v536 = vmul.f32 %v515, %v534
      %v537 = vmul.f32 %v518, %v534
      %v538 = vmul.f32 %v521, %v534
      %v539 = vmul.f32 %v524, %v534
      %v540 = vmul.f32 %v527, %v534
      %v541 = vmul.f32 %v530, %v534
      %v542 = vmul.f32 %v533, %v534
      %v543 = vsub.f32 %v499, %v535
      %v544 = vsub.f32 %v500, %v536
      %v545 = vsub.f32 %v501, %v537
      %v546 = vsub.f32 %v502, %v538
      %v547 = vsub.f32 %v503, %v539
      %v548 = vsub.f32 %v504, %v540
      %v549 = vsub.f32 %v505, %v541
      %v550 = vsub.f32 %v506, %v542
      %v551 = vmul.f32 %v543, %v543
      %v552 = vmul.f32 %v544, %v544
      %v553 = vmul.f32 %v545, %v545
      %v554 = vmul.f32 %v546, %v546
      %v555 = vmul.f32 %v547, %v547
      %v556 = vmul.f32 %v548, %v548
      %v557 = vmul.f32 %v549, %v549
      %v558 = vmul.f32 %v550, %v550
      %v559 = vsel %vm509, %v551, 0.0
      %560 = vadd.xlane.f32.xlu0 %v559
      %v561 = vpop.xlane.xlu0 %560
      %v562 = vsel %vm509, %v552, 0.0
      %563 = vadd.xlane.f32.xlu0 %v562
      %v564 = vpop.xlane.xlu0 %563
      %v565 = vsel %vm509, %v553, 0.0
      %566 = vadd.xlane.f32.xlu0 %v565
      %v567 = vpop.xlane.xlu0 %566
      %v568 = vsel %vm509, %v554, 0.0
      %569 = vadd.xlane.f32.xlu0 %v568
      %v570 = vpop.xlane.xlu0 %569
      %v571 = vsel %vm509, %v555, 0.0
      %572 = vadd.xlane.f32.xlu0 %v571
      %v573 = vpop.xlane.xlu0 %572
      %v574 = vsel %vm509, %v556, 0.0
      %575 = vadd.xlane.f32.xlu0 %v574
      %v576 = vpop.xlane.xlu0 %575
      %v577 = vsel %vm509, %v557, 0.0
      %578 = vadd.xlane.f32.xlu0 %v577
      %v579 = vpop.xlane.xlu0 %578
      %v580 = vsel %vm509, %v558, 0.0
      %581 = vadd.xlane.f32.xlu0 %v580
      %v582 = vpop.xlane.xlu0 %581
      %v583 = vmul.f32 %v561, %v534
      %v584 = vmul.f32 %v564, %v534
      %v585 = vmul.f32 %v567, %v534
      %v586 = vmul.f32 %v570, %v534
      %v587 = vmul.f32 %v573, %v534
      %v588 = vmul.f32 %v576, %v534
      %v589 = vmul.f32 %v579, %v534
      %v590 = vmul.f32 %v582, %v534
      %v591 = vadd.f32 %v583, 1e-05
      %v592 = vadd.f32 %v584, 1e-05
      %v593 = vadd.f32 %v585, 1e-05
      %v594 = vadd.f32 %v586, 1e-05
      %v595 = vadd.f32 %v587, 1e-05
      %v596 = vadd.f32 %v588, 1e-05
      %v597 = vadd.f32 %v589, 1e-05
      %v598 = vadd.f32 %v590, 1e-05
      %v599 = vrsqrt.pop %v591
      %v600 = vrsqrt.pop %v592
      %v601 = vrsqrt.pop %v593
      %v602 = vrsqrt.pop %v594
      %v603 = vrsqrt.pop %v595
      %v604 = vrsqrt.pop %v596
      %v605 = vrsqrt.pop %v597
      %v606 = vrsqrt.pop %v598
      %v607 = vmul.f32 %v543, %v599
      %v608 = vmul.f32 %v544, %v600
      %v609 = vmul.f32 %v545, %v601
      %v610 = vmul.f32 %v546, %v602
      %v611 = vmul.f32 %v547, %v603
      %v612 = vmul.f32 %v548, %v604
      %v613 = vmul.f32 %v549, %v605
      %v614 = vmul.f32 %v550, %v606
      %v616 = vlaneseq
      %v617 = vshrl.u32 %v616, 7
      %v618 = vsub.s32 0, %v617
      %v619 = vrot.slane %v507, %v618
      %v621 = vmul.f32 %v607, %v619
      %v622 = vmul.f32 %v608, %v619
      %v623 = vmul.f32 %v609, %v619
      %v624 = vmul.f32 %v610, %v619
      %v625 = vmul.f32 %v611, %v619
      %v626 = vmul.f32 %v612, %v619
      %v627 = vmul.f32 %v613, %v619
      %v628 = vmul.f32 %v614, %v619
      %v630 = vlaneseq
      %v631 = vshrl.u32 %v630, 7
      %v632 = vsub.s32 0, %v631
      %v633 = vrot.slane %v508, %v632
      %v635 = vadd.f32 %v621, %v633
      %v636 = vadd.f32 %v622, %v633
      %v637 = vadd.f32 %v623, %v633
      %v638 = vadd.f32 %v624, %v633
      %v639 = vadd.f32 %v625, %v633
      %v640 = vadd.f32 %v626, %v633
      %v641 = vadd.f32 %v627, %v633
      %v642 = vadd.f32 %v628, %v633
      %v643 = vpack.c.bf16 %v636, %v635
      %v644 = vpack.c.bf16 %v638, %v637
      %v645 = vpack.c.bf16 %v640, %v639
      %v646 = vpack.c.bf16 %v642, %v641
      %v647 = vld [vmem:[%s3] sm:$0xf]
      %v648 = vld [vmem:[%s3 + $0x4] sm:$0xf]
      %v649 = vld [vmem:[%s3 + $0x8] sm:$0xf]
      %v650 = vld [vmem:[%s3 + $0xc] sm:$0xf]
      %v655 = vunpack.c.l.b16 %v647
      %v656 = vunpack.c.l.b16 %v648
      %v657 = vunpack.c.l.b16 %v649
      %v658 = vunpack.c.l.b16 %v650
      %v659 = vpack.c.b16 %v656, %v655
      %v660 = vpack.c.b16 %v658, %v657
      %v664 = vsel %vm509, %v643, 0
      %v667 = vsel %vm509, %v644, 0
      %v670 = vsel %vm509, %v645, 0
      %v673 = vsel %vm509, %v646, 0
      %675 = vmatprep.subr.bf16.mxu0 0
      %676 = vmatpush1.bf16.msra.mxu0 0
      %677 = vmatprep.subr.bf16.mxu0 0
      %678 = vmatpush1.bf16.msra.mxu0 0
      %679 = vmatprep.subr.bf16.mxu0 0
      %680 = vmatpush1.bf16.msra.mxu0 0
      %681 = vmatprep.subr.bf16.mxu0 0
      %682 = vmatpush1.bf16.msra.mxu0 0
      %683 = vmatprep.subr.bf16.mxu0 0
      %684 = vmatpush1.bf16.msra.mxu0 0
      %685 = vmatprep.subr.bf16.mxu0 0
      %686 = vmatpush1.bf16.msra.mxu0 0
      %687 = vmatprep.subr.bf16.mxu0 0
      %688 = vmatpush1.bf16.msra.mxu0 %v660
      %689 = vmatprep.subr.bf16.mxu0 0
      %690 = vmatpush1.bf16.msra.mxu0 %v659
      %691 = vmatprep.subr.bf16.mxu0 0
      %692 = vmatpush2.bf16.msra.mxu0 0
      %693 = vmatprep.subr.bf16.mxu0 0
      %694 = vmatpush2.bf16.msra.mxu0 0
      %695 = vmatprep.subr.bf16.mxu0 0
      %696 = vmatpush2.bf16.msra.mxu0 0
      %697 = vmatprep.subr.bf16.mxu0 0
      %698 = vmatpush2.bf16.msra.mxu0 0
      %699 = vmatprep.subr.bf16.mxu0 0
      %700 = vmatpush2.bf16.msra.mxu0 0
      %701 = vmatprep.subr.bf16.mxu0 0
      %702 = vmatpush2.bf16.msra.mxu0 0
      %703 = vmatprep.subr.bf16.mxu0 0
      %704 = vmatpush2.bf16.msra.mxu0 0
      %705 = vmatprep.subr.bf16.mxu0 0
      %706 = vmatpush2.bf16.msra.mxu0 0
      %707 = vmatprep.mubr.bf16.mxu0 0
      %708 = vmatmul.mubr.bf16.gmra.mxu0 %v664
      %v709 = vpop.f32.mrf.mxu0
      %v710 = vadd.f32 0.0, %v709
      %v711 = vpop.f32.mrf.mxu0
      %v712 = vpop.f32.mrf.mxu0
      %v713 = vadd.f32 0.0, %v712
      %v714 = vpop.f32.mrf.mxu0
      %715 = vmatprep.mubr.bf16.mxu0 0
      %716 = vmatmul.mubr.bf16.gmra.mxu0 %v667
      %v717 = vpop.f32.mrf.mxu0
      %v718 = vadd.f32 0.0, %v717
      %v719 = vpop.f32.mrf.mxu0
      %v720 = vpop.f32.mrf.mxu0
      %v721 = vadd.f32 0.0, %v720
      %v722 = vpop.f32.mrf.mxu0
      %723 = vmatprep.mubr.bf16.mxu0 0
      %724 = vmatmul.mubr.bf16.gmra.mxu0 %v670
      %v725 = vpop.f32.mrf.mxu0
      %v726 = vadd.f32 0.0, %v725
      %v727 = vpop.f32.mrf.mxu0
      %v728 = vpop.f32.mrf.mxu0
      %v729 = vadd.f32 0.0, %v728
      %v730 = vpop.f32.mrf.mxu0
      %731 = vmatprep.mubr.bf16.mxu0 0
      %732 = vmatmul.mubr.bf16.gmra.mxu0 %v673
      %v733 = vpop.f32.mrf.mxu0
      %v734 = vadd.f32 0.0, %v733
      %v735 = vpop.f32.mrf.mxu0
      %v736 = vpop.f32.mrf.mxu0
      %v737 = vadd.f32 0.0, %v736
      %v738 = vpop.f32.mrf.mxu0
      %739 = vdwg.mxu0
      %v740 = vld [vmem:[%s4] sm:$0xf]
      %v741 = vld [vmem:[%s4 + $0x4] sm:$0xf]
      %v742 = vld [vmem:[%s4 + $0x8] sm:$0xf]
      %v743 = vld [vmem:[%s4 + $0xc] sm:$0xf]
      %v748 = vunpack.c.l.b16 %v740
      %v749 = vunpack.c.l.b16 %v741
      %v750 = vunpack.c.l.b16 %v742
      %v751 = vunpack.c.l.b16 %v743
      %v752 = vpack.c.b16 %v749, %v748
      %v753 = vpack.c.b16 %v751, %v750
      %756 = vmatprep.subr.bf16.mxu0 0
      %757 = vmatpush1.bf16.msra.mxu0 0
      %758 = vmatprep.subr.bf16.mxu0 0
      %759 = vmatpush1.bf16.msra.mxu0 0
      %760 = vmatprep.subr.bf16.mxu0 0
      %761 = vmatpush1.bf16.msra.mxu0 0
      %762 = vmatprep.subr.bf16.mxu0 0
      %763 = vmatpush1.bf16.msra.mxu0 0
      %764 = vmatprep.subr.bf16.mxu0 0
      %765 = vmatpush1.bf16.msra.mxu0 0
      %766 = vmatprep.subr.bf16.mxu0 0
      %767 = vmatpush1.bf16.msra.mxu0 0
      %768 = vmatprep.subr.bf16.mxu0 0
      %769 = vmatpush1.bf16.msra.mxu0 %v753
      %770 = vmatprep.subr.bf16.mxu0 0
      %771 = vmatpush1.bf16.msra.mxu0 %v752
      %772 = vmatprep.subr.bf16.mxu0 0
      %773 = vmatpush2.bf16.msra.mxu0 0
      %774 = vmatprep.subr.bf16.mxu0 0
      %775 = vmatpush2.bf16.msra.mxu0 0
      %776 = vmatprep.subr.bf16.mxu0 0
      %777 = vmatpush2.bf16.msra.mxu0 0
      %778 = vmatprep.subr.bf16.mxu0 0
      %779 = vmatpush2.bf16.msra.mxu0 0
      %780 = vmatprep.subr.bf16.mxu0 0
      %781 = vmatpush2.bf16.msra.mxu0 0
      %782 = vmatprep.subr.bf16.mxu0 0
      %783 = vmatpush2.bf16.msra.mxu0 0
      %784 = vmatprep.subr.bf16.mxu0 0
      %785 = vmatpush2.bf16.msra.mxu0 0
      %786 = vmatprep.subr.bf16.mxu0 0
      %787 = vmatpush2.bf16.msra.mxu0 0
      %788 = vmatprep.mubr.bf16.mxu0 0
      %789 = vmatmul.mubr.bf16.gmra.mxu0 %v664
      %v790 = vpop.f32.mrf.mxu0
      %v791 = vadd.f32 0.0, %v790
      %v792 = vpop.f32.mrf.mxu0
      %v793 = vpop.f32.mrf.mxu0
      %v794 = vadd.f32 0.0, %v793
      %v795 = vpop.f32.mrf.mxu0
      %796 = vmatprep.mubr.bf16.mxu0 0
      %797 = vmatmul.mubr.bf16.gmra.mxu0 %v667
      %v798 = vpop.f32.mrf.mxu0
      %v799 = vadd.f32 0.0, %v798
      %v800 = vpop.f32.mrf.mxu0
      %v801 = vpop.f32.mrf.mxu0
      %v802 = vadd.f32 0.0, %v801
      %v803 = vpop.f32.mrf.mxu0
      %804 = vmatprep.mubr.bf16.mxu0 0
      %805 = vmatmul.mubr.bf16.gmra.mxu0 %v670
      %v806 = vpop.f32.mrf.mxu0
      %v807 = vadd.f32 0.0, %v806
      %v808 = vpop.f32.mrf.mxu0
      %v809 = vpop.f32.mrf.mxu0
      %v810 = vadd.f32 0.0, %v809
      %v811 = vpop.f32.mrf.mxu0
      %812 = vmatprep.mubr.bf16.mxu0 0
      %813 = vmatmul.mubr.bf16.gmra.mxu0 %v673
      %v814 = vpop.f32.mrf.mxu0
      %v815 = vadd.f32 0.0, %v814
      %v816 = vpop.f32.mrf.mxu0
      %v817 = vpop.f32.mrf.mxu0
      %v818 = vadd.f32 0.0, %v817
      %v819 = vpop.f32.mrf.mxu0
      %820 = vdwg.mxu0
      %v821 = vld [vmem:[%s5] sm:$0xf]
      %v822 = vld [vmem:[%s5 + $0x4] sm:$0xf]
      %v823 = vld [vmem:[%s5 + $0x8] sm:$0xf]
      %v824 = vld [vmem:[%s5 + $0xc] sm:$0xf]
      %v829 = vunpack.c.l.b16 %v821
      %v830 = vunpack.c.l.b16 %v822
      %v831 = vunpack.c.l.b16 %v823
      %v832 = vunpack.c.l.b16 %v824
      %v833 = vpack.c.b16 %v830, %v829
      %v834 = vpack.c.b16 %v832, %v831
      %837 = vmatprep.subr.bf16.mxu0 0
      %838 = vmatpush1.bf16.msra.mxu0 0
      %839 = vmatprep.subr.bf16.mxu0 0
      %840 = vmatpush1.bf16.msra.mxu0 0
      %841 = vmatprep.subr.bf16.mxu0 0
      %842 = vmatpush1.bf16.msra.mxu0 0
      %843 = vmatprep.subr.bf16.mxu0 0
      %844 = vmatpush1.bf16.msra.mxu0 0
      %845 = vmatprep.subr.bf16.mxu0 0
      %846 = vmatpush1.bf16.msra.mxu0 0
      %847 = vmatprep.subr.bf16.mxu0 0
      %848 = vmatpush1.bf16.msra.mxu0 0
      %849 = vmatprep.subr.bf16.mxu0 0
      %850 = vmatpush1.bf16.msra.mxu0 %v834
      %851 = vmatprep.subr.bf16.mxu0 0
      %852 = vmatpush1.bf16.msra.mxu0 %v833
      %853 = vmatprep.subr.bf16.mxu0 0
      %854 = vmatpush2.bf16.msra.mxu0 0
      %855 = vmatprep.subr.bf16.mxu0 0
      %856 = vmatpush2.bf16.msra.mxu0 0
      %857 = vmatprep.subr.bf16.mxu0 0
      %858 = vmatpush2.bf16.msra.mxu0 0
      %859 = vmatprep.subr.bf16.mxu0 0
      %860 = vmatpush2.bf16.msra.mxu0 0
      %861 = vmatprep.subr.bf16.mxu0 0
      %862 = vmatpush2.bf16.msra.mxu0 0
      %863 = vmatprep.subr.bf16.mxu0 0
      %864 = vmatpush2.bf16.msra.mxu0 0
      %865 = vmatprep.subr.bf16.mxu0 0
      %866 = vmatpush2.bf16.msra.mxu0 0
      %867 = vmatprep.subr.bf16.mxu0 0
      %868 = vmatpush2.bf16.msra.mxu0 0
      %869 = vmatprep.mubr.bf16.mxu0 0
      %870 = vmatmul.mubr.bf16.gmra.mxu0 %v664
      %v871 = vpop.f32.mrf.mxu0
      %v872 = vadd.f32 0.0, %v871
      %v873 = vpop.f32.mrf.mxu0
      %v874 = vpop.f32.mrf.mxu0
      %v875 = vadd.f32 0.0, %v874
      %v876 = vpop.f32.mrf.mxu0
      %877 = vmatprep.mubr.bf16.mxu0 0
      %878 = vmatmul.mubr.bf16.gmra.mxu0 %v667
      %v879 = vpop.f32.mrf.mxu0
      %v880 = vadd.f32 0.0, %v879
      %v881 = vpop.f32.mrf.mxu0
      %v882 = vpop.f32.mrf.mxu0
      %v883 = vadd.f32 0.0, %v882
      %v884 = vpop.f32.mrf.mxu0
      %885 = vmatprep.mubr.bf16.mxu0 0
      %886 = vmatmul.mubr.bf16.gmra.mxu0 %v670
      %v887 = vpop.f32.mrf.mxu0
      %v888 = vadd.f32 0.0, %v887
      %v889 = vpop.f32.mrf.mxu0
      %v890 = vpop.f32.mrf.mxu0
      %v891 = vadd.f32 0.0, %v890
      %v892 = vpop.f32.mrf.mxu0
      %893 = vmatprep.mubr.bf16.mxu0 0
      %894 = vmatmul.mubr.bf16.gmra.mxu0 %v673
      %v895 = vpop.f32.mrf.mxu0
      %v896 = vadd.f32 0.0, %v895
      %v897 = vpop.f32.mrf.mxu0
      %v898 = vpop.f32.mrf.mxu0
      %v899 = vadd.f32 0.0, %v898
      %v900 = vpop.f32.mrf.mxu0
      %901 = vdwg.mxu0
      %v902 = vlaneseq
      %v903 = vshrl.u32 %v902, 7
      %v904 = vadd.s32 %v903, 8
      %v905 = vlaneseq
      %v906 = vand.u32 %v905, 127
      %v907 = vmul.u32 %v903, 4
      %v908 = vmul.u32 %v904, 4
      %vm909 = vcmp.ge.s32.totalorder %v906, %v907
      %vm910 = vcmp.ge.s32.totalorder %v906, %v908
      %v911 = vadd.s32 %v903, 1
      %v912 = vadd.s32 %v904, 1
      %v913 = vmul.u32 %v911, 4
      %v914 = vmul.u32 %v912, 4
      %vm915 = vcmp.lt.s32.totalorder %v906, %v913
      %vm916 = vcmp.lt.s32.totalorder %v906, %v914
      %vm917 = vmand %vm909, %vm915
      %vm918 = vmand %vm910, %vm916
      %v919 = vsel %vm917, 0.25, 0.0
      %v920 = vsel %vm918, 0.25, 0.0
      %v921 = vpack.c.bf16 %v920, %v919
      %v922 = vpack.c.bf16 %v713, %v710
      %v923 = vpack.c.bf16 %v721, %v718
      %v924 = vpack.c.bf16 %v729, %v726
      %v925 = vpack.c.bf16 %v737, %v734
      %vm926 = vcmask 523264
      %v928 = vsel %vm926, %v921, 0
      %930 = vmatprep.subr.bf16.mxu0 0
      %931 = vmatpush1.bf16.msra.mxu0 0
      %932 = vmatprep.subr.bf16.mxu0 0
      %933 = vmatpush1.bf16.msra.mxu0 0
      %934 = vmatprep.subr.bf16.mxu0 0
      %935 = vmatpush1.bf16.msra.mxu0 0
      %936 = vmatprep.subr.bf16.mxu0 0
      %937 = vmatpush1.bf16.msra.mxu0 0
      %938 = vmatprep.subr.bf16.mxu0 0
      %939 = vmatpush1.bf16.msra.mxu0 %v925
      %940 = vmatprep.subr.bf16.mxu0 0
      %941 = vmatpush1.bf16.msra.mxu0 %v924
      %942 = vmatprep.subr.bf16.mxu0 0
      %943 = vmatpush1.bf16.msra.mxu0 %v923
      %944 = vmatprep.subr.bf16.mxu0 0
      %945 = vmatpush1.bf16.msra.mxu0 %v922
      %946 = vmatprep.subr.bf16.mxu0 0
      %947 = vmatpush2.bf16.msra.mxu0 0
      %948 = vmatprep.subr.bf16.mxu0 0
      %949 = vmatpush2.bf16.msra.mxu0 0
      %950 = vmatprep.subr.bf16.mxu0 0
      %951 = vmatpush2.bf16.msra.mxu0 0
      %952 = vmatprep.subr.bf16.mxu0 0
      %953 = vmatpush2.bf16.msra.mxu0 0
      %954 = vmatprep.subr.bf16.mxu0 0
      %955 = vmatpush2.bf16.msra.mxu0 0
      %956 = vmatprep.subr.bf16.mxu0 0
      %957 = vmatpush2.bf16.msra.mxu0 0
      %958 = vmatprep.subr.bf16.mxu0 0
      %959 = vmatpush2.bf16.msra.mxu0 0
      %960 = vmatprep.subr.bf16.mxu0 0
      %961 = vmatpush2.bf16.msra.mxu0 0
      %962 = vmatprep.mubr.bf16.mxu0 0
      %963 = vmatmul.mubr.bf16.gmra.mxu0 %v928
      %v964 = vpop.f32.mrf.mxu0
      %v965 = vadd.f32 0.0, %v964
      %v966 = vpop.f32.mrf.mxu0
      %v967 = vpop.f32.mrf.mxu0
      %v968 = vadd.f32 0.0, %v967
      %v969 = vpop.f32.mrf.mxu0
      %970 = vdwg.mxu0
      %v971 = vpack.c.bf16 %v794, %v791
      %v972 = vpack.c.bf16 %v802, %v799
      %v973 = vpack.c.bf16 %v810, %v807
      %v974 = vpack.c.bf16 %v818, %v815
      %975 = vmatprep.subr.bf16.mxu0 0
      %976 = vmatpush1.bf16.msra.mxu0 0
      %977 = vmatprep.subr.bf16.mxu0 0
      %978 = vmatpush1.bf16.msra.mxu0 0
      %979 = vmatprep.subr.bf16.mxu0 0
      %980 = vmatpush1.bf16.msra.mxu0 0
      %981 = vmatprep.subr.bf16.mxu0 0
      %982 = vmatpush1.bf16.msra.mxu0 0
      %983 = vmatprep.subr.bf16.mxu0 0
      %984 = vmatpush1.bf16.msra.mxu0 %v974
      %985 = vmatprep.subr.bf16.mxu0 0
      %986 = vmatpush1.bf16.msra.mxu0 %v973
      %987 = vmatprep.subr.bf16.mxu0 0
      %988 = vmatpush1.bf16.msra.mxu0 %v972
      %989 = vmatprep.subr.bf16.mxu0 0
      %990 = vmatpush1.bf16.msra.mxu0 %v971
      %991 = vmatprep.subr.bf16.mxu0 0
      %992 = vmatpush2.bf16.msra.mxu0 0
      %993 = vmatprep.subr.bf16.mxu0 0
      %994 = vmatpush2.bf16.msra.mxu0 0
      %995 = vmatprep.subr.bf16.mxu0 0
      %996 = vmatpush2.bf16.msra.mxu0 0
      %997 = vmatprep.subr.bf16.mxu0 0
      %998 = vmatpush2.bf16.msra.mxu0 0
      %999 = vmatprep.subr.bf16.mxu0 0
      %1000 = vmatpush2.bf16.msra.mxu0 0
      %1001 = vmatprep.subr.bf16.mxu0 0
      %1002 = vmatpush2.bf16.msra.mxu0 0
      %1003 = vmatprep.subr.bf16.mxu0 0
      %1004 = vmatpush2.bf16.msra.mxu0 0
      %1005 = vmatprep.subr.bf16.mxu0 0
      %1006 = vmatpush2.bf16.msra.mxu0 0
      %1007 = vmatprep.mubr.bf16.mxu0 0
      %1008 = vmatmul.mubr.bf16.gmra.mxu0 %v928
      %v1009 = vpop.f32.mrf.mxu0
      %v1010 = vadd.f32 0.0, %v1009
      %v1011 = vpop.f32.mrf.mxu0
      %v1012 = vpop.f32.mrf.mxu0
      %v1013 = vadd.f32 0.0, %v1012
      %v1014 = vpop.f32.mrf.mxu0
      %1015 = vdwg.mxu0
      %v1016 = vpack.c.bf16 %v1013, %v1010
      %vm1017 = vcmask 64512
      %v1019 = vsel %vm1017, %v922, 0
      %v1022 = vsel %vm1017, %v923, 0
      %v1025 = vsel %vm1017, %v924, 0
      %v1028 = vsel %vm1017, %v925, 0
      %v1031 = vsel %vm1017, %v1016, 0
      %1033 = vmatprep.subr.bf16.mxu0 0
      %1034 = vmatpush1.bf16.xpose.msra.mxu0 0
      %1035 = vmatprep.subr.bf16.mxu0 0
      %1036 = vmatpush1.bf16.xpose.msra.mxu0 0
      %1037 = vmatprep.subr.bf16.mxu0 0
      %1038 = vmatpush1.bf16.xpose.msra.mxu0 0
      %1039 = vmatprep.subr.bf16.mxu0 0
      %1040 = vmatpush1.bf16.xpose.msra.mxu0 0
      %1041 = vmatprep.subr.bf16.mxu0 0
      %1042 = vmatpush1.bf16.xpose.msra.mxu0 0
      %1043 = vmatprep.subr.bf16.mxu0 0
      %1044 = vmatpush1.bf16.xpose.msra.mxu0 0
      %1045 = vmatprep.subr.bf16.mxu0 0
      %1046 = vmatpush1.bf16.xpose.msra.mxu0 0
      %1047 = vmatprep.subr.bf16.mxu0 0
      %1048 = vmatpush1.bf16.xpose.msra.mxu0 %v1031
      %1049 = vmatprep.subr.bf16.mxu0 0
      %1050 = vmatpush2.bf16.xpose.msra.mxu0 0
      %1051 = vmatprep.subr.bf16.mxu0 0
      %1052 = vmatpush2.bf16.xpose.msra.mxu0 0
      %1053 = vmatprep.subr.bf16.mxu0 0
      %1054 = vmatpush2.bf16.xpose.msra.mxu0 0
      %1055 = vmatprep.subr.bf16.mxu0 0
      %1056 = vmatpush2.bf16.xpose.msra.mxu0 0
      %1057 = vmatprep.subr.bf16.mxu0 0
      %1058 = vmatpush2.bf16.xpose.msra.mxu0 0
      %1059 = vmatprep.subr.bf16.mxu0 0
      %1060 = vmatpush2.bf16.xpose.msra.mxu0 0
      %1061 = vmatprep.subr.bf16.mxu0 0
      %1062 = vmatpush2.bf16.xpose.msra.mxu0 0
      %1063 = vmatprep.subr.bf16.mxu0 0
      %1064 = vmatpush2.bf16.xpose.msra.mxu0 0
      %1065 = vmatprep.mubr.bf16.mxu0 0
      %1066 = vmatmul.mubr.bf16.gmra.mxu0 %v1019
      %v1067 = vpop.f32.mrf.mxu0
      %v1068 = vadd.f32 0.0, %v1067
      %v1069 = vpop.f32.mrf.mxu0
      %v1070 = vpop.f32.mrf.mxu0
      %v1071 = vadd.f32 0.0, %v1070
      %v1072 = vpop.f32.mrf.mxu0
      %1073 = vmatprep.mubr.bf16.mxu0 0
      %1074 = vmatmul.mubr.bf16.gmra.mxu0 %v1022
      %v1075 = vpop.f32.mrf.mxu0
      %v1076 = vadd.f32 0.0, %v1075
      %v1077 = vpop.f32.mrf.mxu0
      %v1078 = vpop.f32.mrf.mxu0
      %v1079 = vadd.f32 0.0, %v1078
      %v1080 = vpop.f32.mrf.mxu0
      %1081 = vmatprep.mubr.bf16.mxu0 0
      %1082 = vmatmul.mubr.bf16.gmra.mxu0 %v1025
      %v1083 = vpop.f32.mrf.mxu0
      %v1084 = vadd.f32 0.0, %v1083
      %v1085 = vpop.f32.mrf.mxu0
      %v1086 = vpop.f32.mrf.mxu0
      %v1087 = vadd.f32 0.0, %v1086
      %v1088 = vpop.f32.mrf.mxu0
      %1089 = vmatprep.mubr.bf16.mxu0 0
      %1090 = vmatmul.mubr.bf16.gmra.mxu0 %v1028
      %v1091 = vpop.f32.mrf.mxu0
      %v1092 = vadd.f32 0.0, %v1091
      %v1093 = vpop.f32.mrf.mxu0
      %v1094 = vpop.f32.mrf.mxu0
      %v1095 = vadd.f32 0.0, %v1094
      %v1096 = vpop.f32.mrf.mxu0
      %1097 = vdwg.mxu0
      %vm1098 = vcmask 130048
      %v1099 = vsel %vm1098, %v1068, -inf
      %1100 = vmax.xlane.f32.xlu0 %v1099
      %v1101 = vpop.xlane.xlu0 %1100
      %v1102 = vsel %vm1098, %v1071, -inf
      %1103 = vmax.xlane.f32.xlu0 %v1102
      %v1104 = vpop.xlane.xlu0 %1103
      %v1105 = vsel %vm1098, %v1076, -inf
      %1106 = vmax.xlane.f32.xlu0 %v1105
      %v1107 = vpop.xlane.xlu0 %1106
      %v1108 = vsel %vm1098, %v1079, -inf
      %1109 = vmax.xlane.f32.xlu0 %v1108
      %v1110 = vpop.xlane.xlu0 %1109
      %v1111 = vsel %vm1098, %v1084, -inf
      %1112 = vmax.xlane.f32.xlu0 %v1111
      %v1113 = vpop.xlane.xlu0 %1112
      %v1114 = vsel %vm1098, %v1087, -inf
      %1115 = vmax.xlane.f32.xlu0 %v1114
      %v1116 = vpop.xlane.xlu0 %1115
      %v1117 = vsel %vm1098, %v1092, -inf
      %1118 = vmax.xlane.f32.xlu0 %v1117
      %v1119 = vpop.xlane.xlu0 %1118
      %v1120 = vsel %vm1098, %v1095, -inf
      %1121 = vmax.xlane.f32.xlu0 %v1120
      %v1122 = vpop.xlane.xlu0 %1121
      %v1123 = vsub.f32 %v1068, %v1101
      %v1124 = vsub.f32 %v1071, %v1104
      %v1125 = vsub.f32 %v1076, %v1107
      %v1126 = vsub.f32 %v1079, %v1110
      %v1127 = vsub.f32 %v1084, %v1113
      %v1128 = vsub.f32 %v1087, %v1116
      %v1129 = vsub.f32 %v1092, %v1119
      %v1130 = vsub.f32 %v1095, %v1122
      %v1131 = vmul.f32 %v1123, 1.442695
      %v1132 = vpow.pop %v1131
      %v1133 = vmul.f32 %v1124, 1.442695
      %v1134 = vpow.pop %v1133
      %v1135 = vmul.f32 %v1125, 1.442695
      %v1136 = vpow.pop %v1135
      %v1137 = vmul.f32 %v1126, 1.442695
      %v1138 = vpow.pop %v1137
      %v1139 = vmul.f32 %v1127, 1.442695
      %v1140 = vpow.pop %v1139
      %v1141 = vmul.f32 %v1128, 1.442695
      %v1142 = vpow.pop %v1141
      %v1143 = vmul.f32 %v1129, 1.442695
      %v1144 = vpow.pop %v1143
      %v1145 = vmul.f32 %v1130, 1.442695
      %v1146 = vpow.pop %v1145
      %v1147 = vsel %vm1098, %v1132, 0.0
      %1148 = vadd.xlane.f32.xlu0 %v1147
      %v1149 = vpop.xlane.xlu0 %1148
      %v1150 = vsel %vm1098, %v1134, 0.0
      %1151 = vadd.xlane.f32.xlu0 %v1150
      %v1152 = vpop.xlane.xlu0 %1151
      %v1153 = vsel %vm1098, %v1136, 0.0
      %1154 = vadd.xlane.f32.xlu0 %v1153
      %v1155 = vpop.xlane.xlu0 %1154
      %v1156 = vsel %vm1098, %v1138, 0.0
      %1157 = vadd.xlane.f32.xlu0 %v1156
      %v1158 = vpop.xlane.xlu0 %1157
      %v1159 = vsel %vm1098, %v1140, 0.0
      %1160 = vadd.xlane.f32.xlu0 %v1159
      %v1161 = vpop.xlane.xlu0 %1160
      %v1162 = vsel %vm1098, %v1142, 0.0
      %1163 = vadd.xlane.f32.xlu0 %v1162
      %v1164 = vpop.xlane.xlu0 %1163
      %v1165 = vsel %vm1098, %v1144, 0.0
      %1166 = vadd.xlane.f32.xlu0 %v1165
      %v1167 = vpop.xlane.xlu0 %1166
      %v1168 = vsel %vm1098, %v1146, 0.0
      %1169 = vadd.xlane.f32.xlu0 %v1168
      %v1170 = vpop.xlane.xlu0 %1169
      %v1171 = vrcp.pop %v1149
      %v1172 = vrcp.pop %v1152
      %v1173 = vrcp.pop %v1155
      %v1174 = vrcp.pop %v1158
      %v1175 = vrcp.pop %v1161
      %v1176 = vrcp.pop %v1164
      %v1177 = vrcp.pop %v1167
      %v1178 = vrcp.pop %v1170
      %v1179 = vmul.f32 %v1132, %v1171
      %v1180 = vmul.f32 %v1134, %v1172
      %v1181 = vmul.f32 %v1136, %v1173
      %v1182 = vmul.f32 %v1138, %v1174
      %v1183 = vmul.f32 %v1140, %v1175
      %v1184 = vmul.f32 %v1142, %v1176
      %v1185 = vmul.f32 %v1144, %v1177
      %v1186 = vmul.f32 %v1146, %v1178
      %v1187 = vpack.c.bf16 %v968, %v965
      %v1189 = vsel %vm1017, %v1187, 0
      %1191 = vmatprep.subr.bf16.mxu0 0
      %1192 = vmatpush1.bf16.xpose.msra.mxu0 0
      %1193 = vmatprep.subr.bf16.mxu0 0
      %1194 = vmatpush1.bf16.xpose.msra.mxu0 0
      %1195 = vmatprep.subr.bf16.mxu0 0
      %1196 = vmatpush1.bf16.xpose.msra.mxu0 0
      %1197 = vmatprep.subr.bf16.mxu0 0
      %1198 = vmatpush1.bf16.xpose.msra.mxu0 0
      %1199 = vmatprep.subr.bf16.mxu0 0
      %1200 = vmatpush1.bf16.xpose.msra.mxu0 0
      %1201 = vmatprep.subr.bf16.mxu0 0
      %1202 = vmatpush1.bf16.xpose.msra.mxu0 0
      %1203 = vmatprep.subr.bf16.mxu0 0
      %1204 = vmatpush1.bf16.xpose.msra.mxu0 0
      %1205 = vmatprep.subr.bf16.mxu0 0
      %1206 = vmatpush1.bf16.xpose.msra.mxu0 %v1031
      %1207 = vmatprep.subr.bf16.mxu0 0
      %1208 = vmatpush2.bf16.xpose.msra.mxu0 0
      %1209 = vmatprep.subr.bf16.mxu0 0
      %1210 = vmatpush2.bf16.xpose.msra.mxu0 0
      %1211 = vmatprep.subr.bf16.mxu0 0
      %1212 = vmatpush2.bf16.xpose.msra.mxu0 0
      %1213 = vmatprep.subr.bf16.mxu0 0
      %1214 = vmatpush2.bf16.xpose.msra.mxu0 0
      %1215 = vmatprep.subr.bf16.mxu0 0
      %1216 = vmatpush2.bf16.xpose.msra.mxu0 0
      %1217 = vmatprep.subr.bf16.mxu0 0
      %1218 = vmatpush2.bf16.xpose.msra.mxu0 0
      %1219 = vmatprep.subr.bf16.mxu0 0
      %1220 = vmatpush2.bf16.xpose.msra.mxu0 0
      %1221 = vmatprep.subr.bf16.mxu0 0
      %1222 = vmatpush2.bf16.xpose.msra.mxu0 0
      %1223 = vmatprep.mubr.bf16.mxu0 0
      %1224 = vmatmul.mubr.bf16.gmra.mxu0 %v1189
      %v1225 = vpop.f32.mrf.mxu0
      %v1226 = vadd.f32 0.0, %v1225
      %v1227 = vpop.f32.mrf.mxu0
      %v1228 = vpop.f32.mrf.mxu0
      %v1229 = vadd.f32 0.0, %v1228
      %v1230 = vpop.f32.mrf.mxu0
      %1231 = vdwg.mxu0
      %v1232 = vsel %vm1098, %v1226, -inf
      %1233 = vmax.xlane.f32.xlu0 %v1232
      %v1234 = vpop.xlane.xlu0 %1233
      %v1235 = vsel %vm1098, %v1229, -inf
      %1236 = vmax.xlane.f32.xlu0 %v1235
      %v1237 = vpop.xlane.xlu0 %1236
      %v1238 = vsub.f32 %v1226, %v1234
      %v1239 = vsub.f32 %v1229, %v1237
      %v1240 = vmul.f32 %v1238, 1.442695
      %v1241 = vpow.pop %v1240
      %v1242 = vmul.f32 %v1239, 1.442695
      %v1243 = vpow.pop %v1242
      %v1244 = vsel %vm1098, %v1241, 0.0
      %1245 = vadd.xlane.f32.xlu0 %v1244
      %v1246 = vpop.xlane.xlu0 %1245
      %v1247 = vsel %vm1098, %v1243, 0.0
      %1248 = vadd.xlane.f32.xlu0 %v1247
      %v1249 = vpop.xlane.xlu0 %1248
      %v1250 = vrcp.pop %v1246
      %v1251 = vrcp.pop %v1249
      %v1252 = vmul.f32 %v1241, %v1250
      %v1253 = vmul.f32 %v1243, %v1251
      %v1255 = vsel %vm1017, %v971, 0
      %v1258 = vsel %vm1017, %v972, 0
      %v1261 = vsel %vm1017, %v973, 0
      %v1264 = vsel %vm1017, %v974, 0
      %1266 = vmatprep.subr.bf16.mxu0 0
      %1267 = vmatpush1.bf16.xpose.msra.mxu0 0
      %1268 = vmatprep.subr.bf16.mxu0 0
      %1269 = vmatpush1.bf16.xpose.msra.mxu0 0
      %1270 = vmatprep.subr.bf16.mxu0 0
      %1271 = vmatpush1.bf16.xpose.msra.mxu0 0
      %1272 = vmatprep.subr.bf16.mxu0 0
      %1273 = vmatpush1.bf16.xpose.msra.mxu0 0
      %1274 = vmatprep.subr.bf16.mxu0 0
      %1275 = vmatpush1.bf16.xpose.msra.mxu0 %v1264
      %1276 = vmatprep.subr.bf16.mxu0 0
      %1277 = vmatpush1.bf16.xpose.msra.mxu0 %v1261
      %1278 = vmatprep.subr.bf16.mxu0 0
      %1279 = vmatpush1.bf16.xpose.msra.mxu0 %v1258
      %1280 = vmatprep.subr.bf16.mxu0 0
      %1281 = vmatpush1.bf16.xpose.msra.mxu0 %v1255
      %1282 = vmatprep.subr.bf16.mxu0 0
      %1283 = vmatpush2.bf16.xpose.msra.mxu0 0
      %1284 = vmatprep.subr.bf16.mxu0 0
      %1285 = vmatpush2.bf16.xpose.msra.mxu0 0
      %1286 = vmatprep.subr.bf16.mxu0 0
      %1287 = vmatpush2.bf16.xpose.msra.mxu0 0
      %1288 = vmatprep.subr.bf16.mxu0 0
      %1289 = vmatpush2.bf16.xpose.msra.mxu0 0
      %1290 = vmatprep.subr.bf16.mxu0 0
      %1291 = vmatpush2.bf16.xpose.msra.mxu0 0
      %1292 = vmatprep.subr.bf16.mxu0 0
      %1293 = vmatpush2.bf16.xpose.msra.mxu0 0
      %1294 = vmatprep.subr.bf16.mxu0 0
      %1295 = vmatpush2.bf16.xpose.msra.mxu0 0
      %1296 = vmatprep.subr.bf16.mxu0 0
      %1297 = vmatpush2.bf16.xpose.msra.mxu0 0
      %1298 = vmatprep.mubr.bf16.mxu0 0
      %1299 = vmatmul.mubr.bf16.gmra.mxu0 %v1189
      %v1300 = vpop.f32.mrf.mxu0
      %v1301 = vadd.f32 0.0, %v1300
      %v1302 = vpop.f32.mrf.mxu0
      %v1303 = vpop.f32.mrf.mxu0
      %v1304 = vadd.f32 0.0, %v1303
      %v1305 = vpop.f32.mrf.mxu0
      %1306 = vdwg.mxu0
      %v1307 = vsel %vm926, %v1301, -inf
      %1308 = vmax.xlane.f32.xlu0 %v1307
      %v1309 = vpop.xlane.xlu0 %1308
      %v1310 = vsel %vm926, %v1304, -inf
      %1311 = vmax.xlane.f32.xlu0 %v1310
      %v1312 = vpop.xlane.xlu0 %1311
      %v1313 = vsub.f32 %v1301, %v1309
      %v1314 = vsub.f32 %v1304, %v1312
      %v1315 = vmul.f32 %v1313, 1.442695
      %v1316 = vpow.pop %v1315
      %v1317 = vmul.f32 %v1314, 1.442695
      %v1318 = vpow.pop %v1317
      %v1319 = vsel %vm926, %v1316, 0.0
      %1320 = vadd.xlane.f32.xlu0 %v1319
      %v1321 = vpop.xlane.xlu0 %1320
      %v1322 = vsel %vm926, %v1318, 0.0
      %1323 = vadd.xlane.f32.xlu0 %v1322
      %v1324 = vpop.xlane.xlu0 %1323
      %v1325 = vrcp.pop %v1321
      %v1326 = vrcp.pop %v1324
      %v1327 = vmul.f32 %v1316, %v1325
      %v1328 = vmul.f32 %v1318, %v1326
      %v1329 = vpack.c.bf16 %v1328, %v1327
      %v1330 = vpack.c.bf16 %v875, %v872
      %v1331 = vpack.c.bf16 %v883, %v880
      %v1332 = vpack.c.bf16 %v891, %v888
      %v1333 = vpack.c.bf16 %v899, %v896
      %v1335 = vsel %vm926, %v1329, 0
      %1337 = vmatprep.subr.bf16.mxu0 0
      %1338 = vmatpush1.bf16.msra.mxu0 0
      %1339 = vmatprep.subr.bf16.mxu0 0
      %1340 = vmatpush1.bf16.msra.mxu0 0
      %1341 = vmatprep.subr.bf16.mxu0 0
      %1342 = vmatpush1.bf16.msra.mxu0 0
      %1343 = vmatprep.subr.bf16.mxu0 0
      %1344 = vmatpush1.bf16.msra.mxu0 0
      %1345 = vmatprep.subr.bf16.mxu0 0
      %1346 = vmatpush1.bf16.msra.mxu0 %v1333
      %1347 = vmatprep.subr.bf16.mxu0 0
      %1348 = vmatpush1.bf16.msra.mxu0 %v1332
      %1349 = vmatprep.subr.bf16.mxu0 0
      %1350 = vmatpush1.bf16.msra.mxu0 %v1331
      %1351 = vmatprep.subr.bf16.mxu0 0
      %1352 = vmatpush1.bf16.msra.mxu0 %v1330
      %1353 = vmatprep.subr.bf16.mxu0 0
      %1354 = vmatpush2.bf16.msra.mxu0 0
      %1355 = vmatprep.subr.bf16.mxu0 0
      %1356 = vmatpush2.bf16.msra.mxu0 0
      %1357 = vmatprep.subr.bf16.mxu0 0
      %1358 = vmatpush2.bf16.msra.mxu0 0
      %1359 = vmatprep.subr.bf16.mxu0 0
      %1360 = vmatpush2.bf16.msra.mxu0 0
      %1361 = vmatprep.subr.bf16.mxu0 0
      %1362 = vmatpush2.bf16.msra.mxu0 0
      %1363 = vmatprep.subr.bf16.mxu0 0
      %1364 = vmatpush2.bf16.msra.mxu0 0
      %1365 = vmatprep.subr.bf16.mxu0 0
      %1366 = vmatpush2.bf16.msra.mxu0 0
      %1367 = vmatprep.subr.bf16.mxu0 0
      %1368 = vmatpush2.bf16.msra.mxu0 0
      %1369 = vmatprep.mubr.bf16.mxu0 0
      %1370 = vmatmul.mubr.bf16.gmra.mxu0 %v1335
      %v1371 = vpop.f32.mrf.mxu0
      %v1372 = vadd.f32 0.0, %v1371
      %v1373 = vpop.f32.mrf.mxu0
      %v1374 = vpop.f32.mrf.mxu0
      %v1375 = vadd.f32 0.0, %v1374
      %v1376 = vpop.f32.mrf.mxu0
      %1377 = vdwg.mxu0
      %1382 = vrot.lane.b32.xlu0 %v922, 120
      %v1383 = vpop.permute.xlu0 %1382
      %1384 = vrot.lane.b32.xlu0 %v923, 120
      %v1385 = vpop.permute.xlu0 %1384
      %1386 = vrot.lane.b32.xlu0 %v924, 120
      %v1387 = vpop.permute.xlu0 %1386
      %1388 = vrot.lane.b32.xlu0 %v925, 120
      %v1389 = vpop.permute.xlu0 %1388
      %1391 = vrot.lane.b32.xlu0 %v1016, 120
      %v1392 = vpop.permute.xlu0 %1391
      %v1394 = vsel %vm1017, %v1383, 0
      %v1397 = vsel %vm1017, %v1385, 0
      %v1400 = vsel %vm1017, %v1387, 0
      %v1403 = vsel %vm1017, %v1389, 0
      %v1406 = vsel %vm1017, %v1392, 0
      %1408 = vmatprep.subr.bf16.mxu0 0
      %1409 = vmatpush1.bf16.xpose.msra.mxu0 0
      %1410 = vmatprep.subr.bf16.mxu0 0
      %1411 = vmatpush1.bf16.xpose.msra.mxu0 0
      %1412 = vmatprep.subr.bf16.mxu0 0
      %1413 = vmatpush1.bf16.xpose.msra.mxu0 0
      %1414 = vmatprep.subr.bf16.mxu0 0
      %1415 = vmatpush1.bf16.xpose.msra.mxu0 0
      %1416 = vmatprep.subr.bf16.mxu0 0
      %1417 = vmatpush1.bf16.xpose.msra.mxu0 0
      %1418 = vmatprep.subr.bf16.mxu0 0
      %1419 = vmatpush1.bf16.xpose.msra.mxu0 0
      %1420 = vmatprep.subr.bf16.mxu0 0
      %1421 = vmatpush1.bf16.xpose.msra.mxu0 0
      %1422 = vmatprep.subr.bf16.mxu0 0
      %1423 = vmatpush1.bf16.xpose.msra.mxu0 %v1406
      %1424 = vmatprep.subr.bf16.mxu0 0
      %1425 = vmatpush2.bf16.xpose.msra.mxu0 0
      %1426 = vmatprep.subr.bf16.mxu0 0
      %1427 = vmatpush2.bf16.xpose.msra.mxu0 0
      %1428 = vmatprep.subr.bf16.mxu0 0
      %1429 = vmatpush2.bf16.xpose.msra.mxu0 0
      %1430 = vmatprep.subr.bf16.mxu0 0
      %1431 = vmatpush2.bf16.xpose.msra.mxu0 0
      %1432 = vmatprep.subr.bf16.mxu0 0
      %1433 = vmatpush2.bf16.xpose.msra.mxu0 0
      %1434 = vmatprep.subr.bf16.mxu0 0
      %1435 = vmatpush2.bf16.xpose.msra.mxu0 0
      %1436 = vmatprep.subr.bf16.mxu0 0
      %1437 = vmatpush2.bf16.xpose.msra.mxu0 0
      %1438 = vmatprep.subr.bf16.mxu0 0
      %1439 = vmatpush2.bf16.xpose.msra.mxu0 0
      %1440 = vmatprep.mubr.bf16.mxu0 0
      %1441 = vmatmul.mubr.bf16.gmra.mxu0 %v1394
      %v1442 = vpop.f32.mrf.mxu0
      %v1443 = vadd.f32 0.0, %v1442
      %v1444 = vpop.f32.mrf.mxu0
      %v1445 = vpop.f32.mrf.mxu0
      %v1446 = vadd.f32 0.0, %v1445
      %v1447 = vpop.f32.mrf.mxu0
      %1448 = vmatprep.mubr.bf16.mxu0 0
      %1449 = vmatmul.mubr.bf16.gmra.mxu0 %v1397
      %v1450 = vpop.f32.mrf.mxu0
      %v1451 = vadd.f32 0.0, %v1450
      %v1452 = vpop.f32.mrf.mxu0
      %v1453 = vpop.f32.mrf.mxu0
      %v1454 = vadd.f32 0.0, %v1453
      %v1455 = vpop.f32.mrf.mxu0
      %1456 = vmatprep.mubr.bf16.mxu0 0
      %1457 = vmatmul.mubr.bf16.gmra.mxu0 %v1400
      %v1458 = vpop.f32.mrf.mxu0
      %v1459 = vadd.f32 0.0, %v1458
      %v1460 = vpop.f32.mrf.mxu0
      %v1461 = vpop.f32.mrf.mxu0
      %v1462 = vadd.f32 0.0, %v1461
      %v1463 = vpop.f32.mrf.mxu0
      %1464 = vmatprep.mubr.bf16.mxu0 0
      %1465 = vmatmul.mubr.bf16.gmra.mxu0 %v1403
      %v1466 = vpop.f32.mrf.mxu0
      %v1467 = vadd.f32 0.0, %v1466
      %v1468 = vpop.f32.mrf.mxu0
      %v1469 = vpop.f32.mrf.mxu0
      %v1470 = vadd.f32 0.0, %v1469
      %v1471 = vpop.f32.mrf.mxu0
      %1472 = vdwg.mxu0
      %v1473 = vsel %vm1098, %v1443, -inf
      %1474 = vmax.xlane.f32.xlu0 %v1473
      %v1475 = vpop.xlane.xlu0 %1474
      %v1476 = vsel %vm1098, %v1446, -inf
      %1477 = vmax.xlane.f32.xlu0 %v1476
      %v1478 = vpop.xlane.xlu0 %1477
      %v1479 = vsel %vm1098, %v1451, -inf
      %1480 = vmax.xlane.f32.xlu0 %v1479
      %v1481 = vpop.xlane.xlu0 %1480
      %v1482 = vsel %vm1098, %v1454, -inf
      %1483 = vmax.xlane.f32.xlu0 %v1482
      %v1484 = vpop.xlane.xlu0 %1483
      %v1485 = vsel %vm1098, %v1459, -inf
      %1486 = vmax.xlane.f32.xlu0 %v1485
      %v1487 = vpop.xlane.xlu0 %1486
      %v1488 = vsel %vm1098, %v1462, -inf
      %1489 = vmax.xlane.f32.xlu0 %v1488
      %v1490 = vpop.xlane.xlu0 %1489
      %v1491 = vsel %vm1098, %v1467, -inf
      %1492 = vmax.xlane.f32.xlu0 %v1491
      %v1493 = vpop.xlane.xlu0 %1492
      %v1494 = vsel %vm1098, %v1470, -inf
      %1495 = vmax.xlane.f32.xlu0 %v1494
      %v1496 = vpop.xlane.xlu0 %1495
      %v1497 = vsub.f32 %v1443, %v1475
      %v1498 = vsub.f32 %v1446, %v1478
      %v1499 = vsub.f32 %v1451, %v1481
      %v1500 = vsub.f32 %v1454, %v1484
      %v1501 = vsub.f32 %v1459, %v1487
      %v1502 = vsub.f32 %v1462, %v1490
      %v1503 = vsub.f32 %v1467, %v1493
      %v1504 = vsub.f32 %v1470, %v1496
      %v1505 = vmul.f32 %v1497, 1.442695
      %v1506 = vpow.pop %v1505
      %v1507 = vmul.f32 %v1498, 1.442695
      %v1508 = vpow.pop %v1507
      %v1509 = vmul.f32 %v1499, 1.442695
      %v1510 = vpow.pop %v1509
      %v1511 = vmul.f32 %v1500, 1.442695
      %v1512 = vpow.pop %v1511
      %v1513 = vmul.f32 %v1501, 1.442695
      %v1514 = vpow.pop %v1513
      %v1515 = vmul.f32 %v1502, 1.442695
      %v1516 = vpow.pop %v1515
      %v1517 = vmul.f32 %v1503, 1.442695
      %v1518 = vpow.pop %v1517
      %v1519 = vmul.f32 %v1504, 1.442695
      %v1520 = vpow.pop %v1519
      %v1521 = vsel %vm1098, %v1506, 0.0
      %1522 = vadd.xlane.f32.xlu0 %v1521
      %v1523 = vpop.xlane.xlu0 %1522
      %v1524 = vsel %vm1098, %v1508, 0.0
      %1525 = vadd.xlane.f32.xlu0 %v1524
      %v1526 = vpop.xlane.xlu0 %1525
      %v1527 = vsel %vm1098, %v1510, 0.0
      %1528 = vadd.xlane.f32.xlu0 %v1527
      %v1529 = vpop.xlane.xlu0 %1528
      %v1530 = vsel %vm1098, %v1512, 0.0
      %1531 = vadd.xlane.f32.xlu0 %v1530
      %v1532 = vpop.xlane.xlu0 %1531
      %v1533 = vsel %vm1098, %v1514, 0.0
      %1534 = vadd.xlane.f32.xlu0 %v1533
      %v1535 = vpop.xlane.xlu0 %1534
      %v1536 = vsel %vm1098, %v1516, 0.0
      %1537 = vadd.xlane.f32.xlu0 %v1536
      %v1538 = vpop.xlane.xlu0 %1537
      %v1539 = vsel %vm1098, %v1518, 0.0
      %1540 = vadd.xlane.f32.xlu0 %v1539
      %v1541 = vpop.xlane.xlu0 %1540
      %v1542 = vsel %vm1098, %v1520, 0.0
      %1543 = vadd.xlane.f32.xlu0 %v1542
      %v1544 = vpop.xlane.xlu0 %1543
      %v1545 = vrcp.pop %v1523
      %v1546 = vrcp.pop %v1526
      %v1547 = vrcp.pop %v1529
      %v1548 = vrcp.pop %v1532
      %v1549 = vrcp.pop %v1535
      %v1550 = vrcp.pop %v1538
      %v1551 = vrcp.pop %v1541
      %v1552 = vrcp.pop %v1544
      %v1553 = vmul.f32 %v1506, %v1545
      %v1554 = vmul.f32 %v1508, %v1546
      %v1555 = vmul.f32 %v1510, %v1547
      %v1556 = vmul.f32 %v1512, %v1548
      %v1557 = vmul.f32 %v1514, %v1549
      %v1558 = vmul.f32 %v1516, %v1550
      %v1559 = vmul.f32 %v1518, %v1551
      %v1560 = vmul.f32 %v1520, %v1552
      %1562 = vrot.lane.b32.xlu0 %v1187, 120
      %v1563 = vpop.permute.xlu0 %1562
      %v1565 = vsel %vm1017, %v1563, 0
      %1567 = vmatprep.subr.bf16.mxu0 0
      %1568 = vmatpush1.bf16.xpose.msra.mxu0 0
      %1569 = vmatprep.subr.bf16.mxu0 0
      %1570 = vmatpush1.bf16.xpose.msra.mxu0 0
      %1571 = vmatprep.subr.bf16.mxu0 0
      %1572 = vmatpush1.bf16.xpose.msra.mxu0 0
      %1573 = vmatprep.subr.bf16.mxu0 0
      %1574 = vmatpush1.bf16.xpose.msra.mxu0 0
      %1575 = vmatprep.subr.bf16.mxu0 0
      %1576 = vmatpush1.bf16.xpose.msra.mxu0 0
      %1577 = vmatprep.subr.bf16.mxu0 0
      %1578 = vmatpush1.bf16.xpose.msra.mxu0 0
      %1579 = vmatprep.subr.bf16.mxu0 0
      %1580 = vmatpush1.bf16.xpose.msra.mxu0 0
      %1581 = vmatprep.subr.bf16.mxu0 0
      %1582 = vmatpush1.bf16.xpose.msra.mxu0 %v1406
      %1583 = vmatprep.subr.bf16.mxu0 0
      %1584 = vmatpush2.bf16.xpose.msra.mxu0 0
      %1585 = vmatprep.subr.bf16.mxu0 0
      %1586 = vmatpush2.bf16.xpose.msra.mxu0 0
      %1587 = vmatprep.subr.bf16.mxu0 0
      %1588 = vmatpush2.bf16.xpose.msra.mxu0 0
      %1589 = vmatprep.subr.bf16.mxu0 0
      %1590 = vmatpush2.bf16.xpose.msra.mxu0 0
      %1591 = vmatprep.subr.bf16.mxu0 0
      %1592 = vmatpush2.bf16.xpose.msra.mxu0 0
      %1593 = vmatprep.subr.bf16.mxu0 0
      %1594 = vmatpush2.bf16.xpose.msra.mxu0 0
      %1595 = vmatprep.subr.bf16.mxu0 0
      %1596 = vmatpush2.bf16.xpose.msra.mxu0 0
      %1597 = vmatprep.subr.bf16.mxu0 0
      %1598 = vmatpush2.bf16.xpose.msra.mxu0 0
      %1599 = vmatprep.mubr.bf16.mxu0 0
      %1600 = vmatmul.mubr.bf16.gmra.mxu0 %v1565
      %v1601 = vpop.f32.mrf.mxu0
      %v1602 = vadd.f32 0.0, %v1601
      %v1603 = vpop.f32.mrf.mxu0
      %v1604 = vpop.f32.mrf.mxu0
      %v1605 = vadd.f32 0.0, %v1604
      %v1606 = vpop.f32.mrf.mxu0
      %1607 = vdwg.mxu0
      %v1608 = vsel %vm1098, %v1602, -inf
      %1609 = vmax.xlane.f32.xlu0 %v1608
      %v1610 = vpop.xlane.xlu0 %1609
      %v1611 = vsel %vm1098, %v1605, -inf
      %1612 = vmax.xlane.f32.xlu0 %v1611
      %v1613 = vpop.xlane.xlu0 %1612
      %v1614 = vsub.f32 %v1602, %v1610
      %v1615 = vsub.f32 %v1605, %v1613
      %v1616 = vmul.f32 %v1614, 1.442695
      %v1617 = vpow.pop %v1616
      %v1618 = vmul.f32 %v1615, 1.442695
      %v1619 = vpow.pop %v1618
      %v1620 = vsel %vm1098, %v1617, 0.0
      %1621 = vadd.xlane.f32.xlu0 %v1620
      %v1622 = vpop.xlane.xlu0 %1621
      %v1623 = vsel %vm1098, %v1619, 0.0
      %1624 = vadd.xlane.f32.xlu0 %v1623
      %v1625 = vpop.xlane.xlu0 %1624
      %v1626 = vrcp.pop %v1622
      %v1627 = vrcp.pop %v1625
      %v1628 = vmul.f32 %v1617, %v1626
      %v1629 = vmul.f32 %v1619, %v1627
      %1634 = vrot.lane.b32.xlu0 %v971, 120
      %v1635 = vpop.permute.xlu0 %1634
      %1636 = vrot.lane.b32.xlu0 %v972, 120
      %v1637 = vpop.permute.xlu0 %1636
      %1638 = vrot.lane.b32.xlu0 %v973, 120
      %v1639 = vpop.permute.xlu0 %1638
      %1640 = vrot.lane.b32.xlu0 %v974, 120
      %v1641 = vpop.permute.xlu0 %1640
      %v1643 = vsel %vm1017, %v1635, 0
      %v1646 = vsel %vm1017, %v1637, 0
      %v1649 = vsel %vm1017, %v1639, 0
      %v1652 = vsel %vm1017, %v1641, 0
      %1654 = vmatprep.subr.bf16.mxu0 0
      %1655 = vmatpush1.bf16.xpose.msra.mxu0 0
      %1656 = vmatprep.subr.bf16.mxu0 0
      %1657 = vmatpush1.bf16.xpose.msra.mxu0 0
      %1658 = vmatprep.subr.bf16.mxu0 0
      %1659 = vmatpush1.bf16.xpose.msra.mxu0 0
      %1660 = vmatprep.subr.bf16.mxu0 0
      %1661 = vmatpush1.bf16.xpose.msra.mxu0 0
      %1662 = vmatprep.subr.bf16.mxu0 0
      %1663 = vmatpush1.bf16.xpose.msra.mxu0 %v1652
      %1664 = vmatprep.subr.bf16.mxu0 0
      %1665 = vmatpush1.bf16.xpose.msra.mxu0 %v1649
      %1666 = vmatprep.subr.bf16.mxu0 0
      %1667 = vmatpush1.bf16.xpose.msra.mxu0 %v1646
      %1668 = vmatprep.subr.bf16.mxu0 0
      %1669 = vmatpush1.bf16.xpose.msra.mxu0 %v1643
      %1670 = vmatprep.subr.bf16.mxu0 0
      %1671 = vmatpush2.bf16.xpose.msra.mxu0 0
      %1672 = vmatprep.subr.bf16.mxu0 0
      %1673 = vmatpush2.bf16.xpose.msra.mxu0 0
      %1674 = vmatprep.subr.bf16.mxu0 0
      %1675 = vmatpush2.bf16.xpose.msra.mxu0 0
      %1676 = vmatprep.subr.bf16.mxu0 0
      %1677 = vmatpush2.bf16.xpose.msra.mxu0 0
      %1678 = vmatprep.subr.bf16.mxu0 0
      %1679 = vmatpush2.bf16.xpose.msra.mxu0 0
      %1680 = vmatprep.subr.bf16.mxu0 0
      %1681 = vmatpush2.bf16.xpose.msra.mxu0 0
      %1682 = vmatprep.subr.bf16.mxu0 0
      %1683 = vmatpush2.bf16.xpose.msra.mxu0 0
      %1684 = vmatprep.subr.bf16.mxu0 0
      %1685 = vmatpush2.bf16.xpose.msra.mxu0 0
      %1686 = vmatprep.mubr.bf16.mxu0 0
      %1687 = vmatmul.mubr.bf16.gmra.mxu0 %v1565
      %v1688 = vpop.f32.mrf.mxu0
      %v1689 = vadd.f32 0.0, %v1688
      %v1690 = vpop.f32.mrf.mxu0
      %v1691 = vpop.f32.mrf.mxu0
      %v1692 = vadd.f32 0.0, %v1691
      %v1693 = vpop.f32.mrf.mxu0
      %1694 = vdwg.mxu0
      %v1695 = vsel %vm926, %v1689, -inf
      %1696 = vmax.xlane.f32.xlu0 %v1695
      %v1697 = vpop.xlane.xlu0 %1696
      %v1698 = vsel %vm926, %v1692, -inf
      %1699 = vmax.xlane.f32.xlu0 %v1698
      %v1700 = vpop.xlane.xlu0 %1699
      %v1701 = vsub.f32 %v1689, %v1697
      %v1702 = vsub.f32 %v1692, %v1700
      %v1703 = vmul.f32 %v1701, 1.442695
      %v1704 = vpow.pop %v1703
      %v1705 = vmul.f32 %v1702, 1.442695
      %v1706 = vpow.pop %v1705
      %v1707 = vsel %vm926, %v1704, 0.0
      %1708 = vadd.xlane.f32.xlu0 %v1707
      %v1709 = vpop.xlane.xlu0 %1708
      %v1710 = vsel %vm926, %v1706, 0.0
      %1711 = vadd.xlane.f32.xlu0 %v1710
      %v1712 = vpop.xlane.xlu0 %1711
      %v1713 = vrcp.pop %v1709
      %v1714 = vrcp.pop %v1712
      %v1715 = vmul.f32 %v1704, %v1713
      %v1716 = vmul.f32 %v1706, %v1714
      %v1717 = vpack.c.bf16 %v1716, %v1715
      %1722 = vrot.lane.b32.xlu0 %v1330, 120
      %v1723 = vpop.permute.xlu0 %1722
      %1724 = vrot.lane.b32.xlu0 %v1331, 120
      %v1725 = vpop.permute.xlu0 %1724
      %1726 = vrot.lane.b32.xlu0 %v1332, 120
      %v1727 = vpop.permute.xlu0 %1726
      %1728 = vrot.lane.b32.xlu0 %v1333, 120
      %v1729 = vpop.permute.xlu0 %1728
      %v1735 = vsel %vm926, %v1717, 0
      %1737 = vmatprep.subr.bf16.mxu0 0
      %1738 = vmatpush1.bf16.msra.mxu0 0
      %1739 = vmatprep.subr.bf16.mxu0 0
      %1740 = vmatpush1.bf16.msra.mxu0 0
      %1741 = vmatprep.subr.bf16.mxu0 0
      %1742 = vmatpush1.bf16.msra.mxu0 0
      %1743 = vmatprep.subr.bf16.mxu0 0
      %1744 = vmatpush1.bf16.msra.mxu0 0
      %1745 = vmatprep.subr.bf16.mxu0 0
      %1746 = vmatpush1.bf16.msra.mxu0 %v1729
      %1747 = vmatprep.subr.bf16.mxu0 0
      %1748 = vmatpush1.bf16.msra.mxu0 %v1727
      %1749 = vmatprep.subr.bf16.mxu0 0
      %1750 = vmatpush1.bf16.msra.mxu0 %v1725
      %1751 = vmatprep.subr.bf16.mxu0 0
      %1752 = vmatpush1.bf16.msra.mxu0 %v1723
      %1753 = vmatprep.subr.bf16.mxu0 0
      %1754 = vmatpush2.bf16.msra.mxu0 0
      %1755 = vmatprep.subr.bf16.mxu0 0
      %1756 = vmatpush2.bf16.msra.mxu0 0
      %1757 = vmatprep.subr.bf16.mxu0 0
      %1758 = vmatpush2.bf16.msra.mxu0 0
      %1759 = vmatprep.subr.bf16.mxu0 0
      %1760 = vmatpush2.bf16.msra.mxu0 0
      %1761 = vmatprep.subr.bf16.mxu0 0
      %1762 = vmatpush2.bf16.msra.mxu0 0
      %1763 = vmatprep.subr.bf16.mxu0 0
      %1764 = vmatpush2.bf16.msra.mxu0 0
      %1765 = vmatprep.subr.bf16.mxu0 0
      %1766 = vmatpush2.bf16.msra.mxu0 0
      %1767 = vmatprep.subr.bf16.mxu0 0
      %1768 = vmatpush2.bf16.msra.mxu0 0
      %1769 = vmatprep.mubr.bf16.mxu0 0
      %1770 = vmatmul.mubr.bf16.gmra.mxu0 %v1735
      %v1771 = vpop.f32.mrf.mxu0
      %v1772 = vadd.f32 0.0, %v1771
      %v1773 = vpop.f32.mrf.mxu0
      %v1774 = vpop.f32.mrf.mxu0
      %v1775 = vadd.f32 0.0, %v1774
      %v1776 = vpop.f32.mrf.mxu0
      %1777 = vdwg.mxu0
      %1778 = vrot.lane.b32.xlu0 %v922, 112
      %v1779 = vpop.permute.xlu0 %1778
      %1780 = vrot.lane.b32.xlu0 %v923, 112
      %v1781 = vpop.permute.xlu0 %1780
      %1782 = vrot.lane.b32.xlu0 %v924, 112
      %v1783 = vpop.permute.xlu0 %1782
      %1784 = vrot.lane.b32.xlu0 %v925, 112
      %v1785 = vpop.permute.xlu0 %1784
      %1786 = vrot.lane.b32.xlu0 %v1016, 112
      %v1787 = vpop.permute.xlu0 %1786
      %v1789 = vsel %vm1017, %v1779, 0
      %v1792 = vsel %vm1017, %v1781, 0
      %v1795 = vsel %vm1017, %v1783, 0
      %v1798 = vsel %vm1017, %v1785, 0
      %v1801 = vsel %vm1017, %v1787, 0
      %1803 = vmatprep.subr.bf16.mxu0 0
      %1804 = vmatpush1.bf16.xpose.msra.mxu0 0
      %1805 = vmatprep.subr.bf16.mxu0 0
      %1806 = vmatpush1.bf16.xpose.msra.mxu0 0
      %1807 = vmatprep.subr.bf16.mxu0 0
      %1808 = vmatpush1.bf16.xpose.msra.mxu0 0
      %1809 = vmatprep.subr.bf16.mxu0 0
      %1810 = vmatpush1.bf16.xpose.msra.mxu0 0
      %1811 = vmatprep.subr.bf16.mxu0 0
      %1812 = vmatpush1.bf16.xpose.msra.mxu0 0
      %1813 = vmatprep.subr.bf16.mxu0 0
      %1814 = vmatpush1.bf16.xpose.msra.mxu0 0
      %1815 = vmatprep.subr.bf16.mxu0 0
      %1816 = vmatpush1.bf16.xpose.msra.mxu0 0
      %1817 = vmatprep.subr.bf16.mxu0 0
      %1818 = vmatpush1.bf16.xpose.msra.mxu0 %v1801
      %1819 = vmatprep.subr.bf16.mxu0 0
      %1820 = vmatpush2.bf16.xpose.msra.mxu0 0
      %1821 = vmatprep.subr.bf16.mxu0 0
      %1822 = vmatpush2.bf16.xpose.msra.mxu0 0
      %1823 = vmatprep.subr.bf16.mxu0 0
      %1824 = vmatpush2.bf16.xpose.msra.mxu0 0
      %1825 = vmatprep.subr.bf16.mxu0 0
      %1826 = vmatpush2.bf16.xpose.msra.mxu0 0
      %1827 = vmatprep.subr.bf16.mxu0 0
      %1828 = vmatpush2.bf16.xpose.msra.mxu0 0
      %1829 = vmatprep.subr.bf16.mxu0 0
      %1830 = vmatpush2.bf16.xpose.msra.mxu0 0
      %1831 = vmatprep.subr.bf16.mxu0 0
      %1832 = vmatpush2.bf16.xpose.msra.mxu0 0
      %1833 = vmatprep.subr.bf16.mxu0 0
      %1834 = vmatpush2.bf16.xpose.msra.mxu0 0
      %1835 = vmatprep.mubr.bf16.mxu0 0
      %1836 = vmatmul.mubr.bf16.gmra.mxu0 %v1789
      %v1837 = vpop.f32.mrf.mxu0
      %v1838 = vadd.f32 0.0, %v1837
      %v1839 = vpop.f32.mrf.mxu0
      %v1840 = vpop.f32.mrf.mxu0
      %v1841 = vadd.f32 0.0, %v1840
      %v1842 = vpop.f32.mrf.mxu0
      %1843 = vmatprep.mubr.bf16.mxu0 0
      %1844 = vmatmul.mubr.bf16.gmra.mxu0 %v1792
      %v1845 = vpop.f32.mrf.mxu0
      %v1846 = vadd.f32 0.0, %v1845
      %v1847 = vpop.f32.mrf.mxu0
      %v1848 = vpop.f32.mrf.mxu0
      %v1849 = vadd.f32 0.0, %v1848
      %v1850 = vpop.f32.mrf.mxu0
      %1851 = vmatprep.mubr.bf16.mxu0 0
      %1852 = vmatmul.mubr.bf16.gmra.mxu0 %v1795
      %v1853 = vpop.f32.mrf.mxu0
      %v1854 = vadd.f32 0.0, %v1853
      %v1855 = vpop.f32.mrf.mxu0
      %v1856 = vpop.f32.mrf.mxu0
      %v1857 = vadd.f32 0.0, %v1856
      %v1858 = vpop.f32.mrf.mxu0
      %1859 = vmatprep.mubr.bf16.mxu0 0
      %1860 = vmatmul.mubr.bf16.gmra.mxu0 %v1798
      %v1861 = vpop.f32.mrf.mxu0
      %v1862 = vadd.f32 0.0, %v1861
      %v1863 = vpop.f32.mrf.mxu0
      %v1864 = vpop.f32.mrf.mxu0
      %v1865 = vadd.f32 0.0, %v1864
      %v1866 = vpop.f32.mrf.mxu0
      %1867 = vdwg.mxu0
      %v1868 = vsel %vm1098, %v1838, -inf
      %1869 = vmax.xlane.f32.xlu0 %v1868
      %v1870 = vpop.xlane.xlu0 %1869
      %v1871 = vsel %vm1098, %v1841, -inf
      %1872 = vmax.xlane.f32.xlu0 %v1871
      %v1873 = vpop.xlane.xlu0 %1872
      %v1874 = vsel %vm1098, %v1846, -inf
      %1875 = vmax.xlane.f32.xlu0 %v1874
      %v1876 = vpop.xlane.xlu0 %1875
      %v1877 = vsel %vm1098, %v1849, -inf
      %1878 = vmax.xlane.f32.xlu0 %v1877
      %v1879 = vpop.xlane.xlu0 %1878
      %v1880 = vsel %vm1098, %v1854, -inf
      %1881 = vmax.xlane.f32.xlu0 %v1880
      %v1882 = vpop.xlane.xlu0 %1881
      %v1883 = vsel %vm1098, %v1857, -inf
      %1884 = vmax.xlane.f32.xlu0 %v1883
      %v1885 = vpop.xlane.xlu0 %1884
      %v1886 = vsel %vm1098, %v1862, -inf
      %1887 = vmax.xlane.f32.xlu0 %v1886
      %v1888 = vpop.xlane.xlu0 %1887
      %v1889 = vsel %vm1098, %v1865, -inf
      %1890 = vmax.xlane.f32.xlu0 %v1889
      %v1891 = vpop.xlane.xlu0 %1890
      %v1892 = vsub.f32 %v1838, %v1870
      %v1893 = vsub.f32 %v1841, %v1873
      %v1894 = vsub.f32 %v1846, %v1876
      %v1895 = vsub.f32 %v1849, %v1879
      %v1896 = vsub.f32 %v1854, %v1882
      %v1897 = vsub.f32 %v1857, %v1885
      %v1898 = vsub.f32 %v1862, %v1888
      %v1899 = vsub.f32 %v1865, %v1891
      %v1900 = vmul.f32 %v1892, 1.442695
      %v1901 = vpow.pop %v1900
      %v1902 = vmul.f32 %v1893, 1.442695
      %v1903 = vpow.pop %v1902
      %v1904 = vmul.f32 %v1894, 1.442695
      %v1905 = vpow.pop %v1904
      %v1906 = vmul.f32 %v1895, 1.442695
      %v1907 = vpow.pop %v1906
      %v1908 = vmul.f32 %v1896, 1.442695
      %v1909 = vpow.pop %v1908
      %v1910 = vmul.f32 %v1897, 1.442695
      %v1911 = vpow.pop %v1910
      %v1912 = vmul.f32 %v1898, 1.442695
      %v1913 = vpow.pop %v1912
      %v1914 = vmul.f32 %v1899, 1.442695
      %v1915 = vpow.pop %v1914
      %v1916 = vsel %vm1098, %v1901, 0.0
      %1917 = vadd.xlane.f32.xlu0 %v1916
      %v1918 = vpop.xlane.xlu0 %1917
      %v1919 = vsel %vm1098, %v1903, 0.0
      %1920 = vadd.xlane.f32.xlu0 %v1919
      %v1921 = vpop.xlane.xlu0 %1920
      %v1922 = vsel %vm1098, %v1905, 0.0
      %1923 = vadd.xlane.f32.xlu0 %v1922
      %v1924 = vpop.xlane.xlu0 %1923
      %v1925 = vsel %vm1098, %v1907, 0.0
      %1926 = vadd.xlane.f32.xlu0 %v1925
      %v1927 = vpop.xlane.xlu0 %1926
      %v1928 = vsel %vm1098, %v1909, 0.0
      %1929 = vadd.xlane.f32.xlu0 %v1928
      %v1930 = vpop.xlane.xlu0 %1929
      %v1931 = vsel %vm1098, %v1911, 0.0
      %1932 = vadd.xlane.f32.xlu0 %v1931
      %v1933 = vpop.xlane.xlu0 %1932
      %v1934 = vsel %vm1098, %v1913, 0.0
      %1935 = vadd.xlane.f32.xlu0 %v1934
      %v1936 = vpop.xlane.xlu0 %1935
      %v1937 = vsel %vm1098, %v1915, 0.0
      %1938 = vadd.xlane.f32.xlu0 %v1937
      %v1939 = vpop.xlane.xlu0 %1938
      %v1940 = vrcp.pop %v1918
      %v1941 = vrcp.pop %v1921
      %v1942 = vrcp.pop %v1924
      %v1943 = vrcp.pop %v1927
      %v1944 = vrcp.pop %v1930
      %v1945 = vrcp.pop %v1933
      %v1946 = vrcp.pop %v1936
      %v1947 = vrcp.pop %v1939
      %v1948 = vmul.f32 %v1901, %v1940
      %v1949 = vmul.f32 %v1903, %v1941
      %v1950 = vmul.f32 %v1905, %v1942
      %v1951 = vmul.f32 %v1907, %v1943
      %v1952 = vmul.f32 %v1909, %v1944
      %v1953 = vmul.f32 %v1911, %v1945
      %v1954 = vmul.f32 %v1913, %v1946
      %v1955 = vmul.f32 %v1915, %v1947
      %1956 = vrot.lane.b32.xlu0 %v1187, 112
      %v1957 = vpop.permute.xlu0 %1956
      %v1959 = vsel %vm1017, %v1957, 0
      %1961 = vmatprep.subr.bf16.mxu0 0
      %1962 = vmatpush1.bf16.xpose.msra.mxu0 0
      %1963 = vmatprep.subr.bf16.mxu0 0
      %1964 = vmatpush1.bf16.xpose.msra.mxu0 0
      %1965 = vmatprep.subr.bf16.mxu0 0
      %1966 = vmatpush1.bf16.xpose.msra.mxu0 0
      %1967 = vmatprep.subr.bf16.mxu0 0
      %1968 = vmatpush1.bf16.xpose.msra.mxu0 0
      %1969 = vmatprep.subr.bf16.mxu0 0
      %1970 = vmatpush1.bf16.xpose.msra.mxu0 0
      %1971 = vmatprep.subr.bf16.mxu0 0
      %1972 = vmatpush1.bf16.xpose.msra.mxu0 0
      %1973 = vmatprep.subr.bf16.mxu0 0
      %1974 = vmatpush1.bf16.xpose.msra.mxu0 0
      %1975 = vmatprep.subr.bf16.mxu0 0
      %1976 = vmatpush1.bf16.xpose.msra.mxu0 %v1801
      %1977 = vmatprep.subr.bf16.mxu0 0
      %1978 = vmatpush2.bf16.xpose.msra.mxu0 0
      %1979 = vmatprep.subr.bf16.mxu0 0
      %1980 = vmatpush2.bf16.xpose.msra.mxu0 0
      %1981 = vmatprep.subr.bf16.mxu0 0
      %1982 = vmatpush2.bf16.xpose.msra.mxu0 0
      %1983 = vmatprep.subr.bf16.mxu0 0
      %1984 = vmatpush2.bf16.xpose.msra.mxu0 0
      %1985 = vmatprep.subr.bf16.mxu0 0
      %1986 = vmatpush2.bf16.xpose.msra.mxu0 0
      %1987 = vmatprep.subr.bf16.mxu0 0
      %1988 = vmatpush2.bf16.xpose.msra.mxu0 0
      %1989 = vmatprep.subr.bf16.mxu0 0
      %1990 = vmatpush2.bf16.xpose.msra.mxu0 0
      %1991 = vmatprep.subr.bf16.mxu0 0
      %1992 = vmatpush2.bf16.xpose.msra.mxu0 0
      %1993 = vmatprep.mubr.bf16.mxu0 0
      %1994 = vmatmul.mubr.bf16.gmra.mxu0 %v1959
      %v1995 = vpop.f32.mrf.mxu0
      %v1996 = vadd.f32 0.0, %v1995
      %v1997 = vpop.f32.mrf.mxu0
      %v1998 = vpop.f32.mrf.mxu0
      %v1999 = vadd.f32 0.0, %v1998
      %v2000 = vpop.f32.mrf.mxu0
      %2001 = vdwg.mxu0
      %v2002 = vsel %vm1098, %v1996, -inf
      %2003 = vmax.xlane.f32.xlu0 %v2002
      %v2004 = vpop.xlane.xlu0 %2003
      %v2005 = vsel %vm1098, %v1999, -inf
      %2006 = vmax.xlane.f32.xlu0 %v2005
      %v2007 = vpop.xlane.xlu0 %2006
      %v2008 = vsub.f32 %v1996, %v2004
      %v2009 = vsub.f32 %v1999, %v2007
      %v2010 = vmul.f32 %v2008, 1.442695
      %v2011 = vpow.pop %v2010
      %v2012 = vmul.f32 %v2009, 1.442695
      %v2013 = vpow.pop %v2012
      %v2014 = vsel %vm1098, %v2011, 0.0
      %2015 = vadd.xlane.f32.xlu0 %v2014
      %v2016 = vpop.xlane.xlu0 %2015
      %v2017 = vsel %vm1098, %v2013, 0.0
      %2018 = vadd.xlane.f32.xlu0 %v2017
      %v2019 = vpop.xlane.xlu0 %2018
      %v2020 = vrcp.pop %v2016
      %v2021 = vrcp.pop %v2019
      %v2022 = vmul.f32 %v2011, %v2020
      %v2023 = vmul.f32 %v2013, %v2021
      %2024 = vrot.lane.b32.xlu0 %v971, 112
      %v2025 = vpop.permute.xlu0 %2024
      %2026 = vrot.lane.b32.xlu0 %v972, 112
      %v2027 = vpop.permute.xlu0 %2026
      %2028 = vrot.lane.b32.xlu0 %v973, 112
      %v2029 = vpop.permute.xlu0 %2028
      %2030 = vrot.lane.b32.xlu0 %v974, 112
      %v2031 = vpop.permute.xlu0 %2030
      %v2033 = vsel %vm1017, %v2025, 0
      %v2036 = vsel %vm1017, %v2027, 0
      %v2039 = vsel %vm1017, %v2029, 0
      %v2042 = vsel %vm1017, %v2031, 0
      %2044 = vmatprep.subr.bf16.mxu0 0
      %2045 = vmatpush1.bf16.xpose.msra.mxu0 0
      %2046 = vmatprep.subr.bf16.mxu0 0
      %2047 = vmatpush1.bf16.xpose.msra.mxu0 0
      %2048 = vmatprep.subr.bf16.mxu0 0
      %2049 = vmatpush1.bf16.xpose.msra.mxu0 0
      %2050 = vmatprep.subr.bf16.mxu0 0
      %2051 = vmatpush1.bf16.xpose.msra.mxu0 0
      %2052 = vmatprep.subr.bf16.mxu0 0
      %2053 = vmatpush1.bf16.xpose.msra.mxu0 %v2042
      %2054 = vmatprep.subr.bf16.mxu0 0
      %2055 = vmatpush1.bf16.xpose.msra.mxu0 %v2039
      %2056 = vmatprep.subr.bf16.mxu0 0
      %2057 = vmatpush1.bf16.xpose.msra.mxu0 %v2036
      %2058 = vmatprep.subr.bf16.mxu0 0
      %2059 = vmatpush1.bf16.xpose.msra.mxu0 %v2033
      %2060 = vmatprep.subr.bf16.mxu0 0
      %2061 = vmatpush2.bf16.xpose.msra.mxu0 0
      %2062 = vmatprep.subr.bf16.mxu0 0
      %2063 = vmatpush2.bf16.xpose.msra.mxu0 0
      %2064 = vmatprep.subr.bf16.mxu0 0
      %2065 = vmatpush2.bf16.xpose.msra.mxu0 0
      %2066 = vmatprep.subr.bf16.mxu0 0
      %2067 = vmatpush2.bf16.xpose.msra.mxu0 0
      %2068 = vmatprep.subr.bf16.mxu0 0
      %2069 = vmatpush2.bf16.xpose.msra.mxu0 0
      %2070 = vmatprep.subr.bf16.mxu0 0
      %2071 = vmatpush2.bf16.xpose.msra.mxu0 0
      %2072 = vmatprep.subr.bf16.mxu0 0
      %2073 = vmatpush2.bf16.xpose.msra.mxu0 0
      %2074 = vmatprep.subr.bf16.mxu0 0
      %2075 = vmatpush2.bf16.xpose.msra.mxu0 0
      %2076 = vmatprep.mubr.bf16.mxu0 0
      %2077 = vmatmul.mubr.bf16.gmra.mxu0 %v1959
      %v2078 = vpop.f32.mrf.mxu0
      %v2079 = vadd.f32 0.0, %v2078
      %v2080 = vpop.f32.mrf.mxu0
      %v2081 = vpop.f32.mrf.mxu0
      %v2082 = vadd.f32 0.0, %v2081
      %v2083 = vpop.f32.mrf.mxu0
      %2084 = vdwg.mxu0
      %v2085 = vsel %vm926, %v2079, -inf
      %2086 = vmax.xlane.f32.xlu0 %v2085
      %v2087 = vpop.xlane.xlu0 %2086
      %v2088 = vsel %vm926, %v2082, -inf
      %2089 = vmax.xlane.f32.xlu0 %v2088
      %v2090 = vpop.xlane.xlu0 %2089
      %v2091 = vsub.f32 %v2079, %v2087
      %v2092 = vsub.f32 %v2082, %v2090
      %v2093 = vmul.f32 %v2091, 1.442695
      %v2094 = vpow.pop %v2093
      %v2095 = vmul.f32 %v2092, 1.442695
      %v2096 = vpow.pop %v2095
      %v2097 = vsel %vm926, %v2094, 0.0
      %2098 = vadd.xlane.f32.xlu0 %v2097
      %v2099 = vpop.xlane.xlu0 %2098
      %v2100 = vsel %vm926, %v2096, 0.0
      %2101 = vadd.xlane.f32.xlu0 %v2100
      %v2102 = vpop.xlane.xlu0 %2101
      %v2103 = vrcp.pop %v2099
      %v2104 = vrcp.pop %v2102
      %v2105 = vmul.f32 %v2094, %v2103
      %v2106 = vmul.f32 %v2096, %v2104
      %v2107 = vpack.c.bf16 %v2106, %v2105
      %2108 = vrot.lane.b32.xlu0 %v1330, 112
      %v2109 = vpop.permute.xlu0 %2108
      %2110 = vrot.lane.b32.xlu0 %v1331, 112
      %v2111 = vpop.permute.xlu0 %2110
      %2112 = vrot.lane.b32.xlu0 %v1332, 112
      %v2113 = vpop.permute.xlu0 %2112
      %2114 = vrot.lane.b32.xlu0 %v1333, 112
      %v2115 = vpop.permute.xlu0 %2114
      %v2121 = vsel %vm926, %v2107, 0
      %2123 = vmatprep.subr.bf16.mxu0 0
      %2124 = vmatpush1.bf16.msra.mxu0 0
      %2125 = vmatprep.subr.bf16.mxu0 0
      %2126 = vmatpush1.bf16.msra.mxu0 0
      %2127 = vmatprep.subr.bf16.mxu0 0
      %2128 = vmatpush1.bf16.msra.mxu0 0
      %2129 = vmatprep.subr.bf16.mxu0 0
      %2130 = vmatpush1.bf16.msra.mxu0 0
      %2131 = vmatprep.subr.bf16.mxu0 0
      %2132 = vmatpush1.bf16.msra.mxu0 %v2115
      %2133 = vmatprep.subr.bf16.mxu0 0
      %2134 = vmatpush1.bf16.msra.mxu0 %v2113
      %2135 = vmatprep.subr.bf16.mxu0 0
      %2136 = vmatpush1.bf16.msra.mxu0 %v2111
      %2137 = vmatprep.subr.bf16.mxu0 0
      %2138 = vmatpush1.bf16.msra.mxu0 %v2109
      %2139 = vmatprep.subr.bf16.mxu0 0
      %2140 = vmatpush2.bf16.msra.mxu0 0
      %2141 = vmatprep.subr.bf16.mxu0 0
      %2142 = vmatpush2.bf16.msra.mxu0 0
      %2143 = vmatprep.subr.bf16.mxu0 0
      %2144 = vmatpush2.bf16.msra.mxu0 0
      %2145 = vmatprep.subr.bf16.mxu0 0
      %2146 = vmatpush2.bf16.msra.mxu0 0
      %2147 = vmatprep.subr.bf16.mxu0 0
      %2148 = vmatpush2.bf16.msra.mxu0 0
      %2149 = vmatprep.subr.bf16.mxu0 0
      %2150 = vmatpush2.bf16.msra.mxu0 0
      %2151 = vmatprep.subr.bf16.mxu0 0
      %2152 = vmatpush2.bf16.msra.mxu0 0
      %2153 = vmatprep.subr.bf16.mxu0 0
      %2154 = vmatpush2.bf16.msra.mxu0 0
      %2155 = vmatprep.mubr.bf16.mxu0 0
      %2156 = vmatmul.mubr.bf16.gmra.mxu0 %v2121
      %v2157 = vpop.f32.mrf.mxu0
      %v2158 = vadd.f32 0.0, %v2157
      %v2159 = vpop.f32.mrf.mxu0
      %v2160 = vpop.f32.mrf.mxu0
      %v2161 = vadd.f32 0.0, %v2160
      %v2162 = vpop.f32.mrf.mxu0
      %2163 = vdwg.mxu0
      %2164 = vrot.lane.b32.xlu0 %v922, 104
      %v2165 = vpop.permute.xlu0 %2164
      %2166 = vrot.lane.b32.xlu0 %v923, 104
      %v2167 = vpop.permute.xlu0 %2166
      %2168 = vrot.lane.b32.xlu0 %v924, 104
      %v2169 = vpop.permute.xlu0 %2168
      %2170 = vrot.lane.b32.xlu0 %v925, 104
      %v2171 = vpop.permute.xlu0 %2170
      %2172 = vrot.lane.b32.xlu0 %v1016, 104
      %v2173 = vpop.permute.xlu0 %2172
      %v2175 = vsel %vm1017, %v2165, 0
      %v2178 = vsel %vm1017, %v2167, 0
      %v2181 = vsel %vm1017, %v2169, 0
      %v2184 = vsel %vm1017, %v2171, 0
      %v2187 = vsel %vm1017, %v2173, 0
      %2189 = vmatprep.subr.bf16.mxu0 0
      %2190 = vmatpush1.bf16.xpose.msra.mxu0 0
      %2191 = vmatprep.subr.bf16.mxu0 0
      %2192 = vmatpush1.bf16.xpose.msra.mxu0 0
      %2193 = vmatprep.subr.bf16.mxu0 0
      %2194 = vmatpush1.bf16.xpose.msra.mxu0 0
      %2195 = vmatprep.subr.bf16.mxu0 0
      %2196 = vmatpush1.bf16.xpose.msra.mxu0 0
      %2197 = vmatprep.subr.bf16.mxu0 0
      %2198 = vmatpush1.bf16.xpose.msra.mxu0 0
      %2199 = vmatprep.subr.bf16.mxu0 0
      %2200 = vmatpush1.bf16.xpose.msra.mxu0 0
      %2201 = vmatprep.subr.bf16.mxu0 0
      %2202 = vmatpush1.bf16.xpose.msra.mxu0 0
      %2203 = vmatprep.subr.bf16.mxu0 0
      %2204 = vmatpush1.bf16.xpose.msra.mxu0 %v2187
      %2205 = vmatprep.subr.bf16.mxu0 0
      %2206 = vmatpush2.bf16.xpose.msra.mxu0 0
      %2207 = vmatprep.subr.bf16.mxu0 0
      %2208 = vmatpush2.bf16.xpose.msra.mxu0 0
      %2209 = vmatprep.subr.bf16.mxu0 0
      %2210 = vmatpush2.bf16.xpose.msra.mxu0 0
      %2211 = vmatprep.subr.bf16.mxu0 0
      %2212 = vmatpush2.bf16.xpose.msra.mxu0 0
      %2213 = vmatprep.subr.bf16.mxu0 0
      %2214 = vmatpush2.bf16.xpose.msra.mxu0 0
      %2215 = vmatprep.subr.bf16.mxu0 0
      %2216 = vmatpush2.bf16.xpose.msra.mxu0 0
      %2217 = vmatprep.subr.bf16.mxu0 0
      %2218 = vmatpush2.bf16.xpose.msra.mxu0 0
      %2219 = vmatprep.subr.bf16.mxu0 0
      %2220 = vmatpush2.bf16.xpose.msra.mxu0 0
      %2221 = vmatprep.mubr.bf16.mxu0 0
      %2222 = vmatmul.mubr.bf16.gmra.mxu0 %v2175
      %v2223 = vpop.f32.mrf.mxu0
      %v2224 = vadd.f32 0.0, %v2223
      %v2225 = vpop.f32.mrf.mxu0
      %v2226 = vpop.f32.mrf.mxu0
      %v2227 = vadd.f32 0.0, %v2226
      %v2228 = vpop.f32.mrf.mxu0
      %2229 = vmatprep.mubr.bf16.mxu0 0
      %2230 = vmatmul.mubr.bf16.gmra.mxu0 %v2178
      %v2231 = vpop.f32.mrf.mxu0
      %v2232 = vadd.f32 0.0, %v2231
      %v2233 = vpop.f32.mrf.mxu0
      %v2234 = vpop.f32.mrf.mxu0
      %v2235 = vadd.f32 0.0, %v2234
      %v2236 = vpop.f32.mrf.mxu0
      %2237 = vmatprep.mubr.bf16.mxu0 0
      %2238 = vmatmul.mubr.bf16.gmra.mxu0 %v2181
      %v2239 = vpop.f32.mrf.mxu0
      %v2240 = vadd.f32 0.0, %v2239
      %v2241 = vpop.f32.mrf.mxu0
      %v2242 = vpop.f32.mrf.mxu0
      %v2243 = vadd.f32 0.0, %v2242
      %v2244 = vpop.f32.mrf.mxu0
      %2245 = vmatprep.mubr.bf16.mxu0 0
      %2246 = vmatmul.mubr.bf16.gmra.mxu0 %v2184
      %v2247 = vpop.f32.mrf.mxu0
      %v2248 = vadd.f32 0.0, %v2247
      %v2249 = vpop.f32.mrf.mxu0
      %v2250 = vpop.f32.mrf.mxu0
      %v2251 = vadd.f32 0.0, %v2250
      %v2252 = vpop.f32.mrf.mxu0
      %2253 = vdwg.mxu0
      %v2254 = vsel %vm1098, %v2224, -inf
      %2255 = vmax.xlane.f32.xlu0 %v2254
      %v2256 = vpop.xlane.xlu0 %2255
      %v2257 = vsel %vm1098, %v2227, -inf
      %2258 = vmax.xlane.f32.xlu0 %v2257
      %v2259 = vpop.xlane.xlu0 %2258
      %v2260 = vsel %vm1098, %v2232, -inf
      %2261 = vmax.xlane.f32.xlu0 %v2260
      %v2262 = vpop.xlane.xlu0 %2261
      %v2263 = vsel %vm1098, %v2235, -inf
      %2264 = vmax.xlane.f32.xlu0 %v2263
      %v2265 = vpop.xlane.xlu0 %2264
      %v2266 = vsel %vm1098, %v2240, -inf
      %2267 = vmax.xlane.f32.xlu0 %v2266
      %v2268 = vpop.xlane.xlu0 %2267
      %v2269 = vsel %vm1098, %v2243, -inf
      %2270 = vmax.xlane.f32.xlu0 %v2269
      %v2271 = vpop.xlane.xlu0 %2270
      %v2272 = vsel %vm1098, %v2248, -inf
      %2273 = vmax.xlane.f32.xlu0 %v2272
      %v2274 = vpop.xlane.xlu0 %2273
      %v2275 = vsel %vm1098, %v2251, -inf
      %2276 = vmax.xlane.f32.xlu0 %v2275
      %v2277 = vpop.xlane.xlu0 %2276
      %v2278 = vsub.f32 %v2224, %v2256
      %v2279 = vsub.f32 %v2227, %v2259
      %v2280 = vsub.f32 %v2232, %v2262
      %v2281 = vsub.f32 %v2235, %v2265
      %v2282 = vsub.f32 %v2240, %v2268
      %v2283 = vsub.f32 %v2243, %v2271
      %v2284 = vsub.f32 %v2248, %v2274
      %v2285 = vsub.f32 %v2251, %v2277
      %v2286 = vmul.f32 %v2278, 1.442695
      %v2287 = vpow.pop %v2286
      %v2288 = vmul.f32 %v2279, 1.442695
      %v2289 = vpow.pop %v2288
      %v2290 = vmul.f32 %v2280, 1.442695
      %v2291 = vpow.pop %v2290
      %v2292 = vmul.f32 %v2281, 1.442695
      %v2293 = vpow.pop %v2292
      %v2294 = vmul.f32 %v2282, 1.442695
      %v2295 = vpow.pop %v2294
      %v2296 = vmul.f32 %v2283, 1.442695
      %v2297 = vpow.pop %v2296
      %v2298 = vmul.f32 %v2284, 1.442695
      %v2299 = vpow.pop %v2298
      %v2300 = vmul.f32 %v2285, 1.442695
      %v2301 = vpow.pop %v2300
      %v2302 = vsel %vm1098, %v2287, 0.0
      %2303 = vadd.xlane.f32.xlu0 %v2302
      %v2304 = vpop.xlane.xlu0 %2303
      %v2305 = vsel %vm1098, %v2289, 0.0
      %2306 = vadd.xlane.f32.xlu0 %v2305
      %v2307 = vpop.xlane.xlu0 %2306
      %v2308 = vsel %vm1098, %v2291, 0.0
      %2309 = vadd.xlane.f32.xlu0 %v2308
      %v2310 = vpop.xlane.xlu0 %2309
      %v2311 = vsel %vm1098, %v2293, 0.0
      %2312 = vadd.xlane.f32.xlu0 %v2311
      %v2313 = vpop.xlane.xlu0 %2312
      %v2314 = vsel %vm1098, %v2295, 0.0
      %2315 = vadd.xlane.f32.xlu0 %v2314
      %v2316 = vpop.xlane.xlu0 %2315
      %v2317 = vsel %vm1098, %v2297, 0.0
      %2318 = vadd.xlane.f32.xlu0 %v2317
      %v2319 = vpop.xlane.xlu0 %2318
      %v2320 = vsel %vm1098, %v2299, 0.0
      %2321 = vadd.xlane.f32.xlu0 %v2320
      %v2322 = vpop.xlane.xlu0 %2321
      %v2323 = vsel %vm1098, %v2301, 0.0
      %2324 = vadd.xlane.f32.xlu0 %v2323
      %v2325 = vpop.xlane.xlu0 %2324
      %v2326 = vrcp.pop %v2304
      %v2327 = vrcp.pop %v2307
      %v2328 = vrcp.pop %v2310
      %v2329 = vrcp.pop %v2313
      %v2330 = vrcp.pop %v2316
      %v2331 = vrcp.pop %v2319
      %v2332 = vrcp.pop %v2322
      %v2333 = vrcp.pop %v2325
      %v2334 = vmul.f32 %v2287, %v2326
      %v2335 = vmul.f32 %v2289, %v2327
      %v2336 = vmul.f32 %v2291, %v2328
      %v2337 = vmul.f32 %v2293, %v2329
      %v2338 = vmul.f32 %v2295, %v2330
      %v2339 = vmul.f32 %v2297, %v2331
      %v2340 = vmul.f32 %v2299, %v2332
      %v2341 = vmul.f32 %v2301, %v2333
      %2342 = vrot.lane.b32.xlu0 %v1187, 104
      %v2343 = vpop.permute.xlu0 %2342
      %v2345 = vsel %vm1017, %v2343, 0
      %2347 = vmatprep.subr.bf16.mxu0 0
      %2348 = vmatpush1.bf16.xpose.msra.mxu0 0
      %2349 = vmatprep.subr.bf16.mxu0 0
      %2350 = vmatpush1.bf16.xpose.msra.mxu0 0
      %2351 = vmatprep.subr.bf16.mxu0 0
      %2352 = vmatpush1.bf16.xpose.msra.mxu0 0
      %2353 = vmatprep.subr.bf16.mxu0 0
      %2354 = vmatpush1.bf16.xpose.msra.mxu0 0
      %2355 = vmatprep.subr.bf16.mxu0 0
      %2356 = vmatpush1.bf16.xpose.msra.mxu0 0
      %2357 = vmatprep.subr.bf16.mxu0 0
      %2358 = vmatpush1.bf16.xpose.msra.mxu0 0
      %2359 = vmatprep.subr.bf16.mxu0 0
      %2360 = vmatpush1.bf16.xpose.msra.mxu0 0
      %2361 = vmatprep.subr.bf16.mxu0 0
      %2362 = vmatpush1.bf16.xpose.msra.mxu0 %v2187
      %2363 = vmatprep.subr.bf16.mxu0 0
      %2364 = vmatpush2.bf16.xpose.msra.mxu0 0
      %2365 = vmatprep.subr.bf16.mxu0 0
      %2366 = vmatpush2.bf16.xpose.msra.mxu0 0
      %2367 = vmatprep.subr.bf16.mxu0 0
      %2368 = vmatpush2.bf16.xpose.msra.mxu0 0
      %2369 = vmatprep.subr.bf16.mxu0 0
      %2370 = vmatpush2.bf16.xpose.msra.mxu0 0
      %2371 = vmatprep.subr.bf16.mxu0 0
      %2372 = vmatpush2.bf16.xpose.msra.mxu0 0
      %2373 = vmatprep.subr.bf16.mxu0 0
      %2374 = vmatpush2.bf16.xpose.msra.mxu0 0
      %2375 = vmatprep.subr.bf16.mxu0 0
      %2376 = vmatpush2.bf16.xpose.msra.mxu0 0
      %2377 = vmatprep.subr.bf16.mxu0 0
      %2378 = vmatpush2.bf16.xpose.msra.mxu0 0
      %2379 = vmatprep.mubr.bf16.mxu0 0
      %2380 = vmatmul.mubr.bf16.gmra.mxu0 %v2345
      %v2381 = vpop.f32.mrf.mxu0
      %v2382 = vadd.f32 0.0, %v2381
      %v2383 = vpop.f32.mrf.mxu0
      %v2384 = vpop.f32.mrf.mxu0
      %v2385 = vadd.f32 0.0, %v2384
      %v2386 = vpop.f32.mrf.mxu0
      %2387 = vdwg.mxu0
      %v2388 = vsel %vm1098, %v2382, -inf
      %2389 = vmax.xlane.f32.xlu0 %v2388
      %v2390 = vpop.xlane.xlu0 %2389
      %v2391 = vsel %vm1098, %v2385, -inf
      %2392 = vmax.xlane.f32.xlu0 %v2391
      %v2393 = vpop.xlane.xlu0 %2392
      %v2394 = vsub.f32 %v2382, %v2390
      %v2395 = vsub.f32 %v2385, %v2393
      %v2396 = vmul.f32 %v2394, 1.442695
      %v2397 = vpow.pop %v2396
      %v2398 = vmul.f32 %v2395, 1.442695
      %v2399 = vpow.pop %v2398
      %v2400 = vsel %vm1098, %v2397, 0.0
      %2401 = vadd.xlane.f32.xlu0 %v2400
      %v2402 = vpop.xlane.xlu0 %2401
      %v2403 = vsel %vm1098, %v2399, 0.0
      %2404 = vadd.xlane.f32.xlu0 %v2403
      %v2405 = vpop.xlane.xlu0 %2404
      %v2406 = vrcp.pop %v2402
      %v2407 = vrcp.pop %v2405
      %v2408 = vmul.f32 %v2397, %v2406
      %v2409 = vmul.f32 %v2399, %v2407
      %2410 = vrot.lane.b32.xlu0 %v971, 104
      %v2411 = vpop.permute.xlu0 %2410
      %2412 = vrot.lane.b32.xlu0 %v972, 104
      %v2413 = vpop.permute.xlu0 %2412
      %2414 = vrot.lane.b32.xlu0 %v973, 104
      %v2415 = vpop.permute.xlu0 %2414
      %2416 = vrot.lane.b32.xlu0 %v974, 104
      %v2417 = vpop.permute.xlu0 %2416
      %v2419 = vsel %vm1017, %v2411, 0
      %v2422 = vsel %vm1017, %v2413, 0
      %v2425 = vsel %vm1017, %v2415, 0
      %v2428 = vsel %vm1017, %v2417, 0
      %2430 = vmatprep.subr.bf16.mxu0 0
      %2431 = vmatpush1.bf16.xpose.msra.mxu0 0
      %2432 = vmatprep.subr.bf16.mxu0 0
      %2433 = vmatpush1.bf16.xpose.msra.mxu0 0
      %2434 = vmatprep.subr.bf16.mxu0 0
      %2435 = vmatpush1.bf16.xpose.msra.mxu0 0
      %2436 = vmatprep.subr.bf16.mxu0 0
      %2437 = vmatpush1.bf16.xpose.msra.mxu0 0
      %2438 = vmatprep.subr.bf16.mxu0 0
      %2439 = vmatpush1.bf16.xpose.msra.mxu0 %v2428
      %2440 = vmatprep.subr.bf16.mxu0 0
      %2441 = vmatpush1.bf16.xpose.msra.mxu0 %v2425
      %2442 = vmatprep.subr.bf16.mxu0 0
      %2443 = vmatpush1.bf16.xpose.msra.mxu0 %v2422
      %2444 = vmatprep.subr.bf16.mxu0 0
      %2445 = vmatpush1.bf16.xpose.msra.mxu0 %v2419
      %2446 = vmatprep.subr.bf16.mxu0 0
      %2447 = vmatpush2.bf16.xpose.msra.mxu0 0
      %2448 = vmatprep.subr.bf16.mxu0 0
      %2449 = vmatpush2.bf16.xpose.msra.mxu0 0
      %2450 = vmatprep.subr.bf16.mxu0 0
      %2451 = vmatpush2.bf16.xpose.msra.mxu0 0
      %2452 = vmatprep.subr.bf16.mxu0 0
      %2453 = vmatpush2.bf16.xpose.msra.mxu0 0
      %2454 = vmatprep.subr.bf16.mxu0 0
      %2455 = vmatpush2.bf16.xpose.msra.mxu0 0
      %2456 = vmatprep.subr.bf16.mxu0 0
      %2457 = vmatpush2.bf16.xpose.msra.mxu0 0
      %2458 = vmatprep.subr.bf16.mxu0 0
      %2459 = vmatpush2.bf16.xpose.msra.mxu0 0
      %2460 = vmatprep.subr.bf16.mxu0 0
      %2461 = vmatpush2.bf16.xpose.msra.mxu0 0
      %2462 = vmatprep.mubr.bf16.mxu0 0
      %2463 = vmatmul.mubr.bf16.gmra.mxu0 %v2345
      %v2464 = vpop.f32.mrf.mxu0
      %v2465 = vadd.f32 0.0, %v2464
      %v2466 = vpop.f32.mrf.mxu0
      %v2467 = vpop.f32.mrf.mxu0
      %v2468 = vadd.f32 0.0, %v2467
      %v2469 = vpop.f32.mrf.mxu0
      %2470 = vdwg.mxu0
      %v2471 = vsel %vm926, %v2465, -inf
      %2472 = vmax.xlane.f32.xlu0 %v2471
      %v2473 = vpop.xlane.xlu0 %2472
      %v2474 = vsel %vm926, %v2468, -inf
      %2475 = vmax.xlane.f32.xlu0 %v2474
      %v2476 = vpop.xlane.xlu0 %2475
      %v2477 = vsub.f32 %v2465, %v2473
      %v2478 = vsub.f32 %v2468, %v2476
      %v2479 = vmul.f32 %v2477, 1.442695
      %v2480 = vpow.pop %v2479
      %v2481 = vmul.f32 %v2478, 1.442695
      %v2482 = vpow.pop %v2481
      %v2483 = vsel %vm926, %v2480, 0.0
      %2484 = vadd.xlane.f32.xlu0 %v2483
      %v2485 = vpop.xlane.xlu0 %2484
      %v2486 = vsel %vm926, %v2482, 0.0
      %2487 = vadd.xlane.f32.xlu0 %v2486
      %v2488 = vpop.xlane.xlu0 %2487
      %v2489 = vrcp.pop %v2485
      %v2490 = vrcp.pop %v2488
      %v2491 = vmul.f32 %v2480, %v2489
      %v2492 = vmul.f32 %v2482, %v2490
      %v2493 = vpack.c.bf16 %v2492, %v2491
      %2494 = vrot.lane.b32.xlu0 %v1330, 104
      %v2495 = vpop.permute.xlu0 %2494
      %2496 = vrot.lane.b32.xlu0 %v1331, 104
      %v2497 = vpop.permute.xlu0 %2496
      %2498 = vrot.lane.b32.xlu0 %v1332, 104
      %v2499 = vpop.permute.xlu0 %2498
      %2500 = vrot.lane.b32.xlu0 %v1333, 104
      %v2501 = vpop.permute.xlu0 %2500
      %v2507 = vsel %vm926, %v2493, 0
      %2509 = vmatprep.subr.bf16.mxu0 0
      %2510 = vmatpush1.bf16.msra.mxu0 0
      %2511 = vmatprep.subr.bf16.mxu0 0
      %2512 = vmatpush1.bf16.msra.mxu0 0
      %2513 = vmatprep.subr.bf16.mxu0 0
      %2514 = vmatpush1.bf16.msra.mxu0 0
      %2515 = vmatprep.subr.bf16.mxu0 0
      %2516 = vmatpush1.bf16.msra.mxu0 0
      %2517 = vmatprep.subr.bf16.mxu0 0
      %2518 = vmatpush1.bf16.msra.mxu0 %v2501
      %2519 = vmatprep.subr.bf16.mxu0 0
      %2520 = vmatpush1.bf16.msra.mxu0 %v2499
      %2521 = vmatprep.subr.bf16.mxu0 0
      %2522 = vmatpush1.bf16.msra.mxu0 %v2497
      %2523 = vmatprep.subr.bf16.mxu0 0
      %2524 = vmatpush1.bf16.msra.mxu0 %v2495
      %2525 = vmatprep.subr.bf16.mxu0 0
      %2526 = vmatpush2.bf16.msra.mxu0 0
      %2527 = vmatprep.subr.bf16.mxu0 0
      %2528 = vmatpush2.bf16.msra.mxu0 0
      %2529 = vmatprep.subr.bf16.mxu0 0
      %2530 = vmatpush2.bf16.msra.mxu0 0
      %2531 = vmatprep.subr.bf16.mxu0 0
      %2532 = vmatpush2.bf16.msra.mxu0 0
      %2533 = vmatprep.subr.bf16.mxu0 0
      %2534 = vmatpush2.bf16.msra.mxu0 0
      %2535 = vmatprep.subr.bf16.mxu0 0
      %2536 = vmatpush2.bf16.msra.mxu0 0
      %2537 = vmatprep.subr.bf16.mxu0 0
      %2538 = vmatpush2.bf16.msra.mxu0 0
      %2539 = vmatprep.subr.bf16.mxu0 0
      %2540 = vmatpush2.bf16.msra.mxu0 0
      %2541 = vmatprep.mubr.bf16.mxu0 0
      %2542 = vmatmul.mubr.bf16.gmra.mxu0 %v2507
      %v2543 = vpop.f32.mrf.mxu0
      %v2544 = vadd.f32 0.0, %v2543
      %v2545 = vpop.f32.mrf.mxu0
      %v2546 = vpop.f32.mrf.mxu0
      %v2547 = vadd.f32 0.0, %v2546
      %v2548 = vpop.f32.mrf.mxu0
      %2549 = vdwg.mxu0
      %v2550 = vsel %vm1098, %v1252, 0.0
      %v2551 = vsel %vm1098, %v1253, 0.0
      %v2552 = vsel %vm509, %v2550, 0.0
      %v2553 = vsel %vm509, %v2551, 0.0
      %vm2554 = vcmask 392192
      %v2555 = vsel %vm2554, %v2552, 0.0
      %v2556 = vsel %vm2554, %v2553, 0.0
      %2559 = vrot.lane.b32.xlu0 %v1628, 16
      %v2560 = vpop.permute.xlu0 %2559
      %2561 = vrot.lane.b32.xlu0 %v1629, 16
      %v2562 = vpop.permute.xlu0 %2561
      %v2565 = vsel %vm1098, 0.0, %v2560
      %v2566 = vsel %vm1098, 0.0, %v2562
      %v2567 = vsel %vm509, %v2565, 0.0
      %v2568 = vsel %vm509, %v2566, 0.0
      %v2569 = vsel %vm2554, %v2567, 0.0
      %v2570 = vsel %vm2554, %v2568, 0.0
      %2573 = vrot.lane.b32.xlu0 %v2022, 32
      %v2574 = vpop.permute.xlu0 %2573
      %2575 = vrot.lane.b32.xlu0 %v2023, 32
      %v2576 = vpop.permute.xlu0 %2575
      %v2579 = vsel %vm509, 0.0, %v2574
      %v2580 = vsel %vm509, 0.0, %v2576
      %v2581 = vsel %vm2554, %v2579, 0.0
      %v2582 = vsel %vm2554, %v2580, 0.0
      %2585 = vrot.lane.b32.xlu0 %v2408, 48
      %v2586 = vpop.permute.xlu0 %2585
      %2587 = vrot.lane.b32.xlu0 %v2409, 48
      %v2588 = vpop.permute.xlu0 %2587
      %v2591 = vsel %vm2554, 0.0, %v2586
      %v2592 = vsel %vm2554, 0.0, %v2588
      %v2593 = vand.u32 2147483647, %v2555
      %v2594 = vand.u32 2147483647, %v2556
      %v2595 = vand.u32 2147483647, %v2569
      %v2596 = vand.u32 2147483647, %v2570
      %v2597 = vand.u32 2147483647, %v2581
      %v2598 = vand.u32 2147483647, %v2582
      %v2599 = vand.u32 2147483647, %v2591
      %v2600 = vand.u32 2147483647, %v2592
      %v2601 = vsel %vm926, %v2593, 0.0
      %2602 = vadd.xlane.f32.xlu0 %v2601
      %v2603 = vpop.xlane.xlu0 %2602
      %v2604 = vsel %vm926, %v2594, 0.0
      %2605 = vadd.xlane.f32.xlu0 %v2604
      %v2606 = vpop.xlane.xlu0 %2605
      %v2607 = vsel %vm926, %v2595, 0.0
      %2608 = vadd.xlane.f32.xlu0 %v2607
      %v2609 = vpop.xlane.xlu0 %2608
      %v2610 = vsel %vm926, %v2596, 0.0
      %2611 = vadd.xlane.f32.xlu0 %v2610
      %v2612 = vpop.xlane.xlu0 %2611
      %v2613 = vsel %vm926, %v2597, 0.0
      %2614 = vadd.xlane.f32.xlu0 %v2613
      %v2615 = vpop.xlane.xlu0 %2614
      %v2616 = vsel %vm926, %v2598, 0.0
      %2617 = vadd.xlane.f32.xlu0 %v2616
      %v2618 = vpop.xlane.xlu0 %2617
      %v2619 = vsel %vm926, %v2599, 0.0
      %2620 = vadd.xlane.f32.xlu0 %v2619
      %v2621 = vpop.xlane.xlu0 %2620
      %v2622 = vsel %vm926, %v2600, 0.0
      %2623 = vadd.xlane.f32.xlu0 %v2622
      %v2624 = vpop.xlane.xlu0 %2623
      %v2625 = vadd.f32 %v2601, %v2604
      %v2626 = vadd.f32 %v2625, %v2607
      %v2627 = vadd.f32 %v2626, %v2610
      %v2628 = vadd.f32 %v2627, %v2613
      %v2629 = vadd.f32 %v2628, %v2616
      %v2630 = vadd.f32 %v2629, %v2619
      %v2631 = vadd.f32 %v2630, %v2622
      %v2632 = vrot.slane %v2631, 4
      %v2633 = vadd.f32 %v2631, %v2632
      %v2634 = vrot.slane %v2633, 2
      %v2635 = vadd.f32 %v2633, %v2634
      %v2636 = vrot.slane %v2635, 1
      %v2637 = vadd.f32 %v2635, %v2636
      %v2638 = vmax.f32 %v2603, %v2615
      %v2639 = vmax.f32 %v2606, %v2618
      %v2640 = vmax.f32 %v2609, %v2621
      %v2641 = vmax.f32 %v2612, %v2624
      %v2642 = vmax.f32 %v2638, %v2639
      %v2643 = vmax.f32 %v2640, %v2641
      %v2644 = vmax.f32 %v2642, %v2643
      %v2645 = vrot.slane %v2644, 4
      %v2646 = vmax.f32 %v2644, %v2645
      %v2647 = vrot.slane %v2646, 2
      %v2648 = vmax.f32 %v2646, %v2647
      %v2649 = vrot.slane %v2648, 1
      %v2650 = vmax.f32 %v2648, %v2649
      %s2651 = vtos %v2650
      %v2652 = vsel %vm926, %v2637, -inf
      %2653 = vmax.xlane.f32.xlu0 %v2652
      %v2654 = vpop.xlane.xlu0 %2653
      %s2655 = vtos %v2654
      %s2656 = smul.f32 %s2651, %s2655
      %v2657 = vadd.s32 %v903, 16
      %v2658 = vadd.s32 %v903, 24
      %v2659 = vadd.s32 %v903, 32
      %v2660 = vadd.s32 %v903, 40
      %v2661 = vadd.s32 %v903, 48
      %v2662 = vadd.s32 %v903, 56
      %vm2663 = vcmp.eq.s32.totalorder %v903, %v906
      %vm2664 = vcmp.eq.s32.totalorder %v904, %v906
      %vm2665 = vcmp.eq.s32.totalorder %v2657, %v906
      %vm2666 = vcmp.eq.s32.totalorder %v2658, %v906
      %vm2667 = vcmp.eq.s32.totalorder %v2659, %v906
      %vm2668 = vcmp.eq.s32.totalorder %v2660, %v906
      %vm2669 = vcmp.eq.s32.totalorder %v2661, %v906
      %vm2670 = vcmp.eq.s32.totalorder %v2662, %v906
      %v2671 = vsel %vm2663, 1, 0
      %v2672 = vsel %vm2664, 1, 0
      %v2673 = vsel %vm2665, 1, 0
      %v2674 = vsel %vm2666, 1, 0
      %v2675 = vsel %vm2667, 1, 0
      %v2676 = vsel %vm2668, 1, 0
      %v2677 = vsel %vm2669, 1, 0
      %v2678 = vsel %vm2670, 1, 0
      %v2679 = vcvt.s32.f32 %v2671
      %v2680 = vcvt.s32.f32 %v2672
      %v2681 = vcvt.s32.f32 %v2673
      %v2682 = vcvt.s32.f32 %v2674
      %v2683 = vcvt.s32.f32 %v2675
      %v2684 = vcvt.s32.f32 %v2676
      %v2685 = vcvt.s32.f32 %v2677
      %v2686 = vcvt.s32.f32 %v2678
      %v2688 = vsel %vm926, %v2679, 0
      %v2691 = vsel %vm926, %v2680, 0
      %v2694 = vsel %vm926, %v2681, 0
      %v2697 = vsel %vm926, %v2682, 0
      %v2700 = vsel %vm926, %v2683, 0
      %v2703 = vsel %vm926, %v2684, 0
      %v2706 = vsel %vm926, %v2685, 0
      %v2709 = vsel %vm926, %v2686, 0
      %v2712 = vsel %vm926, %v2555, 0
      %v2715 = vsel %vm926, %v2556, 0
      %v2718 = vsel %vm926, %v2569, 0
      %v2721 = vsel %vm926, %v2570, 0
      %v2724 = vsel %vm926, %v2581, 0
      %v2727 = vsel %vm926, %v2582, 0
      %v2730 = vsel %vm926, %v2591, 0
      %v2733 = vsel %vm926, %v2592, 0
      %2735 = vmatprep.subr.mxu0 0.0
      %2736 = vmatpush1.xpose.msra.mxu0 0.0
      %2737 = vmatprep.subr.mxu0 0.0
      %2738 = vmatpush1.xpose.msra.mxu0 0.0
      %2739 = vmatprep.subr.mxu0 0.0
      %2740 = vmatpush1.xpose.msra.mxu0 0.0
      %2741 = vmatprep.subr.mxu0 0.0
      %2742 = vmatpush1.xpose.msra.mxu0 0.0
      %2743 = vmatprep.subr.mxu0 0.0
      %2744 = vmatpush1.xpose.msra.mxu0 0.0
      %2745 = vmatprep.subr.mxu0 0.0
      %2746 = vmatpush1.xpose.msra.mxu0 0.0
      %2747 = vmatprep.subr.mxu0 0.0
      %2748 = vmatpush1.xpose.msra.mxu0 0.0
      %2749 = vmatprep.subr.mxu0 0.0
      %2750 = vmatpush1.xpose.msra.mxu0 0.0
      %2751 = vmatprep.subr.mxu0 0.0
      %2752 = vmatpush1.xpose.msra.mxu0 %v2733
      %2753 = vmatprep.subr.mxu0 0.0
      %2754 = vmatpush1.xpose.msra.mxu0 %v2730
      %2755 = vmatprep.subr.mxu0 0.0
      %2756 = vmatpush1.xpose.msra.mxu0 %v2727
      %2757 = vmatprep.subr.mxu0 0.0
      %2758 = vmatpush1.xpose.msra.mxu0 %v2724
      %2759 = vmatprep.subr.mxu0 0.0
      %2760 = vmatpush1.xpose.msra.mxu0 %v2721
      %2761 = vmatprep.subr.mxu0 0.0
      %2762 = vmatpush1.xpose.msra.mxu0 %v2718
      %2763 = vmatprep.subr.mxu0 0.0
      %2764 = vmatpush1.xpose.msra.mxu0 %v2715
      %2765 = vmatprep.subr.mxu0 0.0
      %2766 = vmatpush1.xpose.msra.mxu0 %v2712
      %2767 = vmatprep.subr.mxu0 0.0
      %2768 = vmatpush2.xpose.msra.mxu0 0.0
      %2769 = vmatprep.subr.mxu0 0.0
      %2770 = vmatpush2.xpose.msra.mxu0 0.0
      %2771 = vmatprep.subr.mxu0 0.0
      %2772 = vmatpush2.xpose.msra.mxu0 0.0
      %2773 = vmatprep.subr.mxu0 0.0
      %2774 = vmatpush2.xpose.msra.mxu0 0.0
      %2775 = vmatprep.subr.mxu0 0.0
      %2776 = vmatpush2.xpose.msra.mxu0 0.0
      %2777 = vmatprep.subr.mxu0 0.0
      %2778 = vmatpush2.xpose.msra.mxu0 0.0
      %2779 = vmatprep.subr.mxu0 0.0
      %2780 = vmatpush2.xpose.msra.mxu0 0.0
      %2781 = vmatprep.subr.mxu0 0.0
      %2782 = vmatpush2.xpose.msra.mxu0 0.0
      %2783 = vmatprep.subr.mxu0 0.0
      %2784 = vmatpush2.xpose.msra.mxu0 0.0
      %2785 = vmatprep.subr.mxu0 0.0
      %2786 = vmatpush2.xpose.msra.mxu0 0.0
      %2787 = vmatprep.subr.mxu0 0.0
      %2788 = vmatpush2.xpose.msra.mxu0 0.0
      %2789 = vmatprep.subr.mxu0 0.0
      %2790 = vmatpush2.xpose.msra.mxu0 0.0
      %2791 = vmatprep.subr.mxu0 0.0
      %2792 = vmatpush2.xpose.msra.mxu0 0.0
      %2793 = vmatprep.subr.mxu0 0.0
      %2794 = vmatpush2.xpose.msra.mxu0 0.0
      %2795 = vmatprep.subr.mxu0 0.0
      %2796 = vmatpush2.xpose.msra.mxu0 0.0
      %2797 = vmatprep.subr.mxu0 0.0
      %2798 = vmatpush2.xpose.msra.mxu0 0.0
      %2799 = vmatprep.mubr.f32.mxu0 0.0
      %2800 = vmatmul.mubr.f32.gmra.mxu0 %v2688
      %v2801 = vpop.f32.mrf.mxu0
      %v2802 = vadd.f32 0.0, %v2801
      %v2803 = vpop.f32.mrf.mxu0
      %2804 = vmatprep.mubr.f32.mxu0 0.0
      %2805 = vmatmul.mubr.f32.gmra.mxu0 %v2691
      %v2806 = vpop.f32.mrf.mxu0
      %v2807 = vadd.f32 0.0, %v2806
      %v2808 = vpop.f32.mrf.mxu0
      %2809 = vmatprep.mubr.f32.mxu0 0.0
      %2810 = vmatmul.mubr.f32.gmra.mxu0 %v2694
      %v2811 = vpop.f32.mrf.mxu0
      %v2812 = vadd.f32 0.0, %v2811
      %v2813 = vpop.f32.mrf.mxu0
      %2814 = vmatprep.mubr.f32.mxu0 0.0
      %2815 = vmatmul.mubr.f32.gmra.mxu0 %v2697
      %v2816 = vpop.f32.mrf.mxu0
      %v2817 = vadd.f32 0.0, %v2816
      %v2818 = vpop.f32.mrf.mxu0
      %2819 = vmatprep.mubr.f32.mxu0 0.0
      %2820 = vmatmul.mubr.f32.gmra.mxu0 %v2700
      %v2821 = vpop.f32.mrf.mxu0
      %v2822 = vadd.f32 0.0, %v2821
      %v2823 = vpop.f32.mrf.mxu0
      %2824 = vmatprep.mubr.f32.mxu0 0.0
      %2825 = vmatmul.mubr.f32.gmra.mxu0 %v2703
      %v2826 = vpop.f32.mrf.mxu0
      %v2827 = vadd.f32 0.0, %v2826
      %v2828 = vpop.f32.mrf.mxu0
      %2829 = vmatprep.mubr.f32.mxu0 0.0
      %2830 = vmatmul.mubr.f32.gmra.mxu0 %v2706
      %v2831 = vpop.f32.mrf.mxu0
      %v2832 = vadd.f32 0.0, %v2831
      %v2833 = vpop.f32.mrf.mxu0
      %2834 = vmatprep.mubr.f32.mxu0 0.0
      %2835 = vmatmul.mubr.f32.gmra.mxu0 %v2709
      %v2836 = vpop.f32.mrf.mxu0
      %v2837 = vadd.f32 0.0, %v2836
      %v2838 = vpop.f32.mrf.mxu0
      %2839 = vdwg.mxu0
      %v2840 = vstv %s2656
      %v2841 = vrcp.pop %v2840
      %v2842 = vmul.f32 %v2802, %v2841
      %v2843 = vmul.f32 %v2807, %v2841
      %v2844 = vmul.f32 %v2812, %v2841
      %v2845 = vmul.f32 %v2817, %v2841
      %v2846 = vmul.f32 %v2822, %v2841
      %v2847 = vmul.f32 %v2827, %v2841
      %v2848 = vmul.f32 %v2832, %v2841
      %v2849 = vmul.f32 %v2837, %v2841
      %v2850 = vpack.c.bf16 %v2556, %v2555
      %v2851 = vpack.c.bf16 %v2570, %v2569
      %v2852 = vpack.c.bf16 %v2582, %v2581
      %v2853 = vpack.c.bf16 %v2592, %v2591
      %v2854 = vpack.c.bf16 %v2843, %v2842
      %v2855 = vpack.c.bf16 %v2845, %v2844
      %v2856 = vpack.c.bf16 %v2847, %v2846
      %v2857 = vpack.c.bf16 %v2849, %v2848
      %v2859 = vsel %vm926, %v2850, 0
      %v2862 = vsel %vm926, %v2851, 0
      %v2865 = vsel %vm926, %v2852, 0
      %v2868 = vsel %vm926, %v2853, 0
      %2870 = vmatprep.subr.bf16.mxu0 0
      %2871 = vmatpush1.bf16.msra.mxu0 0
      %2872 = vmatprep.subr.bf16.mxu0 0
      %2873 = vmatpush1.bf16.msra.mxu0 0
      %2874 = vmatprep.subr.bf16.mxu0 0
      %2875 = vmatpush1.bf16.msra.mxu0 0
      %2876 = vmatprep.subr.bf16.mxu0 0
      %2877 = vmatpush1.bf16.msra.mxu0 0
      %2878 = vmatprep.subr.bf16.mxu0 0
      %2879 = vmatpush1.bf16.msra.mxu0 %v2857
      %2880 = vmatprep.subr.bf16.mxu0 0
      %2881 = vmatpush1.bf16.msra.mxu0 %v2856
      %2882 = vmatprep.subr.bf16.mxu0 0
      %2883 = vmatpush1.bf16.msra.mxu0 %v2855
      %2884 = vmatprep.subr.bf16.mxu0 0
      %2885 = vmatpush1.bf16.msra.mxu0 %v2854
      %2886 = vmatprep.subr.bf16.mxu0 0
      %2887 = vmatpush2.bf16.msra.mxu0 0
      %2888 = vmatprep.subr.bf16.mxu0 0
      %2889 = vmatpush2.bf16.msra.mxu0 0
      %2890 = vmatprep.subr.bf16.mxu0 0
      %2891 = vmatpush2.bf16.msra.mxu0 0
      %2892 = vmatprep.subr.bf16.mxu0 0
      %2893 = vmatpush2.bf16.msra.mxu0 0
      %2894 = vmatprep.subr.bf16.mxu0 0
      %2895 = vmatpush2.bf16.msra.mxu0 0
      %2896 = vmatprep.subr.bf16.mxu0 0
      %2897 = vmatpush2.bf16.msra.mxu0 0
      %2898 = vmatprep.subr.bf16.mxu0 0
      %2899 = vmatpush2.bf16.msra.mxu0 0
      %2900 = vmatprep.subr.bf16.mxu0 0
      %2901 = vmatpush2.bf16.msra.mxu0 0
      %2902 = vmatprep.mubr.bf16.mxu0 0
      %2903 = vmatmul.mubr.bf16.gmra.mxu0 %v2859
      %v2904 = vpop.f32.mrf.mxu0
      %v2905 = vadd.f32 0.0, %v2904
      %v2906 = vpop.f32.mrf.mxu0
      %v2907 = vpop.f32.mrf.mxu0
      %v2908 = vadd.f32 0.0, %v2907
      %v2909 = vpop.f32.mrf.mxu0
      %2910 = vmatprep.mubr.bf16.mxu0 0
      %2911 = vmatmul.mubr.bf16.gmra.mxu0 %v2862
      %v2912 = vpop.f32.mrf.mxu0
      %v2913 = vadd.f32 0.0, %v2912
      %v2914 = vpop.f32.mrf.mxu0
      %v2915 = vpop.f32.mrf.mxu0
      %v2916 = vadd.f32 0.0, %v2915
      %v2917 = vpop.f32.mrf.mxu0
      %2918 = vmatprep.mubr.bf16.mxu0 0
      %2919 = vmatmul.mubr.bf16.gmra.mxu0 %v2865
      %v2920 = vpop.f32.mrf.mxu0
      %v2921 = vadd.f32 0.0, %v2920
      %v2922 = vpop.f32.mrf.mxu0
      %v2923 = vpop.f32.mrf.mxu0
      %v2924 = vadd.f32 0.0, %v2923
      %v2925 = vpop.f32.mrf.mxu0
      %2926 = vmatprep.mubr.bf16.mxu0 0
      %2927 = vmatmul.mubr.bf16.gmra.mxu0 %v2868
      %v2928 = vpop.f32.mrf.mxu0
      %v2929 = vadd.f32 0.0, %v2928
      %v2930 = vpop.f32.mrf.mxu0
      %v2931 = vpop.f32.mrf.mxu0
      %v2932 = vadd.f32 0.0, %v2931
      %v2933 = vpop.f32.mrf.mxu0
      %2934 = vdwg.mxu0
      %v2935 = vmul.f32 %v2679, 7.0
      %v2936 = vmul.f32 %v2680, 7.0
      %v2937 = vmul.f32 %v2681, 7.0
      %v2938 = vmul.f32 %v2682, 7.0
      %v2939 = vmul.f32 %v2683, 7.0
      %v2940 = vmul.f32 %v2684, 7.0
      %v2941 = vmul.f32 %v2685, 7.0
      %v2942 = vmul.f32 %v2686, 7.0
      %v2943 = vsub.f32 %v2935, %v2905
      %v2944 = vsub.f32 %v2936, %v2908
      %v2945 = vsub.f32 %v2937, %v2913
      %v2946 = vsub.f32 %v2938, %v2916
      %v2947 = vsub.f32 %v2939, %v2921
      %v2948 = vsub.f32 %v2940, %v2924
      %v2949 = vsub.f32 %v2941, %v2929
      %v2950 = vsub.f32 %v2942, %v2932
      %v2951 = vmul.f32 %v2679, 15.0
      %v2952 = vmul.f32 %v2680, 15.0
      %v2953 = vmul.f32 %v2681, 15.0
      %v2954 = vmul.f32 %v2682, 15.0
      %v2955 = vmul.f32 %v2683, 15.0
      %v2956 = vmul.f32 %v2684, 15.0
      %v2957 = vmul.f32 %v2685, 15.0
      %v2958 = vmul.f32 %v2686, 15.0
      %v2959 = vpack.c.bf16 %v2908, %v2905
      %v2960 = vpack.c.bf16 %v2916, %v2913
      %v2961 = vpack.c.bf16 %v2924, %v2921
      %v2962 = vpack.c.bf16 %v2932, %v2929
      %v2963 = vpack.c.bf16 %v2944, %v2943
      %v2964 = vpack.c.bf16 %v2946, %v2945
      %v2965 = vpack.c.bf16 %v2948, %v2947
      %v2966 = vpack.c.bf16 %v2950, %v2949
      %v2968 = vsel %vm926, %v2959, 0
      %v2971 = vsel %vm926, %v2960, 0
      %v2974 = vsel %vm926, %v2961, 0
      %v2977 = vsel %vm926, %v2962, 0
      %2979 = vmatprep.subr.bf16.mxu0 0
      %2980 = vmatpush1.bf16.msra.mxu0 0
      %2981 = vmatprep.subr.bf16.mxu0 0
      %2982 = vmatpush1.bf16.msra.mxu0 0
      %2983 = vmatprep.subr.bf16.mxu0 0
      %2984 = vmatpush1.bf16.msra.mxu0 0
      %2985 = vmatprep.subr.bf16.mxu0 0
      %2986 = vmatpush1.bf16.msra.mxu0 0
      %2987 = vmatprep.subr.bf16.mxu0 0
      %2988 = vmatpush1.bf16.msra.mxu0 %v2966
      %2989 = vmatprep.subr.bf16.mxu0 0
      %2990 = vmatpush1.bf16.msra.mxu0 %v2965
      %2991 = vmatprep.subr.bf16.mxu0 0
      %2992 = vmatpush1.bf16.msra.mxu0 %v2964
      %2993 = vmatprep.subr.bf16.mxu0 0
      %2994 = vmatpush1.bf16.msra.mxu0 %v2963
      %2995 = vmatprep.subr.bf16.mxu0 0
      %2996 = vmatpush2.bf16.msra.mxu0 0
      %2997 = vmatprep.subr.bf16.mxu0 0
      %2998 = vmatpush2.bf16.msra.mxu0 0
      %2999 = vmatprep.subr.bf16.mxu0 0
      %3000 = vmatpush2.bf16.msra.mxu0 0
      %3001 = vmatprep.subr.bf16.mxu0 0
      %3002 = vmatpush2.bf16.msra.mxu0 0
      %3003 = vmatprep.subr.bf16.mxu0 0
      %3004 = vmatpush2.bf16.msra.mxu0 0
      %3005 = vmatprep.subr.bf16.mxu0 0
      %3006 = vmatpush2.bf16.msra.mxu0 0
      %3007 = vmatprep.subr.bf16.mxu0 0
      %3008 = vmatpush2.bf16.msra.mxu0 0
      %3009 = vmatprep.subr.bf16.mxu0 0
      %3010 = vmatpush2.bf16.msra.mxu0 0
      %3011 = vmatprep.mubr.bf16.mxu0 0
      %3012 = vmatmul.mubr.bf16.gmra.mxu0 %v2968
      %v3013 = vpop.f32.mrf.mxu0
      %v3014 = vadd.f32 0.0, %v3013
      %v3015 = vpop.f32.mrf.mxu0
      %v3016 = vpop.f32.mrf.mxu0
      %v3017 = vadd.f32 0.0, %v3016
      %v3018 = vpop.f32.mrf.mxu0
      %3019 = vmatprep.mubr.bf16.mxu0 0
      %3020 = vmatmul.mubr.bf16.gmra.mxu0 %v2971
      %v3021 = vpop.f32.mrf.mxu0
      %v3022 = vadd.f32 0.0, %v3021
      %v3023 = vpop.f32.mrf.mxu0
      %v3024 = vpop.f32.mrf.mxu0
      %v3025 = vadd.f32 0.0, %v3024
      %v3026 = vpop.f32.mrf.mxu0
      %3027 = vmatprep.mubr.bf16.mxu0 0
      %3028 = vmatmul.mubr.bf16.gmra.mxu0 %v2974
      %v3029 = vpop.f32.mrf.mxu0
      %v3030 = vadd.f32 0.0, %v3029
      %v3031 = vpop.f32.mrf.mxu0
      %v3032 = vpop.f32.mrf.mxu0
      %v3033 = vadd.f32 0.0, %v3032
      %v3034 = vpop.f32.mrf.mxu0
      %3035 = vmatprep.mubr.bf16.mxu0 0
      %3036 = vmatmul.mubr.bf16.gmra.mxu0 %v2977
      %v3037 = vpop.f32.mrf.mxu0
      %v3038 = vadd.f32 0.0, %v3037
      %v3039 = vpop.f32.mrf.mxu0
      %v3040 = vpop.f32.mrf.mxu0
      %v3041 = vadd.f32 0.0, %v3040
      %v3042 = vpop.f32.mrf.mxu0
      %3043 = vdwg.mxu0
      %v3044 = vsub.f32 %v2951, %v3014
      %v3045 = vsub.f32 %v2952, %v3017
      %v3046 = vsub.f32 %v2953, %v3022
      %v3047 = vsub.f32 %v2954, %v3025
      %v3048 = vsub.f32 %v2955, %v3030
      %v3049 = vsub.f32 %v2956, %v3033
      %v3050 = vsub.f32 %v2957, %v3038
      %v3051 = vsub.f32 %v2958, %v3041
      %v3052 = vmul.f32 %v2679, 13.0
      %v3053 = vmul.f32 %v2680, 13.0
      %v3054 = vmul.f32 %v2681, 13.0
      %v3055 = vmul.f32 %v2682, 13.0
      %v3056 = vmul.f32 %v2683, 13.0
      %v3057 = vmul.f32 %v2684, 13.0
      %v3058 = vmul.f32 %v2685, 13.0
      %v3059 = vmul.f32 %v2686, 13.0
      %v3060 = vpack.c.bf16 %v3045, %v3044
      %v3061 = vpack.c.bf16 %v3047, %v3046
      %v3062 = vpack.c.bf16 %v3049, %v3048
      %v3063 = vpack.c.bf16 %v3051, %v3050
      %3064 = vmatprep.subr.bf16.mxu0 0
      %3065 = vmatpush1.bf16.msra.mxu0 0
      %3066 = vmatprep.subr.bf16.mxu0 0
      %3067 = vmatpush1.bf16.msra.mxu0 0
      %3068 = vmatprep.subr.bf16.mxu0 0
      %3069 = vmatpush1.bf16.msra.mxu0 0
      %3070 = vmatprep.subr.bf16.mxu0 0
      %3071 = vmatpush1.bf16.msra.mxu0 0
      %3072 = vmatprep.subr.bf16.mxu0 0
      %3073 = vmatpush1.bf16.msra.mxu0 %v3063
      %3074 = vmatprep.subr.bf16.mxu0 0
      %3075 = vmatpush1.bf16.msra.mxu0 %v3062
      %3076 = vmatprep.subr.bf16.mxu0 0
      %3077 = vmatpush1.bf16.msra.mxu0 %v3061
      %3078 = vmatprep.subr.bf16.mxu0 0
      %3079 = vmatpush1.bf16.msra.mxu0 %v3060
      %3080 = vmatprep.subr.bf16.mxu0 0
      %3081 = vmatpush2.bf16.msra.mxu0 0
      %3082 = vmatprep.subr.bf16.mxu0 0
      %3083 = vmatpush2.bf16.msra.mxu0 0
      %3084 = vmatprep.subr.bf16.mxu0 0
      %3085 = vmatpush2.bf16.msra.mxu0 0
      %3086 = vmatprep.subr.bf16.mxu0 0
      %3087 = vmatpush2.bf16.msra.mxu0 0
      %3088 = vmatprep.subr.bf16.mxu0 0
      %3089 = vmatpush2.bf16.msra.mxu0 0
      %3090 = vmatprep.subr.bf16.mxu0 0
      %3091 = vmatpush2.bf16.msra.mxu0 0
      %3092 = vmatprep.subr.bf16.mxu0 0
      %3093 = vmatpush2.bf16.msra.mxu0 0
      %3094 = vmatprep.subr.bf16.mxu0 0
      %3095 = vmatpush2.bf16.msra.mxu0 0
      %3096 = vmatprep.mubr.bf16.mxu0 0
      %3097 = vmatmul.mubr.bf16.gmra.mxu0 %v2968
      %v3098 = vpop.f32.mrf.mxu0
      %v3099 = vadd.f32 0.0, %v3098
      %v3100 = vpop.f32.mrf.mxu0
      %v3101 = vpop.f32.mrf.mxu0
      %v3102 = vadd.f32 0.0, %v3101
      %v3103 = vpop.f32.mrf.mxu0
      %3104 = vmatprep.mubr.bf16.mxu0 0
      %3105 = vmatmul.mubr.bf16.gmra.mxu0 %v2971
      %v3106 = vpop.f32.mrf.mxu0
      %v3107 = vadd.f32 0.0, %v3106
      %v3108 = vpop.f32.mrf.mxu0
      %v3109 = vpop.f32.mrf.mxu0
      %v3110 = vadd.f32 0.0, %v3109
      %v3111 = vpop.f32.mrf.mxu0
      %3112 = vmatprep.mubr.bf16.mxu0 0
      %3113 = vmatmul.mubr.bf16.gmra.mxu0 %v2974
      %v3114 = vpop.f32.mrf.mxu0
      %v3115 = vadd.f32 0.0, %v3114
      %v3116 = vpop.f32.mrf.mxu0
      %v3117 = vpop.f32.mrf.mxu0
      %v3118 = vadd.f32 0.0, %v3117
      %v3119 = vpop.f32.mrf.mxu0
      %3120 = vmatprep.mubr.bf16.mxu0 0
      %3121 = vmatmul.mubr.bf16.gmra.mxu0 %v2977
      %v3122 = vpop.f32.mrf.mxu0
      %v3123 = vadd.f32 0.0, %v3122
      %v3124 = vpop.f32.mrf.mxu0
      %v3125 = vpop.f32.mrf.mxu0
      %v3126 = vadd.f32 0.0, %v3125
      %v3127 = vpop.f32.mrf.mxu0
      %3128 = vdwg.mxu0
      %v3129 = vsub.f32 %v3052, %v3099
      %v3130 = vsub.f32 %v3053, %v3102
      %v3131 = vsub.f32 %v3054, %v3107
      %v3132 = vsub.f32 %v3055, %v3110
      %v3133 = vsub.f32 %v3056, %v3115
      %v3134 = vsub.f32 %v3057, %v3118
      %v3135 = vsub.f32 %v3058, %v3123
      %v3136 = vsub.f32 %v3059, %v3126
      %v3137 = vpack.c.bf16 %v3130, %v3129
      %v3138 = vpack.c.bf16 %v3132, %v3131
      %v3139 = vpack.c.bf16 %v3134, %v3133
      %v3140 = vpack.c.bf16 %v3136, %v3135
      %v3142 = vsel %vm926, %v2854, 0
      %v3145 = vsel %vm926, %v2855, 0
      %v3148 = vsel %vm926, %v2856, 0
      %v3151 = vsel %vm926, %v2857, 0
      %3153 = vmatprep.subr.bf16.mxu0 0
      %3154 = vmatpush1.bf16.msra.mxu0 0
      %3155 = vmatprep.subr.bf16.mxu0 0
      %3156 = vmatpush1.bf16.msra.mxu0 0
      %3157 = vmatprep.subr.bf16.mxu0 0
      %3158 = vmatpush1.bf16.msra.mxu0 0
      %3159 = vmatprep.subr.bf16.mxu0 0
      %3160 = vmatpush1.bf16.msra.mxu0 0
      %3161 = vmatprep.subr.bf16.mxu0 0
      %3162 = vmatpush1.bf16.msra.mxu0 %v3140
      %3163 = vmatprep.subr.bf16.mxu0 0
      %3164 = vmatpush1.bf16.msra.mxu0 %v3139
      %3165 = vmatprep.subr.bf16.mxu0 0
      %3166 = vmatpush1.bf16.msra.mxu0 %v3138
      %3167 = vmatprep.subr.bf16.mxu0 0
      %3168 = vmatpush1.bf16.msra.mxu0 %v3137
      %3169 = vmatprep.subr.bf16.mxu0 0
      %3170 = vmatpush2.bf16.msra.mxu0 0
      %3171 = vmatprep.subr.bf16.mxu0 0
      %3172 = vmatpush2.bf16.msra.mxu0 0
      %3173 = vmatprep.subr.bf16.mxu0 0
      %3174 = vmatpush2.bf16.msra.mxu0 0
      %3175 = vmatprep.subr.bf16.mxu0 0
      %3176 = vmatpush2.bf16.msra.mxu0 0
      %3177 = vmatprep.subr.bf16.mxu0 0
      %3178 = vmatpush2.bf16.msra.mxu0 0
      %3179 = vmatprep.subr.bf16.mxu0 0
      %3180 = vmatpush2.bf16.msra.mxu0 0
      %3181 = vmatprep.subr.bf16.mxu0 0
      %3182 = vmatpush2.bf16.msra.mxu0 0
      %3183 = vmatprep.subr.bf16.mxu0 0
      %3184 = vmatpush2.bf16.msra.mxu0 0
      %3185 = vmatprep.mubr.bf16.mxu0 0
      %3186 = vmatmul.mubr.bf16.gmra.mxu0 %v3142
      %v3187 = vpop.f32.mrf.mxu0
      %v3188 = vadd.f32 0.0, %v3187
      %v3189 = vpop.f32.mrf.mxu0
      %v3190 = vpop.f32.mrf.mxu0
      %v3191 = vadd.f32 0.0, %v3190
      %v3192 = vpop.f32.mrf.mxu0
      %3193 = vmatprep.mubr.bf16.mxu0 0
      %3194 = vmatmul.mubr.bf16.gmra.mxu0 %v3145
      %v3195 = vpop.f32.mrf.mxu0
      %v3196 = vadd.f32 0.0, %v3195
      %v3197 = vpop.f32.mrf.mxu0
      %v3198 = vpop.f32.mrf.mxu0
      %v3199 = vadd.f32 0.0, %v3198
      %v3200 = vpop.f32.mrf.mxu0
      %3201 = vmatprep.mubr.bf16.mxu0 0
      %3202 = vmatmul.mubr.bf16.gmra.mxu0 %v3148
      %v3203 = vpop.f32.mrf.mxu0
      %v3204 = vadd.f32 0.0, %v3203
      %v3205 = vpop.f32.mrf.mxu0
      %v3206 = vpop.f32.mrf.mxu0
      %v3207 = vadd.f32 0.0, %v3206
      %v3208 = vpop.f32.mrf.mxu0
      %3209 = vmatprep.mubr.bf16.mxu0 0
      %3210 = vmatmul.mubr.bf16.gmra.mxu0 %v3151
      %v3211 = vpop.f32.mrf.mxu0
      %v3212 = vadd.f32 0.0, %v3211
      %v3213 = vpop.f32.mrf.mxu0
      %v3214 = vpop.f32.mrf.mxu0
      %v3215 = vadd.f32 0.0, %v3214
      %v3216 = vpop.f32.mrf.mxu0
      %3217 = vdwg.mxu0
      %v3218 = vmul.f32 %v3188, 0.25
      %v3219 = vmul.f32 %v3191, 0.25
      %v3220 = vmul.f32 %v3196, 0.25
      %v3221 = vmul.f32 %v3199, 0.25
      %v3222 = vmul.f32 %v3204, 0.25
      %v3223 = vmul.f32 %v3207, 0.25
      %v3224 = vmul.f32 %v3212, 0.25
      %v3225 = vmul.f32 %v3215, 0.25
      %v3226 = vpack.c.bf16 %v3219, %v3218
      %v3227 = vpack.c.bf16 %v3221, %v3220
      %v3228 = vpack.c.bf16 %v3223, %v3222
      %v3229 = vpack.c.bf16 %v3225, %v3224
      %3230 = vmatprep.subr.bf16.mxu0 0
      %3231 = vmatpush1.bf16.msra.mxu0 0
      %3232 = vmatprep.subr.bf16.mxu0 0
      %3233 = vmatpush1.bf16.msra.mxu0 0
      %3234 = vmatprep.subr.bf16.mxu0 0
      %3235 = vmatpush1.bf16.msra.mxu0 0
      %3236 = vmatprep.subr.bf16.mxu0 0
      %3237 = vmatpush1.bf16.msra.mxu0 0
      %3238 = vmatprep.subr.bf16.mxu0 0
      %3239 = vmatpush1.bf16.msra.mxu0 %v3229
      %3240 = vmatprep.subr.bf16.mxu0 0
      %3241 = vmatpush1.bf16.msra.mxu0 %v3228
      %3242 = vmatprep.subr.bf16.mxu0 0
      %3243 = vmatpush1.bf16.msra.mxu0 %v3227
      %3244 = vmatprep.subr.bf16.mxu0 0
      %3245 = vmatpush1.bf16.msra.mxu0 %v3226
      %3246 = vmatprep.subr.bf16.mxu0 0
      %3247 = vmatpush2.bf16.msra.mxu0 0
      %3248 = vmatprep.subr.bf16.mxu0 0
      %3249 = vmatpush2.bf16.msra.mxu0 0
      %3250 = vmatprep.subr.bf16.mxu0 0
      %3251 = vmatpush2.bf16.msra.mxu0 0
      %3252 = vmatprep.subr.bf16.mxu0 0
      %3253 = vmatpush2.bf16.msra.mxu0 0
      %3254 = vmatprep.subr.bf16.mxu0 0
      %3255 = vmatpush2.bf16.msra.mxu0 0
      %3256 = vmatprep.subr.bf16.mxu0 0
      %3257 = vmatpush2.bf16.msra.mxu0 0
      %3258 = vmatprep.subr.bf16.mxu0 0
      %3259 = vmatpush2.bf16.msra.mxu0 0
      %3260 = vmatprep.subr.bf16.mxu0 0
      %3261 = vmatpush2.bf16.msra.mxu0 0
      %3262 = vmatprep.mubr.bf16.mxu0 0
      %3263 = vmatmul.mubr.bf16.gmra.mxu0 %v2859
      %v3264 = vpop.f32.mrf.mxu0
      %v3265 = vadd.f32 0.0, %v3264
      %v3266 = vpop.f32.mrf.mxu0
      %v3267 = vpop.f32.mrf.mxu0
      %v3268 = vadd.f32 0.0, %v3267
      %v3269 = vpop.f32.mrf.mxu0
      %3270 = vmatprep.mubr.bf16.mxu0 0
      %3271 = vmatmul.mubr.bf16.gmra.mxu0 %v2862
      %v3272 = vpop.f32.mrf.mxu0
      %v3273 = vadd.f32 0.0, %v3272
      %v3274 = vpop.f32.mrf.mxu0
      %v3275 = vpop.f32.mrf.mxu0
      %v3276 = vadd.f32 0.0, %v3275
      %v3277 = vpop.f32.mrf.mxu0
      %3278 = vmatprep.mubr.bf16.mxu0 0
      %3279 = vmatmul.mubr.bf16.gmra.mxu0 %v2865
      %v3280 = vpop.f32.mrf.mxu0
      %v3281 = vadd.f32 0.0, %v3280
      %v3282 = vpop.f32.mrf.mxu0
      %v3283 = vpop.f32.mrf.mxu0
      %v3284 = vadd.f32 0.0, %v3283
      %v3285 = vpop.f32.mrf.mxu0
      %3286 = vmatprep.mubr.bf16.mxu0 0
      %3287 = vmatmul.mubr.bf16.gmra.mxu0 %v2868
      %v3288 = vpop.f32.mrf.mxu0
      %v3289 = vadd.f32 0.0, %v3288
      %v3290 = vpop.f32.mrf.mxu0
      %v3291 = vpop.f32.mrf.mxu0
      %v3292 = vadd.f32 0.0, %v3291
      %v3293 = vpop.f32.mrf.mxu0
      %3294 = vdwg.mxu0
      %v3295 = vsub.f32 %v2935, %v3265
      %v3296 = vsub.f32 %v2936, %v3268
      %v3297 = vsub.f32 %v2937, %v3273
      %v3298 = vsub.f32 %v2938, %v3276
      %v3299 = vsub.f32 %v2939, %v3281
      %v3300 = vsub.f32 %v2940, %v3284
      %v3301 = vsub.f32 %v2941, %v3289
      %v3302 = vsub.f32 %v2942, %v3292
      %v3303 = vpack.c.bf16 %v3268, %v3265
      %v3304 = vpack.c.bf16 %v3276, %v3273
      %v3305 = vpack.c.bf16 %v3284, %v3281
      %v3306 = vpack.c.bf16 %v3292, %v3289
      %v3307 = vpack.c.bf16 %v3296, %v3295
      %v3308 = vpack.c.bf16 %v3298, %v3297
      %v3309 = vpack.c.bf16 %v3300, %v3299
      %v3310 = vpack.c.bf16 %v3302, %v3301
      %v3312 = vsel %vm926, %v3303, 0
      %v3315 = vsel %vm926, %v3304, 0
      %v3318 = vsel %vm926, %v3305, 0
      %v3321 = vsel %vm926, %v3306, 0
      %3323 = vmatprep.subr.bf16.mxu0 0
      %3324 = vmatpush1.bf16.msra.mxu0 0
      %3325 = vmatprep.subr.bf16.mxu0 0
      %3326 = vmatpush1.bf16.msra.mxu0 0
      %3327 = vmatprep.subr.bf16.mxu0 0
      %3328 = vmatpush1.bf16.msra.mxu0 0
      %3329 = vmatprep.subr.bf16.mxu0 0
      %3330 = vmatpush1.bf16.msra.mxu0 0
      %3331 = vmatprep.subr.bf16.mxu0 0
      %3332 = vmatpush1.bf16.msra.mxu0 %v3310
      %3333 = vmatprep.subr.bf16.mxu0 0
      %3334 = vmatpush1.bf16.msra.mxu0 %v3309
      %3335 = vmatprep.subr.bf16.mxu0 0
      %3336 = vmatpush1.bf16.msra.mxu0 %v3308
      %3337 = vmatprep.subr.bf16.mxu0 0
      %3338 = vmatpush1.bf16.msra.mxu0 %v3307
      %3339 = vmatprep.subr.bf16.mxu0 0
      %3340 = vmatpush2.bf16.msra.mxu0 0
      %3341 = vmatprep.subr.bf16.mxu0 0
      %3342 = vmatpush2.bf16.msra.mxu0 0
      %3343 = vmatprep.subr.bf16.mxu0 0
      %3344 = vmatpush2.bf16.msra.mxu0 0
      %3345 = vmatprep.subr.bf16.mxu0 0
      %3346 = vmatpush2.bf16.msra.mxu0 0
      %3347 = vmatprep.subr.bf16.mxu0 0
      %3348 = vmatpush2.bf16.msra.mxu0 0
      %3349 = vmatprep.subr.bf16.mxu0 0
      %3350 = vmatpush2.bf16.msra.mxu0 0
      %3351 = vmatprep.subr.bf16.mxu0 0
      %3352 = vmatpush2.bf16.msra.mxu0 0
      %3353 = vmatprep.subr.bf16.mxu0 0
      %3354 = vmatpush2.bf16.msra.mxu0 0
      %3355 = vmatprep.mubr.bf16.mxu0 0
      %3356 = vmatmul.mubr.bf16.gmra.mxu0 %v3312
      %v3357 = vpop.f32.mrf.mxu0
      %v3358 = vadd.f32 0.0, %v3357
      %v3359 = vpop.f32.mrf.mxu0
      %v3360 = vpop.f32.mrf.mxu0
      %v3361 = vadd.f32 0.0, %v3360
      %v3362 = vpop.f32.mrf.mxu0
      %3363 = vmatprep.mubr.bf16.mxu0 0
      %3364 = vmatmul.mubr.bf16.gmra.mxu0 %v3315
      %v3365 = vpop.f32.mrf.mxu0
      %v3366 = vadd.f32 0.0, %v3365
      %v3367 = vpop.f32.mrf.mxu0
      %v3368 = vpop.f32.mrf.mxu0
      %v3369 = vadd.f32 0.0, %v3368
      %v3370 = vpop.f32.mrf.mxu0
      %3371 = vmatprep.mubr.bf16.mxu0 0
      %3372 = vmatmul.mubr.bf16.gmra.mxu0 %v3318
      %v3373 = vpop.f32.mrf.mxu0
      %v3374 = vadd.f32 0.0, %v3373
      %v3375 = vpop.f32.mrf.mxu0
      %v3376 = vpop.f32.mrf.mxu0
      %v3377 = vadd.f32 0.0, %v3376
      %v3378 = vpop.f32.mrf.mxu0
      %3379 = vmatprep.mubr.bf16.mxu0 0
      %3380 = vmatmul.mubr.bf16.gmra.mxu0 %v3321
      %v3381 = vpop.f32.mrf.mxu0
      %v3382 = vadd.f32 0.0, %v3381
      %v3383 = vpop.f32.mrf.mxu0
      %v3384 = vpop.f32.mrf.mxu0
      %v3385 = vadd.f32 0.0, %v3384
      %v3386 = vpop.f32.mrf.mxu0
      %3387 = vdwg.mxu0
      %v3388 = vsub.f32 %v2951, %v3358
      %v3389 = vsub.f32 %v2952, %v3361
      %v3390 = vsub.f32 %v2953, %v3366
      %v3391 = vsub.f32 %v2954, %v3369
      %v3392 = vsub.f32 %v2955, %v3374
      %v3393 = vsub.f32 %v2956, %v3377
      %v3394 = vsub.f32 %v2957, %v3382
      %v3395 = vsub.f32 %v2958, %v3385
      %v3396 = vpack.c.bf16 %v3389, %v3388
      %v3397 = vpack.c.bf16 %v3391, %v3390
      %v3398 = vpack.c.bf16 %v3393, %v3392
      %v3399 = vpack.c.bf16 %v3395, %v3394
      %3400 = vmatprep.subr.bf16.mxu0 0
      %3401 = vmatpush1.bf16.msra.mxu0 0
      %3402 = vmatprep.subr.bf16.mxu0 0
      %3403 = vmatpush1.bf16.msra.mxu0 0
      %3404 = vmatprep.subr.bf16.mxu0 0
      %3405 = vmatpush1.bf16.msra.mxu0 0
      %3406 = vmatprep.subr.bf16.mxu0 0
      %3407 = vmatpush1.bf16.msra.mxu0 0
      %3408 = vmatprep.subr.bf16.mxu0 0
      %3409 = vmatpush1.bf16.msra.mxu0 %v3399
      %3410 = vmatprep.subr.bf16.mxu0 0
      %3411 = vmatpush1.bf16.msra.mxu0 %v3398
      %3412 = vmatprep.subr.bf16.mxu0 0
      %3413 = vmatpush1.bf16.msra.mxu0 %v3397
      %3414 = vmatprep.subr.bf16.mxu0 0
      %3415 = vmatpush1.bf16.msra.mxu0 %v3396
      %3416 = vmatprep.subr.bf16.mxu0 0
      %3417 = vmatpush2.bf16.msra.mxu0 0
      %3418 = vmatprep.subr.bf16.mxu0 0
      %3419 = vmatpush2.bf16.msra.mxu0 0
      %3420 = vmatprep.subr.bf16.mxu0 0
      %3421 = vmatpush2.bf16.msra.mxu0 0
      %3422 = vmatprep.subr.bf16.mxu0 0
      %3423 = vmatpush2.bf16.msra.mxu0 0
      %3424 = vmatprep.subr.bf16.mxu0 0
      %3425 = vmatpush2.bf16.msra.mxu0 0
      %3426 = vmatprep.subr.bf16.mxu0 0
      %3427 = vmatpush2.bf16.msra.mxu0 0
      %3428 = vmatprep.subr.bf16.mxu0 0
      %3429 = vmatpush2.bf16.msra.mxu0 0
      %3430 = vmatprep.subr.bf16.mxu0 0
      %3431 = vmatpush2.bf16.msra.mxu0 0
      %3432 = vmatprep.mubr.bf16.mxu0 0
      %3433 = vmatmul.mubr.bf16.gmra.mxu0 %v3312
      %v3434 = vpop.f32.mrf.mxu0
      %v3435 = vadd.f32 0.0, %v3434
      %v3436 = vpop.f32.mrf.mxu0
      %v3437 = vpop.f32.mrf.mxu0
      %v3438 = vadd.f32 0.0, %v3437
      %v3439 = vpop.f32.mrf.mxu0
      %3440 = vmatprep.mubr.bf16.mxu0 0
      %3441 = vmatmul.mubr.bf16.gmra.mxu0 %v3315
      %v3442 = vpop.f32.mrf.mxu0
      %v3443 = vadd.f32 0.0, %v3442
      %v3444 = vpop.f32.mrf.mxu0
      %v3445 = vpop.f32.mrf.mxu0
      %v3446 = vadd.f32 0.0, %v3445
      %v3447 = vpop.f32.mrf.mxu0
      %3448 = vmatprep.mubr.bf16.mxu0 0
      %3449 = vmatmul.mubr.bf16.gmra.mxu0 %v3318
      %v3450 = vpop.f32.mrf.mxu0
      %v3451 = vadd.f32 0.0, %v3450
      %v3452 = vpop.f32.mrf.mxu0
      %v3453 = vpop.f32.mrf.mxu0
      %v3454 = vadd.f32 0.0, %v3453
      %v3455 = vpop.f32.mrf.mxu0
      %3456 = vmatprep.mubr.bf16.mxu0 0
      %3457 = vmatmul.mubr.bf16.gmra.mxu0 %v3321
      %v3458 = vpop.f32.mrf.mxu0
      %v3459 = vadd.f32 0.0, %v3458
      %v3460 = vpop.f32.mrf.mxu0
      %v3461 = vpop.f32.mrf.mxu0
      %v3462 = vadd.f32 0.0, %v3461
      %v3463 = vpop.f32.mrf.mxu0
      %3464 = vdwg.mxu0
      %v3465 = vsub.f32 %v3052, %v3435
      %v3466 = vsub.f32 %v3053, %v3438
      %v3467 = vsub.f32 %v3054, %v3443
      %v3468 = vsub.f32 %v3055, %v3446
      %v3469 = vsub.f32 %v3056, %v3451
      %v3470 = vsub.f32 %v3057, %v3454
      %v3471 = vsub.f32 %v3058, %v3459
      %v3472 = vsub.f32 %v3059, %v3462
      %v3473 = vpack.c.bf16 %v3466, %v3465
      %v3474 = vpack.c.bf16 %v3468, %v3467
      %v3475 = vpack.c.bf16 %v3470, %v3469
      %v3476 = vpack.c.bf16 %v3472, %v3471
      %v3478 = vsel %vm926, %v3226, 0
      %v3481 = vsel %vm926, %v3227, 0
      %v3484 = vsel %vm926, %v3228, 0
      %v3487 = vsel %vm926, %v3229, 0
      %3489 = vmatprep.subr.bf16.mxu0 0
      %3490 = vmatpush1.bf16.msra.mxu0 0
      %3491 = vmatprep.subr.bf16.mxu0 0
      %3492 = vmatpush1.bf16.msra.mxu0 0
      %3493 = vmatprep.subr.bf16.mxu0 0
      %3494 = vmatpush1.bf16.msra.mxu0 0
      %3495 = vmatprep.subr.bf16.mxu0 0
      %3496 = vmatpush1.bf16.msra.mxu0 0
      %3497 = vmatprep.subr.bf16.mxu0 0
      %3498 = vmatpush1.bf16.msra.mxu0 %v3476
      %3499 = vmatprep.subr.bf16.mxu0 0
      %3500 = vmatpush1.bf16.msra.mxu0 %v3475
      %3501 = vmatprep.subr.bf16.mxu0 0
      %3502 = vmatpush1.bf16.msra.mxu0 %v3474
      %3503 = vmatprep.subr.bf16.mxu0 0
      %3504 = vmatpush1.bf16.msra.mxu0 %v3473
      %3505 = vmatprep.subr.bf16.mxu0 0
      %3506 = vmatpush2.bf16.msra.mxu0 0
      %3507 = vmatprep.subr.bf16.mxu0 0
      %3508 = vmatpush2.bf16.msra.mxu0 0
      %3509 = vmatprep.subr.bf16.mxu0 0
      %3510 = vmatpush2.bf16.msra.mxu0 0
      %3511 = vmatprep.subr.bf16.mxu0 0
      %3512 = vmatpush2.bf16.msra.mxu0 0
      %3513 = vmatprep.subr.bf16.mxu0 0
      %3514 = vmatpush2.bf16.msra.mxu0 0
      %3515 = vmatprep.subr.bf16.mxu0 0
      %3516 = vmatpush2.bf16.msra.mxu0 0
      %3517 = vmatprep.subr.bf16.mxu0 0
      %3518 = vmatpush2.bf16.msra.mxu0 0
      %3519 = vmatprep.subr.bf16.mxu0 0
      %3520 = vmatpush2.bf16.msra.mxu0 0
      %3521 = vmatprep.mubr.bf16.mxu0 0
      %3522 = vmatmul.mubr.bf16.gmra.mxu0 %v3478
      %v3523 = vpop.f32.mrf.mxu0
      %v3524 = vadd.f32 0.0, %v3523
      %v3525 = vpop.f32.mrf.mxu0
      %v3526 = vpop.f32.mrf.mxu0
      %v3527 = vadd.f32 0.0, %v3526
      %v3528 = vpop.f32.mrf.mxu0
      %3529 = vmatprep.mubr.bf16.mxu0 0
      %3530 = vmatmul.mubr.bf16.gmra.mxu0 %v3481
      %v3531 = vpop.f32.mrf.mxu0
      %v3532 = vadd.f32 0.0, %v3531
      %v3533 = vpop.f32.mrf.mxu0
      %v3534 = vpop.f32.mrf.mxu0
      %v3535 = vadd.f32 0.0, %v3534
      %v3536 = vpop.f32.mrf.mxu0
      %3537 = vmatprep.mubr.bf16.mxu0 0
      %3538 = vmatmul.mubr.bf16.gmra.mxu0 %v3484
      %v3539 = vpop.f32.mrf.mxu0
      %v3540 = vadd.f32 0.0, %v3539
      %v3541 = vpop.f32.mrf.mxu0
      %v3542 = vpop.f32.mrf.mxu0
      %v3543 = vadd.f32 0.0, %v3542
      %v3544 = vpop.f32.mrf.mxu0
      %3545 = vmatprep.mubr.bf16.mxu0 0
      %3546 = vmatmul.mubr.bf16.gmra.mxu0 %v3487
      %v3547 = vpop.f32.mrf.mxu0
      %v3548 = vadd.f32 0.0, %v3547
      %v3549 = vpop.f32.mrf.mxu0
      %v3550 = vpop.f32.mrf.mxu0
      %v3551 = vadd.f32 0.0, %v3550
      %v3552 = vpop.f32.mrf.mxu0
      %3553 = vdwg.mxu0
      %v3554 = vmul.f32 %v3524, 0.25
      %v3555 = vmul.f32 %v3527, 0.25
      %v3556 = vmul.f32 %v3532, 0.25
      %v3557 = vmul.f32 %v3535, 0.25
      %v3558 = vmul.f32 %v3540, 0.25
      %v3559 = vmul.f32 %v3543, 0.25
      %v3560 = vmul.f32 %v3548, 0.25
      %v3561 = vmul.f32 %v3551, 0.25
      %v3562 = vpack.c.bf16 %v3555, %v3554
      %v3563 = vpack.c.bf16 %v3557, %v3556
      %v3564 = vpack.c.bf16 %v3559, %v3558
      %v3565 = vpack.c.bf16 %v3561, %v3560
      %3566 = vmatprep.subr.bf16.mxu0 0
      %3567 = vmatpush1.bf16.msra.mxu0 0
      %3568 = vmatprep.subr.bf16.mxu0 0
      %3569 = vmatpush1.bf16.msra.mxu0 0
      %3570 = vmatprep.subr.bf16.mxu0 0
      %3571 = vmatpush1.bf16.msra.mxu0 0
      %3572 = vmatprep.subr.bf16.mxu0 0
      %3573 = vmatpush1.bf16.msra.mxu0 0
      %3574 = vmatprep.subr.bf16.mxu0 0
      %3575 = vmatpush1.bf16.msra.mxu0 %v3565
      %3576 = vmatprep.subr.bf16.mxu0 0
      %3577 = vmatpush1.bf16.msra.mxu0 %v3564
      %3578 = vmatprep.subr.bf16.mxu0 0
      %3579 = vmatpush1.bf16.msra.mxu0 %v3563
      %3580 = vmatprep.subr.bf16.mxu0 0
      %3581 = vmatpush1.bf16.msra.mxu0 %v3562
      %3582 = vmatprep.subr.bf16.mxu0 0
      %3583 = vmatpush2.bf16.msra.mxu0 0
      %3584 = vmatprep.subr.bf16.mxu0 0
      %3585 = vmatpush2.bf16.msra.mxu0 0
      %3586 = vmatprep.subr.bf16.mxu0 0
      %3587 = vmatpush2.bf16.msra.mxu0 0
      %3588 = vmatprep.subr.bf16.mxu0 0
      %3589 = vmatpush2.bf16.msra.mxu0 0
      %3590 = vmatprep.subr.bf16.mxu0 0
      %3591 = vmatpush2.bf16.msra.mxu0 0
      %3592 = vmatprep.subr.bf16.mxu0 0
      %3593 = vmatpush2.bf16.msra.mxu0 0
      %3594 = vmatprep.subr.bf16.mxu0 0
      %3595 = vmatpush2.bf16.msra.mxu0 0
      %3596 = vmatprep.subr.bf16.mxu0 0
      %3597 = vmatpush2.bf16.msra.mxu0 0
      %3598 = vmatprep.mubr.bf16.mxu0 0
      %3599 = vmatmul.mubr.bf16.gmra.mxu0 %v2859
      %v3600 = vpop.f32.mrf.mxu0
      %v3601 = vadd.f32 0.0, %v3600
      %v3602 = vpop.f32.mrf.mxu0
      %v3603 = vpop.f32.mrf.mxu0
      %v3604 = vadd.f32 0.0, %v3603
      %v3605 = vpop.f32.mrf.mxu0
      %3606 = vmatprep.mubr.bf16.mxu0 0
      %3607 = vmatmul.mubr.bf16.gmra.mxu0 %v2862
      %v3608 = vpop.f32.mrf.mxu0
      %v3609 = vadd.f32 0.0, %v3608
      %v3610 = vpop.f32.mrf.mxu0
      %v3611 = vpop.f32.mrf.mxu0
      %v3612 = vadd.f32 0.0, %v3611
      %v3613 = vpop.f32.mrf.mxu0
      %3614 = vmatprep.mubr.bf16.mxu0 0
      %3615 = vmatmul.mubr.bf16.gmra.mxu0 %v2865
      %v3616 = vpop.f32.mrf.mxu0
      %v3617 = vadd.f32 0.0, %v3616
      %v3618 = vpop.f32.mrf.mxu0
      %v3619 = vpop.f32.mrf.mxu0
      %v3620 = vadd.f32 0.0, %v3619
      %v3621 = vpop.f32.mrf.mxu0
      %3622 = vmatprep.mubr.bf16.mxu0 0
      %3623 = vmatmul.mubr.bf16.gmra.mxu0 %v2868
      %v3624 = vpop.f32.mrf.mxu0
      %v3625 = vadd.f32 0.0, %v3624
      %v3626 = vpop.f32.mrf.mxu0
      %v3627 = vpop.f32.mrf.mxu0
      %v3628 = vadd.f32 0.0, %v3627
      %v3629 = vpop.f32.mrf.mxu0
      %3630 = vdwg.mxu0
      %v3631 = vsub.f32 %v2935, %v3601
      %v3632 = vsub.f32 %v2936, %v3604
      %v3633 = vsub.f32 %v2937, %v3609
      %v3634 = vsub.f32 %v2938, %v3612
      %v3635 = vsub.f32 %v2939, %v3617
      %v3636 = vsub.f32 %v2940, %v3620
      %v3637 = vsub.f32 %v2941, %v3625
      %v3638 = vsub.f32 %v2942, %v3628
      %v3639 = vpack.c.bf16 %v3604, %v3601
      %v3640 = vpack.c.bf16 %v3612, %v3609
      %v3641 = vpack.c.bf16 %v3620, %v3617
      %v3642 = vpack.c.bf16 %v3628, %v3625
      %v3643 = vpack.c.bf16 %v3632, %v3631
      %v3644 = vpack.c.bf16 %v3634, %v3633
      %v3645 = vpack.c.bf16 %v3636, %v3635
      %v3646 = vpack.c.bf16 %v3638, %v3637
      %v3648 = vsel %vm926, %v3639, 0
      %v3651 = vsel %vm926, %v3640, 0
      %v3654 = vsel %vm926, %v3641, 0
      %v3657 = vsel %vm926, %v3642, 0
      %3659 = vmatprep.subr.bf16.mxu0 0
      %3660 = vmatpush1.bf16.msra.mxu0 0
      %3661 = vmatprep.subr.bf16.mxu0 0
      %3662 = vmatpush1.bf16.msra.mxu0 0
      %3663 = vmatprep.subr.bf16.mxu0 0
      %3664 = vmatpush1.bf16.msra.mxu0 0
      %3665 = vmatprep.subr.bf16.mxu0 0
      %3666 = vmatpush1.bf16.msra.mxu0 0
      %3667 = vmatprep.subr.bf16.mxu0 0
      %3668 = vmatpush1.bf16.msra.mxu0 %v3646
      %3669 = vmatprep.subr.bf16.mxu0 0
      %3670 = vmatpush1.bf16.msra.mxu0 %v3645
      %3671 = vmatprep.subr.bf16.mxu0 0
      %3672 = vmatpush1.bf16.msra.mxu0 %v3644
      %3673 = vmatprep.subr.bf16.mxu0 0
      %3674 = vmatpush1.bf16.msra.mxu0 %v3643
      %3675 = vmatprep.subr.bf16.mxu0 0
      %3676 = vmatpush2.bf16.msra.mxu0 0
      %3677 = vmatprep.subr.bf16.mxu0 0
      %3678 = vmatpush2.bf16.msra.mxu0 0
      %3679 = vmatprep.subr.bf16.mxu0 0
      %3680 = vmatpush2.bf16.msra.mxu0 0
      %3681 = vmatprep.subr.bf16.mxu0 0
      %3682 = vmatpush2.bf16.msra.mxu0 0
      %3683 = vmatprep.subr.bf16.mxu0 0
      %3684 = vmatpush2.bf16.msra.mxu0 0
      %3685 = vmatprep.subr.bf16.mxu0 0
      %3686 = vmatpush2.bf16.msra.mxu0 0
      %3687 = vmatprep.subr.bf16.mxu0 0
      %3688 = vmatpush2.bf16.msra.mxu0 0
      %3689 = vmatprep.subr.bf16.mxu0 0
      %3690 = vmatpush2.bf16.msra.mxu0 0
      %3691 = vmatprep.mubr.bf16.mxu0 0
      %3692 = vmatmul.mubr.bf16.gmra.mxu0 %v3648
      %v3693 = vpop.f32.mrf.mxu0
      %v3694 = vadd.f32 0.0, %v3693
      %v3695 = vpop.f32.mrf.mxu0
      %v3696 = vpop.f32.mrf.mxu0
      %v3697 = vadd.f32 0.0, %v3696
      %v3698 = vpop.f32.mrf.mxu0
      %3699 = vmatprep.mubr.bf16.mxu0 0
      %3700 = vmatmul.mubr.bf16.gmra.mxu0 %v3651
      %v3701 = vpop.f32.mrf.mxu0
      %v3702 = vadd.f32 0.0, %v3701
      %v3703 = vpop.f32.mrf.mxu0
      %v3704 = vpop.f32.mrf.mxu0
      %v3705 = vadd.f32 0.0, %v3704
      %v3706 = vpop.f32.mrf.mxu0
      %3707 = vmatprep.mubr.bf16.mxu0 0
      %3708 = vmatmul.mubr.bf16.gmra.mxu0 %v3654
      %v3709 = vpop.f32.mrf.mxu0
      %v3710 = vadd.f32 0.0, %v3709
      %v3711 = vpop.f32.mrf.mxu0
      %v3712 = vpop.f32.mrf.mxu0
      %v3713 = vadd.f32 0.0, %v3712
      %v3714 = vpop.f32.mrf.mxu0
      %3715 = vmatprep.mubr.bf16.mxu0 0
      %3716 = vmatmul.mubr.bf16.gmra.mxu0 %v3657
      %v3717 = vpop.f32.mrf.mxu0
      %v3718 = vadd.f32 0.0, %v3717
      %v3719 = vpop.f32.mrf.mxu0
      %v3720 = vpop.f32.mrf.mxu0
      %v3721 = vadd.f32 0.0, %v3720
      %v3722 = vpop.f32.mrf.mxu0
      %3723 = vdwg.mxu0
      %v3724 = vsub.f32 %v2951, %v3694
      %v3725 = vsub.f32 %v2952, %v3697
      %v3726 = vsub.f32 %v2953, %v3702
      %v3727 = vsub.f32 %v2954, %v3705
      %v3728 = vsub.f32 %v2955, %v3710
      %v3729 = vsub.f32 %v2956, %v3713
      %v3730 = vsub.f32 %v2957, %v3718
      %v3731 = vsub.f32 %v2958, %v3721
      %v3732 = vpack.c.bf16 %v3725, %v3724
      %v3733 = vpack.c.bf16 %v3727, %v3726
      %v3734 = vpack.c.bf16 %v3729, %v3728
      %v3735 = vpack.c.bf16 %v3731, %v3730
      %3736 = vmatprep.subr.bf16.mxu0 0
      %3737 = vmatpush1.bf16.msra.mxu0 0
      %3738 = vmatprep.subr.bf16.mxu0 0
      %3739 = vmatpush1.bf16.msra.mxu0 0
      %3740 = vmatprep.subr.bf16.mxu0 0
      %3741 = vmatpush1.bf16.msra.mxu0 0
      %3742 = vmatprep.subr.bf16.mxu0 0
      %3743 = vmatpush1.bf16.msra.mxu0 0
      %3744 = vmatprep.subr.bf16.mxu0 0
      %3745 = vmatpush1.bf16.msra.mxu0 %v3735
      %3746 = vmatprep.subr.bf16.mxu0 0
      %3747 = vmatpush1.bf16.msra.mxu0 %v3734
      %3748 = vmatprep.subr.bf16.mxu0 0
      %3749 = vmatpush1.bf16.msra.mxu0 %v3733
      %3750 = vmatprep.subr.bf16.mxu0 0
      %3751 = vmatpush1.bf16.msra.mxu0 %v3732
      %3752 = vmatprep.subr.bf16.mxu0 0
      %3753 = vmatpush2.bf16.msra.mxu0 0
      %3754 = vmatprep.subr.bf16.mxu0 0
      %3755 = vmatpush2.bf16.msra.mxu0 0
      %3756 = vmatprep.subr.bf16.mxu0 0
      %3757 = vmatpush2.bf16.msra.mxu0 0
      %3758 = vmatprep.subr.bf16.mxu0 0
      %3759 = vmatpush2.bf16.msra.mxu0 0
      %3760 = vmatprep.subr.bf16.mxu0 0
      %3761 = vmatpush2.bf16.msra.mxu0 0
      %3762 = vmatprep.subr.bf16.mxu0 0
      %3763 = vmatpush2.bf16.msra.mxu0 0
      %3764 = vmatprep.subr.bf16.mxu0 0
      %3765 = vmatpush2.bf16.msra.mxu0 0
      %3766 = vmatprep.subr.bf16.mxu0 0
      %3767 = vmatpush2.bf16.msra.mxu0 0
      %3768 = vmatprep.mubr.bf16.mxu0 0
      %3769 = vmatmul.mubr.bf16.gmra.mxu0 %v3648
      %v3770 = vpop.f32.mrf.mxu0
      %v3771 = vadd.f32 0.0, %v3770
      %v3772 = vpop.f32.mrf.mxu0
      %v3773 = vpop.f32.mrf.mxu0
      %v3774 = vadd.f32 0.0, %v3773
      %v3775 = vpop.f32.mrf.mxu0
      %3776 = vmatprep.mubr.bf16.mxu0 0
      %3777 = vmatmul.mubr.bf16.gmra.mxu0 %v3651
      %v3778 = vpop.f32.mrf.mxu0
      %v3779 = vadd.f32 0.0, %v3778
      %v3780 = vpop.f32.mrf.mxu0
      %v3781 = vpop.f32.mrf.mxu0
      %v3782 = vadd.f32 0.0, %v3781
      %v3783 = vpop.f32.mrf.mxu0
      %3784 = vmatprep.mubr.bf16.mxu0 0
      %3785 = vmatmul.mubr.bf16.gmra.mxu0 %v3654
      %v3786 = vpop.f32.mrf.mxu0
      %v3787 = vadd.f32 0.0, %v3786
      %v3788 = vpop.f32.mrf.mxu0
      %v3789 = vpop.f32.mrf.mxu0
      %v3790 = vadd.f32 0.0, %v3789
      %v3791 = vpop.f32.mrf.mxu0
      %3792 = vmatprep.mubr.bf16.mxu0 0
      %3793 = vmatmul.mubr.bf16.gmra.mxu0 %v3657
      %v3794 = vpop.f32.mrf.mxu0
      %v3795 = vadd.f32 0.0, %v3794
      %v3796 = vpop.f32.mrf.mxu0
      %v3797 = vpop.f32.mrf.mxu0
      %v3798 = vadd.f32 0.0, %v3797
      %v3799 = vpop.f32.mrf.mxu0
      %3800 = vdwg.mxu0
      %v3801 = vsub.f32 %v3052, %v3771
      %v3802 = vsub.f32 %v3053, %v3774
      %v3803 = vsub.f32 %v3054, %v3779
      %v3804 = vsub.f32 %v3055, %v3782
      %v3805 = vsub.f32 %v3056, %v3787
      %v3806 = vsub.f32 %v3057, %v3790
      %v3807 = vsub.f32 %v3058, %v3795
      %v3808 = vsub.f32 %v3059, %v3798
      %v3809 = vpack.c.bf16 %v3802, %v3801
      %v3810 = vpack.c.bf16 %v3804, %v3803
      %v3811 = vpack.c.bf16 %v3806, %v3805
      %v3812 = vpack.c.bf16 %v3808, %v3807
      %v3814 = vsel %vm926, %v3562, 0
      %v3817 = vsel %vm926, %v3563, 0
      %v3820 = vsel %vm926, %v3564, 0
      %v3823 = vsel %vm926, %v3565, 0
      %3825 = vmatprep.subr.bf16.mxu0 0
      %3826 = vmatpush1.bf16.msra.mxu0 0
      %3827 = vmatprep.subr.bf16.mxu0 0
      %3828 = vmatpush1.bf16.msra.mxu0 0
      %3829 = vmatprep.subr.bf16.mxu0 0
      %3830 = vmatpush1.bf16.msra.mxu0 0
      %3831 = vmatprep.subr.bf16.mxu0 0
      %3832 = vmatpush1.bf16.msra.mxu0 0
      %3833 = vmatprep.subr.bf16.mxu0 0
      %3834 = vmatpush1.bf16.msra.mxu0 %v3812
      %3835 = vmatprep.subr.bf16.mxu0 0
      %3836 = vmatpush1.bf16.msra.mxu0 %v3811
      %3837 = vmatprep.subr.bf16.mxu0 0
      %3838 = vmatpush1.bf16.msra.mxu0 %v3810
      %3839 = vmatprep.subr.bf16.mxu0 0
      %3840 = vmatpush1.bf16.msra.mxu0 %v3809
      %3841 = vmatprep.subr.bf16.mxu0 0
      %3842 = vmatpush2.bf16.msra.mxu0 0
      %3843 = vmatprep.subr.bf16.mxu0 0
      %3844 = vmatpush2.bf16.msra.mxu0 0
      %3845 = vmatprep.subr.bf16.mxu0 0
      %3846 = vmatpush2.bf16.msra.mxu0 0
      %3847 = vmatprep.subr.bf16.mxu0 0
      %3848 = vmatpush2.bf16.msra.mxu0 0
      %3849 = vmatprep.subr.bf16.mxu0 0
      %3850 = vmatpush2.bf16.msra.mxu0 0
      %3851 = vmatprep.subr.bf16.mxu0 0
      %3852 = vmatpush2.bf16.msra.mxu0 0
      %3853 = vmatprep.subr.bf16.mxu0 0
      %3854 = vmatpush2.bf16.msra.mxu0 0
      %3855 = vmatprep.subr.bf16.mxu0 0
      %3856 = vmatpush2.bf16.msra.mxu0 0
      %3857 = vmatprep.mubr.bf16.mxu0 0
      %3858 = vmatmul.mubr.bf16.gmra.mxu0 %v3814
      %v3859 = vpop.f32.mrf.mxu0
      %v3860 = vadd.f32 0.0, %v3859
      %v3861 = vpop.f32.mrf.mxu0
      %v3862 = vpop.f32.mrf.mxu0
      %v3863 = vadd.f32 0.0, %v3862
      %v3864 = vpop.f32.mrf.mxu0
      %3865 = vmatprep.mubr.bf16.mxu0 0
      %3866 = vmatmul.mubr.bf16.gmra.mxu0 %v3817
      %v3867 = vpop.f32.mrf.mxu0
      %v3868 = vadd.f32 0.0, %v3867
      %v3869 = vpop.f32.mrf.mxu0
      %v3870 = vpop.f32.mrf.mxu0
      %v3871 = vadd.f32 0.0, %v3870
      %v3872 = vpop.f32.mrf.mxu0
      %3873 = vmatprep.mubr.bf16.mxu0 0
      %3874 = vmatmul.mubr.bf16.gmra.mxu0 %v3820
      %v3875 = vpop.f32.mrf.mxu0
      %v3876 = vadd.f32 0.0, %v3875
      %v3877 = vpop.f32.mrf.mxu0
      %v3878 = vpop.f32.mrf.mxu0
      %v3879 = vadd.f32 0.0, %v3878
      %v3880 = vpop.f32.mrf.mxu0
      %3881 = vmatprep.mubr.bf16.mxu0 0
      %3882 = vmatmul.mubr.bf16.gmra.mxu0 %v3823
      %v3883 = vpop.f32.mrf.mxu0
      %v3884 = vadd.f32 0.0, %v3883
      %v3885 = vpop.f32.mrf.mxu0
      %v3886 = vpop.f32.mrf.mxu0
      %v3887 = vadd.f32 0.0, %v3886
      %v3888 = vpop.f32.mrf.mxu0
      %3889 = vdwg.mxu0
      %v3890 = vmul.f32 %v3860, 0.25
      %v3891 = vmul.f32 %v3863, 0.25
      %v3892 = vmul.f32 %v3868, 0.25
      %v3893 = vmul.f32 %v3871, 0.25
      %v3894 = vmul.f32 %v3876, 0.25
      %v3895 = vmul.f32 %v3879, 0.25
      %v3896 = vmul.f32 %v3884, 0.25
      %v3897 = vmul.f32 %v3887, 0.25
      %v3898 = vpack.c.bf16 %v3891, %v3890
      %v3899 = vpack.c.bf16 %v3893, %v3892
      %v3900 = vpack.c.bf16 %v3895, %v3894
      %v3901 = vpack.c.bf16 %v3897, %v3896
      %3902 = vmatprep.subr.bf16.mxu0 0
      %3903 = vmatpush1.bf16.msra.mxu0 0
      %3904 = vmatprep.subr.bf16.mxu0 0
      %3905 = vmatpush1.bf16.msra.mxu0 0
      %3906 = vmatprep.subr.bf16.mxu0 0
      %3907 = vmatpush1.bf16.msra.mxu0 0
      %3908 = vmatprep.subr.bf16.mxu0 0
      %3909 = vmatpush1.bf16.msra.mxu0 0
      %3910 = vmatprep.subr.bf16.mxu0 0
      %3911 = vmatpush1.bf16.msra.mxu0 %v3901
      %3912 = vmatprep.subr.bf16.mxu0 0
      %3913 = vmatpush1.bf16.msra.mxu0 %v3900
      %3914 = vmatprep.subr.bf16.mxu0 0
      %3915 = vmatpush1.bf16.msra.mxu0 %v3899
      %3916 = vmatprep.subr.bf16.mxu0 0
      %3917 = vmatpush1.bf16.msra.mxu0 %v3898
      %3918 = vmatprep.subr.bf16.mxu0 0
      %3919 = vmatpush2.bf16.msra.mxu0 0
      %3920 = vmatprep.subr.bf16.mxu0 0
      %3921 = vmatpush2.bf16.msra.mxu0 0
      %3922 = vmatprep.subr.bf16.mxu0 0
      %3923 = vmatpush2.bf16.msra.mxu0 0
      %3924 = vmatprep.subr.bf16.mxu0 0
      %3925 = vmatpush2.bf16.msra.mxu0 0
      %3926 = vmatprep.subr.bf16.mxu0 0
      %3927 = vmatpush2.bf16.msra.mxu0 0
      %3928 = vmatprep.subr.bf16.mxu0 0
      %3929 = vmatpush2.bf16.msra.mxu0 0
      %3930 = vmatprep.subr.bf16.mxu0 0
      %3931 = vmatpush2.bf16.msra.mxu0 0
      %3932 = vmatprep.subr.bf16.mxu0 0
      %3933 = vmatpush2.bf16.msra.mxu0 0
      %3934 = vmatprep.mubr.bf16.mxu0 0
      %3935 = vmatmul.mubr.bf16.gmra.mxu0 %v2859
      %v3936 = vpop.f32.mrf.mxu0
      %v3937 = vadd.f32 0.0, %v3936
      %v3938 = vpop.f32.mrf.mxu0
      %v3939 = vpop.f32.mrf.mxu0
      %v3940 = vadd.f32 0.0, %v3939
      %v3941 = vpop.f32.mrf.mxu0
      %3942 = vmatprep.mubr.bf16.mxu0 0
      %3943 = vmatmul.mubr.bf16.gmra.mxu0 %v2862
      %v3944 = vpop.f32.mrf.mxu0
      %v3945 = vadd.f32 0.0, %v3944
      %v3946 = vpop.f32.mrf.mxu0
      %v3947 = vpop.f32.mrf.mxu0
      %v3948 = vadd.f32 0.0, %v3947
      %v3949 = vpop.f32.mrf.mxu0
      %3950 = vmatprep.mubr.bf16.mxu0 0
      %3951 = vmatmul.mubr.bf16.gmra.mxu0 %v2865
      %v3952 = vpop.f32.mrf.mxu0
      %v3953 = vadd.f32 0.0, %v3952
      %v3954 = vpop.f32.mrf.mxu0
      %v3955 = vpop.f32.mrf.mxu0
      %v3956 = vadd.f32 0.0, %v3955
      %v3957 = vpop.f32.mrf.mxu0
      %3958 = vmatprep.mubr.bf16.mxu0 0
      %3959 = vmatmul.mubr.bf16.gmra.mxu0 %v2868
      %v3960 = vpop.f32.mrf.mxu0
      %v3961 = vadd.f32 0.0, %v3960
      %v3962 = vpop.f32.mrf.mxu0
      %v3963 = vpop.f32.mrf.mxu0
      %v3964 = vadd.f32 0.0, %v3963
      %v3965 = vpop.f32.mrf.mxu0
      %3966 = vdwg.mxu0
      %v3967 = vsub.f32 %v2935, %v3937
      %v3968 = vsub.f32 %v2936, %v3940
      %v3969 = vsub.f32 %v2937, %v3945
      %v3970 = vsub.f32 %v2938, %v3948
      %v3971 = vsub.f32 %v2939, %v3953
      %v3972 = vsub.f32 %v2940, %v3956
      %v3973 = vsub.f32 %v2941, %v3961
      %v3974 = vsub.f32 %v2942, %v3964
      %v3975 = vpack.c.bf16 %v3940, %v3937
      %v3976 = vpack.c.bf16 %v3948, %v3945
      %v3977 = vpack.c.bf16 %v3956, %v3953
      %v3978 = vpack.c.bf16 %v3964, %v3961
      %v3979 = vpack.c.bf16 %v3968, %v3967
      %v3980 = vpack.c.bf16 %v3970, %v3969
      %v3981 = vpack.c.bf16 %v3972, %v3971
      %v3982 = vpack.c.bf16 %v3974, %v3973
      %v3984 = vsel %vm926, %v3975, 0
      %v3987 = vsel %vm926, %v3976, 0
      %v3990 = vsel %vm926, %v3977, 0
      %v3993 = vsel %vm926, %v3978, 0
      %3995 = vmatprep.subr.bf16.mxu0 0
      %3996 = vmatpush1.bf16.msra.mxu0 0
      %3997 = vmatprep.subr.bf16.mxu0 0
      %3998 = vmatpush1.bf16.msra.mxu0 0
      %3999 = vmatprep.subr.bf16.mxu0 0
      %4000 = vmatpush1.bf16.msra.mxu0 0
      %4001 = vmatprep.subr.bf16.mxu0 0
      %4002 = vmatpush1.bf16.msra.mxu0 0
      %4003 = vmatprep.subr.bf16.mxu0 0
      %4004 = vmatpush1.bf16.msra.mxu0 %v3982
      %4005 = vmatprep.subr.bf16.mxu0 0
      %4006 = vmatpush1.bf16.msra.mxu0 %v3981
      %4007 = vmatprep.subr.bf16.mxu0 0
      %4008 = vmatpush1.bf16.msra.mxu0 %v3980
      %4009 = vmatprep.subr.bf16.mxu0 0
      %4010 = vmatpush1.bf16.msra.mxu0 %v3979
      %4011 = vmatprep.subr.bf16.mxu0 0
      %4012 = vmatpush2.bf16.msra.mxu0 0
      %4013 = vmatprep.subr.bf16.mxu0 0
      %4014 = vmatpush2.bf16.msra.mxu0 0
      %4015 = vmatprep.subr.bf16.mxu0 0
      %4016 = vmatpush2.bf16.msra.mxu0 0
      %4017 = vmatprep.subr.bf16.mxu0 0
      %4018 = vmatpush2.bf16.msra.mxu0 0
      %4019 = vmatprep.subr.bf16.mxu0 0
      %4020 = vmatpush2.bf16.msra.mxu0 0
      %4021 = vmatprep.subr.bf16.mxu0 0
      %4022 = vmatpush2.bf16.msra.mxu0 0
      %4023 = vmatprep.subr.bf16.mxu0 0
      %4024 = vmatpush2.bf16.msra.mxu0 0
      %4025 = vmatprep.subr.bf16.mxu0 0
      %4026 = vmatpush2.bf16.msra.mxu0 0
      %4027 = vmatprep.mubr.bf16.mxu0 0
      %4028 = vmatmul.mubr.bf16.gmra.mxu0 %v3984
      %v4029 = vpop.f32.mrf.mxu0
      %v4030 = vadd.f32 0.0, %v4029
      %v4031 = vpop.f32.mrf.mxu0
      %v4032 = vpop.f32.mrf.mxu0
      %v4033 = vadd.f32 0.0, %v4032
      %v4034 = vpop.f32.mrf.mxu0
      %4035 = vmatprep.mubr.bf16.mxu0 0
      %4036 = vmatmul.mubr.bf16.gmra.mxu0 %v3987
      %v4037 = vpop.f32.mrf.mxu0
      %v4038 = vadd.f32 0.0, %v4037
      %v4039 = vpop.f32.mrf.mxu0
      %v4040 = vpop.f32.mrf.mxu0
      %v4041 = vadd.f32 0.0, %v4040
      %v4042 = vpop.f32.mrf.mxu0
      %4043 = vmatprep.mubr.bf16.mxu0 0
      %4044 = vmatmul.mubr.bf16.gmra.mxu0 %v3990
      %v4045 = vpop.f32.mrf.mxu0
      %v4046 = vadd.f32 0.0, %v4045
      %v4047 = vpop.f32.mrf.mxu0
      %v4048 = vpop.f32.mrf.mxu0
      %v4049 = vadd.f32 0.0, %v4048
      %v4050 = vpop.f32.mrf.mxu0
      %4051 = vmatprep.mubr.bf16.mxu0 0
      %4052 = vmatmul.mubr.bf16.gmra.mxu0 %v3993
      %v4053 = vpop.f32.mrf.mxu0
      %v4054 = vadd.f32 0.0, %v4053
      %v4055 = vpop.f32.mrf.mxu0
      %v4056 = vpop.f32.mrf.mxu0
      %v4057 = vadd.f32 0.0, %v4056
      %v4058 = vpop.f32.mrf.mxu0
      %4059 = vdwg.mxu0
      %v4060 = vsub.f32 %v2951, %v4030
      %v4061 = vsub.f32 %v2952, %v4033
      %v4062 = vsub.f32 %v2953, %v4038
      %v4063 = vsub.f32 %v2954, %v4041
      %v4064 = vsub.f32 %v2955, %v4046
      %v4065 = vsub.f32 %v2956, %v4049
      %v4066 = vsub.f32 %v2957, %v4054
      %v4067 = vsub.f32 %v2958, %v4057
      %v4068 = vpack.c.bf16 %v4061, %v4060
      %v4069 = vpack.c.bf16 %v4063, %v4062
      %v4070 = vpack.c.bf16 %v4065, %v4064
      %v4071 = vpack.c.bf16 %v4067, %v4066
      %4072 = vmatprep.subr.bf16.mxu0 0
      %4073 = vmatpush1.bf16.msra.mxu0 0
      %4074 = vmatprep.subr.bf16.mxu0 0
      %4075 = vmatpush1.bf16.msra.mxu0 0
      %4076 = vmatprep.subr.bf16.mxu0 0
      %4077 = vmatpush1.bf16.msra.mxu0 0
      %4078 = vmatprep.subr.bf16.mxu0 0
      %4079 = vmatpush1.bf16.msra.mxu0 0
      %4080 = vmatprep.subr.bf16.mxu0 0
      %4081 = vmatpush1.bf16.msra.mxu0 %v4071
      %4082 = vmatprep.subr.bf16.mxu0 0
      %4083 = vmatpush1.bf16.msra.mxu0 %v4070
      %4084 = vmatprep.subr.bf16.mxu0 0
      %4085 = vmatpush1.bf16.msra.mxu0 %v4069
      %4086 = vmatprep.subr.bf16.mxu0 0
      %4087 = vmatpush1.bf16.msra.mxu0 %v4068
      %4088 = vmatprep.subr.bf16.mxu0 0
      %4089 = vmatpush2.bf16.msra.mxu0 0
      %4090 = vmatprep.subr.bf16.mxu0 0
      %4091 = vmatpush2.bf16.msra.mxu0 0
      %4092 = vmatprep.subr.bf16.mxu0 0
      %4093 = vmatpush2.bf16.msra.mxu0 0
      %4094 = vmatprep.subr.bf16.mxu0 0
      %4095 = vmatpush2.bf16.msra.mxu0 0
      %4096 = vmatprep.subr.bf16.mxu0 0
      %4097 = vmatpush2.bf16.msra.mxu0 0
      %4098 = vmatprep.subr.bf16.mxu0 0
      %4099 = vmatpush2.bf16.msra.mxu0 0
      %4100 = vmatprep.subr.bf16.mxu0 0
      %4101 = vmatpush2.bf16.msra.mxu0 0
      %4102 = vmatprep.subr.bf16.mxu0 0
      %4103 = vmatpush2.bf16.msra.mxu0 0
      %4104 = vmatprep.mubr.bf16.mxu0 0
      %4105 = vmatmul.mubr.bf16.gmra.mxu0 %v3984
      %v4106 = vpop.f32.mrf.mxu0
      %v4107 = vadd.f32 0.0, %v4106
      %v4108 = vpop.f32.mrf.mxu0
      %v4109 = vpop.f32.mrf.mxu0
      %v4110 = vadd.f32 0.0, %v4109
      %v4111 = vpop.f32.mrf.mxu0
      %4112 = vmatprep.mubr.bf16.mxu0 0
      %4113 = vmatmul.mubr.bf16.gmra.mxu0 %v3987
      %v4114 = vpop.f32.mrf.mxu0
      %v4115 = vadd.f32 0.0, %v4114
      %v4116 = vpop.f32.mrf.mxu0
      %v4117 = vpop.f32.mrf.mxu0
      %v4118 = vadd.f32 0.0, %v4117
      %v4119 = vpop.f32.mrf.mxu0
      %4120 = vmatprep.mubr.bf16.mxu0 0
      %4121 = vmatmul.mubr.bf16.gmra.mxu0 %v3990
      %v4122 = vpop.f32.mrf.mxu0
      %v4123 = vadd.f32 0.0, %v4122
      %v4124 = vpop.f32.mrf.mxu0
      %v4125 = vpop.f32.mrf.mxu0
      %v4126 = vadd.f32 0.0, %v4125
      %v4127 = vpop.f32.mrf.mxu0
      %4128 = vmatprep.mubr.bf16.mxu0 0
      %4129 = vmatmul.mubr.bf16.gmra.mxu0 %v3993
      %v4130 = vpop.f32.mrf.mxu0
      %v4131 = vadd.f32 0.0, %v4130
      %v4132 = vpop.f32.mrf.mxu0
      %v4133 = vpop.f32.mrf.mxu0
      %v4134 = vadd.f32 0.0, %v4133
      %v4135 = vpop.f32.mrf.mxu0
      %4136 = vdwg.mxu0
      %v4137 = vsub.f32 %v3052, %v4107
      %v4138 = vsub.f32 %v3053, %v4110
      %v4139 = vsub.f32 %v3054, %v4115
      %v4140 = vsub.f32 %v3055, %v4118
      %v4141 = vsub.f32 %v3056, %v4123
      %v4142 = vsub.f32 %v3057, %v4126
      %v4143 = vsub.f32 %v3058, %v4131
      %v4144 = vsub.f32 %v3059, %v4134
      %v4145 = vpack.c.bf16 %v4138, %v4137
      %v4146 = vpack.c.bf16 %v4140, %v4139
      %v4147 = vpack.c.bf16 %v4142, %v4141
      %v4148 = vpack.c.bf16 %v4144, %v4143
      %v4150 = vsel %vm926, %v3898, 0
      %v4153 = vsel %vm926, %v3899, 0
      %v4156 = vsel %vm926, %v3900, 0
      %v4159 = vsel %vm926, %v3901, 0
      %4161 = vmatprep.subr.bf16.mxu0 0
      %4162 = vmatpush1.bf16.msra.mxu0 0
      %4163 = vmatprep.subr.bf16.mxu0 0
      %4164 = vmatpush1.bf16.msra.mxu0 0
      %4165 = vmatprep.subr.bf16.mxu0 0
      %4166 = vmatpush1.bf16.msra.mxu0 0
      %4167 = vmatprep.subr.bf16.mxu0 0
      %4168 = vmatpush1.bf16.msra.mxu0 0
      %4169 = vmatprep.subr.bf16.mxu0 0
      %4170 = vmatpush1.bf16.msra.mxu0 %v4148
      %4171 = vmatprep.subr.bf16.mxu0 0
      %4172 = vmatpush1.bf16.msra.mxu0 %v4147
      %4173 = vmatprep.subr.bf16.mxu0 0
      %4174 = vmatpush1.bf16.msra.mxu0 %v4146
      %4175 = vmatprep.subr.bf16.mxu0 0
      %4176 = vmatpush1.bf16.msra.mxu0 %v4145
      %4177 = vmatprep.subr.bf16.mxu0 0
      %4178 = vmatpush2.bf16.msra.mxu0 0
      %4179 = vmatprep.subr.bf16.mxu0 0
      %4180 = vmatpush2.bf16.msra.mxu0 0
      %4181 = vmatprep.subr.bf16.mxu0 0
      %4182 = vmatpush2.bf16.msra.mxu0 0
      %4183 = vmatprep.subr.bf16.mxu0 0
      %4184 = vmatpush2.bf16.msra.mxu0 0
      %4185 = vmatprep.subr.bf16.mxu0 0
      %4186 = vmatpush2.bf16.msra.mxu0 0
      %4187 = vmatprep.subr.bf16.mxu0 0
      %4188 = vmatpush2.bf16.msra.mxu0 0
      %4189 = vmatprep.subr.bf16.mxu0 0
      %4190 = vmatpush2.bf16.msra.mxu0 0
      %4191 = vmatprep.subr.bf16.mxu0 0
      %4192 = vmatpush2.bf16.msra.mxu0 0
      %4193 = vmatprep.mubr.bf16.mxu0 0
      %4194 = vmatmul.mubr.bf16.gmra.mxu0 %v4150
      %v4195 = vpop.f32.mrf.mxu0
      %v4196 = vadd.f32 0.0, %v4195
      %v4197 = vpop.f32.mrf.mxu0
      %v4198 = vpop.f32.mrf.mxu0
      %v4199 = vadd.f32 0.0, %v4198
      %v4200 = vpop.f32.mrf.mxu0
      %4201 = vmatprep.mubr.bf16.mxu0 0
      %4202 = vmatmul.mubr.bf16.gmra.mxu0 %v4153
      %v4203 = vpop.f32.mrf.mxu0
      %v4204 = vadd.f32 0.0, %v4203
      %v4205 = vpop.f32.mrf.mxu0
      %v4206 = vpop.f32.mrf.mxu0
      %v4207 = vadd.f32 0.0, %v4206
      %v4208 = vpop.f32.mrf.mxu0
      %4209 = vmatprep.mubr.bf16.mxu0 0
      %4210 = vmatmul.mubr.bf16.gmra.mxu0 %v4156
      %v4211 = vpop.f32.mrf.mxu0
      %v4212 = vadd.f32 0.0, %v4211
      %v4213 = vpop.f32.mrf.mxu0
      %v4214 = vpop.f32.mrf.mxu0
      %v4215 = vadd.f32 0.0, %v4214
      %v4216 = vpop.f32.mrf.mxu0
      %4217 = vmatprep.mubr.bf16.mxu0 0
      %4218 = vmatmul.mubr.bf16.gmra.mxu0 %v4159
      %v4219 = vpop.f32.mrf.mxu0
      %v4220 = vadd.f32 0.0, %v4219
      %v4221 = vpop.f32.mrf.mxu0
      %v4222 = vpop.f32.mrf.mxu0
      %v4223 = vadd.f32 0.0, %v4222
      %v4224 = vpop.f32.mrf.mxu0
      %4225 = vdwg.mxu0
      %v4226 = vmul.f32 %v4196, 0.25
      %v4227 = vmul.f32 %v4199, 0.25
      %v4228 = vmul.f32 %v4204, 0.25
      %v4229 = vmul.f32 %v4207, 0.25
      %v4230 = vmul.f32 %v4212, 0.25
      %v4231 = vmul.f32 %v4215, 0.25
      %v4232 = vmul.f32 %v4220, 0.25
      %v4233 = vmul.f32 %v4223, 0.25
      %v4234 = vpack.c.bf16 %v4227, %v4226
      %v4235 = vpack.c.bf16 %v4229, %v4228
      %v4236 = vpack.c.bf16 %v4231, %v4230
      %v4237 = vpack.c.bf16 %v4233, %v4232
      %4238 = vmatprep.subr.bf16.mxu0 0
      %4239 = vmatpush1.bf16.msra.mxu0 0
      %4240 = vmatprep.subr.bf16.mxu0 0
      %4241 = vmatpush1.bf16.msra.mxu0 0
      %4242 = vmatprep.subr.bf16.mxu0 0
      %4243 = vmatpush1.bf16.msra.mxu0 0
      %4244 = vmatprep.subr.bf16.mxu0 0
      %4245 = vmatpush1.bf16.msra.mxu0 0
      %4246 = vmatprep.subr.bf16.mxu0 0
      %4247 = vmatpush1.bf16.msra.mxu0 %v4237
      %4248 = vmatprep.subr.bf16.mxu0 0
      %4249 = vmatpush1.bf16.msra.mxu0 %v4236
      %4250 = vmatprep.subr.bf16.mxu0 0
      %4251 = vmatpush1.bf16.msra.mxu0 %v4235
      %4252 = vmatprep.subr.bf16.mxu0 0
      %4253 = vmatpush1.bf16.msra.mxu0 %v4234
      %4254 = vmatprep.subr.bf16.mxu0 0
      %4255 = vmatpush2.bf16.msra.mxu0 0
      %4256 = vmatprep.subr.bf16.mxu0 0
      %4257 = vmatpush2.bf16.msra.mxu0 0
      %4258 = vmatprep.subr.bf16.mxu0 0
      %4259 = vmatpush2.bf16.msra.mxu0 0
      %4260 = vmatprep.subr.bf16.mxu0 0
      %4261 = vmatpush2.bf16.msra.mxu0 0
      %4262 = vmatprep.subr.bf16.mxu0 0
      %4263 = vmatpush2.bf16.msra.mxu0 0
      %4264 = vmatprep.subr.bf16.mxu0 0
      %4265 = vmatpush2.bf16.msra.mxu0 0
      %4266 = vmatprep.subr.bf16.mxu0 0
      %4267 = vmatpush2.bf16.msra.mxu0 0
      %4268 = vmatprep.subr.bf16.mxu0 0
      %4269 = vmatpush2.bf16.msra.mxu0 0
      %4270 = vmatprep.mubr.bf16.mxu0 0
      %4271 = vmatmul.mubr.bf16.gmra.mxu0 %v2859
      %v4272 = vpop.f32.mrf.mxu0
      %v4273 = vadd.f32 0.0, %v4272
      %v4274 = vpop.f32.mrf.mxu0
      %v4275 = vpop.f32.mrf.mxu0
      %v4276 = vadd.f32 0.0, %v4275
      %v4277 = vpop.f32.mrf.mxu0
      %4278 = vmatprep.mubr.bf16.mxu0 0
      %4279 = vmatmul.mubr.bf16.gmra.mxu0 %v2862
      %v4280 = vpop.f32.mrf.mxu0
      %v4281 = vadd.f32 0.0, %v4280
      %v4282 = vpop.f32.mrf.mxu0
      %v4283 = vpop.f32.mrf.mxu0
      %v4284 = vadd.f32 0.0, %v4283
      %v4285 = vpop.f32.mrf.mxu0
      %4286 = vmatprep.mubr.bf16.mxu0 0
      %4287 = vmatmul.mubr.bf16.gmra.mxu0 %v2865
      %v4288 = vpop.f32.mrf.mxu0
      %v4289 = vadd.f32 0.0, %v4288
      %v4290 = vpop.f32.mrf.mxu0
      %v4291 = vpop.f32.mrf.mxu0
      %v4292 = vadd.f32 0.0, %v4291
      %v4293 = vpop.f32.mrf.mxu0
      %4294 = vmatprep.mubr.bf16.mxu0 0
      %4295 = vmatmul.mubr.bf16.gmra.mxu0 %v2868
      %v4296 = vpop.f32.mrf.mxu0
      %v4297 = vadd.f32 0.0, %v4296
      %v4298 = vpop.f32.mrf.mxu0
      %v4299 = vpop.f32.mrf.mxu0
      %v4300 = vadd.f32 0.0, %v4299
      %v4301 = vpop.f32.mrf.mxu0
      %4302 = vdwg.mxu0
      %v4303 = vsub.f32 %v2935, %v4273
      %v4304 = vsub.f32 %v2936, %v4276
      %v4305 = vsub.f32 %v2937, %v4281
      %v4306 = vsub.f32 %v2938, %v4284
      %v4307 = vsub.f32 %v2939, %v4289
      %v4308 = vsub.f32 %v2940, %v4292
      %v4309 = vsub.f32 %v2941, %v4297
      %v4310 = vsub.f32 %v2942, %v4300
      %v4311 = vpack.c.bf16 %v4276, %v4273
      %v4312 = vpack.c.bf16 %v4284, %v4281
      %v4313 = vpack.c.bf16 %v4292, %v4289
      %v4314 = vpack.c.bf16 %v4300, %v4297
      %v4315 = vpack.c.bf16 %v4304, %v4303
      %v4316 = vpack.c.bf16 %v4306, %v4305
      %v4317 = vpack.c.bf16 %v4308, %v4307
      %v4318 = vpack.c.bf16 %v4310, %v4309
      %v4320 = vsel %vm926, %v4311, 0
      %v4323 = vsel %vm926, %v4312, 0
      %v4326 = vsel %vm926, %v4313, 0
      %v4329 = vsel %vm926, %v4314, 0
      %4331 = vmatprep.subr.bf16.mxu0 0
      %4332 = vmatpush1.bf16.msra.mxu0 0
      %4333 = vmatprep.subr.bf16.mxu0 0
      %4334 = vmatpush1.bf16.msra.mxu0 0
      %4335 = vmatprep.subr.bf16.mxu0 0
      %4336 = vmatpush1.bf16.msra.mxu0 0
      %4337 = vmatprep.subr.bf16.mxu0 0
      %4338 = vmatpush1.bf16.msra.mxu0 0
      %4339 = vmatprep.subr.bf16.mxu0 0
      %4340 = vmatpush1.bf16.msra.mxu0 %v4318
      %4341 = vmatprep.subr.bf16.mxu0 0
      %4342 = vmatpush1.bf16.msra.mxu0 %v4317
      %4343 = vmatprep.subr.bf16.mxu0 0
      %4344 = vmatpush1.bf16.msra.mxu0 %v4316
      %4345 = vmatprep.subr.bf16.mxu0 0
      %4346 = vmatpush1.bf16.msra.mxu0 %v4315
      %4347 = vmatprep.subr.bf16.mxu0 0
      %4348 = vmatpush2.bf16.msra.mxu0 0
      %4349 = vmatprep.subr.bf16.mxu0 0
      %4350 = vmatpush2.bf16.msra.mxu0 0
      %4351 = vmatprep.subr.bf16.mxu0 0
      %4352 = vmatpush2.bf16.msra.mxu0 0
      %4353 = vmatprep.subr.bf16.mxu0 0
      %4354 = vmatpush2.bf16.msra.mxu0 0
      %4355 = vmatprep.subr.bf16.mxu0 0
      %4356 = vmatpush2.bf16.msra.mxu0 0
      %4357 = vmatprep.subr.bf16.mxu0 0
      %4358 = vmatpush2.bf16.msra.mxu0 0
      %4359 = vmatprep.subr.bf16.mxu0 0
      %4360 = vmatpush2.bf16.msra.mxu0 0
      %4361 = vmatprep.subr.bf16.mxu0 0
      %4362 = vmatpush2.bf16.msra.mxu0 0
      %4363 = vmatprep.mubr.bf16.mxu0 0
      %4364 = vmatmul.mubr.bf16.gmra.mxu0 %v4320
      %v4365 = vpop.f32.mrf.mxu0
      %v4366 = vadd.f32 0.0, %v4365
      %v4367 = vpop.f32.mrf.mxu0
      %v4368 = vpop.f32.mrf.mxu0
      %v4369 = vadd.f32 0.0, %v4368
      %v4370 = vpop.f32.mrf.mxu0
      %4371 = vmatprep.mubr.bf16.mxu0 0
      %4372 = vmatmul.mubr.bf16.gmra.mxu0 %v4323
      %v4373 = vpop.f32.mrf.mxu0
      %v4374 = vadd.f32 0.0, %v4373
      %v4375 = vpop.f32.mrf.mxu0
      %v4376 = vpop.f32.mrf.mxu0
      %v4377 = vadd.f32 0.0, %v4376
      %v4378 = vpop.f32.mrf.mxu0
      %4379 = vmatprep.mubr.bf16.mxu0 0
      %4380 = vmatmul.mubr.bf16.gmra.mxu0 %v4326
      %v4381 = vpop.f32.mrf.mxu0
      %v4382 = vadd.f32 0.0, %v4381
      %v4383 = vpop.f32.mrf.mxu0
      %v4384 = vpop.f32.mrf.mxu0
      %v4385 = vadd.f32 0.0, %v4384
      %v4386 = vpop.f32.mrf.mxu0
      %4387 = vmatprep.mubr.bf16.mxu0 0
      %4388 = vmatmul.mubr.bf16.gmra.mxu0 %v4329
      %v4389 = vpop.f32.mrf.mxu0
      %v4390 = vadd.f32 0.0, %v4389
      %v4391 = vpop.f32.mrf.mxu0
      %v4392 = vpop.f32.mrf.mxu0
      %v4393 = vadd.f32 0.0, %v4392
      %v4394 = vpop.f32.mrf.mxu0
      %4395 = vdwg.mxu0
      %v4396 = vsub.f32 %v2951, %v4366
      %v4397 = vsub.f32 %v2952, %v4369
      %v4398 = vsub.f32 %v2953, %v4374
      %v4399 = vsub.f32 %v2954, %v4377
      %v4400 = vsub.f32 %v2955, %v4382
      %v4401 = vsub.f32 %v2956, %v4385
      %v4402 = vsub.f32 %v2957, %v4390
      %v4403 = vsub.f32 %v2958, %v4393
      %v4404 = vpack.c.bf16 %v4397, %v4396
      %v4405 = vpack.c.bf16 %v4399, %v4398
      %v4406 = vpack.c.bf16 %v4401, %v4400
      %v4407 = vpack.c.bf16 %v4403, %v4402
      %4408 = vmatprep.subr.bf16.mxu0 0
      %4409 = vmatpush1.bf16.msra.mxu0 0
      %4410 = vmatprep.subr.bf16.mxu0 0
      %4411 = vmatpush1.bf16.msra.mxu0 0
      %4412 = vmatprep.subr.bf16.mxu0 0
      %4413 = vmatpush1.bf16.msra.mxu0 0
      %4414 = vmatprep.subr.bf16.mxu0 0
      %4415 = vmatpush1.bf16.msra.mxu0 0
      %4416 = vmatprep.subr.bf16.mxu0 0
      %4417 = vmatpush1.bf16.msra.mxu0 %v4407
      %4418 = vmatprep.subr.bf16.mxu0 0
      %4419 = vmatpush1.bf16.msra.mxu0 %v4406
      %4420 = vmatprep.subr.bf16.mxu0 0
      %4421 = vmatpush1.bf16.msra.mxu0 %v4405
      %4422 = vmatprep.subr.bf16.mxu0 0
      %4423 = vmatpush1.bf16.msra.mxu0 %v4404
      %4424 = vmatprep.subr.bf16.mxu0 0
      %4425 = vmatpush2.bf16.msra.mxu0 0
      %4426 = vmatprep.subr.bf16.mxu0 0
      %4427 = vmatpush2.bf16.msra.mxu0 0
      %4428 = vmatprep.subr.bf16.mxu0 0
      %4429 = vmatpush2.bf16.msra.mxu0 0
      %4430 = vmatprep.subr.bf16.mxu0 0
      %4431 = vmatpush2.bf16.msra.mxu0 0
      %4432 = vmatprep.subr.bf16.mxu0 0
      %4433 = vmatpush2.bf16.msra.mxu0 0
      %4434 = vmatprep.subr.bf16.mxu0 0
      %4435 = vmatpush2.bf16.msra.mxu0 0
      %4436 = vmatprep.subr.bf16.mxu0 0
      %4437 = vmatpush2.bf16.msra.mxu0 0
      %4438 = vmatprep.subr.bf16.mxu0 0
      %4439 = vmatpush2.bf16.msra.mxu0 0
      %4440 = vmatprep.mubr.bf16.mxu0 0
      %4441 = vmatmul.mubr.bf16.gmra.mxu0 %v4320
      %v4442 = vpop.f32.mrf.mxu0
      %v4443 = vadd.f32 0.0, %v4442
      %v4444 = vpop.f32.mrf.mxu0
      %v4445 = vpop.f32.mrf.mxu0
      %v4446 = vadd.f32 0.0, %v4445
      %v4447 = vpop.f32.mrf.mxu0
      %4448 = vmatprep.mubr.bf16.mxu0 0
      %4449 = vmatmul.mubr.bf16.gmra.mxu0 %v4323
      %v4450 = vpop.f32.mrf.mxu0
      %v4451 = vadd.f32 0.0, %v4450
      %v4452 = vpop.f32.mrf.mxu0
      %v4453 = vpop.f32.mrf.mxu0
      %v4454 = vadd.f32 0.0, %v4453
      %v4455 = vpop.f32.mrf.mxu0
      %4456 = vmatprep.mubr.bf16.mxu0 0
      %4457 = vmatmul.mubr.bf16.gmra.mxu0 %v4326
      %v4458 = vpop.f32.mrf.mxu0
      %v4459 = vadd.f32 0.0, %v4458
      %v4460 = vpop.f32.mrf.mxu0
      %v4461 = vpop.f32.mrf.mxu0
      %v4462 = vadd.f32 0.0, %v4461
      %v4463 = vpop.f32.mrf.mxu0
      %4464 = vmatprep.mubr.bf16.mxu0 0
      %4465 = vmatmul.mubr.bf16.gmra.mxu0 %v4329
      %v4466 = vpop.f32.mrf.mxu0
      %v4467 = vadd.f32 0.0, %v4466
      %v4468 = vpop.f32.mrf.mxu0
      %v4469 = vpop.f32.mrf.mxu0
      %v4470 = vadd.f32 0.0, %v4469
      %v4471 = vpop.f32.mrf.mxu0
      %4472 = vdwg.mxu0
      %v4473 = vsub.f32 %v3052, %v4443
      %v4474 = vsub.f32 %v3053, %v4446
      %v4475 = vsub.f32 %v3054, %v4451
      %v4476 = vsub.f32 %v3055, %v4454
      %v4477 = vsub.f32 %v3056, %v4459
      %v4478 = vsub.f32 %v3057, %v4462
      %v4479 = vsub.f32 %v3058, %v4467
      %v4480 = vsub.f32 %v3059, %v4470
      %v4481 = vpack.c.bf16 %v4474, %v4473
      %v4482 = vpack.c.bf16 %v4476, %v4475
      %v4483 = vpack.c.bf16 %v4478, %v4477
      %v4484 = vpack.c.bf16 %v4480, %v4479
      %v4486 = vsel %vm926, %v4234, 0
      %v4489 = vsel %vm926, %v4235, 0
      %v4492 = vsel %vm926, %v4236, 0
      %v4495 = vsel %vm926, %v4237, 0
      %4497 = vmatprep.subr.bf16.mxu0 0
      %4498 = vmatpush1.bf16.msra.mxu0 0
      %4499 = vmatprep.subr.bf16.mxu0 0
      %4500 = vmatpush1.bf16.msra.mxu0 0
      %4501 = vmatprep.subr.bf16.mxu0 0
      %4502 = vmatpush1.bf16.msra.mxu0 0
      %4503 = vmatprep.subr.bf16.mxu0 0
      %4504 = vmatpush1.bf16.msra.mxu0 0
      %4505 = vmatprep.subr.bf16.mxu0 0
      %4506 = vmatpush1.bf16.msra.mxu0 %v4484
      %4507 = vmatprep.subr.bf16.mxu0 0
      %4508 = vmatpush1.bf16.msra.mxu0 %v4483
      %4509 = vmatprep.subr.bf16.mxu0 0
      %4510 = vmatpush1.bf16.msra.mxu0 %v4482
      %4511 = vmatprep.subr.bf16.mxu0 0
      %4512 = vmatpush1.bf16.msra.mxu0 %v4481
      %4513 = vmatprep.subr.bf16.mxu0 0
      %4514 = vmatpush2.bf16.msra.mxu0 0
      %4515 = vmatprep.subr.bf16.mxu0 0
      %4516 = vmatpush2.bf16.msra.mxu0 0
      %4517 = vmatprep.subr.bf16.mxu0 0
      %4518 = vmatpush2.bf16.msra.mxu0 0
      %4519 = vmatprep.subr.bf16.mxu0 0
      %4520 = vmatpush2.bf16.msra.mxu0 0
      %4521 = vmatprep.subr.bf16.mxu0 0
      %4522 = vmatpush2.bf16.msra.mxu0 0
      %4523 = vmatprep.subr.bf16.mxu0 0
      %4524 = vmatpush2.bf16.msra.mxu0 0
      %4525 = vmatprep.subr.bf16.mxu0 0
      %4526 = vmatpush2.bf16.msra.mxu0 0
      %4527 = vmatprep.subr.bf16.mxu0 0
      %4528 = vmatpush2.bf16.msra.mxu0 0
      %4529 = vmatprep.mubr.bf16.mxu0 0
      %4530 = vmatmul.mubr.bf16.gmra.mxu0 %v4486
      %v4531 = vpop.f32.mrf.mxu0
      %v4532 = vadd.f32 0.0, %v4531
      %v4533 = vpop.f32.mrf.mxu0
      %v4534 = vpop.f32.mrf.mxu0
      %v4535 = vadd.f32 0.0, %v4534
      %v4536 = vpop.f32.mrf.mxu0
      %4537 = vmatprep.mubr.bf16.mxu0 0
      %4538 = vmatmul.mubr.bf16.gmra.mxu0 %v4489
      %v4539 = vpop.f32.mrf.mxu0
      %v4540 = vadd.f32 0.0, %v4539
      %v4541 = vpop.f32.mrf.mxu0
      %v4542 = vpop.f32.mrf.mxu0
      %v4543 = vadd.f32 0.0, %v4542
      %v4544 = vpop.f32.mrf.mxu0
      %4545 = vmatprep.mubr.bf16.mxu0 0
      %4546 = vmatmul.mubr.bf16.gmra.mxu0 %v4492
      %v4547 = vpop.f32.mrf.mxu0
      %v4548 = vadd.f32 0.0, %v4547
      %v4549 = vpop.f32.mrf.mxu0
      %v4550 = vpop.f32.mrf.mxu0
      %v4551 = vadd.f32 0.0, %v4550
      %v4552 = vpop.f32.mrf.mxu0
      %4553 = vmatprep.mubr.bf16.mxu0 0
      %4554 = vmatmul.mubr.bf16.gmra.mxu0 %v4495
      %v4555 = vpop.f32.mrf.mxu0
      %v4556 = vadd.f32 0.0, %v4555
      %v4557 = vpop.f32.mrf.mxu0
      %v4558 = vpop.f32.mrf.mxu0
      %v4559 = vadd.f32 0.0, %v4558
      %v4560 = vpop.f32.mrf.mxu0
      %4561 = vdwg.mxu0
      %v4562 = vmul.f32 %v4532, 0.25
      %v4563 = vmul.f32 %v4535, 0.25
      %v4564 = vmul.f32 %v4540, 0.25
      %v4565 = vmul.f32 %v4543, 0.25
      %v4566 = vmul.f32 %v4548, 0.25
      %v4567 = vmul.f32 %v4551, 0.25
      %v4568 = vmul.f32 %v4556, 0.25
      %v4569 = vmul.f32 %v4559, 0.25
      %v4570 = vpack.c.bf16 %v4563, %v4562
      %v4571 = vpack.c.bf16 %v4565, %v4564
      %v4572 = vpack.c.bf16 %v4567, %v4566
      %v4573 = vpack.c.bf16 %v4569, %v4568
      %4574 = vmatprep.subr.bf16.mxu0 0
      %4575 = vmatpush1.bf16.msra.mxu0 0
      %4576 = vmatprep.subr.bf16.mxu0 0
      %4577 = vmatpush1.bf16.msra.mxu0 0
      %4578 = vmatprep.subr.bf16.mxu0 0
      %4579 = vmatpush1.bf16.msra.mxu0 0
      %4580 = vmatprep.subr.bf16.mxu0 0
      %4581 = vmatpush1.bf16.msra.mxu0 0
      %4582 = vmatprep.subr.bf16.mxu0 0
      %4583 = vmatpush1.bf16.msra.mxu0 %v4573
      %4584 = vmatprep.subr.bf16.mxu0 0
      %4585 = vmatpush1.bf16.msra.mxu0 %v4572
      %4586 = vmatprep.subr.bf16.mxu0 0
      %4587 = vmatpush1.bf16.msra.mxu0 %v4571
      %4588 = vmatprep.subr.bf16.mxu0 0
      %4589 = vmatpush1.bf16.msra.mxu0 %v4570
      %4590 = vmatprep.subr.bf16.mxu0 0
      %4591 = vmatpush2.bf16.msra.mxu0 0
      %4592 = vmatprep.subr.bf16.mxu0 0
      %4593 = vmatpush2.bf16.msra.mxu0 0
      %4594 = vmatprep.subr.bf16.mxu0 0
      %4595 = vmatpush2.bf16.msra.mxu0 0
      %4596 = vmatprep.subr.bf16.mxu0 0
      %4597 = vmatpush2.bf16.msra.mxu0 0
      %4598 = vmatprep.subr.bf16.mxu0 0
      %4599 = vmatpush2.bf16.msra.mxu0 0
      %4600 = vmatprep.subr.bf16.mxu0 0
      %4601 = vmatpush2.bf16.msra.mxu0 0
      %4602 = vmatprep.subr.bf16.mxu0 0
      %4603 = vmatpush2.bf16.msra.mxu0 0
      %4604 = vmatprep.subr.bf16.mxu0 0
      %4605 = vmatpush2.bf16.msra.mxu0 0
      %4606 = vmatprep.mubr.bf16.mxu0 0
      %4607 = vmatmul.mubr.bf16.gmra.mxu0 %v2859
      %v4608 = vpop.f32.mrf.mxu0
      %v4609 = vadd.f32 0.0, %v4608
      %v4610 = vpop.f32.mrf.mxu0
      %v4611 = vpop.f32.mrf.mxu0
      %v4612 = vadd.f32 0.0, %v4611
      %v4613 = vpop.f32.mrf.mxu0
      %4614 = vmatprep.mubr.bf16.mxu0 0
      %4615 = vmatmul.mubr.bf16.gmra.mxu0 %v2862
      %v4616 = vpop.f32.mrf.mxu0
      %v4617 = vadd.f32 0.0, %v4616
      %v4618 = vpop.f32.mrf.mxu0
      %v4619 = vpop.f32.mrf.mxu0
      %v4620 = vadd.f32 0.0, %v4619
      %v4621 = vpop.f32.mrf.mxu0
      %4622 = vmatprep.mubr.bf16.mxu0 0
      %4623 = vmatmul.mubr.bf16.gmra.mxu0 %v2865
      %v4624 = vpop.f32.mrf.mxu0
      %v4625 = vadd.f32 0.0, %v4624
      %v4626 = vpop.f32.mrf.mxu0
      %v4627 = vpop.f32.mrf.mxu0
      %v4628 = vadd.f32 0.0, %v4627
      %v4629 = vpop.f32.mrf.mxu0
      %4630 = vmatprep.mubr.bf16.mxu0 0
      %4631 = vmatmul.mubr.bf16.gmra.mxu0 %v2868
      %v4632 = vpop.f32.mrf.mxu0
      %v4633 = vadd.f32 0.0, %v4632
      %v4634 = vpop.f32.mrf.mxu0
      %v4635 = vpop.f32.mrf.mxu0
      %v4636 = vadd.f32 0.0, %v4635
      %v4637 = vpop.f32.mrf.mxu0
      %4638 = vdwg.mxu0
      %v4639 = vsub.f32 %v2935, %v4609
      %v4640 = vsub.f32 %v2936, %v4612
      %v4641 = vsub.f32 %v2937, %v4617
      %v4642 = vsub.f32 %v2938, %v4620
      %v4643 = vsub.f32 %v2939, %v4625
      %v4644 = vsub.f32 %v2940, %v4628
      %v4645 = vsub.f32 %v2941, %v4633
      %v4646 = vsub.f32 %v2942, %v4636
      %v4647 = vpack.c.bf16 %v4612, %v4609
      %v4648 = vpack.c.bf16 %v4620, %v4617
      %v4649 = vpack.c.bf16 %v4628, %v4625
      %v4650 = vpack.c.bf16 %v4636, %v4633
      %v4651 = vpack.c.bf16 %v4640, %v4639
      %v4652 = vpack.c.bf16 %v4642, %v4641
      %v4653 = vpack.c.bf16 %v4644, %v4643
      %v4654 = vpack.c.bf16 %v4646, %v4645
      %v4656 = vsel %vm926, %v4647, 0
      %v4659 = vsel %vm926, %v4648, 0
      %v4662 = vsel %vm926, %v4649, 0
      %v4665 = vsel %vm926, %v4650, 0
      %4667 = vmatprep.subr.bf16.mxu0 0
      %4668 = vmatpush1.bf16.msra.mxu0 0
      %4669 = vmatprep.subr.bf16.mxu0 0
      %4670 = vmatpush1.bf16.msra.mxu0 0
      %4671 = vmatprep.subr.bf16.mxu0 0
      %4672 = vmatpush1.bf16.msra.mxu0 0
      %4673 = vmatprep.subr.bf16.mxu0 0
      %4674 = vmatpush1.bf16.msra.mxu0 0
      %4675 = vmatprep.subr.bf16.mxu0 0
      %4676 = vmatpush1.bf16.msra.mxu0 %v4654
      %4677 = vmatprep.subr.bf16.mxu0 0
      %4678 = vmatpush1.bf16.msra.mxu0 %v4653
      %4679 = vmatprep.subr.bf16.mxu0 0
      %4680 = vmatpush1.bf16.msra.mxu0 %v4652
      %4681 = vmatprep.subr.bf16.mxu0 0
      %4682 = vmatpush1.bf16.msra.mxu0 %v4651
      %4683 = vmatprep.subr.bf16.mxu0 0
      %4684 = vmatpush2.bf16.msra.mxu0 0
      %4685 = vmatprep.subr.bf16.mxu0 0
      %4686 = vmatpush2.bf16.msra.mxu0 0
      %4687 = vmatprep.subr.bf16.mxu0 0
      %4688 = vmatpush2.bf16.msra.mxu0 0
      %4689 = vmatprep.subr.bf16.mxu0 0
      %4690 = vmatpush2.bf16.msra.mxu0 0
      %4691 = vmatprep.subr.bf16.mxu0 0
      %4692 = vmatpush2.bf16.msra.mxu0 0
      %4693 = vmatprep.subr.bf16.mxu0 0
      %4694 = vmatpush2.bf16.msra.mxu0 0
      %4695 = vmatprep.subr.bf16.mxu0 0
      %4696 = vmatpush2.bf16.msra.mxu0 0
      %4697 = vmatprep.subr.bf16.mxu0 0
      %4698 = vmatpush2.bf16.msra.mxu0 0
      %4699 = vmatprep.mubr.bf16.mxu0 0
      %4700 = vmatmul.mubr.bf16.gmra.mxu0 %v4656
      %v4701 = vpop.f32.mrf.mxu0
      %v4702 = vadd.f32 0.0, %v4701
      %v4703 = vpop.f32.mrf.mxu0
      %v4704 = vpop.f32.mrf.mxu0
      %v4705 = vadd.f32 0.0, %v4704
      %v4706 = vpop.f32.mrf.mxu0
      %4707 = vmatprep.mubr.bf16.mxu0 0
      %4708 = vmatmul.mubr.bf16.gmra.mxu0 %v4659
      %v4709 = vpop.f32.mrf.mxu0
      %v4710 = vadd.f32 0.0, %v4709
      %v4711 = vpop.f32.mrf.mxu0
      %v4712 = vpop.f32.mrf.mxu0
      %v4713 = vadd.f32 0.0, %v4712
      %v4714 = vpop.f32.mrf.mxu0
      %4715 = vmatprep.mubr.bf16.mxu0 0
      %4716 = vmatmul.mubr.bf16.gmra.mxu0 %v4662
      %v4717 = vpop.f32.mrf.mxu0
      %v4718 = vadd.f32 0.0, %v4717
      %v4719 = vpop.f32.mrf.mxu0
      %v4720 = vpop.f32.mrf.mxu0
      %v4721 = vadd.f32 0.0, %v4720
      %v4722 = vpop.f32.mrf.mxu0
      %4723 = vmatprep.mubr.bf16.mxu0 0
      %4724 = vmatmul.mubr.bf16.gmra.mxu0 %v4665
      %v4725 = vpop.f32.mrf.mxu0
      %v4726 = vadd.f32 0.0, %v4725
      %v4727 = vpop.f32.mrf.mxu0
      %v4728 = vpop.f32.mrf.mxu0
      %v4729 = vadd.f32 0.0, %v4728
      %v4730 = vpop.f32.mrf.mxu0
      %4731 = vdwg.mxu0
      %v4732 = vsub.f32 %v2951, %v4702
      %v4733 = vsub.f32 %v2952, %v4705
      %v4734 = vsub.f32 %v2953, %v4710
      %v4735 = vsub.f32 %v2954, %v4713
      %v4736 = vsub.f32 %v2955, %v4718
      %v4737 = vsub.f32 %v2956, %v4721
      %v4738 = vsub.f32 %v2957, %v4726
      %v4739 = vsub.f32 %v2958, %v4729
      %v4740 = vpack.c.bf16 %v4733, %v4732
      %v4741 = vpack.c.bf16 %v4735, %v4734
      %v4742 = vpack.c.bf16 %v4737, %v4736
      %v4743 = vpack.c.bf16 %v4739, %v4738
      %4744 = vmatprep.subr.bf16.mxu0 0
      %4745 = vmatpush1.bf16.msra.mxu0 0
      %4746 = vmatprep.subr.bf16.mxu0 0
      %4747 = vmatpush1.bf16.msra.mxu0 0
      %4748 = vmatprep.subr.bf16.mxu0 0
      %4749 = vmatpush1.bf16.msra.mxu0 0
      %4750 = vmatprep.subr.bf16.mxu0 0
      %4751 = vmatpush1.bf16.msra.mxu0 0
      %4752 = vmatprep.subr.bf16.mxu0 0
      %4753 = vmatpush1.bf16.msra.mxu0 %v4743
      %4754 = vmatprep.subr.bf16.mxu0 0
      %4755 = vmatpush1.bf16.msra.mxu0 %v4742
      %4756 = vmatprep.subr.bf16.mxu0 0
      %4757 = vmatpush1.bf16.msra.mxu0 %v4741
      %4758 = vmatprep.subr.bf16.mxu0 0
      %4759 = vmatpush1.bf16.msra.mxu0 %v4740
      %4760 = vmatprep.subr.bf16.mxu0 0
      %4761 = vmatpush2.bf16.msra.mxu0 0
      %4762 = vmatprep.subr.bf16.mxu0 0
      %4763 = vmatpush2.bf16.msra.mxu0 0
      %4764 = vmatprep.subr.bf16.mxu0 0
      %4765 = vmatpush2.bf16.msra.mxu0 0
      %4766 = vmatprep.subr.bf16.mxu0 0
      %4767 = vmatpush2.bf16.msra.mxu0 0
      %4768 = vmatprep.subr.bf16.mxu0 0
      %4769 = vmatpush2.bf16.msra.mxu0 0
      %4770 = vmatprep.subr.bf16.mxu0 0
      %4771 = vmatpush2.bf16.msra.mxu0 0
      %4772 = vmatprep.subr.bf16.mxu0 0
      %4773 = vmatpush2.bf16.msra.mxu0 0
      %4774 = vmatprep.subr.bf16.mxu0 0
      %4775 = vmatpush2.bf16.msra.mxu0 0
      %4776 = vmatprep.mubr.bf16.mxu0 0
      %4777 = vmatmul.mubr.bf16.gmra.mxu0 %v4656
      %v4778 = vpop.f32.mrf.mxu0
      %v4779 = vadd.f32 0.0, %v4778
      %v4780 = vpop.f32.mrf.mxu0
      %v4781 = vpop.f32.mrf.mxu0
      %v4782 = vadd.f32 0.0, %v4781
      %v4783 = vpop.f32.mrf.mxu0
      %4784 = vmatprep.mubr.bf16.mxu0 0
      %4785 = vmatmul.mubr.bf16.gmra.mxu0 %v4659
      %v4786 = vpop.f32.mrf.mxu0
      %v4787 = vadd.f32 0.0, %v4786
      %v4788 = vpop.f32.mrf.mxu0
      %v4789 = vpop.f32.mrf.mxu0
      %v4790 = vadd.f32 0.0, %v4789
      %v4791 = vpop.f32.mrf.mxu0
      %4792 = vmatprep.mubr.bf16.mxu0 0
      %4793 = vmatmul.mubr.bf16.gmra.mxu0 %v4662
      %v4794 = vpop.f32.mrf.mxu0
      %v4795 = vadd.f32 0.0, %v4794
      %v4796 = vpop.f32.mrf.mxu0
      %v4797 = vpop.f32.mrf.mxu0
      %v4798 = vadd.f32 0.0, %v4797
      %v4799 = vpop.f32.mrf.mxu0
      %4800 = vmatprep.mubr.bf16.mxu0 0
      %4801 = vmatmul.mubr.bf16.gmra.mxu0 %v4665
      %v4802 = vpop.f32.mrf.mxu0
      %v4803 = vadd.f32 0.0, %v4802
      %v4804 = vpop.f32.mrf.mxu0
      %v4805 = vpop.f32.mrf.mxu0
      %v4806 = vadd.f32 0.0, %v4805
      %v4807 = vpop.f32.mrf.mxu0
      %4808 = vdwg.mxu0
      %v4809 = vsub.f32 %v3052, %v4779
      %v4810 = vsub.f32 %v3053, %v4782
      %v4811 = vsub.f32 %v3054, %v4787
      %v4812 = vsub.f32 %v3055, %v4790
      %v4813 = vsub.f32 %v3056, %v4795
      %v4814 = vsub.f32 %v3057, %v4798
      %v4815 = vsub.f32 %v3058, %v4803
      %v4816 = vsub.f32 %v3059, %v4806
      %v4817 = vpack.c.bf16 %v4810, %v4809
      %v4818 = vpack.c.bf16 %v4812, %v4811
      %v4819 = vpack.c.bf16 %v4814, %v4813
      %v4820 = vpack.c.bf16 %v4816, %v4815
      %v4822 = vsel %vm926, %v4570, 0
      %v4825 = vsel %vm926, %v4571, 0
      %v4828 = vsel %vm926, %v4572, 0
      %v4831 = vsel %vm926, %v4573, 0
      %4833 = vmatprep.subr.bf16.mxu0 0
      %4834 = vmatpush1.bf16.msra.mxu0 0
      %4835 = vmatprep.subr.bf16.mxu0 0
      %4836 = vmatpush1.bf16.msra.mxu0 0
      %4837 = vmatprep.subr.bf16.mxu0 0
      %4838 = vmatpush1.bf16.msra.mxu0 0
      %4839 = vmatprep.subr.bf16.mxu0 0
      %4840 = vmatpush1.bf16.msra.mxu0 0
      %4841 = vmatprep.subr.bf16.mxu0 0
      %4842 = vmatpush1.bf16.msra.mxu0 %v4820
      %4843 = vmatprep.subr.bf16.mxu0 0
      %4844 = vmatpush1.bf16.msra.mxu0 %v4819
      %4845 = vmatprep.subr.bf16.mxu0 0
      %4846 = vmatpush1.bf16.msra.mxu0 %v4818
      %4847 = vmatprep.subr.bf16.mxu0 0
      %4848 = vmatpush1.bf16.msra.mxu0 %v4817
      %4849 = vmatprep.subr.bf16.mxu0 0
      %4850 = vmatpush2.bf16.msra.mxu0 0
      %4851 = vmatprep.subr.bf16.mxu0 0
      %4852 = vmatpush2.bf16.msra.mxu0 0
      %4853 = vmatprep.subr.bf16.mxu0 0
      %4854 = vmatpush2.bf16.msra.mxu0 0
      %4855 = vmatprep.subr.bf16.mxu0 0
      %4856 = vmatpush2.bf16.msra.mxu0 0
      %4857 = vmatprep.subr.bf16.mxu0 0
      %4858 = vmatpush2.bf16.msra.mxu0 0
      %4859 = vmatprep.subr.bf16.mxu0 0
      %4860 = vmatpush2.bf16.msra.mxu0 0
      %4861 = vmatprep.subr.bf16.mxu0 0
      %4862 = vmatpush2.bf16.msra.mxu0 0
      %4863 = vmatprep.subr.bf16.mxu0 0
      %4864 = vmatpush2.bf16.msra.mxu0 0
      %4865 = vmatprep.mubr.bf16.mxu0 0
      %4866 = vmatmul.mubr.bf16.gmra.mxu0 %v4822
      %v4867 = vpop.f32.mrf.mxu0
      %v4868 = vadd.f32 0.0, %v4867
      %v4869 = vpop.f32.mrf.mxu0
      %v4870 = vpop.f32.mrf.mxu0
      %v4871 = vadd.f32 0.0, %v4870
      %v4872 = vpop.f32.mrf.mxu0
      %4873 = vmatprep.mubr.bf16.mxu0 0
      %4874 = vmatmul.mubr.bf16.gmra.mxu0 %v4825
      %v4875 = vpop.f32.mrf.mxu0
      %v4876 = vadd.f32 0.0, %v4875
      %v4877 = vpop.f32.mrf.mxu0
      %v4878 = vpop.f32.mrf.mxu0
      %v4879 = vadd.f32 0.0, %v4878
      %v4880 = vpop.f32.mrf.mxu0
      %4881 = vmatprep.mubr.bf16.mxu0 0
      %4882 = vmatmul.mubr.bf16.gmra.mxu0 %v4828
      %v4883 = vpop.f32.mrf.mxu0
      %v4884 = vadd.f32 0.0, %v4883
      %v4885 = vpop.f32.mrf.mxu0
      %v4886 = vpop.f32.mrf.mxu0
      %v4887 = vadd.f32 0.0, %v4886
      %v4888 = vpop.f32.mrf.mxu0
      %4889 = vmatprep.mubr.bf16.mxu0 0
      %4890 = vmatmul.mubr.bf16.gmra.mxu0 %v4831
      %v4891 = vpop.f32.mrf.mxu0
      %v4892 = vadd.f32 0.0, %v4891
      %v4893 = vpop.f32.mrf.mxu0
      %v4894 = vpop.f32.mrf.mxu0
      %v4895 = vadd.f32 0.0, %v4894
      %v4896 = vpop.f32.mrf.mxu0
      %4897 = vdwg.mxu0
      %v4898 = vmul.f32 %v4868, 0.25
      %v4899 = vmul.f32 %v4871, 0.25
      %v4900 = vmul.f32 %v4876, 0.25
      %v4901 = vmul.f32 %v4879, 0.25
      %v4902 = vmul.f32 %v4884, 0.25
      %v4903 = vmul.f32 %v4887, 0.25
      %v4904 = vmul.f32 %v4892, 0.25
      %v4905 = vmul.f32 %v4895, 0.25
      %v4906 = vpack.c.bf16 %v1180, %v1179
      %v4907 = vpack.c.bf16 %v1182, %v1181
      %v4908 = vpack.c.bf16 %v1184, %v1183
      %v4909 = vpack.c.bf16 %v1186, %v1185
      %v4910 = vpack.c.bf16 %v4899, %v4898
      %v4912 = vsel %vm1098, %v4906, 0
      %v4915 = vsel %vm1098, %v4907, 0
      %v4918 = vsel %vm1098, %v4908, 0
      %v4921 = vsel %vm1098, %v4909, 0
      %4923 = vmatprep.subr.bf16.mxu0 0
      %4924 = vmatpush1.bf16.msra.mxu0 0
      %4925 = vmatprep.subr.bf16.mxu0 0
      %4926 = vmatpush1.bf16.msra.mxu0 0
      %4927 = vmatprep.subr.bf16.mxu0 0
      %4928 = vmatpush1.bf16.msra.mxu0 0
      %4929 = vmatprep.subr.bf16.mxu0 0
      %4930 = vmatpush1.bf16.msra.mxu0 0
      %4931 = vmatprep.subr.bf16.mxu0 0
      %4932 = vmatpush1.bf16.msra.mxu0 0
      %4933 = vmatprep.subr.bf16.mxu0 0
      %4934 = vmatpush1.bf16.msra.mxu0 0
      %4935 = vmatprep.subr.bf16.mxu0 0
      %4936 = vmatpush1.bf16.msra.mxu0 0
      %4937 = vmatprep.subr.bf16.mxu0 0
      %4938 = vmatpush1.bf16.msra.mxu0 %v4910
      %4939 = vmatprep.subr.bf16.mxu0 0
      %4940 = vmatpush2.bf16.msra.mxu0 0
      %4941 = vmatprep.subr.bf16.mxu0 0
      %4942 = vmatpush2.bf16.msra.mxu0 0
      %4943 = vmatprep.subr.bf16.mxu0 0
      %4944 = vmatpush2.bf16.msra.mxu0 0
      %4945 = vmatprep.subr.bf16.mxu0 0
      %4946 = vmatpush2.bf16.msra.mxu0 0
      %4947 = vmatprep.subr.bf16.mxu0 0
      %4948 = vmatpush2.bf16.msra.mxu0 0
      %4949 = vmatprep.subr.bf16.mxu0 0
      %4950 = vmatpush2.bf16.msra.mxu0 0
      %4951 = vmatprep.subr.bf16.mxu0 0
      %4952 = vmatpush2.bf16.msra.mxu0 0
      %4953 = vmatprep.subr.bf16.mxu0 0
      %4954 = vmatpush2.bf16.msra.mxu0 0
      %4955 = vmatprep.mubr.bf16.mxu0 0
      %4956 = vmatmul.mubr.bf16.gmra.mxu0 %v4912
      %v4957 = vpop.f32.mrf.mxu0
      %v4958 = vadd.f32 0.0, %v4957
      %v4959 = vpop.f32.mrf.mxu0
      %v4960 = vpop.f32.mrf.mxu0
      %v4961 = vadd.f32 0.0, %v4960
      %v4962 = vpop.f32.mrf.mxu0
      %4963 = vmatprep.mubr.bf16.mxu0 0
      %4964 = vmatmul.mubr.bf16.gmra.mxu0 %v4915
      %v4965 = vpop.f32.mrf.mxu0
      %v4966 = vadd.f32 0.0, %v4965
      %v4967 = vpop.f32.mrf.mxu0
      %v4968 = vpop.f32.mrf.mxu0
      %v4969 = vadd.f32 0.0, %v4968
      %v4970 = vpop.f32.mrf.mxu0
      %4971 = vmatprep.mubr.bf16.mxu0 0
      %4972 = vmatmul.mubr.bf16.gmra.mxu0 %v4918
      %v4973 = vpop.f32.mrf.mxu0
      %v4974 = vadd.f32 0.0, %v4973
      %v4975 = vpop.f32.mrf.mxu0
      %v4976 = vpop.f32.mrf.mxu0
      %v4977 = vadd.f32 0.0, %v4976
      %v4978 = vpop.f32.mrf.mxu0
      %4979 = vmatprep.mubr.bf16.mxu0 0
      %4980 = vmatmul.mubr.bf16.gmra.mxu0 %v4921
      %v4981 = vpop.f32.mrf.mxu0
      %v4982 = vadd.f32 0.0, %v4981
      %v4983 = vpop.f32.mrf.mxu0
      %v4984 = vpop.f32.mrf.mxu0
      %v4985 = vadd.f32 0.0, %v4984
      %v4986 = vpop.f32.mrf.mxu0
      %4987 = vdwg.mxu0
      %v4988 = vpack.c.bf16 %v4961, %v4958
      %v4989 = vpack.c.bf16 %v4969, %v4966
      %v4990 = vpack.c.bf16 %v4977, %v4974
      %v4991 = vpack.c.bf16 %v4985, %v4982
      %v4992 = vpack.c.bf16 %v1375, %v1372
      %v4994 = vsel %vm1098, %v4988, 0
      %v4997 = vsel %vm1098, %v4989, 0
      %v5000 = vsel %vm1098, %v4990, 0
      %v5003 = vsel %vm1098, %v4991, 0
      %5005 = vmatprep.subr.bf16.mxu0 0
      %5006 = vmatpush1.bf16.msra.mxu0 0
      %5007 = vmatprep.subr.bf16.mxu0 0
      %5008 = vmatpush1.bf16.msra.mxu0 0
      %5009 = vmatprep.subr.bf16.mxu0 0
      %5010 = vmatpush1.bf16.msra.mxu0 0
      %5011 = vmatprep.subr.bf16.mxu0 0
      %5012 = vmatpush1.bf16.msra.mxu0 0
      %5013 = vmatprep.subr.bf16.mxu0 0
      %5014 = vmatpush1.bf16.msra.mxu0 0
      %5015 = vmatprep.subr.bf16.mxu0 0
      %5016 = vmatpush1.bf16.msra.mxu0 0
      %5017 = vmatprep.subr.bf16.mxu0 0
      %5018 = vmatpush1.bf16.msra.mxu0 0
      %5019 = vmatprep.subr.bf16.mxu0 0
      %5020 = vmatpush1.bf16.msra.mxu0 %v4992
      %5021 = vmatprep.subr.bf16.mxu0 0
      %5022 = vmatpush2.bf16.msra.mxu0 0
      %5023 = vmatprep.subr.bf16.mxu0 0
      %5024 = vmatpush2.bf16.msra.mxu0 0
      %5025 = vmatprep.subr.bf16.mxu0 0
      %5026 = vmatpush2.bf16.msra.mxu0 0
      %5027 = vmatprep.subr.bf16.mxu0 0
      %5028 = vmatpush2.bf16.msra.mxu0 0
      %5029 = vmatprep.subr.bf16.mxu0 0
      %5030 = vmatpush2.bf16.msra.mxu0 0
      %5031 = vmatprep.subr.bf16.mxu0 0
      %5032 = vmatpush2.bf16.msra.mxu0 0
      %5033 = vmatprep.subr.bf16.mxu0 0
      %5034 = vmatpush2.bf16.msra.mxu0 0
      %5035 = vmatprep.subr.bf16.mxu0 0
      %5036 = vmatpush2.bf16.msra.mxu0 0
      %5037 = vmatprep.mubr.bf16.mxu0 0
      %5038 = vmatmul.mubr.bf16.gmra.mxu0 %v4994
      %v5039 = vpop.f32.mrf.mxu0
      %v5040 = vadd.f32 0.0, %v5039
      %v5041 = vpop.f32.mrf.mxu0
      %v5042 = vpop.f32.mrf.mxu0
      %v5043 = vadd.f32 0.0, %v5042
      %v5044 = vpop.f32.mrf.mxu0
      %5045 = vmatprep.mubr.bf16.mxu0 0
      %5046 = vmatmul.mubr.bf16.gmra.mxu0 %v4997
      %v5047 = vpop.f32.mrf.mxu0
      %v5048 = vadd.f32 0.0, %v5047
      %v5049 = vpop.f32.mrf.mxu0
      %v5050 = vpop.f32.mrf.mxu0
      %v5051 = vadd.f32 0.0, %v5050
      %v5052 = vpop.f32.mrf.mxu0
      %5053 = vmatprep.mubr.bf16.mxu0 0
      %5054 = vmatmul.mubr.bf16.gmra.mxu0 %v5000
      %v5055 = vpop.f32.mrf.mxu0
      %v5056 = vadd.f32 0.0, %v5055
      %v5057 = vpop.f32.mrf.mxu0
      %v5058 = vpop.f32.mrf.mxu0
      %v5059 = vadd.f32 0.0, %v5058
      %v5060 = vpop.f32.mrf.mxu0
      %5061 = vmatprep.mubr.bf16.mxu0 0
      %5062 = vmatmul.mubr.bf16.gmra.mxu0 %v5003
      %v5063 = vpop.f32.mrf.mxu0
      %v5064 = vadd.f32 0.0, %v5063
      %v5065 = vpop.f32.mrf.mxu0
      %v5066 = vpop.f32.mrf.mxu0
      %v5067 = vadd.f32 0.0, %v5066
      %v5068 = vpop.f32.mrf.mxu0
      %5069 = vdwg.mxu0
      %v5070 = vpack.c.bf16 %v1554, %v1553
      %v5071 = vpack.c.bf16 %v1556, %v1555
      %v5072 = vpack.c.bf16 %v1558, %v1557
      %v5073 = vpack.c.bf16 %v1560, %v1559
      %v5074 = vpack.c.bf16 %v4901, %v4900
      %5076 = vrot.lane.b32.xlu0 %v5074, 112
      %v5077 = vpop.permute.xlu0 %5076
      %v5080 = vsel %vm1098, %v5070, 0
      %v5083 = vsel %vm1098, %v5071, 0
      %v5086 = vsel %vm1098, %v5072, 0
      %v5089 = vsel %vm1098, %v5073, 0
      %5091 = vmatprep.subr.bf16.mxu0 0
      %5092 = vmatpush1.bf16.msra.mxu0 0
      %5093 = vmatprep.subr.bf16.mxu0 0
      %5094 = vmatpush1.bf16.msra.mxu0 0
      %5095 = vmatprep.subr.bf16.mxu0 0
      %5096 = vmatpush1.bf16.msra.mxu0 0
      %5097 = vmatprep.subr.bf16.mxu0 0
      %5098 = vmatpush1.bf16.msra.mxu0 0
      %5099 = vmatprep.subr.bf16.mxu0 0
      %5100 = vmatpush1.bf16.msra.mxu0 0
      %5101 = vmatprep.subr.bf16.mxu0 0
      %5102 = vmatpush1.bf16.msra.mxu0 0
      %5103 = vmatprep.subr.bf16.mxu0 0
      %5104 = vmatpush1.bf16.msra.mxu0 0
      %5105 = vmatprep.subr.bf16.mxu0 0
      %5106 = vmatpush1.bf16.msra.mxu0 %v5077
      %5107 = vmatprep.subr.bf16.mxu0 0
      %5108 = vmatpush2.bf16.msra.mxu0 0
      %5109 = vmatprep.subr.bf16.mxu0 0
      %5110 = vmatpush2.bf16.msra.mxu0 0
      %5111 = vmatprep.subr.bf16.mxu0 0
      %5112 = vmatpush2.bf16.msra.mxu0 0
      %5113 = vmatprep.subr.bf16.mxu0 0
      %5114 = vmatpush2.bf16.msra.mxu0 0
      %5115 = vmatprep.subr.bf16.mxu0 0
      %5116 = vmatpush2.bf16.msra.mxu0 0
      %5117 = vmatprep.subr.bf16.mxu0 0
      %5118 = vmatpush2.bf16.msra.mxu0 0
      %5119 = vmatprep.subr.bf16.mxu0 0
      %5120 = vmatpush2.bf16.msra.mxu0 0
      %5121 = vmatprep.subr.bf16.mxu0 0
      %5122 = vmatpush2.bf16.msra.mxu0 0
      %5123 = vmatprep.mubr.bf16.mxu0 0
      %5124 = vmatmul.mubr.bf16.gmra.mxu0 %v5080
      %v5125 = vpop.f32.mrf.mxu0
      %v5126 = vadd.f32 0.0, %v5125
      %v5127 = vpop.f32.mrf.mxu0
      %v5128 = vpop.f32.mrf.mxu0
      %v5129 = vadd.f32 0.0, %v5128
      %v5130 = vpop.f32.mrf.mxu0
      %5131 = vmatprep.mubr.bf16.mxu0 0
      %5132 = vmatmul.mubr.bf16.gmra.mxu0 %v5083
      %v5133 = vpop.f32.mrf.mxu0
      %v5134 = vadd.f32 0.0, %v5133
      %v5135 = vpop.f32.mrf.mxu0
      %v5136 = vpop.f32.mrf.mxu0
      %v5137 = vadd.f32 0.0, %v5136
      %v5138 = vpop.f32.mrf.mxu0
      %5139 = vmatprep.mubr.bf16.mxu0 0
      %5140 = vmatmul.mubr.bf16.gmra.mxu0 %v5086
      %v5141 = vpop.f32.mrf.mxu0
      %v5142 = vadd.f32 0.0, %v5141
      %v5143 = vpop.f32.mrf.mxu0
      %v5144 = vpop.f32.mrf.mxu0
      %v5145 = vadd.f32 0.0, %v5144
      %v5146 = vpop.f32.mrf.mxu0
      %5147 = vmatprep.mubr.bf16.mxu0 0
      %5148 = vmatmul.mubr.bf16.gmra.mxu0 %v5089
      %v5149 = vpop.f32.mrf.mxu0
      %v5150 = vadd.f32 0.0, %v5149
      %v5151 = vpop.f32.mrf.mxu0
      %v5152 = vpop.f32.mrf.mxu0
      %v5153 = vadd.f32 0.0, %v5152
      %v5154 = vpop.f32.mrf.mxu0
      %5155 = vdwg.mxu0
      %v5156 = vpack.c.bf16 %v5129, %v5126
      %v5157 = vpack.c.bf16 %v5137, %v5134
      %v5158 = vpack.c.bf16 %v5145, %v5142
      %v5159 = vpack.c.bf16 %v5153, %v5150
      %v5160 = vpack.c.bf16 %v1775, %v1772
      %v5162 = vsel %vm1098, %v5156, 0
      %v5165 = vsel %vm1098, %v5157, 0
      %v5168 = vsel %vm1098, %v5158, 0
      %v5171 = vsel %vm1098, %v5159, 0
      %5173 = vmatprep.subr.bf16.mxu0 0
      %5174 = vmatpush1.bf16.msra.mxu0 0
      %5175 = vmatprep.subr.bf16.mxu0 0
      %5176 = vmatpush1.bf16.msra.mxu0 0
      %5177 = vmatprep.subr.bf16.mxu0 0
      %5178 = vmatpush1.bf16.msra.mxu0 0
      %5179 = vmatprep.subr.bf16.mxu0 0
      %5180 = vmatpush1.bf16.msra.mxu0 0
      %5181 = vmatprep.subr.bf16.mxu0 0
      %5182 = vmatpush1.bf16.msra.mxu0 0
      %5183 = vmatprep.subr.bf16.mxu0 0
      %5184 = vmatpush1.bf16.msra.mxu0 0
      %5185 = vmatprep.subr.bf16.mxu0 0
      %5186 = vmatpush1.bf16.msra.mxu0 0
      %5187 = vmatprep.subr.bf16.mxu0 0
      %5188 = vmatpush1.bf16.msra.mxu0 %v5160
      %5189 = vmatprep.subr.bf16.mxu0 0
      %5190 = vmatpush2.bf16.msra.mxu0 0
      %5191 = vmatprep.subr.bf16.mxu0 0
      %5192 = vmatpush2.bf16.msra.mxu0 0
      %5193 = vmatprep.subr.bf16.mxu0 0
      %5194 = vmatpush2.bf16.msra.mxu0 0
      %5195 = vmatprep.subr.bf16.mxu0 0
      %5196 = vmatpush2.bf16.msra.mxu0 0
      %5197 = vmatprep.subr.bf16.mxu0 0
      %5198 = vmatpush2.bf16.msra.mxu0 0
      %5199 = vmatprep.subr.bf16.mxu0 0
      %5200 = vmatpush2.bf16.msra.mxu0 0
      %5201 = vmatprep.subr.bf16.mxu0 0
      %5202 = vmatpush2.bf16.msra.mxu0 0
      %5203 = vmatprep.subr.bf16.mxu0 0
      %5204 = vmatpush2.bf16.msra.mxu0 0
      %5205 = vmatprep.mubr.bf16.mxu0 0
      %5206 = vmatmul.mubr.bf16.gmra.mxu0 %v5162
      %v5207 = vpop.f32.mrf.mxu0
      %v5208 = vadd.f32 0.0, %v5207
      %v5209 = vpop.f32.mrf.mxu0
      %v5210 = vpop.f32.mrf.mxu0
      %v5211 = vadd.f32 0.0, %v5210
      %v5212 = vpop.f32.mrf.mxu0
      %5213 = vmatprep.mubr.bf16.mxu0 0
      %5214 = vmatmul.mubr.bf16.gmra.mxu0 %v5165
      %v5215 = vpop.f32.mrf.mxu0
      %v5216 = vadd.f32 0.0, %v5215
      %v5217 = vpop.f32.mrf.mxu0
      %v5218 = vpop.f32.mrf.mxu0
      %v5219 = vadd.f32 0.0, %v5218
      %v5220 = vpop.f32.mrf.mxu0
      %5221 = vmatprep.mubr.bf16.mxu0 0
      %5222 = vmatmul.mubr.bf16.gmra.mxu0 %v5168
      %v5223 = vpop.f32.mrf.mxu0
      %v5224 = vadd.f32 0.0, %v5223
      %v5225 = vpop.f32.mrf.mxu0
      %v5226 = vpop.f32.mrf.mxu0
      %v5227 = vadd.f32 0.0, %v5226
      %v5228 = vpop.f32.mrf.mxu0
      %5229 = vmatprep.mubr.bf16.mxu0 0
      %5230 = vmatmul.mubr.bf16.gmra.mxu0 %v5171
      %v5231 = vpop.f32.mrf.mxu0
      %v5232 = vadd.f32 0.0, %v5231
      %v5233 = vpop.f32.mrf.mxu0
      %v5234 = vpop.f32.mrf.mxu0
      %v5235 = vadd.f32 0.0, %v5234
      %v5236 = vpop.f32.mrf.mxu0
      %5237 = vdwg.mxu0
      %v5238 = vpack.c.bf16 %v1949, %v1948
      %v5239 = vpack.c.bf16 %v1951, %v1950
      %v5240 = vpack.c.bf16 %v1953, %v1952
      %v5241 = vpack.c.bf16 %v1955, %v1954
      %v5242 = vpack.c.bf16 %v4903, %v4902
      %5244 = vrot.lane.b32.xlu0 %v5242, 96
      %v5245 = vpop.permute.xlu0 %5244
      %v5248 = vsel %vm1098, %v5238, 0
      %v5251 = vsel %vm1098, %v5239, 0
      %v5254 = vsel %vm1098, %v5240, 0
      %v5257 = vsel %vm1098, %v5241, 0
      %5259 = vmatprep.subr.bf16.mxu0 0
      %5260 = vmatpush1.bf16.msra.mxu0 0
      %5261 = vmatprep.subr.bf16.mxu0 0
      %5262 = vmatpush1.bf16.msra.mxu0 0
      %5263 = vmatprep.subr.bf16.mxu0 0
      %5264 = vmatpush1.bf16.msra.mxu0 0
      %5265 = vmatprep.subr.bf16.mxu0 0
      %5266 = vmatpush1.bf16.msra.mxu0 0
      %5267 = vmatprep.subr.bf16.mxu0 0
      %5268 = vmatpush1.bf16.msra.mxu0 0
      %5269 = vmatprep.subr.bf16.mxu0 0
      %5270 = vmatpush1.bf16.msra.mxu0 0
      %5271 = vmatprep.subr.bf16.mxu0 0
      %5272 = vmatpush1.bf16.msra.mxu0 0
      %5273 = vmatprep.subr.bf16.mxu0 0
      %5274 = vmatpush1.bf16.msra.mxu0 %v5245
      %5275 = vmatprep.subr.bf16.mxu0 0
      %5276 = vmatpush2.bf16.msra.mxu0 0
      %5277 = vmatprep.subr.bf16.mxu0 0
      %5278 = vmatpush2.bf16.msra.mxu0 0
      %5279 = vmatprep.subr.bf16.mxu0 0
      %5280 = vmatpush2.bf16.msra.mxu0 0
      %5281 = vmatprep.subr.bf16.mxu0 0
      %5282 = vmatpush2.bf16.msra.mxu0 0
      %5283 = vmatprep.subr.bf16.mxu0 0
      %5284 = vmatpush2.bf16.msra.mxu0 0
      %5285 = vmatprep.subr.bf16.mxu0 0
      %5286 = vmatpush2.bf16.msra.mxu0 0
      %5287 = vmatprep.subr.bf16.mxu0 0
      %5288 = vmatpush2.bf16.msra.mxu0 0
      %5289 = vmatprep.subr.bf16.mxu0 0
      %5290 = vmatpush2.bf16.msra.mxu0 0
      %5291 = vmatprep.mubr.bf16.mxu0 0
      %5292 = vmatmul.mubr.bf16.gmra.mxu0 %v5248
      %v5293 = vpop.f32.mrf.mxu0
      %v5294 = vadd.f32 0.0, %v5293
      %v5295 = vpop.f32.mrf.mxu0
      %v5296 = vpop.f32.mrf.mxu0
      %v5297 = vadd.f32 0.0, %v5296
      %v5298 = vpop.f32.mrf.mxu0
      %5299 = vmatprep.mubr.bf16.mxu0 0
      %5300 = vmatmul.mubr.bf16.gmra.mxu0 %v5251
      %v5301 = vpop.f32.mrf.mxu0
      %v5302 = vadd.f32 0.0, %v5301
      %v5303 = vpop.f32.mrf.mxu0
      %v5304 = vpop.f32.mrf.mxu0
      %v5305 = vadd.f32 0.0, %v5304
      %v5306 = vpop.f32.mrf.mxu0
      %5307 = vmatprep.mubr.bf16.mxu0 0
      %5308 = vmatmul.mubr.bf16.gmra.mxu0 %v5254
      %v5309 = vpop.f32.mrf.mxu0
      %v5310 = vadd.f32 0.0, %v5309
      %v5311 = vpop.f32.mrf.mxu0
      %v5312 = vpop.f32.mrf.mxu0
      %v5313 = vadd.f32 0.0, %v5312
      %v5314 = vpop.f32.mrf.mxu0
      %5315 = vmatprep.mubr.bf16.mxu0 0
      %5316 = vmatmul.mubr.bf16.gmra.mxu0 %v5257
      %v5317 = vpop.f32.mrf.mxu0
      %v5318 = vadd.f32 0.0, %v5317
      %v5319 = vpop.f32.mrf.mxu0
      %v5320 = vpop.f32.mrf.mxu0
      %v5321 = vadd.f32 0.0, %v5320
      %v5322 = vpop.f32.mrf.mxu0
      %5323 = vdwg.mxu0
      %v5324 = vpack.c.bf16 %v5297, %v5294
      %v5325 = vpack.c.bf16 %v5305, %v5302
      %v5326 = vpack.c.bf16 %v5313, %v5310
      %v5327 = vpack.c.bf16 %v5321, %v5318
      %v5328 = vpack.c.bf16 %v2161, %v2158
      %v5330 = vsel %vm1098, %v5324, 0
      %v5333 = vsel %vm1098, %v5325, 0
      %v5336 = vsel %vm1098, %v5326, 0
      %v5339 = vsel %vm1098, %v5327, 0
      %5341 = vmatprep.subr.bf16.mxu0 0
      %5342 = vmatpush1.bf16.msra.mxu0 0
      %5343 = vmatprep.subr.bf16.mxu0 0
      %5344 = vmatpush1.bf16.msra.mxu0 0
      %5345 = vmatprep.subr.bf16.mxu0 0
      %5346 = vmatpush1.bf16.msra.mxu0 0
      %5347 = vmatprep.subr.bf16.mxu0 0
      %5348 = vmatpush1.bf16.msra.mxu0 0
      %5349 = vmatprep.subr.bf16.mxu0 0
      %5350 = vmatpush1.bf16.msra.mxu0 0
      %5351 = vmatprep.subr.bf16.mxu0 0
      %5352 = vmatpush1.bf16.msra.mxu0 0
      %5353 = vmatprep.subr.bf16.mxu0 0
      %5354 = vmatpush1.bf16.msra.mxu0 0
      %5355 = vmatprep.subr.bf16.mxu0 0
      %5356 = vmatpush1.bf16.msra.mxu0 %v5328
      %5357 = vmatprep.subr.bf16.mxu0 0
      %5358 = vmatpush2.bf16.msra.mxu0 0
      %5359 = vmatprep.subr.bf16.mxu0 0
      %5360 = vmatpush2.bf16.msra.mxu0 0
      %5361 = vmatprep.subr.bf16.mxu0 0
      %5362 = vmatpush2.bf16.msra.mxu0 0
      %5363 = vmatprep.subr.bf16.mxu0 0
      %5364 = vmatpush2.bf16.msra.mxu0 0
      %5365 = vmatprep.subr.bf16.mxu0 0
      %5366 = vmatpush2.bf16.msra.mxu0 0
      %5367 = vmatprep.subr.bf16.mxu0 0
      %5368 = vmatpush2.bf16.msra.mxu0 0
      %5369 = vmatprep.subr.bf16.mxu0 0
      %5370 = vmatpush2.bf16.msra.mxu0 0
      %5371 = vmatprep.subr.bf16.mxu0 0
      %5372 = vmatpush2.bf16.msra.mxu0 0
      %5373 = vmatprep.mubr.bf16.mxu0 0
      %5374 = vmatmul.mubr.bf16.gmra.mxu0 %v5330
      %v5375 = vpop.f32.mrf.mxu0
      %v5376 = vadd.f32 0.0, %v5375
      %v5377 = vpop.f32.mrf.mxu0
      %v5378 = vpop.f32.mrf.mxu0
      %v5379 = vadd.f32 0.0, %v5378
      %v5380 = vpop.f32.mrf.mxu0
      %5381 = vmatprep.mubr.bf16.mxu0 0
      %5382 = vmatmul.mubr.bf16.gmra.mxu0 %v5333
      %v5383 = vpop.f32.mrf.mxu0
      %v5384 = vadd.f32 0.0, %v5383
      %v5385 = vpop.f32.mrf.mxu0
      %v5386 = vpop.f32.mrf.mxu0
      %v5387 = vadd.f32 0.0, %v5386
      %v5388 = vpop.f32.mrf.mxu0
      %5389 = vmatprep.mubr.bf16.mxu0 0
      %5390 = vmatmul.mubr.bf16.gmra.mxu0 %v5336
      %v5391 = vpop.f32.mrf.mxu0
      %v5392 = vadd.f32 0.0, %v5391
      %v5393 = vpop.f32.mrf.mxu0
      %v5394 = vpop.f32.mrf.mxu0
      %v5395 = vadd.f32 0.0, %v5394
      %v5396 = vpop.f32.mrf.mxu0
      %5397 = vmatprep.mubr.bf16.mxu0 0
      %5398 = vmatmul.mubr.bf16.gmra.mxu0 %v5339
      %v5399 = vpop.f32.mrf.mxu0
      %v5400 = vadd.f32 0.0, %v5399
      %v5401 = vpop.f32.mrf.mxu0
      %v5402 = vpop.f32.mrf.mxu0
      %v5403 = vadd.f32 0.0, %v5402
      %v5404 = vpop.f32.mrf.mxu0
      %5405 = vdwg.mxu0
      %v5406 = vpack.c.bf16 %v2335, %v2334
      %v5407 = vpack.c.bf16 %v2337, %v2336
      %v5408 = vpack.c.bf16 %v2339, %v2338
      %v5409 = vpack.c.bf16 %v2341, %v2340
      %v5410 = vpack.c.bf16 %v4905, %v4904
      %5412 = vrot.lane.b32.xlu0 %v5410, 80
      %v5413 = vpop.permute.xlu0 %5412
      %v5416 = vsel %vm1098, %v5406, 0
      %v5419 = vsel %vm1098, %v5407, 0
      %v5422 = vsel %vm1098, %v5408, 0
      %v5425 = vsel %vm1098, %v5409, 0
      %5427 = vmatprep.subr.bf16.mxu0 0
      %5428 = vmatpush1.bf16.msra.mxu0 0
      %5429 = vmatprep.subr.bf16.mxu0 0
      %5430 = vmatpush1.bf16.msra.mxu0 0
      %5431 = vmatprep.subr.bf16.mxu0 0
      %5432 = vmatpush1.bf16.msra.mxu0 0
      %5433 = vmatprep.subr.bf16.mxu0 0
      %5434 = vmatpush1.bf16.msra.mxu0 0
      %5435 = vmatprep.subr.bf16.mxu0 0
      %5436 = vmatpush1.bf16.msra.mxu0 0
      %5437 = vmatprep.subr.bf16.mxu0 0
      %5438 = vmatpush1.bf16.msra.mxu0 0
      %5439 = vmatprep.subr.bf16.mxu0 0
      %5440 = vmatpush1.bf16.msra.mxu0 0
      %5441 = vmatprep.subr.bf16.mxu0 0
      %5442 = vmatpush1.bf16.msra.mxu0 %v5413
      %5443 = vmatprep.subr.bf16.mxu0 0
      %5444 = vmatpush2.bf16.msra.mxu0 0
      %5445 = vmatprep.subr.bf16.mxu0 0
      %5446 = vmatpush2.bf16.msra.mxu0 0
      %5447 = vmatprep.subr.bf16.mxu0 0
      %5448 = vmatpush2.bf16.msra.mxu0 0
      %5449 = vmatprep.subr.bf16.mxu0 0
      %5450 = vmatpush2.bf16.msra.mxu0 0
      %5451 = vmatprep.subr.bf16.mxu0 0
      %5452 = vmatpush2.bf16.msra.mxu0 0
      %5453 = vmatprep.subr.bf16.mxu0 0
      %5454 = vmatpush2.bf16.msra.mxu0 0
      %5455 = vmatprep.subr.bf16.mxu0 0
      %5456 = vmatpush2.bf16.msra.mxu0 0
      %5457 = vmatprep.subr.bf16.mxu0 0
      %5458 = vmatpush2.bf16.msra.mxu0 0
      %5459 = vmatprep.mubr.bf16.mxu0 0
      %5460 = vmatmul.mubr.bf16.gmra.mxu0 %v5416
      %v5461 = vpop.f32.mrf.mxu0
      %v5462 = vadd.f32 0.0, %v5461
      %v5463 = vpop.f32.mrf.mxu0
      %v5464 = vpop.f32.mrf.mxu0
      %v5465 = vadd.f32 0.0, %v5464
      %v5466 = vpop.f32.mrf.mxu0
      %5467 = vmatprep.mubr.bf16.mxu0 0
      %5468 = vmatmul.mubr.bf16.gmra.mxu0 %v5419
      %v5469 = vpop.f32.mrf.mxu0
      %v5470 = vadd.f32 0.0, %v5469
      %v5471 = vpop.f32.mrf.mxu0
      %v5472 = vpop.f32.mrf.mxu0
      %v5473 = vadd.f32 0.0, %v5472
      %v5474 = vpop.f32.mrf.mxu0
      %5475 = vmatprep.mubr.bf16.mxu0 0
      %5476 = vmatmul.mubr.bf16.gmra.mxu0 %v5422
      %v5477 = vpop.f32.mrf.mxu0
      %v5478 = vadd.f32 0.0, %v5477
      %v5479 = vpop.f32.mrf.mxu0
      %v5480 = vpop.f32.mrf.mxu0
      %v5481 = vadd.f32 0.0, %v5480
      %v5482 = vpop.f32.mrf.mxu0
      %5483 = vmatprep.mubr.bf16.mxu0 0
      %5484 = vmatmul.mubr.bf16.gmra.mxu0 %v5425
      %v5485 = vpop.f32.mrf.mxu0
      %v5486 = vadd.f32 0.0, %v5485
      %v5487 = vpop.f32.mrf.mxu0
      %v5488 = vpop.f32.mrf.mxu0
      %v5489 = vadd.f32 0.0, %v5488
      %v5490 = vpop.f32.mrf.mxu0
      %5491 = vdwg.mxu0
      %v5492 = vpack.c.bf16 %v5465, %v5462
      %v5493 = vpack.c.bf16 %v5473, %v5470
      %v5494 = vpack.c.bf16 %v5481, %v5478
      %v5495 = vpack.c.bf16 %v5489, %v5486
      %v5496 = vpack.c.bf16 %v2547, %v2544
      %v5498 = vsel %vm1098, %v5492, 0
      %v5501 = vsel %vm1098, %v5493, 0
      %v5504 = vsel %vm1098, %v5494, 0
      %v5507 = vsel %vm1098, %v5495, 0
      %5509 = vmatprep.subr.bf16.mxu0 0
      %5510 = vmatpush1.bf16.msra.mxu0 0
      %5511 = vmatprep.subr.bf16.mxu0 0
      %5512 = vmatpush1.bf16.msra.mxu0 0
      %5513 = vmatprep.subr.bf16.mxu0 0
      %5514 = vmatpush1.bf16.msra.mxu0 0
      %5515 = vmatprep.subr.bf16.mxu0 0
      %5516 = vmatpush1.bf16.msra.mxu0 0
      %5517 = vmatprep.subr.bf16.mxu0 0
      %5518 = vmatpush1.bf16.msra.mxu0 0
      %5519 = vmatprep.subr.bf16.mxu0 0
      %5520 = vmatpush1.bf16.msra.mxu0 0
      %5521 = vmatprep.subr.bf16.mxu0 0
      %5522 = vmatpush1.bf16.msra.mxu0 0
      %5523 = vmatprep.subr.bf16.mxu0 0
      %5524 = vmatpush1.bf16.msra.mxu0 %v5496
      %5525 = vmatprep.subr.bf16.mxu0 0
      %5526 = vmatpush2.bf16.msra.mxu0 0
      %5527 = vmatprep.subr.bf16.mxu0 0
      %5528 = vmatpush2.bf16.msra.mxu0 0
      %5529 = vmatprep.subr.bf16.mxu0 0
      %5530 = vmatpush2.bf16.msra.mxu0 0
      %5531 = vmatprep.subr.bf16.mxu0 0
      %5532 = vmatpush2.bf16.msra.mxu0 0
      %5533 = vmatprep.subr.bf16.mxu0 0
      %5534 = vmatpush2.bf16.msra.mxu0 0
      %5535 = vmatprep.subr.bf16.mxu0 0
      %5536 = vmatpush2.bf16.msra.mxu0 0
      %5537 = vmatprep.subr.bf16.mxu0 0
      %5538 = vmatpush2.bf16.msra.mxu0 0
      %5539 = vmatprep.subr.bf16.mxu0 0
      %5540 = vmatpush2.bf16.msra.mxu0 0
      %5541 = vmatprep.mubr.bf16.mxu0 0
      %5542 = vmatmul.mubr.bf16.gmra.mxu0 %v5498
      %v5543 = vpop.f32.mrf.mxu0
      %v5544 = vadd.f32 0.0, %v5543
      %v5545 = vpop.f32.mrf.mxu0
      %v5546 = vpop.f32.mrf.mxu0
      %v5547 = vadd.f32 0.0, %v5546
      %v5548 = vpop.f32.mrf.mxu0
      %5549 = vmatprep.mubr.bf16.mxu0 0
      %5550 = vmatmul.mubr.bf16.gmra.mxu0 %v5501
      %v5551 = vpop.f32.mrf.mxu0
      %v5552 = vadd.f32 0.0, %v5551
      %v5553 = vpop.f32.mrf.mxu0
      %v5554 = vpop.f32.mrf.mxu0
      %v5555 = vadd.f32 0.0, %v5554
      %v5556 = vpop.f32.mrf.mxu0
      %5557 = vmatprep.mubr.bf16.mxu0 0
      %5558 = vmatmul.mubr.bf16.gmra.mxu0 %v5504
      %v5559 = vpop.f32.mrf.mxu0
      %v5560 = vadd.f32 0.0, %v5559
      %v5561 = vpop.f32.mrf.mxu0
      %v5562 = vpop.f32.mrf.mxu0
      %v5563 = vadd.f32 0.0, %v5562
      %v5564 = vpop.f32.mrf.mxu0
      %5565 = vmatprep.mubr.bf16.mxu0 0
      %5566 = vmatmul.mubr.bf16.gmra.mxu0 %v5507
      %v5567 = vpop.f32.mrf.mxu0
      %v5568 = vadd.f32 0.0, %v5567
      %v5569 = vpop.f32.mrf.mxu0
      %v5570 = vpop.f32.mrf.mxu0
      %v5571 = vadd.f32 0.0, %v5570
      %v5572 = vpop.f32.mrf.mxu0
      %5573 = vdwg.mxu0
      %5582 = vrot.lane.b32.xlu0 %v5208, 8
      %v5583 = vpop.permute.xlu0 %5582
      %5584 = vrot.lane.b32.xlu0 %v5211, 8
      %v5585 = vpop.permute.xlu0 %5584
      %5586 = vrot.lane.b32.xlu0 %v5216, 8
      %v5587 = vpop.permute.xlu0 %5586
      %5588 = vrot.lane.b32.xlu0 %v5219, 8
      %v5589 = vpop.permute.xlu0 %5588
      %5590 = vrot.lane.b32.xlu0 %v5224, 8
      %v5591 = vpop.permute.xlu0 %5590
      %5592 = vrot.lane.b32.xlu0 %v5227, 8
      %v5593 = vpop.permute.xlu0 %5592
      %5594 = vrot.lane.b32.xlu0 %v5232, 8
      %v5595 = vpop.permute.xlu0 %5594
      %5596 = vrot.lane.b32.xlu0 %v5235, 8
      %v5597 = vpop.permute.xlu0 %5596
      %5614 = vrot.lane.b32.xlu0 %v5376, 16
      %v5615 = vpop.permute.xlu0 %5614
      %5616 = vrot.lane.b32.xlu0 %v5379, 16
      %v5617 = vpop.permute.xlu0 %5616
      %5618 = vrot.lane.b32.xlu0 %v5384, 16
      %v5619 = vpop.permute.xlu0 %5618
      %5620 = vrot.lane.b32.xlu0 %v5387, 16
      %v5621 = vpop.permute.xlu0 %5620
      %5622 = vrot.lane.b32.xlu0 %v5392, 16
      %v5623 = vpop.permute.xlu0 %5622
      %5624 = vrot.lane.b32.xlu0 %v5395, 16
      %v5625 = vpop.permute.xlu0 %5624
      %5626 = vrot.lane.b32.xlu0 %v5400, 16
      %v5627 = vpop.permute.xlu0 %5626
      %5628 = vrot.lane.b32.xlu0 %v5403, 16
      %v5629 = vpop.permute.xlu0 %5628
      %5646 = vrot.lane.b32.xlu0 %v5544, 24
      %v5647 = vpop.permute.xlu0 %5646
      %5648 = vrot.lane.b32.xlu0 %v5547, 24
      %v5649 = vpop.permute.xlu0 %5648
      %5650 = vrot.lane.b32.xlu0 %v5552, 24
      %v5651 = vpop.permute.xlu0 %5650
      %5652 = vrot.lane.b32.xlu0 %v5555, 24
      %v5653 = vpop.permute.xlu0 %5652
      %5654 = vrot.lane.b32.xlu0 %v5560, 24
      %v5655 = vpop.permute.xlu0 %5654
      %5656 = vrot.lane.b32.xlu0 %v5563, 24
      %v5657 = vpop.permute.xlu0 %5656
      %5658 = vrot.lane.b32.xlu0 %v5568, 24
      %v5659 = vpop.permute.xlu0 %5658
      %5660 = vrot.lane.b32.xlu0 %v5571, 24
      %v5661 = vpop.permute.xlu0 %5660
      %v5670 = vsel %vm1017, %v5040, %v5583
      %v5671 = vsel %vm1017, %v5043, %v5585
      %v5672 = vsel %vm1017, %v5048, %v5587
      %v5673 = vsel %vm1017, %v5051, %v5589
      %v5674 = vsel %vm1017, %v5056, %v5591
      %v5675 = vsel %vm1017, %v5059, %v5593
      %v5676 = vsel %vm1017, %v5064, %v5595
      %v5677 = vsel %vm1017, %v5067, %v5597
      %v5678 = vsel %vm1098, %v5670, %v5615
      %v5679 = vsel %vm1098, %v5671, %v5617
      %v5680 = vsel %vm1098, %v5672, %v5619
      %v5681 = vsel %vm1098, %v5673, %v5621
      %v5682 = vsel %vm1098, %v5674, %v5623
      %v5683 = vsel %vm1098, %v5675, %v5625
      %v5684 = vsel %vm1098, %v5676, %v5627
      %v5685 = vsel %vm1098, %v5677, %v5629
      %vm5686 = vcmask 195584
      %v5687 = vsel %vm5686, %v5678, %v5647
      %v5688 = vsel %vm5686, %v5679, %v5649
      %v5689 = vsel %vm5686, %v5680, %v5651
      %v5690 = vsel %vm5686, %v5681, %v5653
      %v5691 = vsel %vm5686, %v5682, %v5655
      %v5692 = vsel %vm5686, %v5683, %v5657
      %v5693 = vsel %vm5686, %v5684, %v5659
      %v5694 = vsel %vm5686, %v5685, %v5661
      %v5695 = vld [vmem:[%s8] sm:$0xff]
      %v5696 = vld [vmem:[%s8 + $0x8] sm:$0xff]
      %v5697 = vld [vmem:[%s8 + $0x10] sm:$0xff]
      %v5698 = vld [vmem:[%s8 + $0x18] sm:$0xff]
      %v5699 = vld [vmem:[%s8 + $0x20] sm:$0x1]
      %v5700 = vlaneseq
      %v5701 = vshrl.u32 %v5700, 7
      %v5702 = vsub.s32 0, %v5701
      %v5703 = vrot.slane %v5695, %v5702
      %v5704 = vmul.f32 %v5703, 0.0
      %v5705 = vmul.f32 %v872, %v5703
      %v5706 = vmul.f32 %v875, %v5703
      %v5707 = vmul.f32 %v880, %v5703
      %v5708 = vmul.f32 %v883, %v5703
      %v5709 = vmul.f32 %v888, %v5703
      %v5710 = vmul.f32 %v891, %v5703
      %v5711 = vadd.f32 %v5704, 0.0
      %v5712 = vadd.f32 %v5705, 0.0
      %v5713 = vadd.f32 %v5706, 0.0
      %v5714 = vadd.f32 %v5707, 0.0
      %v5715 = vadd.f32 %v5708, 0.0
      %v5716 = vadd.f32 %v5709, 0.0
      %v5717 = vadd.f32 %v5710, 0.0
      %v5718 = vlaneseq
      %v5719 = vshrl.u32 %v5718, 7
      %v5720 = vsub.s32 1, %v5719
      %v5721 = vrot.slane %v5695, %v5720
      %v5722 = vmul.f32 %v5721, 0.0
      %v5723 = vmul.f32 %v872, %v5721
      %v5724 = vmul.f32 %v875, %v5721
      %v5725 = vmul.f32 %v880, %v5721
      %v5726 = vmul.f32 %v883, %v5721
      %v5727 = vmul.f32 %v888, %v5721
      %v5728 = vmul.f32 %v891, %v5721
      %v5729 = vmul.f32 %v896, %v5721
      %vm5738 = vcmask 1046528
      %v5739 = vrot.slane %v5722, 1
      %v5740 = vsel %vm5738, %v5739, %v5739
      %v5741 = vrot.slane %v5723, 1
      %v5742 = vsel %vm5738, %v5739, %v5741
      %v5743 = vrot.slane %v5724, 1
      %v5744 = vsel %vm5738, %v5741, %v5743
      %v5745 = vrot.slane %v5725, 1
      %v5746 = vsel %vm5738, %v5743, %v5745
      %v5747 = vrot.slane %v5726, 1
      %v5748 = vsel %vm5738, %v5745, %v5747
      %v5749 = vrot.slane %v5727, 1
      %v5750 = vsel %vm5738, %v5747, %v5749
      %v5751 = vrot.slane %v5728, 1
      %v5752 = vsel %vm5738, %v5749, %v5751
      %v5753 = vrot.slane %v5729, 1
      %v5754 = vsel %vm5738, %v5751, %v5753
      %v5763 = vadd.f32 %v5711, %v5740
      %v5764 = vadd.f32 %v5711, %v5742
      %v5765 = vadd.f32 %v5712, %v5744
      %v5766 = vadd.f32 %v5713, %v5746
      %v5767 = vadd.f32 %v5714, %v5748
      %v5768 = vadd.f32 %v5715, %v5750
      %v5769 = vadd.f32 %v5716, %v5752
      %v5770 = vadd.f32 %v5717, %v5754
      %v5771 = vlaneseq
      %v5772 = vshrl.u32 %v5771, 7
      %v5773 = vsub.s32 2, %v5772
      %v5774 = vrot.slane %v5695, %v5773
      %v5775 = vmul.f32 %v5774, 0.0
      %v5776 = vmul.f32 %v872, %v5774
      %v5777 = vmul.f32 %v875, %v5774
      %v5778 = vmul.f32 %v880, %v5774
      %v5779 = vmul.f32 %v883, %v5774
      %v5780 = vmul.f32 %v888, %v5774
      %v5781 = vmul.f32 %v891, %v5774
      %v5782 = vmul.f32 %v896, %v5774
      %vm5791 = vcmask 1045504
      %v5792 = vrot.slane %v5775, 2
      %v5793 = vsel %vm5791, %v5792, %v5792
      %v5794 = vrot.slane %v5776, 2
      %v5795 = vsel %vm5791, %v5792, %v5794
      %v5796 = vrot.slane %v5777, 2
      %v5797 = vsel %vm5791, %v5794, %v5796
      %v5798 = vrot.slane %v5778, 2
      %v5799 = vsel %vm5791, %v5796, %v5798
      %v5800 = vrot.slane %v5779, 2
      %v5801 = vsel %vm5791, %v5798, %v5800
      %v5802 = vrot.slane %v5780, 2
      %v5803 = vsel %vm5791, %v5800, %v5802
      %v5804 = vrot.slane %v5781, 2
      %v5805 = vsel %vm5791, %v5802, %v5804
      %v5806 = vrot.slane %v5782, 2
      %v5807 = vsel %vm5791, %v5804, %v5806
      %v5816 = vadd.f32 %v5763, %v5793
      %v5817 = vadd.f32 %v5764, %v5795
      %v5818 = vadd.f32 %v5765, %v5797
      %v5819 = vadd.f32 %v5766, %v5799
      %v5820 = vadd.f32 %v5767, %v5801
      %v5821 = vadd.f32 %v5768, %v5803
      %v5822 = vadd.f32 %v5769, %v5805
      %v5823 = vadd.f32 %v5770, %v5807
      %v5824 = vlaneseq
      %v5825 = vshrl.u32 %v5824, 7
      %v5826 = vsub.s32 3, %v5825
      %v5827 = vrot.slane %v5695, %v5826
      %v5828 = vmul.f32 %v5827, 0.0
      %v5829 = vmul.f32 %v872, %v5827
      %v5830 = vmul.f32 %v875, %v5827
      %v5831 = vmul.f32 %v880, %v5827
      %v5832 = vmul.f32 %v883, %v5827
      %v5833 = vmul.f32 %v888, %v5827
      %v5834 = vmul.f32 %v891, %v5827
      %v5835 = vmul.f32 %v896, %v5827
      %vm5844 = vcmask 1044480
      %v5845 = vrot.slane %v5828, 3
      %v5846 = vsel %vm5844, %v5845, %v5845
      %v5847 = vrot.slane %v5829, 3
      %v5848 = vsel %vm5844, %v5845, %v5847
      %v5849 = vrot.slane %v5830, 3
      %v5850 = vsel %vm5844, %v5847, %v5849
      %v5851 = vrot.slane %v5831, 3
      %v5852 = vsel %vm5844, %v5849, %v5851
      %v5853 = vrot.slane %v5832, 3
      %v5854 = vsel %vm5844, %v5851, %v5853
      %v5855 = vrot.slane %v5833, 3
      %v5856 = vsel %vm5844, %v5853, %v5855
      %v5857 = vrot.slane %v5834, 3
      %v5858 = vsel %vm5844, %v5855, %v5857
      %v5859 = vrot.slane %v5835, 3
      %v5860 = vsel %vm5844, %v5857, %v5859
      %v5869 = vadd.f32 %v5816, %v5846
      %v5870 = vadd.f32 %v5817, %v5848
      %v5871 = vadd.f32 %v5818, %v5850
      %v5872 = vadd.f32 %v5819, %v5852
      %v5873 = vadd.f32 %v5820, %v5854
      %v5874 = vadd.f32 %v5821, %v5856
      %v5875 = vadd.f32 %v5822, %v5858
      %v5876 = vadd.f32 %v5823, %v5860
      %v5877 = vlaneseq
      %v5878 = vshrl.u32 %v5877, 7
      %v5879 = vsub.s32 4, %v5878
      %v5880 = vrot.slane %v5695, %v5879
      %v5881 = vmul.f32 %v5880, 0.0
      %v5882 = vmul.f32 %v872, %v5880
      %v5883 = vmul.f32 %v875, %v5880
      %v5884 = vmul.f32 %v880, %v5880
      %v5885 = vmul.f32 %v883, %v5880
      %v5886 = vmul.f32 %v888, %v5880
      %v5887 = vmul.f32 %v891, %v5880
      %v5888 = vmul.f32 %v896, %v5880
      %vm5897 = vcmask 1043456
      %v5898 = vrot.slane %v5881, 4
      %v5899 = vsel %vm5897, %v5898, %v5898
      %v5900 = vrot.slane %v5882, 4
      %v5901 = vsel %vm5897, %v5898, %v5900
      %v5902 = vrot.slane %v5883, 4
      %v5903 = vsel %vm5897, %v5900, %v5902
      %v5904 = vrot.slane %v5884, 4
      %v5905 = vsel %vm5897, %v5902, %v5904
      %v5906 = vrot.slane %v5885, 4
      %v5907 = vsel %vm5897, %v5904, %v5906
      %v5908 = vrot.slane %v5886, 4
      %v5909 = vsel %vm5897, %v5906, %v5908
      %v5910 = vrot.slane %v5887, 4
      %v5911 = vsel %vm5897, %v5908, %v5910
      %v5912 = vrot.slane %v5888, 4
      %v5913 = vsel %vm5897, %v5910, %v5912
      %v5922 = vadd.f32 %v5869, %v5899
      %v5923 = vadd.f32 %v5870, %v5901
      %v5924 = vadd.f32 %v5871, %v5903
      %v5925 = vadd.f32 %v5872, %v5905
      %v5926 = vadd.f32 %v5873, %v5907
      %v5927 = vadd.f32 %v5874, %v5909
      %v5928 = vadd.f32 %v5875, %v5911
      %v5929 = vadd.f32 %v5876, %v5913
      %v5930 = vlaneseq
      %v5931 = vshrl.u32 %v5930, 7
      %v5932 = vsub.s32 5, %v5931
      %v5933 = vrot.slane %v5695, %v5932
      %v5934 = vmul.f32 %v5933, 0.0
      %v5935 = vmul.f32 %v872, %v5933
      %v5936 = vmul.f32 %v875, %v5933
      %v5937 = vmul.f32 %v880, %v5933
      %v5938 = vmul.f32 %v883, %v5933
      %v5939 = vmul.f32 %v888, %v5933
      %v5940 = vmul.f32 %v891, %v5933
      %v5941 = vmul.f32 %v896, %v5933
      %vm5950 = vcmask 1042432
      %v5951 = vrot.slane %v5934, 5
      %v5952 = vsel %vm5950, %v5951, %v5951
      %v5953 = vrot.slane %v5935, 5
      %v5954 = vsel %vm5950, %v5951, %v5953
      %v5955 = vrot.slane %v5936, 5
      %v5956 = vsel %vm5950, %v5953, %v5955
      %v5957 = vrot.slane %v5937, 5
      %v5958 = vsel %vm5950, %v5955, %v5957
      %v5959 = vrot.slane %v5938, 5
      %v5960 = vsel %vm5950, %v5957, %v5959
      %v5961 = vrot.slane %v5939, 5
      %v5962 = vsel %vm5950, %v5959, %v5961
      %v5963 = vrot.slane %v5940, 5
      %v5964 = vsel %vm5950, %v5961, %v5963
      %v5965 = vrot.slane %v5941, 5
      %v5966 = vsel %vm5950, %v5963, %v5965
      %v5975 = vadd.f32 %v5922, %v5952
      %v5976 = vadd.f32 %v5923, %v5954
      %v5977 = vadd.f32 %v5924, %v5956
      %v5978 = vadd.f32 %v5925, %v5958
      %v5979 = vadd.f32 %v5926, %v5960
      %v5980 = vadd.f32 %v5927, %v5962
      %v5981 = vadd.f32 %v5928, %v5964
      %v5982 = vadd.f32 %v5929, %v5966
      %v5983 = vlaneseq
      %v5984 = vshrl.u32 %v5983, 7
      %v5985 = vsub.s32 6, %v5984
      %v5986 = vrot.slane %v5695, %v5985
      %v5987 = vmul.f32 %v5986, 0.0
      %v5988 = vmul.f32 %v872, %v5986
      %v5989 = vmul.f32 %v875, %v5986
      %v5990 = vmul.f32 %v880, %v5986
      %v5991 = vmul.f32 %v883, %v5986
      %v5992 = vmul.f32 %v888, %v5986
      %v5993 = vmul.f32 %v891, %v5986
      %v5994 = vmul.f32 %v896, %v5986
      %vm6003 = vcmask 1041408
      %v6004 = vrot.slane %v5987, 6
      %v6005 = vsel %vm6003, %v6004, %v6004
      %v6006 = vrot.slane %v5988, 6
      %v6007 = vsel %vm6003, %v6004, %v6006
      %v6008 = vrot.slane %v5989, 6
      %v6009 = vsel %vm6003, %v6006, %v6008
      %v6010 = vrot.slane %v5990, 6
      %v6011 = vsel %vm6003, %v6008, %v6010
      %v6012 = vrot.slane %v5991, 6
      %v6013 = vsel %vm6003, %v6010, %v6012
      %v6014 = vrot.slane %v5992, 6
      %v6015 = vsel %vm6003, %v6012, %v6014
      %v6016 = vrot.slane %v5993, 6
      %v6017 = vsel %vm6003, %v6014, %v6016
      %v6018 = vrot.slane %v5994, 6
      %v6019 = vsel %vm6003, %v6016, %v6018
      %v6028 = vadd.f32 %v5975, %v6005
      %v6029 = vadd.f32 %v5976, %v6007
      %v6030 = vadd.f32 %v5977, %v6009
      %v6031 = vadd.f32 %v5978, %v6011
      %v6032 = vadd.f32 %v5979, %v6013
      %v6033 = vadd.f32 %v5980, %v6015
      %v6034 = vadd.f32 %v5981, %v6017
      %v6035 = vadd.f32 %v5982, %v6019
      %v6036 = vlaneseq
      %v6037 = vshrl.u32 %v6036, 7
      %v6038 = vsub.s32 7, %v6037
      %v6039 = vrot.slane %v5695, %v6038
      %v6040 = vmul.f32 %v6039, 0.0
      %v6041 = vmul.f32 %v872, %v6039
      %v6042 = vmul.f32 %v875, %v6039
      %v6043 = vmul.f32 %v880, %v6039
      %v6044 = vmul.f32 %v883, %v6039
      %v6045 = vmul.f32 %v888, %v6039
      %v6046 = vmul.f32 %v891, %v6039
      %v6047 = vmul.f32 %v896, %v6039
      %vm6056 = vcmask 1040384
      %v6057 = vrot.slane %v6040, 7
      %v6058 = vsel %vm6056, %v6057, %v6057
      %v6059 = vrot.slane %v6041, 7
      %v6060 = vsel %vm6056, %v6057, %v6059
      %v6061 = vrot.slane %v6042, 7
      %v6062 = vsel %vm6056, %v6059, %v6061
      %v6063 = vrot.slane %v6043, 7
      %v6064 = vsel %vm6056, %v6061, %v6063
      %v6065 = vrot.slane %v6044, 7
      %v6066 = vsel %vm6056, %v6063, %v6065
      %v6067 = vrot.slane %v6045, 7
      %v6068 = vsel %vm6056, %v6065, %v6067
      %v6069 = vrot.slane %v6046, 7
      %v6070 = vsel %vm6056, %v6067, %v6069
      %v6071 = vrot.slane %v6047, 7
      %v6072 = vsel %vm6056, %v6069, %v6071
      %v6081 = vadd.f32 %v6028, %v6058
      %v6082 = vadd.f32 %v6029, %v6060
      %v6083 = vadd.f32 %v6030, %v6062
      %v6084 = vadd.f32 %v6031, %v6064
      %v6085 = vadd.f32 %v6032, %v6066
      %v6086 = vadd.f32 %v6033, %v6068
      %v6087 = vadd.f32 %v6034, %v6070
      %v6088 = vadd.f32 %v6035, %v6072
      %v6089 = vlaneseq
      %v6090 = vshrl.u32 %v6089, 7
      %v6091 = vsub.s32 0, %v6090
      %v6092 = vrot.slane %v5696, %v6091
      %v6093 = vmul.f32 %v6092, 0.0
      %v6094 = vmul.f32 %v872, %v6092
      %v6095 = vmul.f32 %v875, %v6092
      %v6096 = vmul.f32 %v880, %v6092
      %v6097 = vmul.f32 %v883, %v6092
      %v6098 = vmul.f32 %v888, %v6092
      %v6099 = vmul.f32 %v891, %v6092
      %v6100 = vmul.f32 %v896, %v6092
      %v6101 = vadd.f32 %v6081, %v6093
      %v6102 = vadd.f32 %v6082, %v6094
      %v6103 = vadd.f32 %v6083, %v6095
      %v6104 = vadd.f32 %v6084, %v6096
      %v6105 = vadd.f32 %v6085, %v6097
      %v6106 = vadd.f32 %v6086, %v6098
      %v6107 = vadd.f32 %v6087, %v6099
      %v6108 = vadd.f32 %v6088, %v6100
      %v6109 = vlaneseq
      %v6110 = vshrl.u32 %v6109, 7
      %v6111 = vsub.s32 1, %v6110
      %v6112 = vrot.slane %v5696, %v6111
      %v6113 = vmul.f32 %v6112, 0.0
      %v6114 = vmul.f32 %v872, %v6112
      %v6115 = vmul.f32 %v875, %v6112
      %v6116 = vmul.f32 %v880, %v6112
      %v6117 = vmul.f32 %v883, %v6112
      %v6118 = vmul.f32 %v888, %v6112
      %v6119 = vmul.f32 %v891, %v6112
      %v6120 = vmul.f32 %v896, %v6112
      %v6121 = vmul.f32 %v899, %v6112
      %v6131 = vrot.slane %v6113, 1
      %v6132 = vrot.slane %v6114, 1
      %v6133 = vsel %vm5738, %v6131, %v6132
      %v6134 = vrot.slane %v6115, 1
      %v6135 = vsel %vm5738, %v6132, %v6134
      %v6136 = vrot.slane %v6116, 1
      %v6137 = vsel %vm5738, %v6134, %v6136
      %v6138 = vrot.slane %v6117, 1
      %v6139 = vsel %vm5738, %v6136, %v6138
      %v6140 = vrot.slane %v6118, 1
      %v6141 = vsel %vm5738, %v6138, %v6140
      %v6142 = vrot.slane %v6119, 1
      %v6143 = vsel %vm5738, %v6140, %v6142
      %v6144 = vrot.slane %v6120, 1
      %v6145 = vsel %vm5738, %v6142, %v6144
      %v6146 = vrot.slane %v6121, 1
      %v6147 = vsel %vm5738, %v6144, %v6146
      %v6156 = vadd.f32 %v6101, %v6133
      %v6157 = vadd.f32 %v6102, %v6135
      %v6158 = vadd.f32 %v6103, %v6137
      %v6159 = vadd.f32 %v6104, %v6139
      %v6160 = vadd.f32 %v6105, %v6141
      %v6161 = vadd.f32 %v6106, %v6143
      %v6162 = vadd.f32 %v6107, %v6145
      %v6163 = vadd.f32 %v6108, %v6147
      %v6164 = vlaneseq
      %v6165 = vshrl.u32 %v6164, 7
      %v6166 = vsub.s32 2, %v6165
      %v6167 = vrot.slane %v5696, %v6166
      %v6168 = vmul.f32 %v6167, 0.0
      %v6169 = vmul.f32 %v872, %v6167
      %v6170 = vmul.f32 %v875, %v6167
      %v6171 = vmul.f32 %v880, %v6167
      %v6172 = vmul.f32 %v883, %v6167
      %v6173 = vmul.f32 %v888, %v6167
      %v6174 = vmul.f32 %v891, %v6167
      %v6175 = vmul.f32 %v896, %v6167
      %v6176 = vmul.f32 %v899, %v6167
      %v6186 = vrot.slane %v6168, 2
      %v6187 = vrot.slane %v6169, 2
      %v6188 = vsel %vm5791, %v6186, %v6187
      %v6189 = vrot.slane %v6170, 2
      %v6190 = vsel %vm5791, %v6187, %v6189
      %v6191 = vrot.slane %v6171, 2
      %v6192 = vsel %vm5791, %v6189, %v6191
      %v6193 = vrot.slane %v6172, 2
      %v6194 = vsel %vm5791, %v6191, %v6193
      %v6195 = vrot.slane %v6173, 2
      %v6196 = vsel %vm5791, %v6193, %v6195
      %v6197 = vrot.slane %v6174, 2
      %v6198 = vsel %vm5791, %v6195, %v6197
      %v6199 = vrot.slane %v6175, 2
      %v6200 = vsel %vm5791, %v6197, %v6199
      %v6201 = vrot.slane %v6176, 2
      %v6202 = vsel %vm5791, %v6199, %v6201
      %v6211 = vadd.f32 %v6156, %v6188
      %v6212 = vadd.f32 %v6157, %v6190
      %v6213 = vadd.f32 %v6158, %v6192
      %v6214 = vadd.f32 %v6159, %v6194
      %v6215 = vadd.f32 %v6160, %v6196
      %v6216 = vadd.f32 %v6161, %v6198
      %v6217 = vadd.f32 %v6162, %v6200
      %v6218 = vadd.f32 %v6163, %v6202
      %v6219 = vlaneseq
      %v6220 = vshrl.u32 %v6219, 7
      %v6221 = vsub.s32 3, %v6220
      %v6222 = vrot.slane %v5696, %v6221
      %v6223 = vmul.f32 %v6222, 0.0
      %v6224 = vmul.f32 %v872, %v6222
      %v6225 = vmul.f32 %v875, %v6222
      %v6226 = vmul.f32 %v880, %v6222
      %v6227 = vmul.f32 %v883, %v6222
      %v6228 = vmul.f32 %v888, %v6222
      %v6229 = vmul.f32 %v891, %v6222
      %v6230 = vmul.f32 %v896, %v6222
      %v6231 = vmul.f32 %v899, %v6222
      %v6241 = vrot.slane %v6223, 3
      %v6242 = vrot.slane %v6224, 3
      %v6243 = vsel %vm5844, %v6241, %v6242
      %v6244 = vrot.slane %v6225, 3
      %v6245 = vsel %vm5844, %v6242, %v6244
      %v6246 = vrot.slane %v6226, 3
      %v6247 = vsel %vm5844, %v6244, %v6246
      %v6248 = vrot.slane %v6227, 3
      %v6249 = vsel %vm5844, %v6246, %v6248
      %v6250 = vrot.slane %v6228, 3
      %v6251 = vsel %vm5844, %v6248, %v6250
      %v6252 = vrot.slane %v6229, 3
      %v6253 = vsel %vm5844, %v6250, %v6252
      %v6254 = vrot.slane %v6230, 3
      %v6255 = vsel %vm5844, %v6252, %v6254
      %v6256 = vrot.slane %v6231, 3
      %v6257 = vsel %vm5844, %v6254, %v6256
      %v6266 = vadd.f32 %v6211, %v6243
      %v6267 = vadd.f32 %v6212, %v6245
      %v6268 = vadd.f32 %v6213, %v6247
      %v6269 = vadd.f32 %v6214, %v6249
      %v6270 = vadd.f32 %v6215, %v6251
      %v6271 = vadd.f32 %v6216, %v6253
      %v6272 = vadd.f32 %v6217, %v6255
      %v6273 = vadd.f32 %v6218, %v6257
      %v6274 = vlaneseq
      %v6275 = vshrl.u32 %v6274, 7
      %v6276 = vsub.s32 4, %v6275
      %v6277 = vrot.slane %v5696, %v6276
      %v6278 = vmul.f32 %v6277, 0.0
      %v6279 = vmul.f32 %v872, %v6277
      %v6280 = vmul.f32 %v875, %v6277
      %v6281 = vmul.f32 %v880, %v6277
      %v6282 = vmul.f32 %v883, %v6277
      %v6283 = vmul.f32 %v888, %v6277
      %v6284 = vmul.f32 %v891, %v6277
      %v6285 = vmul.f32 %v896, %v6277
      %v6286 = vmul.f32 %v899, %v6277
      %v6296 = vrot.slane %v6278, 4
      %v6297 = vrot.slane %v6279, 4
      %v6298 = vsel %vm5897, %v6296, %v6297
      %v6299 = vrot.slane %v6280, 4
      %v6300 = vsel %vm5897, %v6297, %v6299
      %v6301 = vrot.slane %v6281, 4
      %v6302 = vsel %vm5897, %v6299, %v6301
      %v6303 = vrot.slane %v6282, 4
      %v6304 = vsel %vm5897, %v6301, %v6303
      %v6305 = vrot.slane %v6283, 4
      %v6306 = vsel %vm5897, %v6303, %v6305
      %v6307 = vrot.slane %v6284, 4
      %v6308 = vsel %vm5897, %v6305, %v6307
      %v6309 = vrot.slane %v6285, 4
      %v6310 = vsel %vm5897, %v6307, %v6309
      %v6311 = vrot.slane %v6286, 4
      %v6312 = vsel %vm5897, %v6309, %v6311
      %v6321 = vadd.f32 %v6266, %v6298
      %v6322 = vadd.f32 %v6267, %v6300
      %v6323 = vadd.f32 %v6268, %v6302
      %v6324 = vadd.f32 %v6269, %v6304
      %v6325 = vadd.f32 %v6270, %v6306
      %v6326 = vadd.f32 %v6271, %v6308
      %v6327 = vadd.f32 %v6272, %v6310
      %v6328 = vadd.f32 %v6273, %v6312
      %v6329 = vlaneseq
      %v6330 = vshrl.u32 %v6329, 7
      %v6331 = vsub.s32 5, %v6330
      %v6332 = vrot.slane %v5696, %v6331
      %v6333 = vmul.f32 %v6332, 0.0
      %v6334 = vmul.f32 %v872, %v6332
      %v6335 = vmul.f32 %v875, %v6332
      %v6336 = vmul.f32 %v880, %v6332
      %v6337 = vmul.f32 %v883, %v6332
      %v6338 = vmul.f32 %v888, %v6332
      %v6339 = vmul.f32 %v891, %v6332
      %v6340 = vmul.f32 %v896, %v6332
      %v6341 = vmul.f32 %v899, %v6332
      %v6351 = vrot.slane %v6333, 5
      %v6352 = vrot.slane %v6334, 5
      %v6353 = vsel %vm5950, %v6351, %v6352
      %v6354 = vrot.slane %v6335, 5
      %v6355 = vsel %vm5950, %v6352, %v6354
      %v6356 = vrot.slane %v6336, 5
      %v6357 = vsel %vm5950, %v6354, %v6356
      %v6358 = vrot.slane %v6337, 5
      %v6359 = vsel %vm5950, %v6356, %v6358
      %v6360 = vrot.slane %v6338, 5
      %v6361 = vsel %vm5950, %v6358, %v6360
      %v6362 = vrot.slane %v6339, 5
      %v6363 = vsel %vm5950, %v6360, %v6362
      %v6364 = vrot.slane %v6340, 5
      %v6365 = vsel %vm5950, %v6362, %v6364
      %v6366 = vrot.slane %v6341, 5
      %v6367 = vsel %vm5950, %v6364, %v6366
      %v6376 = vadd.f32 %v6321, %v6353
      %v6377 = vadd.f32 %v6322, %v6355
      %v6378 = vadd.f32 %v6323, %v6357
      %v6379 = vadd.f32 %v6324, %v6359
      %v6380 = vadd.f32 %v6325, %v6361
      %v6381 = vadd.f32 %v6326, %v6363
      %v6382 = vadd.f32 %v6327, %v6365
      %v6383 = vadd.f32 %v6328, %v6367
      %v6384 = vlaneseq
      %v6385 = vshrl.u32 %v6384, 7
      %v6386 = vsub.s32 6, %v6385
      %v6387 = vrot.slane %v5696, %v6386
      %v6388 = vmul.f32 %v6387, 0.0
      %v6389 = vmul.f32 %v872, %v6387
      %v6390 = vmul.f32 %v875, %v6387
      %v6391 = vmul.f32 %v880, %v6387
      %v6392 = vmul.f32 %v883, %v6387
      %v6393 = vmul.f32 %v888, %v6387
      %v6394 = vmul.f32 %v891, %v6387
      %v6395 = vmul.f32 %v896, %v6387
      %v6396 = vmul.f32 %v899, %v6387
      %v6406 = vrot.slane %v6388, 6
      %v6407 = vrot.slane %v6389, 6
      %v6408 = vsel %vm6003, %v6406, %v6407
      %v6409 = vrot.slane %v6390, 6
      %v6410 = vsel %vm6003, %v6407, %v6409
      %v6411 = vrot.slane %v6391, 6
      %v6412 = vsel %vm6003, %v6409, %v6411
      %v6413 = vrot.slane %v6392, 6
      %v6414 = vsel %vm6003, %v6411, %v6413
      %v6415 = vrot.slane %v6393, 6
      %v6416 = vsel %vm6003, %v6413, %v6415
      %v6417 = vrot.slane %v6394, 6
      %v6418 = vsel %vm6003, %v6415, %v6417
      %v6419 = vrot.slane %v6395, 6
      %v6420 = vsel %vm6003, %v6417, %v6419
      %v6421 = vrot.slane %v6396, 6
      %v6422 = vsel %vm6003, %v6419, %v6421
      %v6431 = vadd.f32 %v6376, %v6408
      %v6432 = vadd.f32 %v6377, %v6410
      %v6433 = vadd.f32 %v6378, %v6412
      %v6434 = vadd.f32 %v6379, %v6414
      %v6435 = vadd.f32 %v6380, %v6416
      %v6436 = vadd.f32 %v6381, %v6418
      %v6437 = vadd.f32 %v6382, %v6420
      %v6438 = vadd.f32 %v6383, %v6422
      %v6439 = vlaneseq
      %v6440 = vshrl.u32 %v6439, 7
      %v6441 = vsub.s32 7, %v6440
      %v6442 = vrot.slane %v5696, %v6441
      %v6443 = vmul.f32 %v6442, 0.0
      %v6444 = vmul.f32 %v872, %v6442
      %v6445 = vmul.f32 %v875, %v6442
      %v6446 = vmul.f32 %v880, %v6442
      %v6447 = vmul.f32 %v883, %v6442
      %v6448 = vmul.f32 %v888, %v6442
      %v6449 = vmul.f32 %v891, %v6442
      %v6450 = vmul.f32 %v896, %v6442
      %v6451 = vmul.f32 %v899, %v6442
      %v6461 = vrot.slane %v6443, 7
      %v6462 = vrot.slane %v6444, 7
      %v6463 = vsel %vm6056, %v6461, %v6462
      %v6464 = vrot.slane %v6445, 7
      %v6465 = vsel %vm6056, %v6462, %v6464
      %v6466 = vrot.slane %v6446, 7
      %v6467 = vsel %vm6056, %v6464, %v6466
      %v6468 = vrot.slane %v6447, 7
      %v6469 = vsel %vm6056, %v6466, %v6468
      %v6470 = vrot.slane %v6448, 7
      %v6471 = vsel %vm6056, %v6468, %v6470
      %v6472 = vrot.slane %v6449, 7
      %v6473 = vsel %vm6056, %v6470, %v6472
      %v6474 = vrot.slane %v6450, 7
      %v6475 = vsel %vm6056, %v6472, %v6474
      %v6476 = vrot.slane %v6451, 7
      %v6477 = vsel %vm6056, %v6474, %v6476
      %v6486 = vadd.f32 %v6431, %v6463
      %v6487 = vadd.f32 %v6432, %v6465
      %v6488 = vadd.f32 %v6433, %v6467
      %v6489 = vadd.f32 %v6434, %v6469
      %v6490 = vadd.f32 %v6435, %v6471
      %v6491 = vadd.f32 %v6436, %v6473
      %v6492 = vadd.f32 %v6437, %v6475
      %v6493 = vadd.f32 %v6438, %v6477
      %v6494 = vlaneseq
      %v6495 = vshrl.u32 %v6494, 7
      %v6496 = vsub.s32 0, %v6495
      %v6497 = vrot.slane %v5697, %v6496
      %v6498 = vmul.f32 %v872, %v6497
      %v6499 = vmul.f32 %v875, %v6497
      %v6500 = vmul.f32 %v880, %v6497
      %v6501 = vmul.f32 %v883, %v6497
      %v6502 = vmul.f32 %v888, %v6497
      %v6503 = vmul.f32 %v891, %v6497
      %v6504 = vmul.f32 %v896, %v6497
      %v6505 = vmul.f32 %v899, %v6497
      %v6506 = vadd.f32 %v6486, %v6498
      %v6507 = vadd.f32 %v6487, %v6499
      %v6508 = vadd.f32 %v6488, %v6500
      %v6509 = vadd.f32 %v6489, %v6501
      %v6510 = vadd.f32 %v6490, %v6502
      %v6511 = vadd.f32 %v6491, %v6503
      %v6512 = vadd.f32 %v6492, %v6504
      %v6513 = vadd.f32 %v6493, %v6505
      %v6514 = vlaneseq
      %v6515 = vshrl.u32 %v6514, 7
      %v6516 = vsub.s32 1, %v6515
      %v6517 = vrot.slane %v5697, %v6516
      %v6518 = vmul.f32 %v872, %v6517
      %v6519 = vmul.f32 %v875, %v6517
      %v6520 = vmul.f32 %v880, %v6517
      %v6521 = vmul.f32 %v883, %v6517
      %v6522 = vmul.f32 %v888, %v6517
      %v6523 = vmul.f32 %v891, %v6517
      %v6524 = vmul.f32 %v896, %v6517
      %v6525 = vmul.f32 %v899, %v6517
      %v6526 = vmul.f32 %v6517, 0.0
      %v6536 = vrot.slane %v6518, 1
      %v6537 = vrot.slane %v6519, 1
      %v6538 = vsel %vm5738, %v6536, %v6537
      %v6539 = vrot.slane %v6520, 1
      %v6540 = vsel %vm5738, %v6537, %v6539
      %v6541 = vrot.slane %v6521, 1
      %v6542 = vsel %vm5738, %v6539, %v6541
      %v6543 = vrot.slane %v6522, 1
      %v6544 = vsel %vm5738, %v6541, %v6543
      %v6545 = vrot.slane %v6523, 1
      %v6546 = vsel %vm5738, %v6543, %v6545
      %v6547 = vrot.slane %v6524, 1
      %v6548 = vsel %vm5738, %v6545, %v6547
      %v6549 = vrot.slane %v6525, 1
      %v6550 = vsel %vm5738, %v6547, %v6549
      %v6551 = vrot.slane %v6526, 1
      %v6552 = vsel %vm5738, %v6549, %v6551
      %v6561 = vadd.f32 %v6506, %v6538
      %v6562 = vadd.f32 %v6507, %v6540
      %v6563 = vadd.f32 %v6508, %v6542
      %v6564 = vadd.f32 %v6509, %v6544
      %v6565 = vadd.f32 %v6510, %v6546
      %v6566 = vadd.f32 %v6511, %v6548
      %v6567 = vadd.f32 %v6512, %v6550
      %v6568 = vadd.f32 %v6513, %v6552
      %v6569 = vlaneseq
      %v6570 = vshrl.u32 %v6569, 7
      %v6571 = vsub.s32 2, %v6570
      %v6572 = vrot.slane %v5697, %v6571
      %v6573 = vmul.f32 %v872, %v6572
      %v6574 = vmul.f32 %v875, %v6572
      %v6575 = vmul.f32 %v880, %v6572
      %v6576 = vmul.f32 %v883, %v6572
      %v6577 = vmul.f32 %v888, %v6572
      %v6578 = vmul.f32 %v891, %v6572
      %v6579 = vmul.f32 %v896, %v6572
      %v6580 = vmul.f32 %v899, %v6572
      %v6581 = vmul.f32 %v6572, 0.0
      %v6591 = vrot.slane %v6573, 2
      %v6592 = vrot.slane %v6574, 2
      %v6593 = vsel %vm5791, %v6591, %v6592
      %v6594 = vrot.slane %v6575, 2
      %v6595 = vsel %vm5791, %v6592, %v6594
      %v6596 = vrot.slane %v6576, 2
      %v6597 = vsel %vm5791, %v6594, %v6596
      %v6598 = vrot.slane %v6577, 2
      %v6599 = vsel %vm5791, %v6596, %v6598
      %v6600 = vrot.slane %v6578, 2
      %v6601 = vsel %vm5791, %v6598, %v6600
      %v6602 = vrot.slane %v6579, 2
      %v6603 = vsel %vm5791, %v6600, %v6602
      %v6604 = vrot.slane %v6580, 2
      %v6605 = vsel %vm5791, %v6602, %v6604
      %v6606 = vrot.slane %v6581, 2
      %v6607 = vsel %vm5791, %v6604, %v6606
      %v6616 = vadd.f32 %v6561, %v6593
      %v6617 = vadd.f32 %v6562, %v6595
      %v6618 = vadd.f32 %v6563, %v6597
      %v6619 = vadd.f32 %v6564, %v6599
      %v6620 = vadd.f32 %v6565, %v6601
      %v6621 = vadd.f32 %v6566, %v6603
      %v6622 = vadd.f32 %v6567, %v6605
      %v6623 = vadd.f32 %v6568, %v6607
      %v6624 = vlaneseq
      %v6625 = vshrl.u32 %v6624, 7
      %v6626 = vsub.s32 3, %v6625
      %v6627 = vrot.slane %v5697, %v6626
      %v6628 = vmul.f32 %v872, %v6627
      %v6629 = vmul.f32 %v875, %v6627
      %v6630 = vmul.f32 %v880, %v6627
      %v6631 = vmul.f32 %v883, %v6627
      %v6632 = vmul.f32 %v888, %v6627
      %v6633 = vmul.f32 %v891, %v6627
      %v6634 = vmul.f32 %v896, %v6627
      %v6635 = vmul.f32 %v899, %v6627
      %v6636 = vmul.f32 %v6627, 0.0
      %v6646 = vrot.slane %v6628, 3
      %v6647 = vrot.slane %v6629, 3
      %v6648 = vsel %vm5844, %v6646, %v6647
      %v6649 = vrot.slane %v6630, 3
      %v6650 = vsel %vm5844, %v6647, %v6649
      %v6651 = vrot.slane %v6631, 3
      %v6652 = vsel %vm5844, %v6649, %v6651
      %v6653 = vrot.slane %v6632, 3
      %v6654 = vsel %vm5844, %v6651, %v6653
      %v6655 = vrot.slane %v6633, 3
      %v6656 = vsel %vm5844, %v6653, %v6655
      %v6657 = vrot.slane %v6634, 3
      %v6658 = vsel %vm5844, %v6655, %v6657
      %v6659 = vrot.slane %v6635, 3
      %v6660 = vsel %vm5844, %v6657, %v6659
      %v6661 = vrot.slane %v6636, 3
      %v6662 = vsel %vm5844, %v6659, %v6661
      %v6671 = vadd.f32 %v6616, %v6648
      %v6672 = vadd.f32 %v6617, %v6650
      %v6673 = vadd.f32 %v6618, %v6652
      %v6674 = vadd.f32 %v6619, %v6654
      %v6675 = vadd.f32 %v6620, %v6656
      %v6676 = vadd.f32 %v6621, %v6658
      %v6677 = vadd.f32 %v6622, %v6660
      %v6678 = vadd.f32 %v6623, %v6662
      %v6679 = vlaneseq
      %v6680 = vshrl.u32 %v6679, 7
      %v6681 = vsub.s32 4, %v6680
      %v6682 = vrot.slane %v5697, %v6681
      %v6683 = vmul.f32 %v872, %v6682
      %v6684 = vmul.f32 %v875, %v6682
      %v6685 = vmul.f32 %v880, %v6682
      %v6686 = vmul.f32 %v883, %v6682
      %v6687 = vmul.f32 %v888, %v6682
      %v6688 = vmul.f32 %v891, %v6682
      %v6689 = vmul.f32 %v896, %v6682
      %v6690 = vmul.f32 %v899, %v6682
      %v6691 = vmul.f32 %v6682, 0.0
      %v6701 = vrot.slane %v6683, 4
      %v6702 = vrot.slane %v6684, 4
      %v6703 = vsel %vm5897, %v6701, %v6702
      %v6704 = vrot.slane %v6685, 4
      %v6705 = vsel %vm5897, %v6702, %v6704
      %v6706 = vrot.slane %v6686, 4
      %v6707 = vsel %vm5897, %v6704, %v6706
      %v6708 = vrot.slane %v6687, 4
      %v6709 = vsel %vm5897, %v6706, %v6708
      %v6710 = vrot.slane %v6688, 4
      %v6711 = vsel %vm5897, %v6708, %v6710
      %v6712 = vrot.slane %v6689, 4
      %v6713 = vsel %vm5897, %v6710, %v6712
      %v6714 = vrot.slane %v6690, 4
      %v6715 = vsel %vm5897, %v6712, %v6714
      %v6716 = vrot.slane %v6691, 4
      %v6717 = vsel %vm5897, %v6714, %v6716
      %v6726 = vadd.f32 %v6671, %v6703
      %v6727 = vadd.f32 %v6672, %v6705
      %v6728 = vadd.f32 %v6673, %v6707
      %v6729 = vadd.f32 %v6674, %v6709
      %v6730 = vadd.f32 %v6675, %v6711
      %v6731 = vadd.f32 %v6676, %v6713
      %v6732 = vadd.f32 %v6677, %v6715
      %v6733 = vadd.f32 %v6678, %v6717
      %v6734 = vlaneseq
      %v6735 = vshrl.u32 %v6734, 7
      %v6736 = vsub.s32 5, %v6735
      %v6737 = vrot.slane %v5697, %v6736
      %v6738 = vmul.f32 %v872, %v6737
      %v6739 = vmul.f32 %v875, %v6737
      %v6740 = vmul.f32 %v880, %v6737
      %v6741 = vmul.f32 %v883, %v6737
      %v6742 = vmul.f32 %v888, %v6737
      %v6743 = vmul.f32 %v891, %v6737
      %v6744 = vmul.f32 %v896, %v6737
      %v6745 = vmul.f32 %v899, %v6737
      %v6746 = vmul.f32 %v6737, 0.0
      %v6756 = vrot.slane %v6738, 5
      %v6757 = vrot.slane %v6739, 5
      %v6758 = vsel %vm5950, %v6756, %v6757
      %v6759 = vrot.slane %v6740, 5
      %v6760 = vsel %vm5950, %v6757, %v6759
      %v6761 = vrot.slane %v6741, 5
      %v6762 = vsel %vm5950, %v6759, %v6761
      %v6763 = vrot.slane %v6742, 5
      %v6764 = vsel %vm5950, %v6761, %v6763
      %v6765 = vrot.slane %v6743, 5
      %v6766 = vsel %vm5950, %v6763, %v6765
      %v6767 = vrot.slane %v6744, 5
      %v6768 = vsel %vm5950, %v6765, %v6767
      %v6769 = vrot.slane %v6745, 5
      %v6770 = vsel %vm5950, %v6767, %v6769
      %v6771 = vrot.slane %v6746, 5
      %v6772 = vsel %vm5950, %v6769, %v6771
      %v6781 = vadd.f32 %v6726, %v6758
      %v6782 = vadd.f32 %v6727, %v6760
      %v6783 = vadd.f32 %v6728, %v6762
      %v6784 = vadd.f32 %v6729, %v6764
      %v6785 = vadd.f32 %v6730, %v6766
      %v6786 = vadd.f32 %v6731, %v6768
      %v6787 = vadd.f32 %v6732, %v6770
      %v6788 = vadd.f32 %v6733, %v6772
      %v6789 = vlaneseq
      %v6790 = vshrl.u32 %v6789, 7
      %v6791 = vsub.s32 6, %v6790
      %v6792 = vrot.slane %v5697, %v6791
      %v6793 = vmul.f32 %v872, %v6792
      %v6794 = vmul.f32 %v875, %v6792
      %v6795 = vmul.f32 %v880, %v6792
      %v6796 = vmul.f32 %v883, %v6792
      %v6797 = vmul.f32 %v888, %v6792
      %v6798 = vmul.f32 %v891, %v6792
      %v6799 = vmul.f32 %v896, %v6792
      %v6800 = vmul.f32 %v899, %v6792
      %v6801 = vmul.f32 %v6792, 0.0
      %v6811 = vrot.slane %v6793, 6
      %v6812 = vrot.slane %v6794, 6
      %v6813 = vsel %vm6003, %v6811, %v6812
      %v6814 = vrot.slane %v6795, 6
      %v6815 = vsel %vm6003, %v6812, %v6814
      %v6816 = vrot.slane %v6796, 6
      %v6817 = vsel %vm6003, %v6814, %v6816
      %v6818 = vrot.slane %v6797, 6
      %v6819 = vsel %vm6003, %v6816, %v6818
      %v6820 = vrot.slane %v6798, 6
      %v6821 = vsel %vm6003, %v6818, %v6820
      %v6822 = vrot.slane %v6799, 6
      %v6823 = vsel %vm6003, %v6820, %v6822
      %v6824 = vrot.slane %v6800, 6
      %v6825 = vsel %vm6003, %v6822, %v6824
      %v6826 = vrot.slane %v6801, 6
      %v6827 = vsel %vm6003, %v6824, %v6826
      %v6836 = vadd.f32 %v6781, %v6813
      %v6837 = vadd.f32 %v6782, %v6815
      %v6838 = vadd.f32 %v6783, %v6817
      %v6839 = vadd.f32 %v6784, %v6819
      %v6840 = vadd.f32 %v6785, %v6821
      %v6841 = vadd.f32 %v6786, %v6823
      %v6842 = vadd.f32 %v6787, %v6825
      %v6843 = vadd.f32 %v6788, %v6827
      %v6844 = vlaneseq
      %v6845 = vshrl.u32 %v6844, 7
      %v6846 = vsub.s32 7, %v6845
      %v6847 = vrot.slane %v5697, %v6846
      %v6848 = vmul.f32 %v872, %v6847
      %v6849 = vmul.f32 %v875, %v6847
      %v6850 = vmul.f32 %v880, %v6847
      %v6851 = vmul.f32 %v883, %v6847
      %v6852 = vmul.f32 %v888, %v6847
      %v6853 = vmul.f32 %v891, %v6847
      %v6854 = vmul.f32 %v896, %v6847
      %v6855 = vmul.f32 %v899, %v6847
      %v6856 = vmul.f32 %v6847, 0.0
      %v6866 = vrot.slane %v6848, 7
      %v6867 = vrot.slane %v6849, 7
      %v6868 = vsel %vm6056, %v6866, %v6867
      %v6869 = vrot.slane %v6850, 7
      %v6870 = vsel %vm6056, %v6867, %v6869
      %v6871 = vrot.slane %v6851, 7
      %v6872 = vsel %vm6056, %v6869, %v6871
      %v6873 = vrot.slane %v6852, 7
      %v6874 = vsel %vm6056, %v6871, %v6873
      %v6875 = vrot.slane %v6853, 7
      %v6876 = vsel %vm6056, %v6873, %v6875
      %v6877 = vrot.slane %v6854, 7
      %v6878 = vsel %vm6056, %v6875, %v6877
      %v6879 = vrot.slane %v6855, 7
      %v6880 = vsel %vm6056, %v6877, %v6879
      %v6881 = vrot.slane %v6856, 7
      %v6882 = vsel %vm6056, %v6879, %v6881
      %v6891 = vadd.f32 %v6836, %v6868
      %v6892 = vadd.f32 %v6837, %v6870
      %v6893 = vadd.f32 %v6838, %v6872
      %v6894 = vadd.f32 %v6839, %v6874
      %v6895 = vadd.f32 %v6840, %v6876
      %v6896 = vadd.f32 %v6841, %v6878
      %v6897 = vadd.f32 %v6842, %v6880
      %v6898 = vadd.f32 %v6843, %v6882
      %v6899 = vlaneseq
      %v6900 = vshrl.u32 %v6899, 7
      %v6901 = vsub.s32 0, %v6900
      %v6902 = vrot.slane %v5698, %v6901
      %v6903 = vmul.f32 %v875, %v6902
      %v6904 = vmul.f32 %v880, %v6902
      %v6905 = vmul.f32 %v883, %v6902
      %v6906 = vmul.f32 %v888, %v6902
      %v6907 = vmul.f32 %v891, %v6902
      %v6908 = vmul.f32 %v896, %v6902
      %v6909 = vmul.f32 %v899, %v6902
      %v6910 = vmul.f32 %v6902, 0.0
      %v6911 = vadd.f32 %v6891, %v6903
      %v6912 = vadd.f32 %v6892, %v6904
      %v6913 = vadd.f32 %v6893, %v6905
      %v6914 = vadd.f32 %v6894, %v6906
      %v6915 = vadd.f32 %v6895, %v6907
      %v6916 = vadd.f32 %v6896, %v6908
      %v6917 = vadd.f32 %v6897, %v6909
      %v6918 = vadd.f32 %v6898, %v6910
      %v6919 = vlaneseq
      %v6920 = vshrl.u32 %v6919, 7
      %v6921 = vsub.s32 1, %v6920
      %v6922 = vrot.slane %v5698, %v6921
      %v6923 = vmul.f32 %v875, %v6922
      %v6924 = vmul.f32 %v880, %v6922
      %v6925 = vmul.f32 %v883, %v6922
      %v6926 = vmul.f32 %v888, %v6922
      %v6927 = vmul.f32 %v891, %v6922
      %v6928 = vmul.f32 %v896, %v6922
      %v6929 = vmul.f32 %v899, %v6922
      %v6930 = vmul.f32 %v6922, 0.0
      %v6939 = vrot.slane %v6923, 1
      %v6940 = vrot.slane %v6924, 1
      %v6941 = vsel %vm5738, %v6939, %v6940
      %v6942 = vrot.slane %v6925, 1
      %v6943 = vsel %vm5738, %v6940, %v6942
      %v6944 = vrot.slane %v6926, 1
      %v6945 = vsel %vm5738, %v6942, %v6944
      %v6946 = vrot.slane %v6927, 1
      %v6947 = vsel %vm5738, %v6944, %v6946
      %v6948 = vrot.slane %v6928, 1
      %v6949 = vsel %vm5738, %v6946, %v6948
      %v6950 = vrot.slane %v6929, 1
      %v6951 = vsel %vm5738, %v6948, %v6950
      %v6952 = vrot.slane %v6930, 1
      %v6953 = vsel %vm5738, %v6950, %v6952
      %v6954 = vsel %vm5738, %v6952, %v6952
      %v6963 = vadd.f32 %v6911, %v6941
      %v6964 = vadd.f32 %v6912, %v6943
      %v6965 = vadd.f32 %v6913, %v6945
      %v6966 = vadd.f32 %v6914, %v6947
      %v6967 = vadd.f32 %v6915, %v6949
      %v6968 = vadd.f32 %v6916, %v6951
      %v6969 = vadd.f32 %v6917, %v6953
      %v6970 = vadd.f32 %v6918, %v6954
      %v6971 = vlaneseq
      %v6972 = vshrl.u32 %v6971, 7
      %v6973 = vsub.s32 2, %v6972
      %v6974 = vrot.slane %v5698, %v6973
      %v6975 = vmul.f32 %v875, %v6974
      %v6976 = vmul.f32 %v880, %v6974
      %v6977 = vmul.f32 %v883, %v6974
      %v6978 = vmul.f32 %v888, %v6974
      %v6979 = vmul.f32 %v891, %v6974
      %v6980 = vmul.f32 %v896, %v6974
      %v6981 = vmul.f32 %v899, %v6974
      %v6982 = vmul.f32 %v6974, 0.0
      %v6991 = vrot.slane %v6975, 2
      %v6992 = vrot.slane %v6976, 2
      %v6993 = vsel %vm5791, %v6991, %v6992
      %v6994 = vrot.slane %v6977, 2
      %v6995 = vsel %vm5791, %v6992, %v6994
      %v6996 = vrot.slane %v6978, 2
      %v6997 = vsel %vm5791, %v6994, %v6996
      %v6998 = vrot.slane %v6979, 2
      %v6999 = vsel %vm5791, %v6996, %v6998
      %v7000 = vrot.slane %v6980, 2
      %v7001 = vsel %vm5791, %v6998, %v7000
      %v7002 = vrot.slane %v6981, 2
      %v7003 = vsel %vm5791, %v7000, %v7002
      %v7004 = vrot.slane %v6982, 2
      %v7005 = vsel %vm5791, %v7002, %v7004
      %v7006 = vsel %vm5791, %v7004, %v7004
      %v7015 = vadd.f32 %v6963, %v6993
      %v7016 = vadd.f32 %v6964, %v6995
      %v7017 = vadd.f32 %v6965, %v6997
      %v7018 = vadd.f32 %v6966, %v6999
      %v7019 = vadd.f32 %v6967, %v7001
      %v7020 = vadd.f32 %v6968, %v7003
      %v7021 = vadd.f32 %v6969, %v7005
      %v7022 = vadd.f32 %v6970, %v7006
      %v7023 = vlaneseq
      %v7024 = vshrl.u32 %v7023, 7
      %v7025 = vsub.s32 3, %v7024
      %v7026 = vrot.slane %v5698, %v7025
      %v7027 = vmul.f32 %v875, %v7026
      %v7028 = vmul.f32 %v880, %v7026
      %v7029 = vmul.f32 %v883, %v7026
      %v7030 = vmul.f32 %v888, %v7026
      %v7031 = vmul.f32 %v891, %v7026
      %v7032 = vmul.f32 %v896, %v7026
      %v7033 = vmul.f32 %v899, %v7026
      %v7034 = vmul.f32 %v7026, 0.0
      %v7043 = vrot.slane %v7027, 3
      %v7044 = vrot.slane %v7028, 3
      %v7045 = vsel %vm5844, %v7043, %v7044
      %v7046 = vrot.slane %v7029, 3
      %v7047 = vsel %vm5844, %v7044, %v7046
      %v7048 = vrot.slane %v7030, 3
      %v7049 = vsel %vm5844, %v7046, %v7048
      %v7050 = vrot.slane %v7031, 3
      %v7051 = vsel %vm5844, %v7048, %v7050
      %v7052 = vrot.slane %v7032, 3
      %v7053 = vsel %vm5844, %v7050, %v7052
      %v7054 = vrot.slane %v7033, 3
      %v7055 = vsel %vm5844, %v7052, %v7054
      %v7056 = vrot.slane %v7034, 3
      %v7057 = vsel %vm5844, %v7054, %v7056
      %v7058 = vsel %vm5844, %v7056, %v7056
      %v7067 = vadd.f32 %v7015, %v7045
      %v7068 = vadd.f32 %v7016, %v7047
      %v7069 = vadd.f32 %v7017, %v7049
      %v7070 = vadd.f32 %v7018, %v7051
      %v7071 = vadd.f32 %v7019, %v7053
      %v7072 = vadd.f32 %v7020, %v7055
      %v7073 = vadd.f32 %v7021, %v7057
      %v7074 = vadd.f32 %v7022, %v7058
      %v7075 = vlaneseq
      %v7076 = vshrl.u32 %v7075, 7
      %v7077 = vsub.s32 4, %v7076
      %v7078 = vrot.slane %v5698, %v7077
      %v7079 = vmul.f32 %v875, %v7078
      %v7080 = vmul.f32 %v880, %v7078
      %v7081 = vmul.f32 %v883, %v7078
      %v7082 = vmul.f32 %v888, %v7078
      %v7083 = vmul.f32 %v891, %v7078
      %v7084 = vmul.f32 %v896, %v7078
      %v7085 = vmul.f32 %v899, %v7078
      %v7086 = vmul.f32 %v7078, 0.0
      %v7095 = vrot.slane %v7079, 4
      %v7096 = vrot.slane %v7080, 4
      %v7097 = vsel %vm5897, %v7095, %v7096
      %v7098 = vrot.slane %v7081, 4
      %v7099 = vsel %vm5897, %v7096, %v7098
      %v7100 = vrot.slane %v7082, 4
      %v7101 = vsel %vm5897, %v7098, %v7100
      %v7102 = vrot.slane %v7083, 4
      %v7103 = vsel %vm5897, %v7100, %v7102
      %v7104 = vrot.slane %v7084, 4
      %v7105 = vsel %vm5897, %v7102, %v7104
      %v7106 = vrot.slane %v7085, 4
      %v7107 = vsel %vm5897, %v7104, %v7106
      %v7108 = vrot.slane %v7086, 4
      %v7109 = vsel %vm5897, %v7106, %v7108
      %v7110 = vsel %vm5897, %v7108, %v7108
      %v7119 = vadd.f32 %v7067, %v7097
      %v7120 = vadd.f32 %v7068, %v7099
      %v7121 = vadd.f32 %v7069, %v7101
      %v7122 = vadd.f32 %v7070, %v7103
      %v7123 = vadd.f32 %v7071, %v7105
      %v7124 = vadd.f32 %v7072, %v7107
      %v7125 = vadd.f32 %v7073, %v7109
      %v7126 = vadd.f32 %v7074, %v7110
      %v7127 = vlaneseq
      %v7128 = vshrl.u32 %v7127, 7
      %v7129 = vsub.s32 5, %v7128
      %v7130 = vrot.slane %v5698, %v7129
      %v7131 = vmul.f32 %v875, %v7130
      %v7132 = vmul.f32 %v880, %v7130
      %v7133 = vmul.f32 %v883, %v7130
      %v7134 = vmul.f32 %v888, %v7130
      %v7135 = vmul.f32 %v891, %v7130
      %v7136 = vmul.f32 %v896, %v7130
      %v7137 = vmul.f32 %v899, %v7130
      %v7138 = vmul.f32 %v7130, 0.0
      %v7147 = vrot.slane %v7131, 5
      %v7148 = vrot.slane %v7132, 5
      %v7149 = vsel %vm5950, %v7147, %v7148
      %v7150 = vrot.slane %v7133, 5
      %v7151 = vsel %vm5950, %v7148, %v7150
      %v7152 = vrot.slane %v7134, 5
      %v7153 = vsel %vm5950, %v7150, %v7152
      %v7154 = vrot.slane %v7135, 5
      %v7155 = vsel %vm5950, %v7152, %v7154
      %v7156 = vrot.slane %v7136, 5
      %v7157 = vsel %vm5950, %v7154, %v7156
      %v7158 = vrot.slane %v7137, 5
      %v7159 = vsel %vm5950, %v7156, %v7158
      %v7160 = vrot.slane %v7138, 5
      %v7161 = vsel %vm5950, %v7158, %v7160
      %v7162 = vsel %vm5950, %v7160, %v7160
      %v7171 = vadd.f32 %v7119, %v7149
      %v7172 = vadd.f32 %v7120, %v7151
      %v7173 = vadd.f32 %v7121, %v7153
      %v7174 = vadd.f32 %v7122, %v7155
      %v7175 = vadd.f32 %v7123, %v7157
      %v7176 = vadd.f32 %v7124, %v7159
      %v7177 = vadd.f32 %v7125, %v7161
      %v7178 = vadd.f32 %v7126, %v7162
      %v7179 = vlaneseq
      %v7180 = vshrl.u32 %v7179, 7
      %v7181 = vsub.s32 6, %v7180
      %v7182 = vrot.slane %v5698, %v7181
      %v7183 = vmul.f32 %v875, %v7182
      %v7184 = vmul.f32 %v880, %v7182
      %v7185 = vmul.f32 %v883, %v7182
      %v7186 = vmul.f32 %v888, %v7182
      %v7187 = vmul.f32 %v891, %v7182
      %v7188 = vmul.f32 %v896, %v7182
      %v7189 = vmul.f32 %v899, %v7182
      %v7190 = vmul.f32 %v7182, 0.0
      %v7199 = vrot.slane %v7183, 6
      %v7200 = vrot.slane %v7184, 6
      %v7201 = vsel %vm6003, %v7199, %v7200
      %v7202 = vrot.slane %v7185, 6
      %v7203 = vsel %vm6003, %v7200, %v7202
      %v7204 = vrot.slane %v7186, 6
      %v7205 = vsel %vm6003, %v7202, %v7204
      %v7206 = vrot.slane %v7187, 6
      %v7207 = vsel %vm6003, %v7204, %v7206
      %v7208 = vrot.slane %v7188, 6
      %v7209 = vsel %vm6003, %v7206, %v7208
      %v7210 = vrot.slane %v7189, 6
      %v7211 = vsel %vm6003, %v7208, %v7210
      %v7212 = vrot.slane %v7190, 6
      %v7213 = vsel %vm6003, %v7210, %v7212
      %v7214 = vsel %vm6003, %v7212, %v7212
      %v7223 = vadd.f32 %v7171, %v7201
      %v7224 = vadd.f32 %v7172, %v7203
      %v7225 = vadd.f32 %v7173, %v7205
      %v7226 = vadd.f32 %v7174, %v7207
      %v7227 = vadd.f32 %v7175, %v7209
      %v7228 = vadd.f32 %v7176, %v7211
      %v7229 = vadd.f32 %v7177, %v7213
      %v7230 = vadd.f32 %v7178, %v7214
      %v7231 = vlaneseq
      %v7232 = vshrl.u32 %v7231, 7
      %v7233 = vsub.s32 7, %v7232
      %v7234 = vrot.slane %v5698, %v7233
      %v7235 = vmul.f32 %v875, %v7234
      %v7236 = vmul.f32 %v880, %v7234
      %v7237 = vmul.f32 %v883, %v7234
      %v7238 = vmul.f32 %v888, %v7234
      %v7239 = vmul.f32 %v891, %v7234
      %v7240 = vmul.f32 %v896, %v7234
      %v7241 = vmul.f32 %v899, %v7234
      %v7242 = vmul.f32 %v7234, 0.0
      %v7251 = vrot.slane %v7235, 7
      %v7252 = vrot.slane %v7236, 7
      %v7253 = vsel %vm6056, %v7251, %v7252
      %v7254 = vrot.slane %v7237, 7
      %v7255 = vsel %vm6056, %v7252, %v7254
      %v7256 = vrot.slane %v7238, 7
      %v7257 = vsel %vm6056, %v7254, %v7256
      %v7258 = vrot.slane %v7239, 7
      %v7259 = vsel %vm6056, %v7256, %v7258
      %v7260 = vrot.slane %v7240, 7
      %v7261 = vsel %vm6056, %v7258, %v7260
      %v7262 = vrot.slane %v7241, 7
      %v7263 = vsel %vm6056, %v7260, %v7262
      %v7264 = vrot.slane %v7242, 7
      %v7265 = vsel %vm6056, %v7262, %v7264
      %v7266 = vsel %vm6056, %v7264, %v7264
      %v7275 = vadd.f32 %v7223, %v7253
      %v7276 = vadd.f32 %v7224, %v7255
      %v7277 = vadd.f32 %v7225, %v7257
      %v7278 = vadd.f32 %v7226, %v7259
      %v7279 = vadd.f32 %v7227, %v7261
      %v7280 = vadd.f32 %v7228, %v7263
      %v7281 = vadd.f32 %v7229, %v7265
      %v7282 = vadd.f32 %v7230, %v7266
      %v7283 = vlaneseq
      %v7284 = vshrl.u32 %v7283, 7
      %v7285 = vsub.s32 0, %v7284
      %v7286 = vrot.slane %v5699, %v7285
      %v7287 = vmul.f32 %v880, %v7286
      %v7288 = vmul.f32 %v883, %v7286
      %v7289 = vmul.f32 %v888, %v7286
      %v7290 = vmul.f32 %v891, %v7286
      %v7291 = vmul.f32 %v896, %v7286
      %v7292 = vmul.f32 %v899, %v7286
      %v7293 = vmul.f32 %v7286, 0.0
      %v7294 = vadd.f32 %v7275, %v7287
      %v7295 = vadd.f32 %v7276, %v7288
      %v7296 = vadd.f32 %v7277, %v7289
      %v7297 = vadd.f32 %v7278, %v7290
      %v7298 = vadd.f32 %v7279, %v7291
      %v7299 = vadd.f32 %v7280, %v7292
      %v7300 = vadd.f32 %v7281, %v7293
      %v7301 = vadd.f32 %v7282, %v7293
      %v7302 = vadd.f32 %v5687, %v7294
      %v7303 = vadd.f32 %v5688, %v7295
      %v7304 = vadd.f32 %v5689, %v7296
      %v7305 = vadd.f32 %v5690, %v7297
      %v7306 = vadd.f32 %v5691, %v7298
      %v7307 = vadd.f32 %v5692, %v7299
      %v7308 = vadd.f32 %v5693, %v7300
      %v7309 = vadd.f32 %v5694, %v7301
      %v7310 = vld [vmem:[%s6] sm:$0xf]
      %v7311 = vld [vmem:[%s6 + $0x4] sm:$0xf]
      %v7312 = vld [vmem:[%s6 + $0x8] sm:$0xf]
      %v7313 = vld [vmem:[%s6 + $0xc] sm:$0xf]
      %v7314 = vpack.c.bf16 %v7303, %v7302
      %v7315 = vpack.c.bf16 %v7305, %v7304
      %v7316 = vpack.c.bf16 %v7307, %v7306
      %v7317 = vpack.c.bf16 %v7309, %v7308
      %v7318 = vld [vmem:[%s7] sm:$0x1]
      %v7320 = vlaneseq
      %v7321 = vshrl.u32 %v7320, 7
      %v7322 = vsub.s32 0, %v7321
      %v7323 = vrot.slane %v7318, %v7322
      %v7329 = vunpack.c.l.b16 %v7310
      %v7330 = vunpack.c.l.b16 %v7311
      %v7331 = vunpack.c.l.b16 %v7312
      %v7332 = vunpack.c.l.b16 %v7313
      %v7333 = vpack.c.b16 %v7330, %v7329
      %v7334 = vpack.c.b16 %v7332, %v7331
      %v7338 = vsel %vm509, %v7314, 0
      %v7341 = vsel %vm509, %v7315, 0
      %v7344 = vsel %vm509, %v7316, 0
      %v7347 = vsel %vm509, %v7317, 0
      %7349 = vmatprep.subr.bf16.mxu0 0
      %7350 = vmatpush1.bf16.msra.mxu0 0
      %7351 = vmatprep.subr.bf16.mxu0 0
      %7352 = vmatpush1.bf16.msra.mxu0 0
      %7353 = vmatprep.subr.bf16.mxu0 0
      %7354 = vmatpush1.bf16.msra.mxu0 0
      %7355 = vmatprep.subr.bf16.mxu0 0
      %7356 = vmatpush1.bf16.msra.mxu0 0
      %7357 = vmatprep.subr.bf16.mxu0 0
      %7358 = vmatpush1.bf16.msra.mxu0 0
      %7359 = vmatprep.subr.bf16.mxu0 0
      %7360 = vmatpush1.bf16.msra.mxu0 0
      %7361 = vmatprep.subr.bf16.mxu0 0
      %7362 = vmatpush1.bf16.msra.mxu0 %v7334
      %7363 = vmatprep.subr.bf16.mxu0 0
      %7364 = vmatpush1.bf16.msra.mxu0 %v7333
      %7365 = vmatprep.subr.bf16.mxu0 0
      %7366 = vmatpush2.bf16.msra.mxu0 0
      %7367 = vmatprep.subr.bf16.mxu0 0
      %7368 = vmatpush2.bf16.msra.mxu0 0
      %7369 = vmatprep.subr.bf16.mxu0 0
      %7370 = vmatpush2.bf16.msra.mxu0 0
      %7371 = vmatprep.subr.bf16.mxu0 0
      %7372 = vmatpush2.bf16.msra.mxu0 0
      %7373 = vmatprep.subr.bf16.mxu0 0
      %7374 = vmatpush2.bf16.msra.mxu0 0
      %7375 = vmatprep.subr.bf16.mxu0 0
      %7376 = vmatpush2.bf16.msra.mxu0 0
      %7377 = vmatprep.subr.bf16.mxu0 0
      %7378 = vmatpush2.bf16.msra.mxu0 0
      %7379 = vmatprep.subr.bf16.mxu0 0
      %7380 = vmatpush2.bf16.msra.mxu0 0
      %7381 = vmatprep.mubr.bf16.mxu0 0
      %7382 = vmatmul.mubr.bf16.gmra.mxu0 %v7338
      %v7383 = vpop.f32.mrf.mxu0
      %v7384 = vadd.f32 %v7323, %v7383
      %v7385 = vpop.f32.mrf.mxu0
      %v7386 = vpop.f32.mrf.mxu0
      %v7387 = vadd.f32 %v7323, %v7386
      %v7388 = vpop.f32.mrf.mxu0
      %7389 = vmatprep.mubr.bf16.mxu0 0
      %7390 = vmatmul.mubr.bf16.gmra.mxu0 %v7341
      %v7391 = vpop.f32.mrf.mxu0
      %v7392 = vadd.f32 %v7323, %v7391
      %v7393 = vpop.f32.mrf.mxu0
      %v7394 = vpop.f32.mrf.mxu0
      %v7395 = vadd.f32 %v7323, %v7394
      %v7396 = vpop.f32.mrf.mxu0
      %7397 = vmatprep.mubr.bf16.mxu0 0
      %7398 = vmatmul.mubr.bf16.gmra.mxu0 %v7344
      %v7399 = vpop.f32.mrf.mxu0
      %v7400 = vadd.f32 %v7323, %v7399
      %v7401 = vpop.f32.mrf.mxu0
      %v7402 = vpop.f32.mrf.mxu0
      %v7403 = vadd.f32 %v7323, %v7402
      %v7404 = vpop.f32.mrf.mxu0
      %7405 = vmatprep.mubr.bf16.mxu0 0
      %7406 = vmatmul.mubr.bf16.gmra.mxu0 %v7347
      %v7407 = vpop.f32.mrf.mxu0
      %v7408 = vadd.f32 %v7323, %v7407
      %v7409 = vpop.f32.mrf.mxu0
      %v7410 = vpop.f32.mrf.mxu0
      %v7411 = vadd.f32 %v7323, %v7410
      %v7412 = vpop.f32.mrf.mxu0
      %7413 = vdwg.mxu0
      %v7414 = vadd.f32 %v499, %v7384
      %v7415 = vadd.f32 %v500, %v7387
      %v7416 = vadd.f32 %v501, %v7392
      %v7417 = vadd.f32 %v502, %v7395
      %v7418 = vadd.f32 %v503, %v7400
      %v7419 = vadd.f32 %v504, %v7403
      %v7420 = vadd.f32 %v505, %v7408
      %v7421 = vadd.f32 %v506, %v7411
      %v7422 = vld [vmem:[%s9] sm:$0x1]
      %v7423 = vld [vmem:[%s10] sm:$0x1]
      %v7424 = vsel %vm509, %v7414, 0.0
      %7425 = vadd.xlane.f32.xlu0 %v7424
      %v7426 = vpop.xlane.xlu0 %7425
      %v7427 = vsel %vm509, %v7415, 0.0
      %7428 = vadd.xlane.f32.xlu0 %v7427
      %v7429 = vpop.xlane.xlu0 %7428
      %v7430 = vsel %vm509, %v7416, 0.0
      %7431 = vadd.xlane.f32.xlu0 %v7430
      %v7432 = vpop.xlane.xlu0 %7431
      %v7433 = vsel %vm509, %v7417, 0.0
      %7434 = vadd.xlane.f32.xlu0 %v7433
      %v7435 = vpop.xlane.xlu0 %7434
      %v7436 = vsel %vm509, %v7418, 0.0
      %7437 = vadd.xlane.f32.xlu0 %v7436
      %v7438 = vpop.xlane.xlu0 %7437
      %v7439 = vsel %vm509, %v7419, 0.0
      %7440 = vadd.xlane.f32.xlu0 %v7439
      %v7441 = vpop.xlane.xlu0 %7440
      %v7442 = vsel %vm509, %v7420, 0.0
      %7443 = vadd.xlane.f32.xlu0 %v7442
      %v7444 = vpop.xlane.xlu0 %7443
      %v7445 = vsel %vm509, %v7421, 0.0
      %7446 = vadd.xlane.f32.xlu0 %v7445
      %v7447 = vpop.xlane.xlu0 %7446
      %v7448 = vmul.f32 %v7426, %v534
      %v7449 = vmul.f32 %v7429, %v534
      %v7450 = vmul.f32 %v7432, %v534
      %v7451 = vmul.f32 %v7435, %v534
      %v7452 = vmul.f32 %v7438, %v534
      %v7453 = vmul.f32 %v7441, %v534
      %v7454 = vmul.f32 %v7444, %v534
      %v7455 = vmul.f32 %v7447, %v534
      %v7456 = vsub.f32 %v7414, %v7448
      %v7457 = vsub.f32 %v7415, %v7449
      %v7458 = vsub.f32 %v7416, %v7450
      %v7459 = vsub.f32 %v7417, %v7451
      %v7460 = vsub.f32 %v7418, %v7452
      %v7461 = vsub.f32 %v7419, %v7453
      %v7462 = vsub.f32 %v7420, %v7454
      %v7463 = vsub.f32 %v7421, %v7455
      %v7464 = vmul.f32 %v7456, %v7456
      %v7465 = vmul.f32 %v7457, %v7457
      %v7466 = vmul.f32 %v7458, %v7458
      %v7467 = vmul.f32 %v7459, %v7459
      %v7468 = vmul.f32 %v7460, %v7460
      %v7469 = vmul.f32 %v7461, %v7461
      %v7470 = vmul.f32 %v7462, %v7462
      %v7471 = vmul.f32 %v7463, %v7463
      %v7472 = vsel %vm509, %v7464, 0.0
      %7473 = vadd.xlane.f32.xlu0 %v7472
      %v7474 = vpop.xlane.xlu0 %7473
      %v7475 = vsel %vm509, %v7465, 0.0
      %7476 = vadd.xlane.f32.xlu0 %v7475
      %v7477 = vpop.xlane.xlu0 %7476
      %v7478 = vsel %vm509, %v7466, 0.0
      %7479 = vadd.xlane.f32.xlu0 %v7478
      %v7480 = vpop.xlane.xlu0 %7479
      %v7481 = vsel %vm509, %v7467, 0.0
      %7482 = vadd.xlane.f32.xlu0 %v7481
      %v7483 = vpop.xlane.xlu0 %7482
      %v7484 = vsel %vm509, %v7468, 0.0
      %7485 = vadd.xlane.f32.xlu0 %v7484
      %v7486 = vpop.xlane.xlu0 %7485
      %v7487 = vsel %vm509, %v7469, 0.0
      %7488 = vadd.xlane.f32.xlu0 %v7487
      %v7489 = vpop.xlane.xlu0 %7488
      %v7490 = vsel %vm509, %v7470, 0.0
      %7491 = vadd.xlane.f32.xlu0 %v7490
      %v7492 = vpop.xlane.xlu0 %7491
      %v7493 = vsel %vm509, %v7471, 0.0
      %7494 = vadd.xlane.f32.xlu0 %v7493
      %v7495 = vpop.xlane.xlu0 %7494
      %v7496 = vmul.f32 %v7474, %v534
      %v7497 = vmul.f32 %v7477, %v534
      %v7498 = vmul.f32 %v7480, %v534
      %v7499 = vmul.f32 %v7483, %v534
      %v7500 = vmul.f32 %v7486, %v534
      %v7501 = vmul.f32 %v7489, %v534
      %v7502 = vmul.f32 %v7492, %v534
      %v7503 = vmul.f32 %v7495, %v534
      %v7504 = vadd.f32 %v7496, 1e-05
      %v7505 = vadd.f32 %v7497, 1e-05
      %v7506 = vadd.f32 %v7498, 1e-05
      %v7507 = vadd.f32 %v7499, 1e-05
      %v7508 = vadd.f32 %v7500, 1e-05
      %v7509 = vadd.f32 %v7501, 1e-05
      %v7510 = vadd.f32 %v7502, 1e-05
      %v7511 = vadd.f32 %v7503, 1e-05
      %v7512 = vrsqrt.pop %v7504
      %v7513 = vrsqrt.pop %v7505
      %v7514 = vrsqrt.pop %v7506
      %v7515 = vrsqrt.pop %v7507
      %v7516 = vrsqrt.pop %v7508
      %v7517 = vrsqrt.pop %v7509
      %v7518 = vrsqrt.pop %v7510
      %v7519 = vrsqrt.pop %v7511
      %v7520 = vmul.f32 %v7456, %v7512
      %v7521 = vmul.f32 %v7457, %v7513
      %v7522 = vmul.f32 %v7458, %v7514
      %v7523 = vmul.f32 %v7459, %v7515
      %v7524 = vmul.f32 %v7460, %v7516
      %v7525 = vmul.f32 %v7461, %v7517
      %v7526 = vmul.f32 %v7462, %v7518
      %v7527 = vmul.f32 %v7463, %v7519
      %v7529 = vlaneseq
      %v7530 = vshrl.u32 %v7529, 7
      %v7531 = vsub.s32 0, %v7530
      %v7532 = vrot.slane %v7422, %v7531
      %v7534 = vmul.f32 %v7520, %v7532
      %v7535 = vmul.f32 %v7521, %v7532
      %v7536 = vmul.f32 %v7522, %v7532
      %v7537 = vmul.f32 %v7523, %v7532
      %v7538 = vmul.f32 %v7524, %v7532
      %v7539 = vmul.f32 %v7525, %v7532
      %v7540 = vmul.f32 %v7526, %v7532
      %v7541 = vmul.f32 %v7527, %v7532
      %v7543 = vlaneseq
      %v7544 = vshrl.u32 %v7543, 7
      %v7545 = vsub.s32 0, %v7544
      %v7546 = vrot.slane %v7423, %v7545
      %v7548 = vadd.f32 %v7534, %v7546
      %v7549 = vadd.f32 %v7535, %v7546
      %v7550 = vadd.f32 %v7536, %v7546
      %v7551 = vadd.f32 %v7537, %v7546
      %v7552 = vadd.f32 %v7538, %v7546
      %v7553 = vadd.f32 %v7539, %v7546
      %v7554 = vadd.f32 %v7540, %v7546
      %v7555 = vadd.f32 %v7541, %v7546
      %v7556 = vld [vmem:[%s11] sm:$0xf]
      %v7557 = vld [vmem:[%s11 + $0x4] sm:$0xf]
      %v7558 = vld [vmem:[%s11 + $0x8] sm:$0xf]
      %v7559 = vld [vmem:[%s11 + $0xc] sm:$0xf]
      %v7560 = vpack.c.bf16 %v7549, %v7548
      %v7561 = vpack.c.bf16 %v7551, %v7550
      %v7562 = vpack.c.bf16 %v7553, %v7552
      %v7563 = vpack.c.bf16 %v7555, %v7554
      %v7564 = vld [vmem:[%s12] sm:$0x1]
      %v7566 = vlaneseq
      %v7567 = vshrl.u32 %v7566, 7
      %v7568 = vsub.s32 0, %v7567
      %v7569 = vrot.slane %v7564, %v7568
      %v7575 = vunpack.c.l.b16 %v7556
      %v7576 = vunpack.c.l.b16 %v7557
      %v7577 = vunpack.c.l.b16 %v7558
      %v7578 = vunpack.c.l.b16 %v7559
      %v7579 = vpack.c.b16 %v7576, %v7575
      %v7580 = vpack.c.b16 %v7578, %v7577
      %v7584 = vsel %vm509, %v7560, 0
      %v7587 = vsel %vm509, %v7561, 0
      %v7590 = vsel %vm509, %v7562, 0
      %v7593 = vsel %vm509, %v7563, 0
      %7595 = vmatprep.subr.bf16.mxu0 0
      %7596 = vmatpush1.bf16.msra.mxu0 0
      %7597 = vmatprep.subr.bf16.mxu0 0
      %7598 = vmatpush1.bf16.msra.mxu0 0
      %7599 = vmatprep.subr.bf16.mxu0 0
      %7600 = vmatpush1.bf16.msra.mxu0 0
      %7601 = vmatprep.subr.bf16.mxu0 0
      %7602 = vmatpush1.bf16.msra.mxu0 0
      %7603 = vmatprep.subr.bf16.mxu0 0
      %7604 = vmatpush1.bf16.msra.mxu0 0
      %7605 = vmatprep.subr.bf16.mxu0 0
      %7606 = vmatpush1.bf16.msra.mxu0 0
      %7607 = vmatprep.subr.bf16.mxu0 0
      %7608 = vmatpush1.bf16.msra.mxu0 %v7580
      %7609 = vmatprep.subr.bf16.mxu0 0
      %7610 = vmatpush1.bf16.msra.mxu0 %v7579
      %7611 = vmatprep.subr.bf16.mxu0 0
      %7612 = vmatpush2.bf16.msra.mxu0 0
      %7613 = vmatprep.subr.bf16.mxu0 0
      %7614 = vmatpush2.bf16.msra.mxu0 0
      %7615 = vmatprep.subr.bf16.mxu0 0
      %7616 = vmatpush2.bf16.msra.mxu0 0
      %7617 = vmatprep.subr.bf16.mxu0 0
      %7618 = vmatpush2.bf16.msra.mxu0 0
      %7619 = vmatprep.subr.bf16.mxu0 0
      %7620 = vmatpush2.bf16.msra.mxu0 0
      %7621 = vmatprep.subr.bf16.mxu0 0
      %7622 = vmatpush2.bf16.msra.mxu0 0
      %7623 = vmatprep.subr.bf16.mxu0 0
      %7624 = vmatpush2.bf16.msra.mxu0 0
      %7625 = vmatprep.subr.bf16.mxu0 0
      %7626 = vmatpush2.bf16.msra.mxu0 0
      %7627 = vmatprep.mubr.bf16.mxu0 0
      %7628 = vmatmul.mubr.bf16.gmra.mxu0 %v7584
      %v7629 = vpop.f32.mrf.mxu0
      %v7630 = vadd.f32 %v7569, %v7629
      %v7631 = vpop.f32.mrf.mxu0
      %v7632 = vpop.f32.mrf.mxu0
      %v7633 = vadd.f32 %v7569, %v7632
      %v7634 = vpop.f32.mrf.mxu0
      %7635 = vmatprep.mubr.bf16.mxu0 0
      %7636 = vmatmul.mubr.bf16.gmra.mxu0 %v7587
      %v7637 = vpop.f32.mrf.mxu0
      %v7638 = vadd.f32 %v7569, %v7637
      %v7639 = vpop.f32.mrf.mxu0
      %v7640 = vpop.f32.mrf.mxu0
      %v7641 = vadd.f32 %v7569, %v7640
      %v7642 = vpop.f32.mrf.mxu0
      %7643 = vmatprep.mubr.bf16.mxu0 0
      %7644 = vmatmul.mubr.bf16.gmra.mxu0 %v7590
      %v7645 = vpop.f32.mrf.mxu0
      %v7646 = vadd.f32 %v7569, %v7645
      %v7647 = vpop.f32.mrf.mxu0
      %v7648 = vpop.f32.mrf.mxu0
      %v7649 = vadd.f32 %v7569, %v7648
      %v7650 = vpop.f32.mrf.mxu0
      %7651 = vmatprep.mubr.bf16.mxu0 0
      %7652 = vmatmul.mubr.bf16.gmra.mxu0 %v7593
      %v7653 = vpop.f32.mrf.mxu0
      %v7654 = vadd.f32 %v7569, %v7653
      %v7655 = vpop.f32.mrf.mxu0
      %v7656 = vpop.f32.mrf.mxu0
      %v7657 = vadd.f32 %v7569, %v7656
      %v7658 = vpop.f32.mrf.mxu0
      %7659 = vdwg.mxu0
      %v7660 = vmul.f32 %v7630, 0.5
      %v7661 = vmul.f32 %v7633, 0.5
      %v7662 = vmul.f32 %v7638, 0.5
      %v7663 = vmul.f32 %v7641, 0.5
      %v7664 = vmul.f32 %v7646, 0.5
      %v7665 = vmul.f32 %v7649, 0.5
      %v7666 = vmul.f32 %v7654, 0.5
      %v7667 = vmul.f32 %v7657, 0.5
      %v7668 = vrcp.pop 1.4142135
      %v7669 = vmul.f32 %v7630, %v7668
      %v7670 = vmul.f32 %v7633, %v7668
      %v7671 = vmul.f32 %v7638, %v7668
      %v7672 = vmul.f32 %v7641, %v7668
      %v7673 = vmul.f32 %v7646, %v7668
      %v7674 = vmul.f32 %v7649, %v7668
      %v7675 = vmul.f32 %v7654, %v7668
      %v7676 = vmul.f32 %v7657, %v7668
      %v7677 = verf.f32.pop %v7669
      %v7678 = verf.f32.pop %v7670
      %v7679 = verf.f32.pop %v7671
      %v7680 = verf.f32.pop %v7672
      %v7681 = verf.f32.pop %v7673
      %v7682 = verf.f32.pop %v7674
      %v7683 = verf.f32.pop %v7675
      %v7684 = verf.f32.pop %v7676
      %v7685 = vadd.f32 %v7677, 1.0
      %v7686 = vadd.f32 %v7678, 1.0
      %v7687 = vadd.f32 %v7679, 1.0
      %v7688 = vadd.f32 %v7680, 1.0
      %v7689 = vadd.f32 %v7681, 1.0
      %v7690 = vadd.f32 %v7682, 1.0
      %v7691 = vadd.f32 %v7683, 1.0
      %v7692 = vadd.f32 %v7684, 1.0
      %v7693 = vmul.f32 %v7660, %v7685
      %v7694 = vmul.f32 %v7661, %v7686
      %v7695 = vmul.f32 %v7662, %v7687
      %v7696 = vmul.f32 %v7663, %v7688
      %v7697 = vmul.f32 %v7664, %v7689
      %v7698 = vmul.f32 %v7665, %v7690
      %v7699 = vmul.f32 %v7666, %v7691
      %v7700 = vmul.f32 %v7667, %v7692
      %v7701 = vld [vmem:[%s13] sm:$0xf]
      %v7702 = vld [vmem:[%s13 + $0x4] sm:$0xf]
      %v7703 = vld [vmem:[%s13 + $0x8] sm:$0xf]
      %v7704 = vld [vmem:[%s13 + $0xc] sm:$0xf]
      %v7705 = vld [vmem:[%s13 + $0x10] sm:$0xf]
      %v7706 = vld [vmem:[%s13 + $0x14] sm:$0xf]
      %v7707 = vld [vmem:[%s13 + $0x18] sm:$0xf]
      %v7708 = vld [vmem:[%s13 + $0x1c] sm:$0xf]
      %v7709 = vld [vmem:[%s13 + $0x20] sm:$0xf]
      %v7710 = vld [vmem:[%s13 + $0x24] sm:$0xf]
      %v7711 = vld [vmem:[%s13 + $0x28] sm:$0xf]
      %v7712 = vld [vmem:[%s13 + $0x2c] sm:$0xf]
      %v7713 = vld [vmem:[%s13 + $0x30] sm:$0xf]
      %v7714 = vld [vmem:[%s13 + $0x34] sm:$0xf]
      %v7715 = vld [vmem:[%s13 + $0x38] sm:$0xf]
      %v7716 = vld [vmem:[%s13 + $0x3c] sm:$0xf]
      %v7717 = vpack.c.bf16 %v7694, %v7693
      %v7718 = vpack.c.bf16 %v7696, %v7695
      %v7719 = vpack.c.bf16 %v7698, %v7697
      %v7720 = vpack.c.bf16 %v7700, %v7699
      %v7721 = vld [vmem:[%s14] sm:$0x1]
      %v7723 = vlaneseq
      %v7724 = vshrl.u32 %v7723, 7
      %v7725 = vsub.s32 0, %v7724
      %v7726 = vrot.slane %v7721, %v7725
      %v7744 = vunpack.c.l.b16 %v7701
      %v7745 = vunpack.c.l.b16 %v7702
      %v7746 = vunpack.c.l.b16 %v7703
      %v7747 = vunpack.c.l.b16 %v7704
      %v7748 = vunpack.c.l.b16 %v7705
      %v7749 = vunpack.c.l.b16 %v7706
      %v7750 = vunpack.c.l.b16 %v7707
      %v7751 = vunpack.c.l.b16 %v7708
      %v7752 = vunpack.c.l.b16 %v7709
      %v7753 = vunpack.c.l.b16 %v7710
      %v7754 = vunpack.c.l.b16 %v7711
      %v7755 = vunpack.c.l.b16 %v7712
      %v7756 = vunpack.c.l.b16 %v7713
      %v7757 = vunpack.c.l.b16 %v7714
      %v7758 = vunpack.c.l.b16 %v7715
      %v7759 = vunpack.c.l.b16 %v7716
      %v7760 = vpack.c.b16 %v7745, %v7744
      %v7761 = vpack.c.b16 %v7747, %v7746
      %v7762 = vpack.c.b16 %v7749, %v7748
      %v7763 = vpack.c.b16 %v7751, %v7750
      %v7764 = vpack.c.b16 %v7753, %v7752
      %v7765 = vpack.c.b16 %v7755, %v7754
      %v7766 = vpack.c.b16 %v7757, %v7756
      %v7767 = vpack.c.b16 %v7759, %v7758
      %7776 = vmatprep.subr.bf16.mxu0 0
      %7777 = vmatpush1.bf16.msra.mxu0 %v7767
      %7778 = vmatprep.subr.bf16.mxu0 0
      %7779 = vmatpush1.bf16.msra.mxu0 %v7766
      %7780 = vmatprep.subr.bf16.mxu0 0
      %7781 = vmatpush1.bf16.msra.mxu0 %v7765
      %7782 = vmatprep.subr.bf16.mxu0 0
      %7783 = vmatpush1.bf16.msra.mxu0 %v7764
      %7784 = vmatprep.subr.bf16.mxu0 0
      %7785 = vmatpush1.bf16.msra.mxu0 %v7763
      %7786 = vmatprep.subr.bf16.mxu0 0
      %7787 = vmatpush1.bf16.msra.mxu0 %v7762
      %7788 = vmatprep.subr.bf16.mxu0 0
      %7789 = vmatpush1.bf16.msra.mxu0 %v7761
      %7790 = vmatprep.subr.bf16.mxu0 0
      %7791 = vmatpush1.bf16.msra.mxu0 %v7760
      %7792 = vmatprep.subr.bf16.mxu0 0
      %7793 = vmatpush2.bf16.msra.mxu0 0
      %7794 = vmatprep.subr.bf16.mxu0 0
      %7795 = vmatpush2.bf16.msra.mxu0 0
      %7796 = vmatprep.subr.bf16.mxu0 0
      %7797 = vmatpush2.bf16.msra.mxu0 0
      %7798 = vmatprep.subr.bf16.mxu0 0
      %7799 = vmatpush2.bf16.msra.mxu0 0
      %7800 = vmatprep.subr.bf16.mxu0 0
      %7801 = vmatpush2.bf16.msra.mxu0 0
      %7802 = vmatprep.subr.bf16.mxu0 0
      %7803 = vmatpush2.bf16.msra.mxu0 0
      %7804 = vmatprep.subr.bf16.mxu0 0
      %7805 = vmatpush2.bf16.msra.mxu0 0
      %7806 = vmatprep.subr.bf16.mxu0 0
      %7807 = vmatpush2.bf16.msra.mxu0 0
      %7808 = vmatprep.mubr.bf16.mxu0 0
      %7809 = vmatmul.mubr.bf16.gmra.mxu0 %v7717
      %v7810 = vpop.f32.mrf.mxu0
      %v7811 = vadd.f32 %v7726, %v7810
      %v7812 = vpop.f32.mrf.mxu0
      %v7813 = vpop.f32.mrf.mxu0
      %v7814 = vadd.f32 %v7726, %v7813
      %v7815 = vpop.f32.mrf.mxu0
      %7816 = vmatprep.mubr.bf16.mxu0 0
      %7817 = vmatmul.mubr.bf16.gmra.mxu0 %v7718
      %v7818 = vpop.f32.mrf.mxu0
      %v7819 = vadd.f32 %v7726, %v7818
      %v7820 = vpop.f32.mrf.mxu0
      %v7821 = vpop.f32.mrf.mxu0
      %v7822 = vadd.f32 %v7726, %v7821
      %v7823 = vpop.f32.mrf.mxu0
      %7824 = vmatprep.mubr.bf16.mxu0 0
      %7825 = vmatmul.mubr.bf16.gmra.mxu0 %v7719
      %v7826 = vpop.f32.mrf.mxu0
      %v7827 = vadd.f32 %v7726, %v7826
      %v7828 = vpop.f32.mrf.mxu0
      %v7829 = vpop.f32.mrf.mxu0
      %v7830 = vadd.f32 %v7726, %v7829
      %v7831 = vpop.f32.mrf.mxu0
      %7832 = vmatprep.mubr.bf16.mxu0 0
      %7833 = vmatmul.mubr.bf16.gmra.mxu0 %v7720
      %v7834 = vpop.f32.mrf.mxu0
      %v7835 = vadd.f32 %v7726, %v7834
      %v7836 = vpop.f32.mrf.mxu0
      %v7837 = vpop.f32.mrf.mxu0
      %v7838 = vadd.f32 %v7726, %v7837
      %v7839 = vpop.f32.mrf.mxu0
      %7840 = vdwg.mxu0
      %v7841 = vadd.f32 %v7414, %v7811
      %v7842 = vadd.f32 %v7415, %v7814
      %v7843 = vadd.f32 %v7416, %v7819
      %v7844 = vadd.f32 %v7417, %v7822
      %v7845 = vadd.f32 %v7418, %v7827
      %v7846 = vadd.f32 %v7419, %v7830
      %v7847 = vadd.f32 %v7420, %v7835
      %v7848 = vadd.f32 %v7421, %v7838
      %7849 = vst.msk [vmem:[%s496] sm:$0xff] %vm509, %v7841
      %7850 = vst.msk [vmem:[%s496 + $0x8] sm:$0xff] %vm509, %v7842
      %7851 = vst.msk [vmem:[%s496 + $0x10] sm:$0xff] %vm509, %v7843
      %7852 = vst.msk [vmem:[%s496 + $0x18] sm:$0xff] %vm509, %v7844
      %7853 = vst.msk [vmem:[%s496 + $0x20] sm:$0xff] %vm509, %v7845
      %7854 = vst.msk [vmem:[%s496 + $0x28] sm:$0xff] %vm509, %v7846
      %7855 = vst.msk [vmem:[%s496 + $0x30] sm:$0xff] %vm509, %v7847
      %7856 = vst.msk [vmem:[%s496 + $0x38] sm:$0xff] %vm509, %v7848
      %s7857 = smul.u32 8, %s26
      %p7858 = scmp.lt.s32.totalorder %s7857, 15
      %s7859 = scalar_select %p7858, %s7857, 15
      %s7860 = smul.addr %s7859, 8
      %s7861 = scalar_lea.vmem %s15, %s7860
      // Predicated region
      $region81: #{nystromformer2d_forward.2} parent=79 // pred_check
        %p7862 = pneg %p364
      $region82: #{nystromformer2d_forward.2} parent=79 // pred_check_branch
        %7864 = sbr.rel (%p7862) target = $region84
      $region83: #{nystromformer2d_forward.2} parent=79 // pred_region
        %s7865 = smul.u32 8, %s26
      $region84: #{nystromformer2d_forward.2} parent=79 // pred_fallthru
        _
    $region80: #{nystromformer2d_forward.2} parent=5 // pred_fallthru
      _
    %p7866 = scmp.le.s32.totalorder 2, %s21
    // Predicated region
    $region85: #{nystromformer2d_forward.2} parent=5 // pred_check
      %p7867 = pneg %p7866
    $region86: #{nystromformer2d_forward.2} parent=5 // pred_check_branch
      %7869 = sbr.rel (%p7867) target = $region88
    $region87: #{nystromformer2d_forward.2} parent=5 // pred_region
      %s7870 = ssub.s32 %s21, 2
      // Predicated region
      $region89: #{nystromformer2d_forward.2} parent=87 // pred_check
        %p7871 = pneg %p370
      $region90: #{nystromformer2d_forward.2} parent=87 // pred_check_branch
        %7873 = sbr.rel (%p7871) target = $region92
      $region91: #{nystromformer2d_forward.2} parent=87 // pred_region
        %s7874 = smul.u32 8, %s27
        %p7875 = scmp.lt.s32.totalorder %s7874, 15
        %s7876 = scalar_select %p7875, %s7874, 15
        %s7877 = smul.addr %s7876, 8
        %s7878 = scalar_lea.vmem %s15, %s7877
      $region92: #{nystromformer2d_forward.2} parent=87 // pred_fallthru
        _
    $region88: #{nystromformer2d_forward.2} parent=5 // pred_fallthru
      _
  $region6: #{nystromformer2d_forward.2} parent=0 // loop_footer
    %s25 = sadd.s32 1, %s21
  $region7: #{nystromformer2d_forward.2} parent=0 // loop_footer_branch
    %20 = sbr.rel target = $region3
  $region8: #{nystromformer2d_forward.2} parent=0 // loop_exit
    _

</llo_original>
